<compile_context>
chip_gen: v6e
topology: v6e:2x2x1
jax: 0.10.0
libtpu: 0.0.40
codegen_flags: <defaults>
</compile_context>

<pallas_src>
import math
import functools

import jax
import jax.numpy as jnp
from jax import lax
from jax.experimental import pallas as pl
from jax.experimental.pallas import tpu as pltpu

LRELU_SLOPE = 0.2
IN_EPS = 1e-5          # torch.nn.InstanceNorm2d default eps


def _round_up(a, m):
    return (a + m - 1) // m * m


# ----------------------------- Pallas kernels ------------------------------ #

def _conv_mm_kernel(p_ref, w_ref, b_ref, *refs, apply_lrelu, emit_stats,
                    mask_rows, true_s, tm):
    """Tiled im2col matmul: bf16 x bf16 -> f32 accumulate.

    Last-K epilogue: add bias, optional LeakyReLU, zero spatial padding rows,
    optionally emit per-tile (sum, sum_sq) column partials for the fused
    InstanceNorm, and store the bf16 tile.
    """
    if emit_stats:
        o_ref, sum_ref, ssq_ref, acc_ref = refs
    else:
        o_ref, acc_ref = refs

    # Grid queries must stay at the top level of the kernel body; calling
    # pl.program_id inside a pl.when body breaks the interpret lowering path.
    i_row = pl.program_id(1)
    kk = pl.program_id(3)
    nk = pl.num_programs(3)
    if mask_rows:
        rows = i_row * tm + lax.broadcasted_iota(jnp.int32, (tm, 1), 0)

    @pl.when(kk == 0)
    def _():
        acc_ref[...] = jnp.zeros_like(acc_ref)

    acc_ref[...] += jnp.dot(p_ref[...], w_ref[...],
                            preferred_element_type=jnp.float32)

    # Bias / activation / stats only on the last K step (K loop stays pure MXU).
    @pl.when(kk == nk - 1)
    def _():
        z = acc_ref[...] + b_ref[...]                      # (tm, tn) + (1, tn)
        if apply_lrelu:
            z = jnp.where(z >= 0, z, LRELU_SLOPE * z)
        if mask_rows:
            # Zero the spatial padding rows so the fused InstanceNorm
            # statistics (divided by the true spatial size) remain exact.
            z = jnp.where(rows < true_s, z, 0.0)
        if emit_stats:
            sum_ref[...] = jnp.sum(z, axis=0, keepdims=True)       # (1, tn)
            ssq_ref[...] = jnp.sum(z * z, axis=0, keepdims=True)   # (1, tn)
        o_ref[...] = z.astype(o_ref.dtype)


def _conv_bias_act(patches, w_flat, bias, *, tm, tn, tk, true_s,
                   apply_lrelu, emit_stats):
    """patches: (B, S_pad, K_pad) bf16; w_flat: (K_pad, N_pad) bf16; bias: (1, N_pad) f32."""
    B, S_pad, K_pad = patches.shape
    _, N_pad = w_flat.shape
    n_i = S_pad // tm
    grid = (B, n_i, N_pad // tn, K_pad // tk)

    kern = functools.partial(_conv_mm_kernel, apply_lrelu=apply_lrelu,
                             emit_stats=emit_stats,
                             mask_rows=(S_pad != true_s), true_s=true_s, tm=tm)

    out_shape = [jax.ShapeDtypeStruct((B, S_pad, N_pad), jnp.bfloat16)]
    out_specs = [pl.BlockSpec((None, tm, tn), lambda b, i, j, k: (b, i, j))]
    if emit_stats:
        out_shape += [jax.ShapeDtypeStruct((B, n_i, 1, N_pad), jnp.float32)] * 2
        out_specs += [pl.BlockSpec((None, None, 1, tn),
                                   lambda b, i, j, k: (b, i, 0, j))] * 2

    res = pl.pallas_call(
        kern,
        out_shape=tuple(out_shape),
        grid=grid,
        in_specs=[
            pl.BlockSpec((None, tm, tk), lambda b, i, j, k: (b, i, k)),
            pl.BlockSpec((tk, tn),       lambda b, i, j, k: (k, j)),
            pl.BlockSpec((1, tn),        lambda b, i, j, k: (0, j)),
        ],
        out_specs=tuple(out_specs),
        scratch_shapes=[pltpu.VMEM((tm, tn), jnp.float32)],
        compiler_params=pltpu.CompilerParams(
            dimension_semantics=("parallel", "parallel", "parallel", "arbitrary"),
            vmem_limit_bytes=32 * 1024 * 1024),
    )(patches, w_flat, bias)
    return res if emit_stats else res[0]


def _norm_lrelu_kernel(z_ref, sc_ref, sh_ref, o_ref):
    """y = LeakyReLU(z * scale + shift): pure elementwise, fully tiled."""
    z = z_ref[...].astype(jnp.float32)                     # (ts, tc)
    y = z * sc_ref[...] + sh_ref[...]                      # (1, tc) broadcast
    y = jnp.where(y >= 0, y, LRELU_SLOPE * y)
    o_ref[...] = y.astype(o_ref.dtype)


def _apply_norm_lrelu(z, scale, shift, *, ts, tc):
    """z: (B, S_pad, C) bf16; scale/shift: (B, 1, C) f32 (precomputed from fused stats)."""
    B, S_pad, C = z.shape
    grid = (B, S_pad // ts, C // tc)
    return pl.pallas_call(
        _norm_lrelu_kernel,
        out_shape=jax.ShapeDtypeStruct((B, S_pad, C), z.dtype),
        grid=grid,
        in_specs=[pl.BlockSpec((None, ts, tc), lambda b, i, c: (b, i, c)),
                  pl.BlockSpec((None, 1, tc),  lambda b, i, c: (b, 0, c)),
                  pl.BlockSpec((None, 1, tc),  lambda b, i, c: (b, 0, c))],
        out_specs=pl.BlockSpec((None, ts, tc), lambda b, i, c: (b, i, c)),
        compiler_params=pltpu.CompilerParams(
            dimension_semantics=("parallel", "parallel", "parallel"),
            vmem_limit_bytes=32 * 1024 * 1024),
    )(z, scale, shift)


# ------------------------------ JAX-side glue ------------------------------ #

def _im2col(x, k, s):
    """x: (B, H, W, C) -> patches (B, OH*OW, k*k*C), tap order (kh, kw, ci)."""
    B, H, W, C = x.shape
    OH = (H - k) // s + 1
    OW = (W - k) // s + 1
    cols = []
    for kh in range(k):
        for kw in range(k):
            cols.append(x[:, kh:kh + s * (OH - 1) + 1:s,
                           kw:kw + s * (OW - 1) + 1:s, :])
    p = jnp.concatenate(cols, axis=-1)                     # (B, OH, OW, k*k*C)
    # TODO(synk): fold the patch extraction into the conv kernel's K loop
    # (halo DMA / strided taps) to avoid materializing the k*k-expanded
    # patches in HBM; for now patches are materialized in bf16 only.
    return p.reshape(B, OH * OW, k * k * C), OH, OW


def _pick_tiles(S, K_pad, N_pad):
    """Big tiles (VMEM allows ~6 MiB worst case) while keeping the S pad small."""
    S16 = _round_up(S, 16)
    if S16 <= 512:
        tm = S_pad = S16                                   # single row tile
    elif S <= 4096:
        S_pad = _round_up(S, 128)
        tm = max(t for t in (128, 256, 512) if S_pad % t == 0)
    else:
        tm, S_pad = 512, _round_up(S, 512)                 # pad waste <= 512/S
    tk = next(t for t in (1024, 512, 256, 128) if K_pad % t == 0)
    tn = min(N_pad, 512)
    return tm, S_pad, tk, tn


def init_patchgan_params(key, in_channels=3, ndf=64, n_layers=3):
    """Mirrors PatchGAN.__init__ (spectral=False): 5 convs for n_layers=3."""
    chans = [in_channels, ndf]
    for n in range(1, n_layers):
        chans.append(ndf * min(2 ** n, 8))
    chans.append(ndf * min(2 ** n_layers, 8))
    chans.append(1)
    strides = [2] * n_layers + [1, 1]
    norms = [False] + [True] * (n_layers - 1) + [True, False]
    acts = [True] * (n_layers + 1) + [False]

    params = []
    for cin, cout in zip(chans[:-1], chans[1:]):
        key, kw, kb = jax.random.split(key, 3)
        fan_in = cin * 4 * 4
        bound = 1.0 / math.sqrt(fan_in)   # PyTorch Conv2d default init range
        w = jax.random.uniform(kw, (4, 4, cin, cout), jnp.float32, -bound, bound)
        b = jax.random.uniform(kb, (cout,), jnp.float32, -bound, bound)
        params.append((w, b))
    return params, strides, norms, acts


def patchgan_forward(x_nchw, params, strides, norms, acts):
    x = jnp.transpose(x_nchw, (0, 2, 3, 1)).astype(jnp.bfloat16)  # NCHW -> NHWC
    B = x.shape[0]
    for (w, b), stride, use_norm, use_act in zip(params, strides, norms, acts):
        k, _, cin, cout = w.shape

        if cout == 1:
            # Final 1-channel head: N=1 would use 1/256 of the MXU columns —
            # bf16 operands with f32 accumulation in plain JAX instead.
            patches, OH, OW = _im2col(x, k, stride)
            wf = w.reshape(k * k * cin, cout).astype(jnp.bfloat16)
            z = lax.dot_general(patches, wf, (((2,), (0,)), ((), ())),
                                preferred_element_type=jnp.float32)
            z = z + b.astype(jnp.float32)
            if use_act:
                z = jnp.where(z >= 0, z, LRELU_SLOPE * z)
            x = z.reshape(B, OH, OW, cout)
            continue

        # Pad cin to a multiple of 8 *before* im2col (layer 1 only, on the
        # small x) so K = 16*cin_pad is a multiple of 128 and the expanded
        # patches never need a K pad.
        cin_pad = _round_up(cin, 8)
        if cin_pad != cin:
            x = jnp.pad(x, ((0, 0), (0, 0), (0, 0), (0, cin_pad - cin)))
            w = jnp.pad(w, ((0, 0), (0, 0), (0, cin_pad - cin), (0, 0)))

        patches, OH, OW = _im2col(x, k, stride)            # (B, S, K_pad) bf16
        S, K_pad = OH * OW, k * k * cin_pad
        N_pad = _round_up(cout, 128)                       # lane-dense stores
        tm, S_pad, tk, tn = _pick_tiles(S, K_pad, N_pad)
        if S_pad != S:
            patches = jnp.pad(patches, ((0, 0), (0, S_pad - S), (0, 0)))

        wf = jnp.pad(w.reshape(K_pad, cout),
                     ((0, 0), (0, N_pad - cout))).astype(jnp.bfloat16)
        bp = jnp.pad(b, (0, N_pad - cout)).astype(jnp.float32).reshape(1, N_pad)

        if use_norm:
            # Conv with fused per-tile InstanceNorm sum / sum_sq partials.
            z, ssum, ssq = _conv_bias_act(patches, wf, bp, tm=tm, tn=tn, tk=tk,
                                          true_s=S, apply_lrelu=False,
                                          emit_stats=True)
            inv_s = 1.0 / float(S)
            mean = jnp.sum(ssum, axis=1) * inv_s                   # (B, 1, N_pad)
            var = jnp.maximum(jnp.sum(ssq, axis=1) * inv_s - mean * mean, 0.0)
            rstd = lax.rsqrt(var + IN_EPS)
            # TODO(synk): LeakyReLU is fused here because every normed layer in
            # this architecture is followed by one; split if that ever changes.
            z = _apply_norm_lrelu(z, rstd, -mean * rstd, ts=tm, tc=128)
        else:
            # PyTorch order is conv -> LeakyReLU when there is no norm.
            z = _conv_bias_act(patches, wf, bp, tm=tm, tn=tn, tk=tk,
                               true_s=S, apply_lrelu=use_act, emit_stats=False)

        # Drop spatial / channel padding lazily (fuses into the next im2col).
        x = z[:, :S, :cout].reshape(B, OH, OW, cout)

    return jnp.transpose(x, (0, 3, 1, 2)).astype(jnp.float32)      # back to NCHW


# ---------------------------------- main ----------------------------------- #

if __name__ == "__main__":
    key = jax.random.PRNGKey(0)
    kp, kx = jax.random.split(key)

    IN_CH, NDF, N_LAYERS = 3, 16, 3   # small ndf keeps the smoke test light
    params, strides, norms, acts = init_patchgan_params(kp, IN_CH, NDF, N_LAYERS)

    # 70x70 is the smallest spatial size for which the valid-padding stack
    # (k=4: strides 2,2,2,1,1) yields a non-empty (1x1) patch map.
    x = jax.random.normal(kx, (2, IN_CH, 70, 70), jnp.float32)

    fwd = jax.jit(lambda xx: patchgan_forward(xx, params, strides, norms, acts))
    out = jax.block_until_ready(fwd(x))

    assert out.shape == (2, 1, 1, 1), out.shape
    assert bool(jnp.all(jnp.isfinite(out)))
    print("KERNEL_OK")
</pallas_src>

<mosaic_0001>
module attributes {stable_mosaic.version = 11 : i64} {
  func.func @_conv_mm_kernel(%arg0: i32, %arg1: i32, %arg2: i32, %arg3: i32, %arg4: memref<1x256x128xbf16, #tpu.memory_space<vmem>>, %arg5: memref<128x128xbf16, #tpu.memory_space<vmem>>, %arg6: memref<1x128xf32, #tpu.memory_space<vmem>>, %arg7: memref<1x256x128xbf16, #tpu.memory_space<vmem>>, %arg8: memref<256x128xf32, #tpu.memory_space<vmem>>) attributes {dimension_semantics = [#tpu.dimension_semantics<parallel>, #tpu.dimension_semantics<parallel>, #tpu.dimension_semantics<parallel>, #tpu.dimension_semantics<arbitrary>], iteration_bounds = array<i64: 2, 5, 1, 1>, scalar_prefetch = 0 : i64, scratch_operands = 1 : i64, tpu.core_type = #tpu.core_type<tc>, window_params = [{transform_indices = @transform_0, window_bounds = array<i64: 1, 256, 128>}, {transform_indices = @transform_1, window_bounds = array<i64: 128, 128>}, {transform_indices = @transform_2, window_bounds = array<i64: 1, 128>}, {transform_indices = @transform_3, window_bounds = array<i64: 1, 256, 128>}]} {
    %c256_i32 = arith.constant 256 : i32
    %0 = arith.muli %arg1, %c256_i32 : i32
    %1 = tpu.iota {dimensions = array<i32: 0>} : vector<256x1xi32>
    %2 = vector.broadcast %0 : i32 to vector<256x1xi32>
    %3 = arith.addi %2, %1 : vector<256x1xi32>
    %c0_i32 = arith.constant 0 : i32
    %4 = arith.cmpi eq, %arg3, %c0_i32 : i32
    %5 = arith.extui %4 : i1 to i32
    %c0_i32_0 = arith.constant 0 : i32
    %6 = arith.cmpi ne, %5, %c0_i32_0 : i32
    scf.if %6 {
      %cst_11 = arith.constant 0.000000e+00 : f32
      %17 = vector.broadcast %cst_11 : f32 to vector<256x128xf32>
      %c0_12 = arith.constant 0 : index
      %c0_13 = arith.constant 0 : index
      %18 = vector.load %arg8[%c0_12, %c0_13] : memref<256x128xf32, #tpu.memory_space<vmem>>, vector<256x128xf32>
      tpu.vector_store %arg8[%c0_12, %c0_13], %17 {strides = array<i32>} : memref<256x128xf32, #tpu.memory_space<vmem>>, vector<256x128xf32>,
    } else {
    }
    %c0 = arith.constant 0 : index
    %c0_1 = arith.constant 0 : index
    %7 = vector.load %arg8[%c0, %c0_1] : memref<256x128xf32, #tpu.memory_space<vmem>>, vector<256x128xf32>
    %c0_2 = arith.constant 0 : index
    %c0_3 = arith.constant 0 : index
    %c0_4 = arith.constant 0 : index
    %8 = vector.load %arg4[%c0_2, %c0_3, %c0_4] : memref<1x256x128xbf16, #tpu.memory_space<vmem>>, vector<1x256x128xbf16>
    %9 = vector.shape_cast %8 : vector<1x256x128xbf16> to vector<256x128xbf16>
    %c0_5 = arith.constant 0 : index
    %c0_6 = arith.constant 0 : index
    %10 = vector.load %arg5[%c0_5, %c0_6] : memref<128x128xbf16, #tpu.memory_space<vmem>>, vector<128x128xbf16>
    %cst = arith.constant dense<0.000000e+00> : vector<256x128xf32>
    %11 = tpu.matmul %9, %10, %cst {dimension_numbers = #tpu.dot_dimension_numbers<[1], [0], [0], [1], [0, 0, 1, 1], [], []>} : vector<256x128xbf16>, vector<128x128xbf16>, vector<256x128xf32> -> vector<256x128xf32>
    %12 = arith.addf %7, %11 : vector<256x128xf32>
    %c0_7 = arith.constant 0 : index
    %c0_8 = arith.constant 0 : index
    %13 = vector.load %arg8[%c0_7, %c0_8] : memref<256x128xf32, #tpu.memory_space<vmem>>, vector<256x128xf32>
    tpu.vector_store %arg8[%c0_7, %c0_8], %12 {strides = array<i32>} : memref<256x128xf32, #tpu.memory_space<vmem>>, vector<256x128xf32>,
    %c0_i32_9 = arith.constant 0 : i32
    %14 = arith.cmpi eq, %arg3, %c0_i32_9 : i32
    %15 = arith.extui %14 : i1 to i32
    %c0_i32_10 = arith.constant 0 : i32
    %16 = arith.cmpi ne, %15, %c0_i32_10 : i32
    scf.if %16 {
      %c0_11 = arith.constant 0 : index
      %c0_12 = arith.constant 0 : index
      %17 = vector.load %arg8[%c0_11, %c0_12] : memref<256x128xf32, #tpu.memory_space<vmem>>, vector<256x128xf32>
      %c0_13 = arith.constant 0 : index
      %c0_14 = arith.constant 0 : index
      %18 = vector.load %arg6[%c0_13, %c0_14] : memref<1x128xf32, #tpu.memory_space<vmem>>, vector<1x128xf32>
      %19 = vector.broadcast %18 : vector<1x128xf32> to vector<256x128xf32>
      %20 = arith.addf %17, %19 : vector<256x128xf32>
      %cst_15 = arith.constant 0.000000e+00 : f32
      %21 = vector.broadcast %cst_15 : f32 to vector<256x128xf32>
      %22 = arith.cmpf oge, %20, %21 : vector<256x128xf32>
      %cst_16 = arith.constant 2.000000e-01 : f32
      %23 = vector.broadcast %cst_16 : f32 to vector<256x128xf32>
      %24 = arith.mulf %23, %20 : vector<256x128xf32>
      %25 = arith.select %22, %20, %24 : vector<256x128xi1>, vector<256x128xf32>
      %c1156_i32 = arith.constant 1156 : i32
      %26 = vector.broadcast %c1156_i32 : i32 to vector<256x1xi32>
      %27 = arith.cmpi slt, %3, %26 : vector<256x1xi32>
      %cst_17 = arith.constant 0.000000e+00 : f32
      %28 = vector.shape_cast %27 : vector<256x1xi1> to vector<256x1xi1>
      %29 = vector.broadcast %28 : vector<256x1xi1> to vector<256x128xi1>
      %30 = vector.broadcast %cst_17 : f32 to vector<256x128xf32>
      %31 = arith.select %29, %25, %30 : vector<256x128xi1>, vector<256x128xf32>
      %32 = arith.truncf %31 : vector<256x128xf32> to vector<256x128xbf16>
      %c0_18 = arith.constant 0 : index
      %c0_19 = arith.constant 0 : index
      %c0_20 = arith.constant 0 : index
      %33 = vector.load %arg7[%c0_18, %c0_19, %c0_20] : memref<1x256x128xbf16, #tpu.memory_space<vmem>>, vector<1x256x128xbf16>
      %34 = vector.shape_cast %33 : vector<1x256x128xbf16> to vector<256x128xbf16>
      %35 = vector.shape_cast %32 : vector<256x128xbf16> to vector<1x256x128xbf16>
      tpu.vector_store %arg7[%c0_18, %c0_19, %c0_20], %35 {strides = array<i32>} : memref<1x256x128xbf16, #tpu.memory_space<vmem>>, vector<1x256x128xbf16>,
    } else {
    }
    return
  }
  func.func @transform_0(%arg0: i32, %arg1: i32, %arg2: i32, %arg3: i32) -> (i32, i32, i32) {
    %c0_i32 = arith.constant 0 : i32
    return %arg0, %arg1, %arg3 : i32, i32, i32
  }
  func.func @transform_1(%arg0: i32, %arg1: i32, %arg2: i32, %arg3: i32) -> (i32, i32) {
    %c0_i32 = arith.constant 0 : i32
    return %arg3, %arg2 : i32, i32
  }
  func.func @transform_2(%arg0: i32, %arg1: i32, %arg2: i32, %arg3: i32) -> (i32, i32) {
    %c0_i32 = arith.constant 0 : i32
    %c0_i32_0 = arith.constant 0 : i32
    return %c0_i32, %arg2 : i32, i32
  }
  func.func @transform_3(%arg0: i32, %arg1: i32, %arg2: i32, %arg3: i32) -> (i32, i32, i32) {
    %c0_i32 = arith.constant 0 : i32
    return %arg0, %arg1, %arg2 : i32, i32, i32
  }
}

module attributes {stable_mosaic.version = 11 : i64} {
  func.func @_conv_mm_kernel(%arg0: i32, %arg1: i32, %arg2: i32, %arg3: i32, %arg4: memref<1x256x256xbf16, #tpu.memory_space<vmem>>, %arg5: memref<256x128xbf16, #tpu.memory_space<vmem>>, %arg6: memref<1x128xf32, #tpu.memory_space<vmem>>, %arg7: memref<1x256x128xbf16, #tpu.memory_space<vmem>>, %arg8: memref<1x1x1x128xf32, #tpu.memory_space<vmem>>, %arg9: memref<1x1x1x128xf32, #tpu.memory_space<vmem>>, %arg10: memref<256x128xf32, #tpu.memory_space<vmem>>) attributes {dimension_semantics = [#tpu.dimension_semantics<parallel>, #tpu.dimension_semantics<parallel>, #tpu.dimension_semantics<parallel>, #tpu.dimension_semantics<arbitrary>], iteration_bounds = array<i64: 2, 1, 1, 1>, scalar_prefetch = 0 : i64, scratch_operands = 1 : i64, tpu.core_type = #tpu.core_type<tc>, window_params = [{transform_indices = @transform_0, window_bounds = array<i64: 1, 256, 256>}, {transform_indices = @transform_1, window_bounds = array<i64: 256, 128>}, {transform_indices = @transform_2, window_bounds = array<i64: 1, 128>}, {transform_indices = @transform_3, window_bounds = array<i64: 1, 256, 128>}, {transform_indices = @transform_4, window_bounds = array<i64: 1, 1, 1, 128>}, {transform_indices = @transform_5, window_bounds = array<i64: 1, 1, 1, 128>}]} {
    %c0_i32 = arith.constant 0 : i32
    %0 = arith.cmpi eq, %arg3, %c0_i32 : i32
    %1 = arith.extui %0 : i1 to i32
    %c0_i32_0 = arith.constant 0 : i32
    %2 = arith.cmpi ne, %1, %c0_i32_0 : i32
    scf.if %2 {
      %cst_11 = arith.constant 0.000000e+00 : f32
      %13 = vector.broadcast %cst_11 : f32 to vector<256x128xf32>
      %c0_12 = arith.constant 0 : index
      %c0_13 = arith.constant 0 : index
      %14 = vector.load %arg10[%c0_12, %c0_13] : memref<256x128xf32, #tpu.memory_space<vmem>>, vector<256x128xf32>
      tpu.vector_store %arg10[%c0_12, %c0_13], %13 {strides = array<i32>} : memref<256x128xf32, #tpu.memory_space<vmem>>, vector<256x128xf32>,
    } else {
    }
    %c0 = arith.constant 0 : index
    %c0_1 = arith.constant 0 : index
    %3 = vector.load %arg10[%c0, %c0_1] : memref<256x128xf32, #tpu.memory_space<vmem>>, vector<256x128xf32>
    %c0_2 = arith.constant 0 : index
    %c0_3 = arith.constant 0 : index
    %c0_4 = arith.constant 0 : index
    %4 = vector.load %arg4[%c0_2, %c0_3, %c0_4] : memref<1x256x256xbf16, #tpu.memory_space<vmem>>, vector<1x256x256xbf16>
    %5 = vector.shape_cast %4 : vector<1x256x256xbf16> to vector<256x256xbf16>
    %c0_5 = arith.constant 0 : index
    %c0_6 = arith.constant 0 : index
    %6 = vector.load %arg5[%c0_5, %c0_6] : memref<256x128xbf16, #tpu.memory_space<vmem>>, vector<256x128xbf16>
    %cst = arith.constant dense<0.000000e+00> : vector<256x128xf32>
    %7 = tpu.matmul %5, %6, %cst {dimension_numbers = #tpu.dot_dimension_numbers<[1], [0], [0], [1], [0, 0, 1, 1], [], []>} : vector<256x256xbf16>, vector<256x128xbf16>, vector<256x128xf32> -> vector<256x128xf32>
    %8 = arith.addf %3, %7 : vector<256x128xf32>
    %c0_7 = arith.constant 0 : index
    %c0_8 = arith.constant 0 : index
    %9 = vector.load %arg10[%c0_7, %c0_8] : memref<256x128xf32, #tpu.memory_space<vmem>>, vector<256x128xf32>
    tpu.vector_store %arg10[%c0_7, %c0_8], %8 {strides = array<i32>} : memref<256x128xf32, #tpu.memory_space<vmem>>, vector<256x128xf32>,
    %c0_i32_9 = arith.constant 0 : i32
    %10 = arith.cmpi eq, %arg3, %c0_i32_9 : i32
    %11 = arith.extui %10 : i1 to i32
    %c0_i32_10 = arith.constant 0 : i32
    %12 = arith.cmpi ne, %11, %c0_i32_10 : i32
    scf.if %12 {
      %c0_11 = arith.constant 0 : index
      %c0_12 = arith.constant 0 : index
      %13 = vector.load %arg10[%c0_11, %c0_12] : memref<256x128xf32, #tpu.memory_space<vmem>>, vector<256x128xf32>
      %c0_13 = arith.constant 0 : index
      %c0_14 = arith.constant 0 : index
      %14 = vector.load %arg6[%c0_13, %c0_14] : memref<1x128xf32, #tpu.memory_space<vmem>>, vector<1x128xf32>
      %15 = vector.broadcast %14 : vector<1x128xf32> to vector<256x128xf32>
      %16 = arith.addf %13, %15 : vector<256x128xf32>
      %cst_15 = arith.constant dense<0.000000e+00> : vector<128xf32>
      %17 = vector.multi_reduction <add>, %16, %cst_15 [0] : vector<256x128xf32> to vector<128xf32>
      %18 = vector.shape_cast %17 : vector<128xf32> to vector<1x128xf32>
      %c0_16 = arith.constant 0 : index
      %c0_17 = arith.constant 0 : index
      %c0_18 = arith.constant 0 : index
      %c0_19 = arith.constant 0 : index
      %19 = vector.load %arg8[%c0_16, %c0_17, %c0_18, %c0_19] : memref<1x1x1x128xf32, #tpu.memory_space<vmem>>, vector<1x1x1x128xf32>
      %20 = vector.shape_cast %19 : vector<1x1x1x128xf32> to vector<1x128xf32>
      %21 = vector.shape_cast %18 : vector<1x128xf32> to vector<1x1x1x128xf32>
      tpu.vector_store %arg8[%c0_16, %c0_17, %c0_18, %c0_19], %21 {strides = array<i32>} : memref<1x1x1x128xf32, #tpu.memory_space<vmem>>, vector<1x1x1x128xf32>,
      %22 = arith.mulf %16, %16 : vector<256x128xf32>
      %cst_20 = arith.constant dense<0.000000e+00> : vector<128xf32>
      %23 = vector.multi_reduction <add>, %22, %cst_20 [0] : vector<256x128xf32> to vector<128xf32>
      %24 = vector.shape_cast %23 : vector<128xf32> to vector<1x128xf32>
      %c0_21 = arith.constant 0 : index
      %c0_22 = arith.constant 0 : index
      %c0_23 = arith.constant 0 : index
      %c0_24 = arith.constant 0 : index
      %25 = vector.load %arg9[%c0_21, %c0_22, %c0_23, %c0_24] : memref<1x1x1x128xf32, #tpu.memory_space<vmem>>, vector<1x1x1x128xf32>
      %26 = vector.shape_cast %25 : vector<1x1x1x128xf32> to vector<1x128xf32>
      %27 = vector.shape_cast %24 : vector<1x128xf32> to vector<1x1x1x128xf32>
      tpu.vector_store %arg9[%c0_21, %c0_22, %c0_23, %c0_24], %27 {strides = array<i32>} : memref<1x1x1x128xf32, #tpu.memory_space<vmem>>, vector<1x1x1x128xf32>,
      %28 = arith.truncf %16 : vector<256x128xf32> to vector<256x128xbf16>
      %c0_25 = arith.constant 0 : index
      %c0_26 = arith.constant 0 : index
      %c0_27 = arith.constant 0 : index
      %29 = vector.load %arg7[%c0_25, %c0_26, %c0_27] : memref<1x256x128xbf16, #tpu.memory_space<vmem>>, vector<1x256x128xbf16>
      %30 = vector.shape_cast %29 : vector<1x256x128xbf16> to vector<256x128xbf16>
      %31 = vector.shape_cast %28 : vector<256x128xbf16> to vector<1x256x128xbf16>
      tpu.vector_store %arg7[%c0_25, %c0_26, %c0_27], %31 {strides = array<i32>} : memref<1x256x128xbf16, #tpu.memory_space<vmem>>, vector<1x256x128xbf16>,
    } else {
    }
    return
  }
  func.func @transform_0(%arg0: i32, %arg1: i32, %arg2: i32, %arg3: i32) -> (i32, i32, i32) {
    %c0_i32 = arith.constant 0 : i32
    return %arg0, %arg1, %arg3 : i32, i32, i32
  }
  func.func @transform_1(%arg0: i32, %arg1: i32, %arg2: i32, %arg3: i32) -> (i32, i32) {
    %c0_i32 = arith.constant 0 : i32
    return %arg3, %arg2 : i32, i32
  }
  func.func @transform_2(%arg0: i32, %arg1: i32, %arg2: i32, %arg3: i32) -> (i32, i32) {
    %c0_i32 = arith.constant 0 : i32
    %c0_i32_0 = arith.constant 0 : i32
    return %c0_i32, %arg2 : i32, i32
  }
  func.func @transform_3(%arg0: i32, %arg1: i32, %arg2: i32, %arg3: i32) -> (i32, i32, i32) {
    %c0_i32 = arith.constant 0 : i32
    return %arg0, %arg1, %arg2 : i32, i32, i32
  }
  func.func @transform_4(%arg0: i32, %arg1: i32, %arg2: i32, %arg3: i32) -> (i32, i32, i32, i32) {
    %c0_i32 = arith.constant 0 : i32
    %c0_i32_0 = arith.constant 0 : i32
    return %arg0, %arg1, %c0_i32, %arg2 : i32, i32, i32, i32
  }
  func.func @transform_5(%arg0: i32, %arg1: i32, %arg2: i32, %arg3: i32) -> (i32, i32, i32, i32) {
    %c0_i32 = arith.constant 0 : i32
    %c0_i32_0 = arith.constant 0 : i32
    return %arg0, %arg1, %c0_i32, %arg2 : i32, i32, i32, i32
  }
}

module attributes {stable_mosaic.version = 11 : i64} {
  func.func @_norm_lrelu_kernel(%arg0: i32, %arg1: i32, %arg2: i32, %arg3: memref<1x256x128xbf16, #tpu.memory_space<vmem>>, %arg4: memref<1x1x128xf32, #tpu.memory_space<vmem>>, %arg5: memref<1x1x128xf32, #tpu.memory_space<vmem>>, %arg6: memref<1x256x128xbf16, #tpu.memory_space<vmem>>) attributes {dimension_semantics = [#tpu.dimension_semantics<parallel>, #tpu.dimension_semantics<parallel>, #tpu.dimension_semantics<parallel>], iteration_bounds = array<i64: 2, 1, 1>, scalar_prefetch = 0 : i64, scratch_operands = 0 : i64, tpu.core_type = #tpu.core_type<tc>, window_params = [{transform_indices = @transform_0, window_bounds = array<i64: 1, 256, 128>}, {transform_indices = @transform_1, window_bounds = array<i64: 1, 1, 128>}, {transform_indices = @transform_2, window_bounds = array<i64: 1, 1, 128>}, {transform_indices = @transform_3, window_bounds = array<i64: 1, 256, 128>}]} {
    %c0 = arith.constant 0 : index
    %c0_0 = arith.constant 0 : index
    %c0_1 = arith.constant 0 : index
    %0 = vector.load %arg3[%c0, %c0_0, %c0_1] : memref<1x256x128xbf16, #tpu.memory_space<vmem>>, vector<1x256x128xbf16>
    %1 = vector.shape_cast %0 : vector<1x256x128xbf16> to vector<256x128xbf16>
    %2 = arith.extf %1 : vector<256x128xbf16> to vector<256x128xf32>
    %c0_2 = arith.constant 0 : index
    %c0_3 = arith.constant 0 : index
    %c0_4 = arith.constant 0 : index
    %3 = vector.load %arg4[%c0_2, %c0_3, %c0_4] : memref<1x1x128xf32, #tpu.memory_space<vmem>>, vector<1x1x128xf32>
    %4 = vector.shape_cast %3 : vector<1x1x128xf32> to vector<1x128xf32>
    %5 = vector.broadcast %4 : vector<1x128xf32> to vector<256x128xf32>
    %6 = arith.mulf %2, %5 : vector<256x128xf32>
    %c0_5 = arith.constant 0 : index
    %c0_6 = arith.constant 0 : index
    %c0_7 = arith.constant 0 : index
    %7 = vector.load %arg5[%c0_5, %c0_6, %c0_7] : memref<1x1x128xf32, #tpu.memory_space<vmem>>, vector<1x1x128xf32>
    %8 = vector.shape_cast %7 : vector<1x1x128xf32> to vector<1x128xf32>
    %9 = vector.broadcast %8 : vector<1x128xf32> to vector<256x128xf32>
    %10 = arith.addf %6, %9 : vector<256x128xf32>
    %cst = arith.constant 0.000000e+00 : f32
    %11 = vector.broadcast %cst : f32 to vector<256x128xf32>
    %12 = arith.cmpf oge, %10, %11 : vector<256x128xf32>
    %cst_8 = arith.constant 2.000000e-01 : f32
    %13 = vector.broadcast %cst_8 : f32 to vector<256x128xf32>
    %14 = arith.mulf %13, %10 : vector<256x128xf32>
    %15 = arith.select %12, %10, %14 : vector<256x128xi1>, vector<256x128xf32>
    %16 = arith.truncf %15 : vector<256x128xf32> to vector<256x128xbf16>
    %c0_9 = arith.constant 0 : index
    %c0_10 = arith.constant 0 : index
    %c0_11 = arith.constant 0 : index
    %17 = vector.load %arg6[%c0_9, %c0_10, %c0_11] : memref<1x256x128xbf16, #tpu.memory_space<vmem>>, vector<1x256x128xbf16>
    %18 = vector.shape_cast %17 : vector<1x256x128xbf16> to vector<256x128xbf16>
    %19 = vector.shape_cast %16 : vector<256x128xbf16> to vector<1x256x128xbf16>
    tpu.vector_store %arg6[%c0_9, %c0_10, %c0_11], %19 {strides = array<i32>} : memref<1x256x128xbf16, #tpu.memory_space<vmem>>, vector<1x256x128xbf16>,
    return
  }
  func.func @transform_0(%arg0: i32, %arg1: i32, %arg2: i32) -> (i32, i32, i32) {
    %c0_i32 = arith.constant 0 : i32
    return %arg0, %arg1, %arg2 : i32, i32, i32
  }
  func.func @transform_1(%arg0: i32, %arg1: i32, %arg2: i32) -> (i32, i32, i32) {
    %c0_i32 = arith.constant 0 : i32
    %c0_i32_0 = arith.constant 0 : i32
    return %arg0, %c0_i32, %arg2 : i32, i32, i32
  }
  func.func @transform_2(%arg0: i32, %arg1: i32, %arg2: i32) -> (i32, i32, i32) {
    %c0_i32 = arith.constant 0 : i32
    %c0_i32_0 = arith.constant 0 : i32
    return %arg0, %c0_i32, %arg2 : i32, i32, i32
  }
  func.func @transform_3(%arg0: i32, %arg1: i32, %arg2: i32) -> (i32, i32, i32) {
    %c0_i32 = arith.constant 0 : i32
    return %arg0, %arg1, %arg2 : i32, i32, i32
  }
}

module attributes {stable_mosaic.version = 11 : i64} {
  func.func @_conv_mm_kernel(%arg0: i32, %arg1: i32, %arg2: i32, %arg3: i32, %arg4: memref<1x64x512xbf16, #tpu.memory_space<vmem>>, %arg5: memref<512x128xbf16, #tpu.memory_space<vmem>>, %arg6: memref<1x128xf32, #tpu.memory_space<vmem>>, %arg7: memref<1x64x128xbf16, #tpu.memory_space<vmem>>, %arg8: memref<1x1x1x128xf32, #tpu.memory_space<vmem>>, %arg9: memref<1x1x1x128xf32, #tpu.memory_space<vmem>>, %arg10: memref<64x128xf32, #tpu.memory_space<vmem>>) attributes {dimension_semantics = [#tpu.dimension_semantics<parallel>, #tpu.dimension_semantics<parallel>, #tpu.dimension_semantics<parallel>, #tpu.dimension_semantics<arbitrary>], iteration_bounds = array<i64: 2, 1, 1, 1>, scalar_prefetch = 0 : i64, scratch_operands = 1 : i64, tpu.core_type = #tpu.core_type<tc>, window_params = [{transform_indices = @transform_0, window_bounds = array<i64: 1, 64, 512>}, {transform_indices = @transform_1, window_bounds = array<i64: 512, 128>}, {transform_indices = @transform_2, window_bounds = array<i64: 1, 128>}, {transform_indices = @transform_3, window_bounds = array<i64: 1, 64, 128>}, {transform_indices = @transform_4, window_bounds = array<i64: 1, 1, 1, 128>}, {transform_indices = @transform_5, window_bounds = array<i64: 1, 1, 1, 128>}]} {
    %c64_i32 = arith.constant 64 : i32
    %0 = arith.muli %arg1, %c64_i32 : i32
    %1 = tpu.iota {dimensions = array<i32: 0>} : vector<64x1xi32>
    %2 = vector.broadcast %0 : i32 to vector<64x1xi32>
    %3 = arith.addi %2, %1 : vector<64x1xi32>
    %c0_i32 = arith.constant 0 : i32
    %4 = arith.cmpi eq, %arg3, %c0_i32 : i32
    %5 = arith.extui %4 : i1 to i32
    %c0_i32_0 = arith.constant 0 : i32
    %6 = arith.cmpi ne, %5, %c0_i32_0 : i32
    scf.if %6 {
      %cst_11 = arith.constant 0.000000e+00 : f32
      %17 = vector.broadcast %cst_11 : f32 to vector<64x128xf32>
      %c0_12 = arith.constant 0 : index
      %c0_13 = arith.constant 0 : index
      %18 = vector.load %arg10[%c0_12, %c0_13] : memref<64x128xf32, #tpu.memory_space<vmem>>, vector<64x128xf32>
      tpu.vector_store %arg10[%c0_12, %c0_13], %17 {strides = array<i32>} : memref<64x128xf32, #tpu.memory_space<vmem>>, vector<64x128xf32>,
    } else {
    }
    %c0 = arith.constant 0 : index
    %c0_1 = arith.constant 0 : index
    %7 = vector.load %arg10[%c0, %c0_1] : memref<64x128xf32, #tpu.memory_space<vmem>>, vector<64x128xf32>
    %c0_2 = arith.constant 0 : index
    %c0_3 = arith.constant 0 : index
    %c0_4 = arith.constant 0 : index
    %8 = vector.load %arg4[%c0_2, %c0_3, %c0_4] : memref<1x64x512xbf16, #tpu.memory_space<vmem>>, vector<1x64x512xbf16>
    %9 = vector.shape_cast %8 : vector<1x64x512xbf16> to vector<64x512xbf16>
    %c0_5 = arith.constant 0 : index
    %c0_6 = arith.constant 0 : index
    %10 = vector.load %arg5[%c0_5, %c0_6] : memref<512x128xbf16, #tpu.memory_space<vmem>>, vector<512x128xbf16>
    %cst = arith.constant dense<0.000000e+00> : vector<64x128xf32>
    %11 = tpu.matmul %9, %10, %cst {dimension_numbers = #tpu.dot_dimension_numbers<[1], [0], [0], [1], [0, 0, 1, 1], [], []>} : vector<64x512xbf16>, vector<512x128xbf16>, vector<64x128xf32> -> vector<64x128xf32>
    %12 = arith.addf %7, %11 : vector<64x128xf32>
    %c0_7 = arith.constant 0 : index
    %c0_8 = arith.constant 0 : index
    %13 = vector.load %arg10[%c0_7, %c0_8] : memref<64x128xf32, #tpu.memory_space<vmem>>, vector<64x128xf32>
    tpu.vector_store %arg10[%c0_7, %c0_8], %12 {strides = array<i32>} : memref<64x128xf32, #tpu.memory_space<vmem>>, vector<64x128xf32>,
    %c0_i32_9 = arith.constant 0 : i32
    %14 = arith.cmpi eq, %arg3, %c0_i32_9 : i32
    %15 = arith.extui %14 : i1 to i32
    %c0_i32_10 = arith.constant 0 : i32
    %16 = arith.cmpi ne, %15, %c0_i32_10 : i32
    scf.if %16 {
      %c0_11 = arith.constant 0 : index
      %c0_12 = arith.constant 0 : index
      %17 = vector.load %arg10[%c0_11, %c0_12] : memref<64x128xf32, #tpu.memory_space<vmem>>, vector<64x128xf32>
      %c0_13 = arith.constant 0 : index
      %c0_14 = arith.constant 0 : index
      %18 = vector.load %arg6[%c0_13, %c0_14] : memref<1x128xf32, #tpu.memory_space<vmem>>, vector<1x128xf32>
      %19 = vector.broadcast %18 : vector<1x128xf32> to vector<64x128xf32>
      %20 = arith.addf %17, %19 : vector<64x128xf32>
      %c49_i32 = arith.constant 49 : i32
      %21 = vector.broadcast %c49_i32 : i32 to vector<64x1xi32>
      %22 = arith.cmpi slt, %3, %21 : vector<64x1xi32>
      %cst_15 = arith.constant 0.000000e+00 : f32
      %23 = vector.shape_cast %22 : vector<64x1xi1> to vector<64x1xi1>
      %24 = vector.broadcast %23 : vector<64x1xi1> to vector<64x128xi1>
      %25 = vector.broadcast %cst_15 : f32 to vector<64x128xf32>
      %26 = arith.select %24, %20, %25 : vector<64x128xi1>, vector<64x128xf32>
      %cst_16 = arith.constant dense<0.000000e+00> : vector<128xf32>
      %27 = vector.multi_reduction <add>, %26, %cst_16 [0] : vector<64x128xf32> to vector<128xf32>
      %28 = vector.shape_cast %27 : vector<128xf32> to vector<1x128xf32>
      %c0_17 = arith.constant 0 : index
      %c0_18 = arith.constant 0 : index
      %c0_19 = arith.constant 0 : index
      %c0_20 = arith.constant 0 : index
      %29 = vector.load %arg8[%c0_17, %c0_18, %c0_19, %c0_20] : memref<1x1x1x128xf32, #tpu.memory_space<vmem>>, vector<1x1x1x128xf32>
      %30 = vector.shape_cast %29 : vector<1x1x1x128xf32> to vector<1x128xf32>
      %31 = vector.shape_cast %28 : vector<1x128xf32> to vector<1x1x1x128xf32>
      tpu.vector_store %arg8[%c0_17, %c0_18, %c0_19, %c0_20], %31 {strides = array<i32>} : memref<1x1x1x128xf32, #tpu.memory_space<vmem>>, vector<1x1x1x128xf32>,
      %32 = arith.mulf %26, %26 : vector<64x128xf32>
      %cst_21 = arith.constant dense<0.000000e+00> : vector<128xf32>
      %33 = vector.multi_reduction <add>, %32, %cst_21 [0] : vector<64x128xf32> to vector<128xf32>
      %34 = vector.shape_cast %33 : vector<128xf32> to vector<1x128xf32>
      %c0_22 = arith.constant 0 : index
      %c0_23 = arith.constant 0 : index
      %c0_24 = arith.constant 0 : index
      %c0_25 = arith.constant 0 : index
      %35 = vector.load %arg9[%c0_22, %c0_23, %c0_24, %c0_25] : memref<1x1x1x128xf32, #tpu.memory_space<vmem>>, vector<1x1x1x128xf32>
      %36 = vector.shape_cast %35 : vector<1x1x1x128xf32> to vector<1x128xf32>
      %37 = vector.shape_cast %34 : vector<1x128xf32> to vector<1x1x1x128xf32>
      tpu.vector_store %arg9[%c0_22, %c0_23, %c0_24, %c0_25], %37 {strides = array<i32>} : memref<1x1x1x128xf32, #tpu.memory_space<vmem>>, vector<1x1x1x128xf32>,
      %38 = arith.truncf %26 : vector<64x128xf32> to vector<64x128xbf16>
      %c0_26 = arith.constant 0 : index
      %c0_27 = arith.constant 0 : index
      %c0_28 = arith.constant 0 : index
      %39 = vector.load %arg7[%c0_26, %c0_27, %c0_28] : memref<1x64x128xbf16, #tpu.memory_space<vmem>>, vector<1x64x128xbf16>
      %40 = vector.shape_cast %39 : vector<1x64x128xbf16> to vector<64x128xbf16>
      %41 = vector.shape_cast %38 : vector<64x128xbf16> to vector<1x64x128xbf16>
      tpu.vector_store %arg7[%c0_26, %c0_27, %c0_28], %41 {strides = array<i32>} : memref<1x64x128xbf16, #tpu.memory_space<vmem>>, vector<1x64x128xbf16>,
    } else {
    }
    return
  }
  func.func @transform_0(%arg0: i32, %arg1: i32, %arg2: i32, %arg3: i32) -> (i32, i32, i32) {
    %c0_i32 = arith.constant 0 : i32
    return %arg0, %arg1, %arg3 : i32, i32, i32
  }
  func.func @transform_1(%arg0: i32, %arg1: i32, %arg2: i32, %arg3: i32) -> (i32, i32) {
    %c0_i32 = arith.constant 0 : i32
    return %arg3, %arg2 : i32, i32
  }
  func.func @transform_2(%arg0: i32, %arg1: i32, %arg2: i32, %arg3: i32) -> (i32, i32) {
    %c0_i32 = arith.constant 0 : i32
    %c0_i32_0 = arith.constant 0 : i32
    return %c0_i32, %arg2 : i32, i32
  }
  func.func @transform_3(%arg0: i32, %arg1: i32, %arg2: i32, %arg3: i32) -> (i32, i32, i32) {
    %c0_i32 = arith.constant 0 : i32
    return %arg0, %arg1, %arg2 : i32, i32, i32
  }
  func.func @transform_4(%arg0: i32, %arg1: i32, %arg2: i32, %arg3: i32) -> (i32, i32, i32, i32) {
    %c0_i32 = arith.constant 0 : i32
    %c0_i32_0 = arith.constant 0 : i32
    return %arg0, %arg1, %c0_i32, %arg2 : i32, i32, i32, i32
  }
  func.func @transform_5(%arg0: i32, %arg1: i32, %arg2: i32, %arg3: i32) -> (i32, i32, i32, i32) {
    %c0_i32 = arith.constant 0 : i32
    %c0_i32_0 = arith.constant 0 : i32
    return %arg0, %arg1, %c0_i32, %arg2 : i32, i32, i32, i32
  }
}

module attributes {stable_mosaic.version = 11 : i64} {
  func.func @_norm_lrelu_kernel(%arg0: i32, %arg1: i32, %arg2: i32, %arg3: memref<1x64x128xbf16, #tpu.memory_space<vmem>>, %arg4: memref<1x1x128xf32, #tpu.memory_space<vmem>>, %arg5: memref<1x1x128xf32, #tpu.memory_space<vmem>>, %arg6: memref<1x64x128xbf16, #tpu.memory_space<vmem>>) attributes {dimension_semantics = [#tpu.dimension_semantics<parallel>, #tpu.dimension_semantics<parallel>, #tpu.dimension_semantics<parallel>], iteration_bounds = array<i64: 2, 1, 1>, scalar_prefetch = 0 : i64, scratch_operands = 0 : i64, tpu.core_type = #tpu.core_type<tc>, window_params = [{transform_indices = @transform_0, window_bounds = array<i64: 1, 64, 128>}, {transform_indices = @transform_1, window_bounds = array<i64: 1, 1, 128>}, {transform_indices = @transform_2, window_bounds = array<i64: 1, 1, 128>}, {transform_indices = @transform_3, window_bounds = array<i64: 1, 64, 128>}]} {
    %c0 = arith.constant 0 : index
    %c0_0 = arith.constant 0 : index
    %c0_1 = arith.constant 0 : index
    %0 = vector.load %arg3[%c0, %c0_0, %c0_1] : memref<1x64x128xbf16, #tpu.memory_space<vmem>>, vector<1x64x128xbf16>
    %1 = vector.shape_cast %0 : vector<1x64x128xbf16> to vector<64x128xbf16>
    %2 = arith.extf %1 : vector<64x128xbf16> to vector<64x128xf32>
    %c0_2 = arith.constant 0 : index
    %c0_3 = arith.constant 0 : index
    %c0_4 = arith.constant 0 : index
    %3 = vector.load %arg4[%c0_2, %c0_3, %c0_4] : memref<1x1x128xf32, #tpu.memory_space<vmem>>, vector<1x1x128xf32>
    %4 = vector.shape_cast %3 : vector<1x1x128xf32> to vector<1x128xf32>
    %5 = vector.broadcast %4 : vector<1x128xf32> to vector<64x128xf32>
    %6 = arith.mulf %2, %5 : vector<64x128xf32>
    %c0_5 = arith.constant 0 : index
    %c0_6 = arith.constant 0 : index
    %c0_7 = arith.constant 0 : index
    %7 = vector.load %arg5[%c0_5, %c0_6, %c0_7] : memref<1x1x128xf32, #tpu.memory_space<vmem>>, vector<1x1x128xf32>
    %8 = vector.shape_cast %7 : vector<1x1x128xf32> to vector<1x128xf32>
    %9 = vector.broadcast %8 : vector<1x128xf32> to vector<64x128xf32>
    %10 = arith.addf %6, %9 : vector<64x128xf32>
    %cst = arith.constant 0.000000e+00 : f32
    %11 = vector.broadcast %cst : f32 to vector<64x128xf32>
    %12 = arith.cmpf oge, %10, %11 : vector<64x128xf32>
    %cst_8 = arith.constant 2.000000e-01 : f32
    %13 = vector.broadcast %cst_8 : f32 to vector<64x128xf32>
    %14 = arith.mulf %13, %10 : vector<64x128xf32>
    %15 = arith.select %12, %10, %14 : vector<64x128xi1>, vector<64x128xf32>
    %16 = arith.truncf %15 : vector<64x128xf32> to vector<64x128xbf16>
    %c0_9 = arith.constant 0 : index
    %c0_10 = arith.constant 0 : index
    %c0_11 = arith.constant 0 : index
    %17 = vector.load %arg6[%c0_9, %c0_10, %c0_11] : memref<1x64x128xbf16, #tpu.memory_space<vmem>>, vector<1x64x128xbf16>
    %18 = vector.shape_cast %17 : vector<1x64x128xbf16> to vector<64x128xbf16>
    %19 = vector.shape_cast %16 : vector<64x128xbf16> to vector<1x64x128xbf16>
    tpu.vector_store %arg6[%c0_9, %c0_10, %c0_11], %19 {strides = array<i32>} : memref<1x64x128xbf16, #tpu.memory_space<vmem>>, vector<1x64x128xbf16>,
    return
  }
  func.func @transform_0(%arg0: i32, %arg1: i32, %arg2: i32) -> (i32, i32, i32) {
    %c0_i32 = arith.constant 0 : i32
    return %arg0, %arg1, %arg2 : i32, i32, i32
  }
  func.func @transform_1(%arg0: i32, %arg1: i32, %arg2: i32) -> (i32, i32, i32) {
    %c0_i32 = arith.constant 0 : i32
    %c0_i32_0 = arith.constant 0 : i32
    return %arg0, %c0_i32, %arg2 : i32, i32, i32
  }
  func.func @transform_2(%arg0: i32, %arg1: i32, %arg2: i32) -> (i32, i32, i32) {
    %c0_i32 = arith.constant 0 : i32
    %c0_i32_0 = arith.constant 0 : i32
    return %arg0, %c0_i32, %arg2 : i32, i32, i32
  }
  func.func @transform_3(%arg0: i32, %arg1: i32, %arg2: i32) -> (i32, i32, i32) {
    %c0_i32 = arith.constant 0 : i32
    return %arg0, %arg1, %arg2 : i32, i32, i32
  }
}

module attributes {stable_mosaic.version = 11 : i64} {
  func.func @_conv_mm_kernel(%arg0: i32, %arg1: i32, %arg2: i32, %arg3: i32, %arg4: memref<1x16x1024xbf16, #tpu.memory_space<vmem>>, %arg5: memref<1024x128xbf16, #tpu.memory_space<vmem>>, %arg6: memref<1x128xf32, #tpu.memory_space<vmem>>, %arg7: memref<1x16x128xbf16, #tpu.memory_space<vmem>>, %arg8: memref<1x1x1x128xf32, #tpu.memory_space<vmem>>, %arg9: memref<1x1x1x128xf32, #tpu.memory_space<vmem>>, %arg10: memref<16x128xf32, #tpu.memory_space<vmem>>) attributes {dimension_semantics = [#tpu.dimension_semantics<parallel>, #tpu.dimension_semantics<parallel>, #tpu.dimension_semantics<parallel>, #tpu.dimension_semantics<arbitrary>], iteration_bounds = array<i64: 2, 1, 1, 1>, scalar_prefetch = 0 : i64, scratch_operands = 1 : i64, tpu.core_type = #tpu.core_type<tc>, window_params = [{transform_indices = @transform_0, window_bounds = array<i64: 1, 16, 1024>}, {transform_indices = @transform_1, window_bounds = array<i64: 1024, 128>}, {transform_indices = @transform_2, window_bounds = array<i64: 1, 128>}, {transform_indices = @transform_3, window_bounds = array<i64: 1, 16, 128>}, {transform_indices = @transform_4, window_bounds = array<i64: 1, 1, 1, 128>}, {transform_indices = @transform_5, window_bounds = array<i64: 1, 1, 1, 128>}]} {
    %c0_i32 = arith.constant 0 : i32
    %0 = arith.cmpi eq, %arg3, %c0_i32 : i32
    %1 = arith.extui %0 : i1 to i32
    %c0_i32_0 = arith.constant 0 : i32
    %2 = arith.cmpi ne, %1, %c0_i32_0 : i32
    scf.if %2 {
      %cst_11 = arith.constant 0.000000e+00 : f32
      %13 = vector.broadcast %cst_11 : f32 to vector<16x128xf32>
      %c0_12 = arith.constant 0 : index
      %c0_13 = arith.constant 0 : index
      %14 = vector.load %arg10[%c0_12, %c0_13] : memref<16x128xf32, #tpu.memory_space<vmem>>, vector<16x128xf32>
      tpu.vector_store %arg10[%c0_12, %c0_13], %13 {strides = array<i32>} : memref<16x128xf32, #tpu.memory_space<vmem>>, vector<16x128xf32>,
    } else {
    }
    %c0 = arith.constant 0 : index
    %c0_1 = arith.constant 0 : index
    %3 = vector.load %arg10[%c0, %c0_1] : memref<16x128xf32, #tpu.memory_space<vmem>>, vector<16x128xf32>
    %c0_2 = arith.constant 0 : index
    %c0_3 = arith.constant 0 : index
    %c0_4 = arith.constant 0 : index
    %4 = vector.load %arg4[%c0_2, %c0_3, %c0_4] : memref<1x16x1024xbf16, #tpu.memory_space<vmem>>, vector<1x16x1024xbf16>
    %5 = vector.shape_cast %4 : vector<1x16x1024xbf16> to vector<16x1024xbf16>
    %c0_5 = arith.constant 0 : index
    %c0_6 = arith.constant 0 : index
    %6 = vector.load %arg5[%c0_5, %c0_6] : memref<1024x128xbf16, #tpu.memory_space<vmem>>, vector<1024x128xbf16>
    %cst = arith.constant dense<0.000000e+00> : vector<16x128xf32>
    %7 = tpu.matmul %5, %6, %cst {dimension_numbers = #tpu.dot_dimension_numbers<[1], [0], [0], [1], [0, 0, 1, 1], [], []>} : vector<16x1024xbf16>, vector<1024x128xbf16>, vector<16x128xf32> -> vector<16x128xf32>
    %8 = arith.addf %3, %7 : vector<16x128xf32>
    %c0_7 = arith.constant 0 : index
    %c0_8 = arith.constant 0 : index
    %9 = vector.load %arg10[%c0_7, %c0_8] : memref<16x128xf32, #tpu.memory_space<vmem>>, vector<16x128xf32>
    tpu.vector_store %arg10[%c0_7, %c0_8], %8 {strides = array<i32>} : memref<16x128xf32, #tpu.memory_space<vmem>>, vector<16x128xf32>,
    %c0_i32_9 = arith.constant 0 : i32
    %10 = arith.cmpi eq, %arg3, %c0_i32_9 : i32
    %11 = arith.extui %10 : i1 to i32
    %c0_i32_10 = arith.constant 0 : i32
    %12 = arith.cmpi ne, %11, %c0_i32_10 : i32
    scf.if %12 {
      %c0_11 = arith.constant 0 : index
      %c0_12 = arith.constant 0 : index
      %13 = vector.load %arg10[%c0_11, %c0_12] : memref<16x128xf32, #tpu.memory_space<vmem>>, vector<16x128xf32>
      %c0_13 = arith.constant 0 : index
      %c0_14 = arith.constant 0 : index
      %14 = vector.load %arg6[%c0_13, %c0_14] : memref<1x128xf32, #tpu.memory_space<vmem>>, vector<1x128xf32>
      %15 = vector.broadcast %14 : vector<1x128xf32> to vector<16x128xf32>
      %16 = arith.addf %13, %15 : vector<16x128xf32>
      %cst_15 = arith.constant dense<0.000000e+00> : vector<128xf32>
      %17 = vector.multi_reduction <add>, %16, %cst_15 [0] : vector<16x128xf32> to vector<128xf32>
      %18 = vector.shape_cast %17 : vector<128xf32> to vector<1x128xf32>
      %c0_16 = arith.constant 0 : index
      %c0_17 = arith.constant 0 : index
      %c0_18 = arith.constant 0 : index
      %c0_19 = arith.constant 0 : index
      %19 = vector.load %arg8[%c0_16, %c0_17, %c0_18, %c0_19] : memref<1x1x1x128xf32, #tpu.memory_space<vmem>>, vector<1x1x1x128xf32>
      %20 = vector.shape_cast %19 : vector<1x1x1x128xf32> to vector<1x128xf32>
      %21 = vector.shape_cast %18 : vector<1x128xf32> to vector<1x1x1x128xf32>
      tpu.vector_store %arg8[%c0_16, %c0_17, %c0_18, %c0_19], %21 {strides = array<i32>} : memref<1x1x1x128xf32, #tpu.memory_space<vmem>>, vector<1x1x1x128xf32>,
      %22 = arith.mulf %16, %16 : vector<16x128xf32>
      %cst_20 = arith.constant dense<0.000000e+00> : vector<128xf32>
      %23 = vector.multi_reduction <add>, %22, %cst_20 [0] : vector<16x128xf32> to vector<128xf32>
      %24 = vector.shape_cast %23 : vector<128xf32> to vector<1x128xf32>
      %c0_21 = arith.constant 0 : index
      %c0_22 = arith.constant 0 : index
      %c0_23 = arith.constant 0 : index
      %c0_24 = arith.constant 0 : index
      %25 = vector.load %arg9[%c0_21, %c0_22, %c0_23, %c0_24] : memref<1x1x1x128xf32, #tpu.memory_space<vmem>>, vector<1x1x1x128xf32>
      %26 = vector.shape_cast %25 : vector<1x1x1x128xf32> to vector<1x128xf32>
      %27 = vector.shape_cast %24 : vector<1x128xf32> to vector<1x1x1x128xf32>
      tpu.vector_store %arg9[%c0_21, %c0_22, %c0_23, %c0_24], %27 {strides = array<i32>} : memref<1x1x1x128xf32, #tpu.memory_space<vmem>>, vector<1x1x1x128xf32>,
      %28 = arith.truncf %16 : vector<16x128xf32> to vector<16x128xbf16>
      %c0_25 = arith.constant 0 : index
      %c0_26 = arith.constant 0 : index
      %c0_27 = arith.constant 0 : index
      %29 = vector.load %arg7[%c0_25, %c0_26, %c0_27] : memref<1x16x128xbf16, #tpu.memory_space<vmem>>, vector<1x16x128xbf16>
      %30 = vector.shape_cast %29 : vector<1x16x128xbf16> to vector<16x128xbf16>
      %31 = vector.shape_cast %28 : vector<16x128xbf16> to vector<1x16x128xbf16>
      tpu.vector_store %arg7[%c0_25, %c0_26, %c0_27], %31 {strides = array<i32>} : memref<1x16x128xbf16, #tpu.memory_space<vmem>>, vector<1x16x128xbf16>,
    } else {
    }
    return
  }
  func.func @transform_0(%arg0: i32, %arg1: i32, %arg2: i32, %arg3: i32) -> (i32, i32, i32) {
    %c0_i32 = arith.constant 0 : i32
    return %arg0, %arg1, %arg3 : i32, i32, i32
  }
  func.func @transform_1(%arg0: i32, %arg1: i32, %arg2: i32, %arg3: i32) -> (i32, i32) {
    %c0_i32 = arith.constant 0 : i32
    return %arg3, %arg2 : i32, i32
  }
  func.func @transform_2(%arg0: i32, %arg1: i32, %arg2: i32, %arg3: i32) -> (i32, i32) {
    %c0_i32 = arith.constant 0 : i32
    %c0_i32_0 = arith.constant 0 : i32
    return %c0_i32, %arg2 : i32, i32
  }
  func.func @transform_3(%arg0: i32, %arg1: i32, %arg2: i32, %arg3: i32) -> (i32, i32, i32) {
    %c0_i32 = arith.constant 0 : i32
    return %arg0, %arg1, %arg2 : i32, i32, i32
  }
  func.func @transform_4(%arg0: i32, %arg1: i32, %arg2: i32, %arg3: i32) -> (i32, i32, i32, i32) {
    %c0_i32 = arith.constant 0 : i32
    %c0_i32_0 = arith.constant 0 : i32
    return %arg0, %arg1, %c0_i32, %arg2 : i32, i32, i32, i32
  }
  func.func @transform_5(%arg0: i32, %arg1: i32, %arg2: i32, %arg3: i32) -> (i32, i32, i32, i32) {
    %c0_i32 = arith.constant 0 : i32
    %c0_i32_0 = arith.constant 0 : i32
    return %arg0, %arg1, %c0_i32, %arg2 : i32, i32, i32, i32
  }
}

module attributes {stable_mosaic.version = 11 : i64} {
  func.func @_norm_lrelu_kernel(%arg0: i32, %arg1: i32, %arg2: i32, %arg3: memref<1x16x128xbf16, #tpu.memory_space<vmem>>, %arg4: memref<1x1x128xf32, #tpu.memory_space<vmem>>, %arg5: memref<1x1x128xf32, #tpu.memory_space<vmem>>, %arg6: memref<1x16x128xbf16, #tpu.memory_space<vmem>>) attributes {dimension_semantics = [#tpu.dimension_semantics<parallel>, #tpu.dimension_semantics<parallel>, #tpu.dimension_semantics<parallel>], iteration_bounds = array<i64: 2, 1, 1>, scalar_prefetch = 0 : i64, scratch_operands = 0 : i64, tpu.core_type = #tpu.core_type<tc>, window_params = [{transform_indices = @transform_0, window_bounds = array<i64: 1, 16, 128>}, {transform_indices = @transform_1, window_bounds = array<i64: 1, 1, 128>}, {transform_indices = @transform_2, window_bounds = array<i64: 1, 1, 128>}, {transform_indices = @transform_3, window_bounds = array<i64: 1, 16, 128>}]} {
    %c0 = arith.constant 0 : index
    %c0_0 = arith.constant 0 : index
    %c0_1 = arith.constant 0 : index
    %0 = vector.load %arg3[%c0, %c0_0, %c0_1] : memref<1x16x128xbf16, #tpu.memory_space<vmem>>, vector<1x16x128xbf16>
    %1 = vector.shape_cast %0 : vector<1x16x128xbf16> to vector<16x128xbf16>
    %2 = arith.extf %1 : vector<16x128xbf16> to vector<16x128xf32>
    %c0_2 = arith.constant 0 : index
    %c0_3 = arith.constant 0 : index
    %c0_4 = arith.constant 0 : index
    %3 = vector.load %arg4[%c0_2, %c0_3, %c0_4] : memref<1x1x128xf32, #tpu.memory_space<vmem>>, vector<1x1x128xf32>
    %4 = vector.shape_cast %3 : vector<1x1x128xf32> to vector<1x128xf32>
    %5 = vector.broadcast %4 : vector<1x128xf32> to vector<16x128xf32>
    %6 = arith.mulf %2, %5 : vector<16x128xf32>
    %c0_5 = arith.constant 0 : index
    %c0_6 = arith.constant 0 : index
    %c0_7 = arith.constant 0 : index
    %7 = vector.load %arg5[%c0_5, %c0_6, %c0_7] : memref<1x1x128xf32, #tpu.memory_space<vmem>>, vector<1x1x128xf32>
    %8 = vector.shape_cast %7 : vector<1x1x128xf32> to vector<1x128xf32>
    %9 = vector.broadcast %8 : vector<1x128xf32> to vector<16x128xf32>
    %10 = arith.addf %6, %9 : vector<16x128xf32>
    %cst = arith.constant 0.000000e+00 : f32
    %11 = vector.broadcast %cst : f32 to vector<16x128xf32>
    %12 = arith.cmpf oge, %10, %11 : vector<16x128xf32>
    %cst_8 = arith.constant 2.000000e-01 : f32
    %13 = vector.broadcast %cst_8 : f32 to vector<16x128xf32>
    %14 = arith.mulf %13, %10 : vector<16x128xf32>
    %15 = arith.select %12, %10, %14 : vector<16x128xi1>, vector<16x128xf32>
    %16 = arith.truncf %15 : vector<16x128xf32> to vector<16x128xbf16>
    %c0_9 = arith.constant 0 : index
    %c0_10 = arith.constant 0 : index
    %c0_11 = arith.constant 0 : index
    %17 = vector.load %arg6[%c0_9, %c0_10, %c0_11] : memref<1x16x128xbf16, #tpu.memory_space<vmem>>, vector<1x16x128xbf16>
    %18 = vector.shape_cast %17 : vector<1x16x128xbf16> to vector<16x128xbf16>
    %19 = vector.shape_cast %16 : vector<16x128xbf16> to vector<1x16x128xbf16>
    tpu.vector_store %arg6[%c0_9, %c0_10, %c0_11], %19 {strides = array<i32>} : memref<1x16x128xbf16, #tpu.memory_space<vmem>>, vector<1x16x128xbf16>,
    return
  }
  func.func @transform_0(%arg0: i32, %arg1: i32, %arg2: i32) -> (i32, i32, i32) {
    %c0_i32 = arith.constant 0 : i32
    return %arg0, %arg1, %arg2 : i32, i32, i32
  }
  func.func @transform_1(%arg0: i32, %arg1: i32, %arg2: i32) -> (i32, i32, i32) {
    %c0_i32 = arith.constant 0 : i32
    %c0_i32_0 = arith.constant 0 : i32
    return %arg0, %c0_i32, %arg2 : i32, i32, i32
  }
  func.func @transform_2(%arg0: i32, %arg1: i32, %arg2: i32) -> (i32, i32, i32) {
    %c0_i32 = arith.constant 0 : i32
    %c0_i32_0 = arith.constant 0 : i32
    return %arg0, %c0_i32, %arg2 : i32, i32, i32
  }
  func.func @transform_3(%arg0: i32, %arg1: i32, %arg2: i32) -> (i32, i32, i32) {
    %c0_i32 = arith.constant 0 : i32
    return %arg0, %arg1, %arg2 : i32, i32, i32
  }
}

</mosaic_0001>

<llo_original>
// kernel: _lambda_.7
$region0: #{_lambda_.7}
  #allocation0 [shape = 'u32[]', space=smem, size = 0x4, offset = 0x4, fixed_abs, tag = 'smem constant byte address 0x4 - core index']
  #allocation1 [shape = 'u32[144,128]{1,0:T(1,128)}', space=vmem, size = 0x12000, scoped, tag = 'internal scratch']
  #allocation2 [shape = 'f32[256,128]{1,0:T(8,128)}', space=vmem, size = 0x20000, scoped, tag = 'scratch operand']
  %s0 = inlined_call_operand.vmem [shape: bf16[2,1280,128], index: 0, kind: input, shape index: {}]
  %s1 = inlined_call_operand.vmem [shape: bf16[128,128], index: 1, kind: input, shape index: {}]
  %s2 = inlined_call_operand.vmem [shape: f32[1,128], index: 2, kind: input, shape index: {}]
  %s3 = inlined_call_operand.vmem [shape: bf16[2,1280,128], index: 3, kind: output, shape index: {}]
  %s4 = sld [smem:[#allocation0]]
  $region53: #{_lambda_.7} parent=0
    _
  %s6 = ssub.s32 1, %s4
  %s7 = scalar_select 0, %s6, %s4
  loop: start=0, step=1, limit=12
  $region2: #{_lambda_.7} parent=0 // loop_pre_header
    _
  $region3: #{_lambda_.7} parent=0 // loop_header
    %s9 = sphi 0, %s13
    %p10 = scmp.ge.s32.totalorder %s9, 12
    %s16 = sphi 0, %s42
    %s17 = sphi 0, %s38
    %s18 = sphi 0, %s34
    %s19 = sphi 0, %s30
    %s20 = sphi 0, %s16
    %s21 = sphi 0, %s17
    %s22 = sphi 0, %s18
    %s23 = sphi 0, %s19
    %s24 = sphi 0, %s20
    %s25 = sphi 0, %s21
    %s26 = sphi 0, %s22
    %s27 = sphi 0, %s23
    %s49 = sphi 0, %s51
    %s52 = sphi 0, %s49
    %s53 = sphi 0, %s52
    %s69 = sphi 0, %s53
    %s77 = sphi 0, %s79
    %s80 = sphi 0, %s77
    %s81 = sphi 0, %s80
    %s97 = sphi 0, %s81
    %s103 = sphi 0, %s105
    %s106 = sphi 0, %s103
    %s107 = sphi 0, %s106
    %s123 = sphi 0, %s107
    %s133 = sphi 0, %s135
    %s136 = sphi 0, %s133
    %s137 = sphi 0, %s136
    %s153 = sphi 0, %s137
  $region4: #{_lambda_.7} parent=0 // loop_header_branch
    %12 = sbr.rel (%p10) target = $region8
  $region5: #{_lambda_.7} parent=0 // loop_body
    %s14 = ssub.s32 %s9, 1
    %s15 = ssub.s32 %s9, 2
    %s28 = sadd.s32 1, %s19
    %p29 = scmp.ge.s32.totalorder %s28, 1
    %s30 = scalar_select %p29, 0, %s28
    %s31 = sadd.s32 1, %s18
    %s32 = scalar_select %p29, %s31, %s18
    %p33 = scmp.ge.s32.totalorder %s32, 1
    %s34 = scalar_select %p33, 0, %s32
    %s35 = sadd.s32 1, %s17
    %s36 = scalar_select %p33, %s35, %s17
    %p37 = scmp.ge.s32.totalorder %s36, 5
    %s38 = scalar_select %p37, 0, %s36
    %s39 = sadd.s32 1, %s16
    %s40 = scalar_select %p37, %s39, %s16
    %p41 = scmp.ge.s32.totalorder %s40, 2
    %s42 = scalar_select %p41, 0, %s40
    %s43 = ssub.s32 %s16, %s42
    %s44 = ssub.s32 %s17, %s38
    %s45 = sor.u32 %s43, %s44
    %s46 = ssub.s32 %s19, %s30
    %s47 = sor.u32 %s45, %s46
    %p48 = scmp.eq.s32.totalorder %s47, 0
    %s50 = sadd.s32 %s49, 1
    %s51 = scalar_select %p48, %s49, %s50
    %p54 = pneg %p48
    %p55 = scmp.eq.s32.totalorder %s9, 9
    %p56 = por %p54, %p55
    %p57 = scmp.ne.s32.totalorder %s49, %s52
    %p58 = scmp.eq.s32.totalorder %s9, 0
    %p59 = por %p57, %p58
    %p60 = scmp.ne.s32.totalorder %s49, %s52
    %p61 = scmp.eq.s32.totalorder %s14, 9
    %p62 = por %p60, %p61
    %p63 = scmp.ne.s32.totalorder %s52, %s53
    %p64 = scmp.eq.s32.totalorder %s14, 0
    %p65 = por %p63, %p64
    %p66 = scmp.ne.s32.totalorder %s52, %s53
    %p67 = scmp.eq.s32.totalorder %s15, 9
    %p68 = por %p66, %p67
    %p70 = scmp.ne.s32.totalorder %s53, %s69
    %p71 = scmp.eq.s32.totalorder %s15, 0
    %p72 = por %p70, %p71
    %s73 = ssub.s32 %s19, %s30
    %s74 = ssub.s32 %s18, %s34
    %s75 = sor.u32 %s73, %s74
    %p76 = scmp.eq.s32.totalorder %s75, 0
    %s78 = sadd.s32 %s77, 1
    %s79 = scalar_select %p76, %s77, %s78
    %p82 = pneg %p76
    %p83 = scmp.eq.s32.totalorder %s9, 9
    %p84 = por %p82, %p83
    %p85 = scmp.ne.s32.totalorder %s77, %s80
    %p86 = scmp.eq.s32.totalorder %s9, 0
    %p87 = por %p85, %p86
    %p88 = scmp.ne.s32.totalorder %s77, %s80
    %p89 = scmp.eq.s32.totalorder %s14, 9
    %p90 = por %p88, %p89
    %p91 = scmp.ne.s32.totalorder %s80, %s81
    %p92 = scmp.eq.s32.totalorder %s14, 0
    %p93 = por %p91, %p92
    %p94 = scmp.ne.s32.totalorder %s80, %s81
    %p95 = scmp.eq.s32.totalorder %s15, 9
    %p96 = por %p94, %p95
    %p98 = scmp.ne.s32.totalorder %s81, %s97
    %p99 = scmp.eq.s32.totalorder %s15, 0
    %p100 = por %p98, %p99
    %s101 = ssub.s32 %s18, %s34
    %p102 = scmp.eq.s32.totalorder %s101, 0
    %s104 = sadd.s32 %s103, 1
    %s105 = scalar_select %p102, %s103, %s104
    %p108 = pneg %p102
    %p109 = scmp.eq.s32.totalorder %s9, 9
    %p110 = por %p108, %p109
    %p111 = scmp.ne.s32.totalorder %s103, %s106
    %p112 = scmp.eq.s32.totalorder %s9, 0
    %p113 = por %p111, %p112
    %p114 = scmp.ne.s32.totalorder %s103, %s106
    %p115 = scmp.eq.s32.totalorder %s14, 9
    %p116 = por %p114, %p115
    %p117 = scmp.ne.s32.totalorder %s106, %s107
    %p118 = scmp.eq.s32.totalorder %s14, 0
    %p119 = por %p117, %p118
    %p120 = scmp.ne.s32.totalorder %s106, %s107
    %p121 = scmp.eq.s32.totalorder %s15, 9
    %p122 = por %p120, %p121
    %p124 = scmp.ne.s32.totalorder %s107, %s123
    %p125 = scmp.eq.s32.totalorder %s15, 0
    %p126 = por %p124, %p125
    %s127 = ssub.s32 %s16, %s42
    %s128 = ssub.s32 %s17, %s38
    %s129 = sor.u32 %s127, %s128
    %s130 = ssub.s32 %s18, %s34
    %s131 = sor.u32 %s129, %s130
    %p132 = scmp.eq.s32.totalorder %s131, 0
    %s134 = sadd.s32 %s133, 1
    %s135 = scalar_select %p132, %s133, %s134
    %p138 = pneg %p132
    %p139 = scmp.eq.s32.totalorder %s9, 9
    %p140 = por %p138, %p139
    %p141 = scmp.ne.s32.totalorder %s133, %s136
    %p142 = scmp.eq.s32.totalorder %s9, 0
    %p143 = por %p141, %p142
    %p144 = scmp.ne.s32.totalorder %s133, %s136
    %p145 = scmp.eq.s32.totalorder %s14, 9
    %p146 = por %p144, %p145
    %p147 = scmp.ne.s32.totalorder %s136, %s137
    %p148 = scmp.eq.s32.totalorder %s14, 0
    %p149 = por %p147, %p148
    %p150 = scmp.ne.s32.totalorder %s136, %s137
    %p151 = scmp.eq.s32.totalorder %s15, 9
    %p152 = por %p150, %p151
    %p154 = scmp.ne.s32.totalorder %s137, %s153
    %p155 = scmp.eq.s32.totalorder %s15, 0
    %p156 = por %p154, %p155
    %p157 = scmp.le.s32.totalorder 1, %s9
    %p158 = scmp.lt.s32.totalorder %s9, 11
    %p159 = pnand %p157, %p158
    %p160 = pneg %p159
    // Predicated region
    $region9: #{_lambda_.7} parent=5 // pred_check
      _
    $region10: #{_lambda_.7} parent=5 // pred_check_branch
      %162 = sbr.rel (%p159) target = $region12
    $region11: #{_lambda_.7} parent=5 // pred_region
      %s163 = ssub.s32 %s9, 1
      // Predicated region
      $region13: #{_lambda_.7} parent=11 // pred_check
        %p164 = pneg %p93
      $region14: #{_lambda_.7} parent=11 // pred_check_branch
        %166 = sbr.rel (%p164) target = $region16
      $region15: #{_lambda_.7} parent=11 // pred_region
        %s167 = smul.u32 16, %s23
        %p168 = scmp.lt.s32.totalorder %s167, 15
        %s169 = scalar_select %p168, %s167, 15
        %p170 = scmp.lt.s32.totalorder %s22, 0
        %s171 = scalar_select %p170, %s22, 0
        %s172 = sadd.s32 %s171, %s169
        %s173 = smul.addr %s172, 4
        %s174 = scalar_lea.vmem %s1, %s173
        %s175 = smul.u32 16, %s23
      $region16: #{_lambda_.7} parent=11 // pred_fallthru
        _
      // Predicated region
      $region17: #{_lambda_.7} parent=11 // pred_check
        %p176 = pneg %p119
      $region18: #{_lambda_.7} parent=11 // pred_check_branch
        %178 = sbr.rel (%p176) target = $region20
      $region19: #{_lambda_.7} parent=11 // pred_region
        %p179 = scmp.lt.s32.totalorder %s22, 0
        %s180 = scalar_select %p179, %s22, 0
        %s181 = scalar_lea.vmem %s2, %s180
      $region20: #{_lambda_.7} parent=11 // pred_fallthru
        _
    $region12: #{_lambda_.7} parent=5 // pred_fallthru
      _
    %p182 = scmp.lt.s32.totalorder %s9, 10
    // Predicated region
    $region21: #{_lambda_.7} parent=5 // pred_check
      %p183 = pneg %p182
    $region22: #{_lambda_.7} parent=5 // pred_check_branch
      %185 = sbr.rel (%p183) target = $region24
    $region23: #{_lambda_.7} parent=5 // pred_region
      // Predicated region
      $region25: #{_lambda_.7} parent=23 // pred_check
        %p186 = pneg %p59
      $region26: #{_lambda_.7} parent=23 // pred_check_branch
        %188 = sbr.rel (%p186) target = $region28
      $region27: #{_lambda_.7} parent=23 // pred_region
        %s189 = smul.u32 32, %s17
        %p190 = scmp.lt.s32.totalorder %s16, 1
        %s191 = scalar_select %p190, %s16, 1
        %p192 = scmp.lt.s32.totalorder %s189, 159
        %s193 = scalar_select %p192, %s189, 159
        %p194 = scmp.lt.s32.totalorder %s19, 0
        %s195 = scalar_select %p194, %s19, 0
        %s196 = sadd.s32 %s195, %s193
        %s197 = smul.addr %s191, 160
        %s198 = sadd.s32 %s196, %s197
        %s199 = smul.addr %s198, 4
        %s200 = scalar_lea.vmem %s0, %s199
        %s201 = smul.u32 32, %s17
      $region28: #{_lambda_.7} parent=23 // pred_fallthru
        _
    $region24: #{_lambda_.7} parent=5 // pred_fallthru
      _
    %p202 = scmp.le.s32.totalorder 1, %s9
    %p203 = scmp.lt.s32.totalorder %s9, 11
    %p204 = pnand %p202, %p203
    %p205 = pneg %p204
    // Predicated region
    $region29: #{_lambda_.7} parent=5 // pred_check
      _
    $region30: #{_lambda_.7} parent=5 // pred_check_branch
      %207 = sbr.rel (%p204) target = $region32
    $region31: #{_lambda_.7} parent=5 // pred_region
      %s208 = ssub.s32 %s9, 1
      %s209 = smul.u32 32, %s21
      %p210 = scmp.lt.s32.totalorder %s20, 1
      %s211 = scalar_select %p210, %s20, 1
      %p212 = scmp.lt.s32.totalorder %s209, 159
      %s213 = scalar_select %p212, %s209, 159
      %p214 = scmp.lt.s32.totalorder %s23, 0
      %s215 = scalar_select %p214, %s23, 0
      %s216 = sadd.s32 %s215, %s213
      %s217 = smul.addr %s211, 160
      %s218 = sadd.s32 %s216, %s217
      %s219 = smul.addr %s218, 4
      %s220 = scalar_lea.vmem %s0, %s219
      %p221 = pneg %p65
      %p222 = pneg %p62
      %s223 = smul.u32 16, %s23
      %p224 = scmp.lt.s32.totalorder %s223, 15
      %s225 = scalar_select %p224, %s223, 15
      %p226 = scmp.lt.s32.totalorder %s22, 0
      %s227 = scalar_select %p226, %s22, 0
      %s228 = sadd.s32 %s227, %s225
      %s229 = smul.addr %s228, 4
      %s230 = scalar_lea.vmem %s1, %s229
      %p231 = pneg %p93
      %p232 = pneg %p90
      %p233 = scmp.lt.s32.totalorder %s22, 0
      %s234 = scalar_select %p233, %s22, 0
      %s235 = scalar_lea.vmem %s2, %s234
      %p236 = pneg %p119
      %p237 = pneg %p116
      %p238 = pneg %p149
      %p239 = pneg %p146
      %s240 = smul.u32 32, %s21
      %p241 = scmp.lt.s32.totalorder %s20, 1
      %s242 = scalar_select %p241, %s20, 1
      %p243 = scmp.lt.s32.totalorder %s240, 159
      %s244 = scalar_select %p243, %s240, 159
      %p245 = scmp.lt.s32.totalorder %s22, 0
      %s246 = scalar_select %p245, %s22, 0
      %s247 = sadd.s32 %s246, %s244
      %s248 = smul.addr %s242, 160
      %s249 = sadd.s32 %s247, %s248
      %s250 = smul.addr %s249, 4
      %s251 = scalar_lea.vmem %s3, %s250
      %s252 = smul.u32 32, %s21
      %p253 = scmp.lt.s32.totalorder %s20, 1
      %s254 = scalar_select %p253, %s20, 1
      %p255 = scmp.lt.s32.totalorder %s252, 159
      %s256 = scalar_select %p255, %s252, 159
      %p257 = scmp.lt.s32.totalorder %s23, 0
      %s258 = scalar_select %p257, %s23, 0
      %s259 = sadd.s32 %s258, %s256
      %s260 = smul.addr %s254, 160
      %s261 = sadd.s32 %s259, %s260
      %s262 = smul.addr %s261, 4
      %s263 = scalar_lea.vmem %s0, %s262
      %s264 = smul.u32 32, %s21
      %s265 = smul.u32 16, %s23
      %p266 = scmp.lt.s32.totalorder %s265, 15
      %s267 = scalar_select %p266, %s265, 15
      %p268 = scmp.lt.s32.totalorder %s22, 0
      %s269 = scalar_select %p268, %s22, 0
      %s270 = sadd.s32 %s269, %s267
      %s271 = smul.addr %s270, 4
      %s272 = scalar_lea.vmem %s1, %s271
      %s273 = smul.u32 16, %s23
      %p274 = scmp.lt.s32.totalorder %s22, 0
      %s275 = scalar_select %p274, %s22, 0
      %s276 = scalar_lea.vmem %s2, %s275
      %s277 = smul.u32 32, %s21
      %p278 = scmp.lt.s32.totalorder %s20, 1
      %s279 = scalar_select %p278, %s20, 1
      %p280 = scmp.lt.s32.totalorder %s277, 159
      %s281 = scalar_select %p280, %s277, 159
      %p282 = scmp.lt.s32.totalorder %s22, 0
      %s283 = scalar_select %p282, %s22, 0
      %s284 = sadd.s32 %s283, %s281
      %s285 = smul.addr %s279, 160
      %s286 = sadd.s32 %s284, %s285
      %s287 = smul.addr %s286, 4
      %s288 = scalar_lea.vmem %s3, %s287
      %s289 = smul.u32 32, %s21
      %s291 = smul.u32 %s21, 256
      %v292 = vlaneseq
      %v293 = vshrl.u32 %v292, 7
      %v294 = vadd.s32 %v293, 8
      %v295 = vadd.s32 %v293, 16
      %v296 = vadd.s32 %v293, 24
      %v297 = vadd.s32 %v293, 32
      %v298 = vadd.s32 %v293, 40
      %v299 = vadd.s32 %v293, 48
      %v300 = vadd.s32 %v293, 56
      %v301 = vadd.s32 %v293, 64
      %v302 = vadd.s32 %v293, 72
      %v303 = vadd.s32 %v293, 80
      %v304 = vadd.s32 %v293, 88
      %v305 = vadd.s32 %v293, 96
      %v306 = vadd.s32 %v293, 104
      %v307 = vadd.s32 %v293, 112
      %v308 = vadd.s32 %v293, 120
      %v309 = vadd.s32 %v293, 128
      %v310 = vadd.s32 %v293, 136
      %v311 = vadd.s32 %v293, 144
      %v312 = vadd.s32 %v293, 152
      %v313 = vadd.s32 %v293, 160
      %v314 = vadd.s32 %v293, 168
      %v315 = vadd.s32 %v293, 176
      %v316 = vadd.s32 %v293, 184
      %v317 = vadd.s32 %v293, 192
      %v318 = vadd.s32 %v293, 200
      %v319 = vadd.s32 %v293, 208
      %v320 = vadd.s32 %v293, 216
      %v321 = vadd.s32 %v293, 224
      %v322 = vadd.s32 %v293, 232
      %v323 = vadd.s32 %v293, 240
      %v324 = vadd.s32 %v293, 248
      %v325 = vstv %s291
      %v326 = vadd.s32 %v325, %v293
      %v327 = vadd.s32 %v325, %v294
      %v328 = vadd.s32 %v325, %v295
      %v329 = vadd.s32 %v325, %v296
      %v330 = vadd.s32 %v325, %v297
      %v331 = vadd.s32 %v325, %v298
      %v332 = vadd.s32 %v325, %v299
      %v333 = vadd.s32 %v325, %v300
      %v334 = vadd.s32 %v325, %v301
      %v335 = vadd.s32 %v325, %v302
      %v336 = vadd.s32 %v325, %v303
      %v337 = vadd.s32 %v325, %v304
      %v338 = vadd.s32 %v325, %v305
      %v339 = vadd.s32 %v325, %v306
      %v340 = vadd.s32 %v325, %v307
      %v341 = vadd.s32 %v325, %v308
      %v342 = vadd.s32 %v325, %v309
      %v343 = vadd.s32 %v325, %v310
      %v344 = vadd.s32 %v325, %v311
      %v345 = vadd.s32 %v325, %v312
      %v346 = vadd.s32 %v325, %v313
      %v347 = vadd.s32 %v325, %v314
      %v348 = vadd.s32 %v325, %v315
      %v349 = vadd.s32 %v325, %v316
      %v350 = vadd.s32 %v325, %v317
      %v351 = vadd.s32 %v325, %v318
      %v352 = vadd.s32 %v325, %v319
      %v353 = vadd.s32 %v325, %v320
      %v354 = vadd.s32 %v325, %v321
      %v355 = vadd.s32 %v325, %v322
      %v356 = vadd.s32 %v325, %v323
      %v357 = vadd.s32 %v325, %v324
      %p358 = scmp.eq.s32.totalorder %s23, 0
      // Predicated region
      $region33: #{_lambda_.7} parent=31 // pred_check
        %p359 = pneg %p358
      $region34: #{_lambda_.7} parent=31 // pred_check_branch
        %361 = sbr.rel (%p359) target = $region36
      $region35: #{_lambda_.7} parent=31 // pred_region
        %362 = vst [vmem:[#allocation2] sm:$0xff] 0.0
        %363 = vst [vmem:[#allocation2 + $0x8] sm:$0xff] 0.0
        %364 = vst [vmem:[#allocation2 + $0x10] sm:$0xff] 0.0
        %365 = vst [vmem:[#allocation2 + $0x18] sm:$0xff] 0.0
        %366 = vst [vmem:[#allocation2 + $0x20] sm:$0xff] 0.0
        %367 = vst [vmem:[#allocation2 + $0x28] sm:$0xff] 0.0
        %368 = vst [vmem:[#allocation2 + $0x30] sm:$0xff] 0.0
        %369 = vst [vmem:[#allocation2 + $0x38] sm:$0xff] 0.0
        %370 = vst [vmem:[#allocation2 + $0x40] sm:$0xff] 0.0
        %371 = vst [vmem:[#allocation2 + $0x48] sm:$0xff] 0.0
        %372 = vst [vmem:[#allocation2 + $0x50] sm:$0xff] 0.0
        %373 = vst [vmem:[#allocation2 + $0x58] sm:$0xff] 0.0
        %374 = vst [vmem:[#allocation2 + $0x60] sm:$0xff] 0.0
        %375 = vst [vmem:[#allocation2 + $0x68] sm:$0xff] 0.0
        %376 = vst [vmem:[#allocation2 + $0x70] sm:$0xff] 0.0
        %377 = vst [vmem:[#allocation2 + $0x78] sm:$0xff] 0.0
        %378 = vst [vmem:[#allocation2 + $0x80] sm:$0xff] 0.0
        %379 = vst [vmem:[#allocation2 + $0x88] sm:$0xff] 0.0
        %380 = vst [vmem:[#allocation2 + $0x90] sm:$0xff] 0.0
        %381 = vst [vmem:[#allocation2 + $0x98] sm:$0xff] 0.0
        %382 = vst [vmem:[#allocation2 + $0xa0] sm:$0xff] 0.0
        %383 = vst [vmem:[#allocation2 + $0xa8] sm:$0xff] 0.0
        %384 = vst [vmem:[#allocation2 + $0xb0] sm:$0xff] 0.0
        %385 = vst [vmem:[#allocation2 + $0xb8] sm:$0xff] 0.0
        %386 = vst [vmem:[#allocation2 + $0xc0] sm:$0xff] 0.0
        %387 = vst [vmem:[#allocation2 + $0xc8] sm:$0xff] 0.0
        %388 = vst [vmem:[#allocation2 + $0xd0] sm:$0xff] 0.0
        %389 = vst [vmem:[#allocation2 + $0xd8] sm:$0xff] 0.0
        %390 = vst [vmem:[#allocation2 + $0xe0] sm:$0xff] 0.0
        %391 = vst [vmem:[#allocation2 + $0xe8] sm:$0xff] 0.0
        %392 = vst [vmem:[#allocation2 + $0xf0] sm:$0xff] 0.0
        %393 = vst [vmem:[#allocation2 + $0xf8] sm:$0xff] 0.0
      $region36: #{_lambda_.7} parent=31 // pred_fallthru
        _
      %v394 = vld [vmem:[#allocation2] sm:$0xff]
      %v395 = vld [vmem:[#allocation2 + $0x8] sm:$0xff]
      %v396 = vld [vmem:[#allocation2 + $0x10] sm:$0xff]
      %v397 = vld [vmem:[#allocation2 + $0x18] sm:$0xff]
      %v398 = vld [vmem:[#allocation2 + $0x20] sm:$0xff]
      %v399 = vld [vmem:[#allocation2 + $0x28] sm:$0xff]
      %v400 = vld [vmem:[#allocation2 + $0x30] sm:$0xff]
      %v401 = vld [vmem:[#allocation2 + $0x38] sm:$0xff]
      %v402 = vld [vmem:[#allocation2 + $0x40] sm:$0xff]
      %v403 = vld [vmem:[#allocation2 + $0x48] sm:$0xff]
      %v404 = vld [vmem:[#allocation2 + $0x50] sm:$0xff]
      %v405 = vld [vmem:[#allocation2 + $0x58] sm:$0xff]
      %v406 = vld [vmem:[#allocation2 + $0x60] sm:$0xff]
      %v407 = vld [vmem:[#allocation2 + $0x68] sm:$0xff]
      %v408 = vld [vmem:[#allocation2 + $0x70] sm:$0xff]
      %v409 = vld [vmem:[#allocation2 + $0x78] sm:$0xff]
      %v410 = vld [vmem:[#allocation2 + $0x80] sm:$0xff]
      %v411 = vld [vmem:[#allocation2 + $0x88] sm:$0xff]
      %v412 = vld [vmem:[#allocation2 + $0x90] sm:$0xff]
      %v413 = vld [vmem:[#allocation2 + $0x98] sm:$0xff]
      %v414 = vld [vmem:[#allocation2 + $0xa0] sm:$0xff]
      %v415 = vld [vmem:[#allocation2 + $0xa8] sm:$0xff]
      %v416 = vld [vmem:[#allocation2 + $0xb0] sm:$0xff]
      %v417 = vld [vmem:[#allocation2 + $0xb8] sm:$0xff]
      %v418 = vld [vmem:[#allocation2 + $0xc0] sm:$0xff]
      %v419 = vld [vmem:[#allocation2 + $0xc8] sm:$0xff]
      %v420 = vld [vmem:[#allocation2 + $0xd0] sm:$0xff]
      %v421 = vld [vmem:[#allocation2 + $0xd8] sm:$0xff]
      %v422 = vld [vmem:[#allocation2 + $0xe0] sm:$0xff]
      %v423 = vld [vmem:[#allocation2 + $0xe8] sm:$0xff]
      %v424 = vld [vmem:[#allocation2 + $0xf0] sm:$0xff]
      %v425 = vld [vmem:[#allocation2 + $0xf8] sm:$0xff]
      %v426 = vld [vmem:[%s263] sm:$0xf]
      %v427 = vld [vmem:[%s263 + $0x4] sm:$0xf]
      %v428 = vld [vmem:[%s263 + $0x8] sm:$0xf]
      %v429 = vld [vmem:[%s263 + $0xc] sm:$0xf]
      %v430 = vld [vmem:[%s263 + $0x10] sm:$0xf]
      %v431 = vld [vmem:[%s263 + $0x14] sm:$0xf]
      %v432 = vld [vmem:[%s263 + $0x18] sm:$0xf]
      %v433 = vld [vmem:[%s263 + $0x1c] sm:$0xf]
      %v434 = vld [vmem:[%s263 + $0x20] sm:$0xf]
      %v435 = vld [vmem:[%s263 + $0x24] sm:$0xf]
      %v436 = vld [vmem:[%s263 + $0x28] sm:$0xf]
      %v437 = vld [vmem:[%s263 + $0x2c] sm:$0xf]
      %v438 = vld [vmem:[%s263 + $0x30] sm:$0xf]
      %v439 = vld [vmem:[%s263 + $0x34] sm:$0xf]
      %v440 = vld [vmem:[%s263 + $0x38] sm:$0xf]
      %v441 = vld [vmem:[%s263 + $0x3c] sm:$0xf]
      %v442 = vld [vmem:[%s263 + $0x40] sm:$0xf]
      %v443 = vld [vmem:[%s263 + $0x44] sm:$0xf]
      %v444 = vld [vmem:[%s263 + $0x48] sm:$0xf]
      %v445 = vld [vmem:[%s263 + $0x4c] sm:$0xf]
      %v446 = vld [vmem:[%s263 + $0x50] sm:$0xf]
      %v447 = vld [vmem:[%s263 + $0x54] sm:$0xf]
      %v448 = vld [vmem:[%s263 + $0x58] sm:$0xf]
      %v449 = vld [vmem:[%s263 + $0x5c] sm:$0xf]
      %v450 = vld [vmem:[%s263 + $0x60] sm:$0xf]
      %v451 = vld [vmem:[%s263 + $0x64] sm:$0xf]
      %v452 = vld [vmem:[%s263 + $0x68] sm:$0xf]
      %v453 = vld [vmem:[%s263 + $0x6c] sm:$0xf]
      %v454 = vld [vmem:[%s263 + $0x70] sm:$0xf]
      %v455 = vld [vmem:[%s263 + $0x74] sm:$0xf]
      %v456 = vld [vmem:[%s263 + $0x78] sm:$0xf]
      %v457 = vld [vmem:[%s263 + $0x7c] sm:$0xf]
      %v458 = vld [vmem:[%s272] sm:$0xf]
      %v459 = vld [vmem:[%s272 + $0x4] sm:$0xf]
      %v460 = vld [vmem:[%s272 + $0x8] sm:$0xf]
      %v461 = vld [vmem:[%s272 + $0xc] sm:$0xf]
      %v462 = vld [vmem:[%s272 + $0x10] sm:$0xf]
      %v463 = vld [vmem:[%s272 + $0x14] sm:$0xf]
      %v464 = vld [vmem:[%s272 + $0x18] sm:$0xf]
      %v465 = vld [vmem:[%s272 + $0x1c] sm:$0xf]
      %v466 = vld [vmem:[%s272 + $0x20] sm:$0xf]
      %v467 = vld [vmem:[%s272 + $0x24] sm:$0xf]
      %v468 = vld [vmem:[%s272 + $0x28] sm:$0xf]
      %v469 = vld [vmem:[%s272 + $0x2c] sm:$0xf]
      %v470 = vld [vmem:[%s272 + $0x30] sm:$0xf]
      %v471 = vld [vmem:[%s272 + $0x34] sm:$0xf]
      %v472 = vld [vmem:[%s272 + $0x38] sm:$0xf]
      %v473 = vld [vmem:[%s272 + $0x3c] sm:$0xf]
      %v506 = vunpack.c.l.b16 %v426
      %v507 = vunpack.c.l.b16 %v427
      %v508 = vunpack.c.l.b16 %v428
      %v509 = vunpack.c.l.b16 %v429
      %v510 = vunpack.c.l.b16 %v430
      %v511 = vunpack.c.l.b16 %v431
      %v512 = vunpack.c.l.b16 %v432
      %v513 = vunpack.c.l.b16 %v433
      %v514 = vunpack.c.l.b16 %v434
      %v515 = vunpack.c.l.b16 %v435
      %v516 = vunpack.c.l.b16 %v436
      %v517 = vunpack.c.l.b16 %v437
      %v518 = vunpack.c.l.b16 %v438
      %v519 = vunpack.c.l.b16 %v439
      %v520 = vunpack.c.l.b16 %v440
      %v521 = vunpack.c.l.b16 %v441
      %v522 = vunpack.c.l.b16 %v442
      %v523 = vunpack.c.l.b16 %v443
      %v524 = vunpack.c.l.b16 %v444
      %v525 = vunpack.c.l.b16 %v445
      %v526 = vunpack.c.l.b16 %v446
      %v527 = vunpack.c.l.b16 %v447
      %v528 = vunpack.c.l.b16 %v448
      %v529 = vunpack.c.l.b16 %v449
      %v530 = vunpack.c.l.b16 %v450
      %v531 = vunpack.c.l.b16 %v451
      %v532 = vunpack.c.l.b16 %v452
      %v533 = vunpack.c.l.b16 %v453
      %v534 = vunpack.c.l.b16 %v454
      %v535 = vunpack.c.l.b16 %v455
      %v536 = vunpack.c.l.b16 %v456
      %v537 = vunpack.c.l.b16 %v457
      %v538 = vpack.c.b16 %v507, %v506
      %v539 = vpack.c.b16 %v509, %v508
      %v540 = vpack.c.b16 %v511, %v510
      %v541 = vpack.c.b16 %v513, %v512
      %v542 = vpack.c.b16 %v515, %v514
      %v543 = vpack.c.b16 %v517, %v516
      %v544 = vpack.c.b16 %v519, %v518
      %v545 = vpack.c.b16 %v521, %v520
      %v546 = vpack.c.b16 %v523, %v522
      %v547 = vpack.c.b16 %v525, %v524
      %v548 = vpack.c.b16 %v527, %v526
      %v549 = vpack.c.b16 %v529, %v528
      %v550 = vpack.c.b16 %v531, %v530
      %v551 = vpack.c.b16 %v533, %v532
      %v552 = vpack.c.b16 %v535, %v534
      %v553 = vpack.c.b16 %v537, %v536
      %v586 = vunpack.c.l.b16 %v458
      %v587 = vunpack.c.l.b16 %v459
      %v588 = vunpack.c.l.b16 %v460
      %v589 = vunpack.c.l.b16 %v461
      %v590 = vunpack.c.l.b16 %v462
      %v591 = vunpack.c.l.b16 %v463
      %v592 = vunpack.c.l.b16 %v464
      %v593 = vunpack.c.l.b16 %v465
      %v594 = vunpack.c.l.b16 %v466
      %v595 = vunpack.c.l.b16 %v467
      %v596 = vunpack.c.l.b16 %v468
      %v597 = vunpack.c.l.b16 %v469
      %v598 = vunpack.c.l.b16 %v470
      %v599 = vunpack.c.l.b16 %v471
      %v600 = vunpack.c.l.b16 %v472
      %v601 = vunpack.c.l.b16 %v473
      %v602 = vpack.c.b16 %v587, %v586
      %v603 = vpack.c.b16 %v589, %v588
      %v604 = vpack.c.b16 %v591, %v590
      %v605 = vpack.c.b16 %v593, %v592
      %v606 = vpack.c.b16 %v595, %v594
      %v607 = vpack.c.b16 %v597, %v596
      %v608 = vpack.c.b16 %v599, %v598
      %v609 = vpack.c.b16 %v601, %v600
      %618 = vmatprep.subr.bf16.mxu0 0
      %619 = vmatpush1.bf16.msra.mxu0 %v609
      %620 = vmatprep.subr.bf16.mxu0 0
      %621 = vmatpush1.bf16.msra.mxu0 %v608
      %622 = vmatprep.subr.bf16.mxu0 0
      %623 = vmatpush1.bf16.msra.mxu0 %v607
      %624 = vmatprep.subr.bf16.mxu0 0
      %625 = vmatpush1.bf16.msra.mxu0 %v606
      %626 = vmatprep.subr.bf16.mxu0 0
      %627 = vmatpush1.bf16.msra.mxu0 %v605
      %628 = vmatprep.subr.bf16.mxu0 0
      %629 = vmatpush1.bf16.msra.mxu0 %v604
      %630 = vmatprep.subr.bf16.mxu0 0
      %631 = vmatpush1.bf16.msra.mxu0 %v603
      %632 = vmatprep.subr.bf16.mxu0 0
      %633 = vmatpush1.bf16.msra.mxu0 %v602
      %634 = vmatprep.subr.bf16.mxu0 0
      %635 = vmatpush2.bf16.msra.mxu0 0
      %636 = vmatprep.subr.bf16.mxu0 0
      %637 = vmatpush2.bf16.msra.mxu0 0
      %638 = vmatprep.subr.bf16.mxu0 0
      %639 = vmatpush2.bf16.msra.mxu0 0
      %640 = vmatprep.subr.bf16.mxu0 0
      %641 = vmatpush2.bf16.msra.mxu0 0
      %642 = vmatprep.subr.bf16.mxu0 0
      %643 = vmatpush2.bf16.msra.mxu0 0
      %644 = vmatprep.subr.bf16.mxu0 0
      %645 = vmatpush2.bf16.msra.mxu0 0
      %646 = vmatprep.subr.bf16.mxu0 0
      %647 = vmatpush2.bf16.msra.mxu0 0
      %648 = vmatprep.subr.bf16.mxu0 0
      %649 = vmatpush2.bf16.msra.mxu0 0
      %650 = vmatprep.mubr.bf16.mxu0 0
      %651 = vmatmul.mubr.bf16.gmra.mxu0 %v538
      %v652 = vpop.f32.mrf.mxu0
      %v653 = vadd.f32 0.0, %v652
      %v654 = vpop.f32.mrf.mxu0
      %v655 = vpop.f32.mrf.mxu0
      %v656 = vadd.f32 0.0, %v655
      %v657 = vpop.f32.mrf.mxu0
      %658 = vmatprep.mubr.bf16.mxu0 0
      %659 = vmatmul.mubr.bf16.gmra.mxu0 %v539
      %v660 = vpop.f32.mrf.mxu0
      %v661 = vadd.f32 0.0, %v660
      %v662 = vpop.f32.mrf.mxu0
      %v663 = vpop.f32.mrf.mxu0
      %v664 = vadd.f32 0.0, %v663
      %v665 = vpop.f32.mrf.mxu0
      %666 = vmatprep.mubr.bf16.mxu0 0
      %667 = vmatmul.mubr.bf16.gmra.mxu0 %v540
      %v668 = vpop.f32.mrf.mxu0
      %v669 = vadd.f32 0.0, %v668
      %v670 = vpop.f32.mrf.mxu0
      %v671 = vpop.f32.mrf.mxu0
      %v672 = vadd.f32 0.0, %v671
      %v673 = vpop.f32.mrf.mxu0
      %674 = vmatprep.mubr.bf16.mxu0 0
      %675 = vmatmul.mubr.bf16.gmra.mxu0 %v541
      %v676 = vpop.f32.mrf.mxu0
      %v677 = vadd.f32 0.0, %v676
      %v678 = vpop.f32.mrf.mxu0
      %v679 = vpop.f32.mrf.mxu0
      %v680 = vadd.f32 0.0, %v679
      %v681 = vpop.f32.mrf.mxu0
      %682 = vmatprep.mubr.bf16.mxu0 0
      %683 = vmatmul.mubr.bf16.gmra.mxu0 %v542
      %v684 = vpop.f32.mrf.mxu0
      %v685 = vadd.f32 0.0, %v684
      %v686 = vpop.f32.mrf.mxu0
      %v687 = vpop.f32.mrf.mxu0
      %v688 = vadd.f32 0.0, %v687
      %v689 = vpop.f32.mrf.mxu0
      %690 = vmatprep.mubr.bf16.mxu0 0
      %691 = vmatmul.mubr.bf16.gmra.mxu0 %v543
      %v692 = vpop.f32.mrf.mxu0
      %v693 = vadd.f32 0.0, %v692
      %v694 = vpop.f32.mrf.mxu0
      %v695 = vpop.f32.mrf.mxu0
      %v696 = vadd.f32 0.0, %v695
      %v697 = vpop.f32.mrf.mxu0
      %698 = vmatprep.mubr.bf16.mxu0 0
      %699 = vmatmul.mubr.bf16.gmra.mxu0 %v544
      %v700 = vpop.f32.mrf.mxu0
      %v701 = vadd.f32 0.0, %v700
      %v702 = vpop.f32.mrf.mxu0
      %v703 = vpop.f32.mrf.mxu0
      %v704 = vadd.f32 0.0, %v703
      %v705 = vpop.f32.mrf.mxu0
      %706 = vmatprep.mubr.bf16.mxu0 0
      %707 = vmatmul.mubr.bf16.gmra.mxu0 %v545
      %v708 = vpop.f32.mrf.mxu0
      %v709 = vadd.f32 0.0, %v708
      %v710 = vpop.f32.mrf.mxu0
      %v711 = vpop.f32.mrf.mxu0
      %v712 = vadd.f32 0.0, %v711
      %v713 = vpop.f32.mrf.mxu0
      %714 = vmatprep.mubr.bf16.mxu0 0
      %715 = vmatmul.mubr.bf16.gmra.mxu0 %v546
      %v716 = vpop.f32.mrf.mxu0
      %v717 = vadd.f32 0.0, %v716
      %v718 = vpop.f32.mrf.mxu0
      %v719 = vpop.f32.mrf.mxu0
      %v720 = vadd.f32 0.0, %v719
      %v721 = vpop.f32.mrf.mxu0
      %722 = vmatprep.mubr.bf16.mxu0 0
      %723 = vmatmul.mubr.bf16.gmra.mxu0 %v547
      %v724 = vpop.f32.mrf.mxu0
      %v725 = vadd.f32 0.0, %v724
      %v726 = vpop.f32.mrf.mxu0
      %v727 = vpop.f32.mrf.mxu0
      %v728 = vadd.f32 0.0, %v727
      %v729 = vpop.f32.mrf.mxu0
      %730 = vmatprep.mubr.bf16.mxu0 0
      %731 = vmatmul.mubr.bf16.gmra.mxu0 %v548
      %v732 = vpop.f32.mrf.mxu0
      %v733 = vadd.f32 0.0, %v732
      %v734 = vpop.f32.mrf.mxu0
      %v735 = vpop.f32.mrf.mxu0
      %v736 = vadd.f32 0.0, %v735
      %v737 = vpop.f32.mrf.mxu0
      %738 = vmatprep.mubr.bf16.mxu0 0
      %739 = vmatmul.mubr.bf16.gmra.mxu0 %v549
      %v740 = vpop.f32.mrf.mxu0
      %v741 = vadd.f32 0.0, %v740
      %v742 = vpop.f32.mrf.mxu0
      %v743 = vpop.f32.mrf.mxu0
      %v744 = vadd.f32 0.0, %v743
      %v745 = vpop.f32.mrf.mxu0
      %746 = vmatprep.mubr.bf16.mxu0 0
      %747 = vmatmul.mubr.bf16.gmra.mxu0 %v550
      %v748 = vpop.f32.mrf.mxu0
      %v749 = vadd.f32 0.0, %v748
      %v750 = vpop.f32.mrf.mxu0
      %v751 = vpop.f32.mrf.mxu0
      %v752 = vadd.f32 0.0, %v751
      %v753 = vpop.f32.mrf.mxu0
      %754 = vmatprep.mubr.bf16.mxu0 0
      %755 = vmatmul.mubr.bf16.gmra.mxu0 %v551
      %v756 = vpop.f32.mrf.mxu0
      %v757 = vadd.f32 0.0, %v756
      %v758 = vpop.f32.mrf.mxu0
      %v759 = vpop.f32.mrf.mxu0
      %v760 = vadd.f32 0.0, %v759
      %v761 = vpop.f32.mrf.mxu0
      %762 = vmatprep.mubr.bf16.mxu0 0
      %763 = vmatmul.mubr.bf16.gmra.mxu0 %v552
      %v764 = vpop.f32.mrf.mxu0
      %v765 = vadd.f32 0.0, %v764
      %v766 = vpop.f32.mrf.mxu0
      %v767 = vpop.f32.mrf.mxu0
      %v768 = vadd.f32 0.0, %v767
      %v769 = vpop.f32.mrf.mxu0
      %770 = vmatprep.mubr.bf16.mxu0 0
      %771 = vmatmul.mubr.bf16.gmra.mxu0 %v553
      %v772 = vpop.f32.mrf.mxu0
      %v773 = vadd.f32 0.0, %v772
      %v774 = vpop.f32.mrf.mxu0
      %v775 = vpop.f32.mrf.mxu0
      %v776 = vadd.f32 0.0, %v775
      %v777 = vpop.f32.mrf.mxu0
      %778 = vdwg.mxu0
      %v779 = vadd.f32 %v394, %v653
      %v780 = vadd.f32 %v395, %v656
      %v781 = vadd.f32 %v396, %v661
      %v782 = vadd.f32 %v397, %v664
      %v783 = vadd.f32 %v398, %v669
      %v784 = vadd.f32 %v399, %v672
      %v785 = vadd.f32 %v400, %v677
      %v786 = vadd.f32 %v401, %v680
      %v787 = vadd.f32 %v402, %v685
      %v788 = vadd.f32 %v403, %v688
      %v789 = vadd.f32 %v404, %v693
      %v790 = vadd.f32 %v405, %v696
      %v791 = vadd.f32 %v406, %v701
      %v792 = vadd.f32 %v407, %v704
      %v793 = vadd.f32 %v408, %v709
      %v794 = vadd.f32 %v409, %v712
      %v795 = vadd.f32 %v410, %v717
      %v796 = vadd.f32 %v411, %v720
      %v797 = vadd.f32 %v412, %v725
      %v798 = vadd.f32 %v413, %v728
      %v799 = vadd.f32 %v414, %v733
      %v800 = vadd.f32 %v415, %v736
      %v801 = vadd.f32 %v416, %v741
      %v802 = vadd.f32 %v417, %v744
      %v803 = vadd.f32 %v418, %v749
      %v804 = vadd.f32 %v419, %v752
      %v805 = vadd.f32 %v420, %v757
      %v806 = vadd.f32 %v421, %v760
      %v807 = vadd.f32 %v422, %v765
      %v808 = vadd.f32 %v423, %v768
      %v809 = vadd.f32 %v424, %v773
      %v810 = vadd.f32 %v425, %v776
      %811 = vst [vmem:[#allocation2] sm:$0xff] %v779
      %812 = vst [vmem:[#allocation2 + $0x8] sm:$0xff] %v780
      %813 = vst [vmem:[#allocation2 + $0x10] sm:$0xff] %v781
      %814 = vst [vmem:[#allocation2 + $0x18] sm:$0xff] %v782
      %815 = vst [vmem:[#allocation2 + $0x20] sm:$0xff] %v783
      %816 = vst [vmem:[#allocation2 + $0x28] sm:$0xff] %v784
      %817 = vst [vmem:[#allocation2 + $0x30] sm:$0xff] %v785
      %818 = vst [vmem:[#allocation2 + $0x38] sm:$0xff] %v786
      %819 = vst [vmem:[#allocation2 + $0x40] sm:$0xff] %v787
      %820 = vst [vmem:[#allocation2 + $0x48] sm:$0xff] %v788
      %821 = vst [vmem:[#allocation2 + $0x50] sm:$0xff] %v789
      %822 = vst [vmem:[#allocation2 + $0x58] sm:$0xff] %v790
      %823 = vst [vmem:[#allocation2 + $0x60] sm:$0xff] %v791
      %824 = vst [vmem:[#allocation2 + $0x68] sm:$0xff] %v792
      %825 = vst [vmem:[#allocation2 + $0x70] sm:$0xff] %v793
      %826 = vst [vmem:[#allocation2 + $0x78] sm:$0xff] %v794
      %827 = vst [vmem:[#allocation2 + $0x80] sm:$0xff] %v795
      %828 = vst [vmem:[#allocation2 + $0x88] sm:$0xff] %v796
      %829 = vst [vmem:[#allocation2 + $0x90] sm:$0xff] %v797
      %830 = vst [vmem:[#allocation2 + $0x98] sm:$0xff] %v798
      %831 = vst [vmem:[#allocation2 + $0xa0] sm:$0xff] %v799
      %832 = vst [vmem:[#allocation2 + $0xa8] sm:$0xff] %v800
      %833 = vst [vmem:[#allocation2 + $0xb0] sm:$0xff] %v801
      %834 = vst [vmem:[#allocation2 + $0xb8] sm:$0xff] %v802
      %835 = vst [vmem:[#allocation2 + $0xc0] sm:$0xff] %v803
      %836 = vst [vmem:[#allocation2 + $0xc8] sm:$0xff] %v804
      %837 = vst [vmem:[#allocation2 + $0xd0] sm:$0xff] %v805
      %838 = vst [vmem:[#allocation2 + $0xd8] sm:$0xff] %v806
      %839 = vst [vmem:[#allocation2 + $0xe0] sm:$0xff] %v807
      %840 = vst [vmem:[#allocation2 + $0xe8] sm:$0xff] %v808
      %841 = vst [vmem:[#allocation2 + $0xf0] sm:$0xff] %v809
      %842 = vst [vmem:[#allocation2 + $0xf8] sm:$0xff] %v810
      // Predicated region
      $region37: #{_lambda_.7} parent=31 // pred_check
        %p843 = pneg %p358
      $region38: #{_lambda_.7} parent=31 // pred_check_branch
        %845 = sbr.rel (%p843) target = $region40
      $region39: #{_lambda_.7} parent=31 // pred_region
        %v846 = vld [vmem:[#allocation2] sm:$0xff]
        %v847 = vld [vmem:[#allocation2 + $0x8] sm:$0xff]
        %v848 = vld [vmem:[#allocation2 + $0x10] sm:$0xff]
        %v849 = vld [vmem:[#allocation2 + $0x18] sm:$0xff]
        %v850 = vld [vmem:[#allocation2 + $0x20] sm:$0xff]
        %v851 = vld [vmem:[#allocation2 + $0x28] sm:$0xff]
        %v852 = vld [vmem:[#allocation2 + $0x30] sm:$0xff]
        %v853 = vld [vmem:[#allocation2 + $0x38] sm:$0xff]
        %v854 = vld [vmem:[#allocation2 + $0x40] sm:$0xff]
        %v855 = vld [vmem:[#allocation2 + $0x48] sm:$0xff]
        %v856 = vld [vmem:[#allocation2 + $0x50] sm:$0xff]
        %v857 = vld [vmem:[#allocation2 + $0x58] sm:$0xff]
        %v858 = vld [vmem:[#allocation2 + $0x60] sm:$0xff]
        %v859 = vld [vmem:[#allocation2 + $0x68] sm:$0xff]
        %v860 = vld [vmem:[#allocation2 + $0x70] sm:$0xff]
        %v861 = vld [vmem:[#allocation2 + $0x78] sm:$0xff]
        %v862 = vld [vmem:[#allocation2 + $0x80] sm:$0xff]
        %v863 = vld [vmem:[#allocation2 + $0x88] sm:$0xff]
        %v864 = vld [vmem:[#allocation2 + $0x90] sm:$0xff]
        %v865 = vld [vmem:[#allocation2 + $0x98] sm:$0xff]
        %v866 = vld [vmem:[#allocation2 + $0xa0] sm:$0xff]
        %v867 = vld [vmem:[#allocation2 + $0xa8] sm:$0xff]
        %v868 = vld [vmem:[#allocation2 + $0xb0] sm:$0xff]
        %v869 = vld [vmem:[#allocation2 + $0xb8] sm:$0xff]
        %v870 = vld [vmem:[#allocation2 + $0xc0] sm:$0xff]
        %v871 = vld [vmem:[#allocation2 + $0xc8] sm:$0xff]
        %v872 = vld [vmem:[#allocation2 + $0xd0] sm:$0xff]
        %v873 = vld [vmem:[#allocation2 + $0xd8] sm:$0xff]
        %v874 = vld [vmem:[#allocation2 + $0xe0] sm:$0xff]
        %v875 = vld [vmem:[#allocation2 + $0xe8] sm:$0xff]
        %v876 = vld [vmem:[#allocation2 + $0xf0] sm:$0xff]
        %v877 = vld [vmem:[#allocation2 + $0xf8] sm:$0xff]
        %v878 = vld [vmem:[%s276] sm:$0x1]
        %v880 = vlaneseq
        %v881 = vshrl.u32 %v880, 7
        %v882 = vsub.s32 0, %v881
        %v883 = vrot.slane %v878, %v882
        %v885 = vadd.f32 %v846, %v883
        %v886 = vadd.f32 %v847, %v883
        %v887 = vadd.f32 %v848, %v883
        %v888 = vadd.f32 %v849, %v883
        %v889 = vadd.f32 %v850, %v883
        %v890 = vadd.f32 %v851, %v883
        %v891 = vadd.f32 %v852, %v883
        %v892 = vadd.f32 %v853, %v883
        %v893 = vadd.f32 %v854, %v883
        %v894 = vadd.f32 %v855, %v883
        %v895 = vadd.f32 %v856, %v883
        %v896 = vadd.f32 %v857, %v883
        %v897 = vadd.f32 %v858, %v883
        %v898 = vadd.f32 %v859, %v883
        %v899 = vadd.f32 %v860, %v883
        %v900 = vadd.f32 %v861, %v883
        %v901 = vadd.f32 %v862, %v883
        %v902 = vadd.f32 %v863, %v883
        %v903 = vadd.f32 %v864, %v883
        %v904 = vadd.f32 %v865, %v883
        %v905 = vadd.f32 %v866, %v883
        %v906 = vadd.f32 %v867, %v883
        %v907 = vadd.f32 %v868, %v883
        %v908 = vadd.f32 %v869, %v883
        %v909 = vadd.f32 %v870, %v883
        %v910 = vadd.f32 %v871, %v883
        %v911 = vadd.f32 %v872, %v883
        %v912 = vadd.f32 %v873, %v883
        %v913 = vadd.f32 %v874, %v883
        %v914 = vadd.f32 %v875, %v883
        %v915 = vadd.f32 %v876, %v883
        %v916 = vadd.f32 %v877, %v883
        %vm917 = vcmp.ge.f32.partialorder %v885, 0.0
        %vm918 = vcmp.ge.f32.partialorder %v886, 0.0
        %vm919 = vcmp.ge.f32.partialorder %v887, 0.0
        %vm920 = vcmp.ge.f32.partialorder %v888, 0.0
        %vm921 = vcmp.ge.f32.partialorder %v889, 0.0
        %vm922 = vcmp.ge.f32.partialorder %v890, 0.0
        %vm923 = vcmp.ge.f32.partialorder %v891, 0.0
        %vm924 = vcmp.ge.f32.partialorder %v892, 0.0
        %vm925 = vcmp.ge.f32.partialorder %v893, 0.0
        %vm926 = vcmp.ge.f32.partialorder %v894, 0.0
        %vm927 = vcmp.ge.f32.partialorder %v895, 0.0
        %vm928 = vcmp.ge.f32.partialorder %v896, 0.0
        %vm929 = vcmp.ge.f32.partialorder %v897, 0.0
        %vm930 = vcmp.ge.f32.partialorder %v898, 0.0
        %vm931 = vcmp.ge.f32.partialorder %v899, 0.0
        %vm932 = vcmp.ge.f32.partialorder %v900, 0.0
        %vm933 = vcmp.ge.f32.partialorder %v901, 0.0
        %vm934 = vcmp.ge.f32.partialorder %v902, 0.0
        %vm935 = vcmp.ge.f32.partialorder %v903, 0.0
        %vm936 = vcmp.ge.f32.partialorder %v904, 0.0
        %vm937 = vcmp.ge.f32.partialorder %v905, 0.0
        %vm938 = vcmp.ge.f32.partialorder %v906, 0.0
        %vm939 = vcmp.ge.f32.partialorder %v907, 0.0
        %vm940 = vcmp.ge.f32.partialorder %v908, 0.0
        %vm941 = vcmp.ge.f32.partialorder %v909, 0.0
        %vm942 = vcmp.ge.f32.partialorder %v910, 0.0
        %vm943 = vcmp.ge.f32.partialorder %v911, 0.0
        %vm944 = vcmp.ge.f32.partialorder %v912, 0.0
        %vm945 = vcmp.ge.f32.partialorder %v913, 0.0
        %vm946 = vcmp.ge.f32.partialorder %v914, 0.0
        %vm947 = vcmp.ge.f32.partialorder %v915, 0.0
        %vm948 = vcmp.ge.f32.partialorder %v916, 0.0
        %v949 = vmul.f32 %v885, 0.2
        %v950 = vmul.f32 %v886, 0.2
        %v951 = vmul.f32 %v887, 0.2
        %v952 = vmul.f32 %v888, 0.2
        %v953 = vmul.f32 %v889, 0.2
        %v954 = vmul.f32 %v890, 0.2
        %v955 = vmul.f32 %v891, 0.2
        %v956 = vmul.f32 %v892, 0.2
        %v957 = vmul.f32 %v893, 0.2
        %v958 = vmul.f32 %v894, 0.2
        %v959 = vmul.f32 %v895, 0.2
        %v960 = vmul.f32 %v896, 0.2
        %v961 = vmul.f32 %v897, 0.2
        %v962 = vmul.f32 %v898, 0.2
        %v963 = vmul.f32 %v899, 0.2
        %v964 = vmul.f32 %v900, 0.2
        %v965 = vmul.f32 %v901, 0.2
        %v966 = vmul.f32 %v902, 0.2
        %v967 = vmul.f32 %v903, 0.2
        %v968 = vmul.f32 %v904, 0.2
        %v969 = vmul.f32 %v905, 0.2
        %v970 = vmul.f32 %v906, 0.2
        %v971 = vmul.f32 %v907, 0.2
        %v972 = vmul.f32 %v908, 0.2
        %v973 = vmul.f32 %v909, 0.2
        %v974 = vmul.f32 %v910, 0.2
        %v975 = vmul.f32 %v911, 0.2
        %v976 = vmul.f32 %v912, 0.2
        %v977 = vmul.f32 %v913, 0.2
        %v978 = vmul.f32 %v914, 0.2
        %v979 = vmul.f32 %v915, 0.2
        %v980 = vmul.f32 %v916, 0.2
        %v981 = vsel %vm917, %v885, %v949
        %v982 = vsel %vm918, %v886, %v950
        %v983 = vsel %vm919, %v887, %v951
        %v984 = vsel %vm920, %v888, %v952
        %v985 = vsel %vm921, %v889, %v953
        %v986 = vsel %vm922, %v890, %v954
        %v987 = vsel %vm923, %v891, %v955
        %v988 = vsel %vm924, %v892, %v956
        %v989 = vsel %vm925, %v893, %v957
        %v990 = vsel %vm926, %v894, %v958
        %v991 = vsel %vm927, %v895, %v959
        %v992 = vsel %vm928, %v896, %v960
        %v993 = vsel %vm929, %v897, %v961
        %v994 = vsel %vm930, %v898, %v962
        %v995 = vsel %vm931, %v899, %v963
        %v996 = vsel %vm932, %v900, %v964
        %v997 = vsel %vm933, %v901, %v965
        %v998 = vsel %vm934, %v902, %v966
        %v999 = vsel %vm935, %v903, %v967
        %v1000 = vsel %vm936, %v904, %v968
        %v1001 = vsel %vm937, %v905, %v969
        %v1002 = vsel %vm938, %v906, %v970
        %v1003 = vsel %vm939, %v907, %v971
        %v1004 = vsel %vm940, %v908, %v972
        %v1005 = vsel %vm941, %v909, %v973
        %v1006 = vsel %vm942, %v910, %v974
        %v1007 = vsel %vm943, %v911, %v975
        %v1008 = vsel %vm944, %v912, %v976
        %v1009 = vsel %vm945, %v913, %v977
        %v1010 = vsel %vm946, %v914, %v978
        %v1011 = vsel %vm947, %v915, %v979
        %v1012 = vsel %vm948, %v916, %v980
        %vm1013 = vcmp.lt.s32.totalorder %v326, 1156
        %vm1014 = vcmp.lt.s32.totalorder %v327, 1156
        %vm1015 = vcmp.lt.s32.totalorder %v328, 1156
        %vm1016 = vcmp.lt.s32.totalorder %v329, 1156
        %vm1017 = vcmp.lt.s32.totalorder %v330, 1156
        %vm1018 = vcmp.lt.s32.totalorder %v331, 1156
        %vm1019 = vcmp.lt.s32.totalorder %v332, 1156
        %vm1020 = vcmp.lt.s32.totalorder %v333, 1156
        %vm1021 = vcmp.lt.s32.totalorder %v334, 1156
        %vm1022 = vcmp.lt.s32.totalorder %v335, 1156
        %vm1023 = vcmp.lt.s32.totalorder %v336, 1156
        %vm1024 = vcmp.lt.s32.totalorder %v337, 1156
        %vm1025 = vcmp.lt.s32.totalorder %v338, 1156
        %vm1026 = vcmp.lt.s32.totalorder %v339, 1156
        %vm1027 = vcmp.lt.s32.totalorder %v340, 1156
        %vm1028 = vcmp.lt.s32.totalorder %v341, 1156
        %vm1029 = vcmp.lt.s32.totalorder %v342, 1156
        %vm1030 = vcmp.lt.s32.totalorder %v343, 1156
        %vm1031 = vcmp.lt.s32.totalorder %v344, 1156
        %vm1032 = vcmp.lt.s32.totalorder %v345, 1156
        %vm1033 = vcmp.lt.s32.totalorder %v346, 1156
        %vm1034 = vcmp.lt.s32.totalorder %v347, 1156
        %vm1035 = vcmp.lt.s32.totalorder %v348, 1156
        %vm1036 = vcmp.lt.s32.totalorder %v349, 1156
        %vm1037 = vcmp.lt.s32.totalorder %v350, 1156
        %vm1038 = vcmp.lt.s32.totalorder %v351, 1156
        %vm1039 = vcmp.lt.s32.totalorder %v352, 1156
        %vm1040 = vcmp.lt.s32.totalorder %v353, 1156
        %vm1041 = vcmp.lt.s32.totalorder %v354, 1156
        %vm1042 = vcmp.lt.s32.totalorder %v355, 1156
        %vm1043 = vcmp.lt.s32.totalorder %v356, 1156
        %vm1044 = vcmp.lt.s32.totalorder %v357, 1156
        %v1045 = vsel %vm1013, 1, 0
        %v1046 = vsel %vm1014, 1, 0
        %v1047 = vsel %vm1015, 1, 0
        %v1048 = vsel %vm1016, 1, 0
        %v1049 = vsel %vm1017, 1, 0
        %v1050 = vsel %vm1018, 1, 0
        %v1051 = vsel %vm1019, 1, 0
        %v1052 = vsel %vm1020, 1, 0
        %v1053 = vsel %vm1021, 1, 0
        %v1054 = vsel %vm1022, 1, 0
        %v1055 = vsel %vm1023, 1, 0
        %v1056 = vsel %vm1024, 1, 0
        %v1057 = vsel %vm1025, 1, 0
        %v1058 = vsel %vm1026, 1, 0
        %v1059 = vsel %vm1027, 1, 0
        %v1060 = vsel %vm1028, 1, 0
        %v1061 = vsel %vm1029, 1, 0
        %v1062 = vsel %vm1030, 1, 0
        %v1063 = vsel %vm1031, 1, 0
        %v1064 = vsel %vm1032, 1, 0
        %v1065 = vsel %vm1033, 1, 0
        %v1066 = vsel %vm1034, 1, 0
        %v1067 = vsel %vm1035, 1, 0
        %v1068 = vsel %vm1036, 1, 0
        %v1069 = vsel %vm1037, 1, 0
        %v1070 = vsel %vm1038, 1, 0
        %v1071 = vsel %vm1039, 1, 0
        %v1072 = vsel %vm1040, 1, 0
        %v1073 = vsel %vm1041, 1, 0
        %v1074 = vsel %vm1042, 1, 0
        %v1075 = vsel %vm1043, 1, 0
        %v1076 = vsel %vm1044, 1, 0
        %vm1077 = vcmp.eq.s32.totalorder %v1045, 1
        %vm1078 = vcmp.eq.s32.totalorder %v1046, 1
        %vm1079 = vcmp.eq.s32.totalorder %v1047, 1
        %vm1080 = vcmp.eq.s32.totalorder %v1048, 1
        %vm1081 = vcmp.eq.s32.totalorder %v1049, 1
        %vm1082 = vcmp.eq.s32.totalorder %v1050, 1
        %vm1083 = vcmp.eq.s32.totalorder %v1051, 1
        %vm1084 = vcmp.eq.s32.totalorder %v1052, 1
        %vm1085 = vcmp.eq.s32.totalorder %v1053, 1
        %vm1086 = vcmp.eq.s32.totalorder %v1054, 1
        %vm1087 = vcmp.eq.s32.totalorder %v1055, 1
        %vm1088 = vcmp.eq.s32.totalorder %v1056, 1
        %vm1089 = vcmp.eq.s32.totalorder %v1057, 1
        %vm1090 = vcmp.eq.s32.totalorder %v1058, 1
        %vm1091 = vcmp.eq.s32.totalorder %v1059, 1
        %vm1092 = vcmp.eq.s32.totalorder %v1060, 1
        %vm1093 = vcmp.eq.s32.totalorder %v1061, 1
        %vm1094 = vcmp.eq.s32.totalorder %v1062, 1
        %vm1095 = vcmp.eq.s32.totalorder %v1063, 1
        %vm1096 = vcmp.eq.s32.totalorder %v1064, 1
        %vm1097 = vcmp.eq.s32.totalorder %v1065, 1
        %vm1098 = vcmp.eq.s32.totalorder %v1066, 1
        %vm1099 = vcmp.eq.s32.totalorder %v1067, 1
        %vm1100 = vcmp.eq.s32.totalorder %v1068, 1
        %vm1101 = vcmp.eq.s32.totalorder %v1069, 1
        %vm1102 = vcmp.eq.s32.totalorder %v1070, 1
        %vm1103 = vcmp.eq.s32.totalorder %v1071, 1
        %vm1104 = vcmp.eq.s32.totalorder %v1072, 1
        %vm1105 = vcmp.eq.s32.totalorder %v1073, 1
        %vm1106 = vcmp.eq.s32.totalorder %v1074, 1
        %vm1107 = vcmp.eq.s32.totalorder %v1075, 1
        %vm1108 = vcmp.eq.s32.totalorder %v1076, 1
        %v1109 = vsel %vm1077, %v981, 0.0
        %v1110 = vsel %vm1078, %v982, 0.0
        %v1111 = vsel %vm1079, %v983, 0.0
        %v1112 = vsel %vm1080, %v984, 0.0
        %v1113 = vsel %vm1081, %v985, 0.0
        %v1114 = vsel %vm1082, %v986, 0.0
        %v1115 = vsel %vm1083, %v987, 0.0
        %v1116 = vsel %vm1084, %v988, 0.0
        %v1117 = vsel %vm1085, %v989, 0.0
        %v1118 = vsel %vm1086, %v990, 0.0
        %v1119 = vsel %vm1087, %v991, 0.0
        %v1120 = vsel %vm1088, %v992, 0.0
        %v1121 = vsel %vm1089, %v993, 0.0
        %v1122 = vsel %vm1090, %v994, 0.0
        %v1123 = vsel %vm1091, %v995, 0.0
        %v1124 = vsel %vm1092, %v996, 0.0
        %v1125 = vsel %vm1093, %v997, 0.0
        %v1126 = vsel %vm1094, %v998, 0.0
        %v1127 = vsel %vm1095, %v999, 0.0
        %v1128 = vsel %vm1096, %v1000, 0.0
        %v1129 = vsel %vm1097, %v1001, 0.0
        %v1130 = vsel %vm1098, %v1002, 0.0
        %v1131 = vsel %vm1099, %v1003, 0.0
        %v1132 = vsel %vm1100, %v1004, 0.0
        %v1133 = vsel %vm1101, %v1005, 0.0
        %v1134 = vsel %vm1102, %v1006, 0.0
        %v1135 = vsel %vm1103, %v1007, 0.0
        %v1136 = vsel %vm1104, %v1008, 0.0
        %v1137 = vsel %vm1105, %v1009, 0.0
        %v1138 = vsel %vm1106, %v1010, 0.0
        %v1139 = vsel %vm1107, %v1011, 0.0
        %v1140 = vsel %vm1108, %v1012, 0.0
        %v1141 = vpack.c.bf16 %v1110, %v1109
        %v1142 = vpack.c.bf16 %v1112, %v1111
        %v1143 = vpack.c.bf16 %v1114, %v1113
        %v1144 = vpack.c.bf16 %v1116, %v1115
        %v1145 = vpack.c.bf16 %v1118, %v1117
        %v1146 = vpack.c.bf16 %v1120, %v1119
        %v1147 = vpack.c.bf16 %v1122, %v1121
        %v1148 = vpack.c.bf16 %v1124, %v1123
        %v1149 = vpack.c.bf16 %v1126, %v1125
        %v1150 = vpack.c.bf16 %v1128, %v1127
        %v1151 = vpack.c.bf16 %v1130, %v1129
        %v1152 = vpack.c.bf16 %v1132, %v1131
        %v1153 = vpack.c.bf16 %v1134, %v1133
        %v1154 = vpack.c.bf16 %v1136, %v1135
        %v1155 = vpack.c.bf16 %v1138, %v1137
        %v1156 = vpack.c.bf16 %v1140, %v1139
        %v1173 = vunpack.c.l.b16 %v1141
        %v1174 = vunpack.c.h.b16 %v1141
        %v1175 = vunpack.c.l.b16 %v1142
        %v1176 = vunpack.c.h.b16 %v1142
        %v1177 = vunpack.c.l.b16 %v1143
        %v1178 = vunpack.c.h.b16 %v1143
        %v1179 = vunpack.c.l.b16 %v1144
        %v1180 = vunpack.c.h.b16 %v1144
        %v1181 = vunpack.c.l.b16 %v1145
        %v1182 = vunpack.c.h.b16 %v1145
        %v1183 = vunpack.c.l.b16 %v1146
        %v1184 = vunpack.c.h.b16 %v1146
        %v1185 = vunpack.c.l.b16 %v1147
        %v1186 = vunpack.c.h.b16 %v1147
        %v1187 = vunpack.c.l.b16 %v1148
        %v1188 = vunpack.c.h.b16 %v1148
        %v1189 = vunpack.c.l.b16 %v1149
        %v1190 = vunpack.c.h.b16 %v1149
        %v1191 = vunpack.c.l.b16 %v1150
        %v1192 = vunpack.c.h.b16 %v1150
        %v1193 = vunpack.c.l.b16 %v1151
        %v1194 = vunpack.c.h.b16 %v1151
        %v1195 = vunpack.c.l.b16 %v1152
        %v1196 = vunpack.c.h.b16 %v1152
        %v1197 = vunpack.c.l.b16 %v1153
        %v1198 = vunpack.c.h.b16 %v1153
        %v1199 = vunpack.c.l.b16 %v1154
        %v1200 = vunpack.c.h.b16 %v1154
        %v1201 = vunpack.c.l.b16 %v1155
        %v1202 = vunpack.c.h.b16 %v1155
        %v1203 = vunpack.c.l.b16 %v1156
        %v1204 = vunpack.c.h.b16 %v1156
        %v1205 = vpack.c.b16 %v1173, %v1173
        %v1206 = vpack.c.b16 %v1174, %v1174
        %v1207 = vpack.c.b16 %v1175, %v1175
        %v1208 = vpack.c.b16 %v1176, %v1176
        %v1209 = vpack.c.b16 %v1177, %v1177
        %v1210 = vpack.c.b16 %v1178, %v1178
        %v1211 = vpack.c.b16 %v1179, %v1179
        %v1212 = vpack.c.b16 %v1180, %v1180
        %v1213 = vpack.c.b16 %v1181, %v1181
        %v1214 = vpack.c.b16 %v1182, %v1182
        %v1215 = vpack.c.b16 %v1183, %v1183
        %v1216 = vpack.c.b16 %v1184, %v1184
        %v1217 = vpack.c.b16 %v1185, %v1185
        %v1218 = vpack.c.b16 %v1186, %v1186
        %v1219 = vpack.c.b16 %v1187, %v1187
        %v1220 = vpack.c.b16 %v1188, %v1188
        %v1221 = vpack.c.b16 %v1189, %v1189
        %v1222 = vpack.c.b16 %v1190, %v1190
        %v1223 = vpack.c.b16 %v1191, %v1191
        %v1224 = vpack.c.b16 %v1192, %v1192
        %v1225 = vpack.c.b16 %v1193, %v1193
        %v1226 = vpack.c.b16 %v1194, %v1194
        %v1227 = vpack.c.b16 %v1195, %v1195
        %v1228 = vpack.c.b16 %v1196, %v1196
        %v1229 = vpack.c.b16 %v1197, %v1197
        %v1230 = vpack.c.b16 %v1198, %v1198
        %v1231 = vpack.c.b16 %v1199, %v1199
        %v1232 = vpack.c.b16 %v1200, %v1200
        %v1233 = vpack.c.b16 %v1201, %v1201
        %v1234 = vpack.c.b16 %v1202, %v1202
        %v1235 = vpack.c.b16 %v1203, %v1203
        %v1236 = vpack.c.b16 %v1204, %v1204
        %1269 = vst [vmem:[%s288] sm:$0xf] %v1205
        %1270 = vst [vmem:[%s288 + $0x4] sm:$0xf] %v1206
        %1271 = vst [vmem:[%s288 + $0x8] sm:$0xf] %v1207
        %1272 = vst [vmem:[%s288 + $0xc] sm:$0xf] %v1208
        %1273 = vst [vmem:[%s288 + $0x10] sm:$0xf] %v1209
        %1274 = vst [vmem:[%s288 + $0x14] sm:$0xf] %v1210
        %1275 = vst [vmem:[%s288 + $0x18] sm:$0xf] %v1211
        %1276 = vst [vmem:[%s288 + $0x1c] sm:$0xf] %v1212
        %1277 = vst [vmem:[%s288 + $0x20] sm:$0xf] %v1213
        %1278 = vst [vmem:[%s288 + $0x24] sm:$0xf] %v1214
        %1279 = vst [vmem:[%s288 + $0x28] sm:$0xf] %v1215
        %1280 = vst [vmem:[%s288 + $0x2c] sm:$0xf] %v1216
        %1281 = vst [vmem:[%s288 + $0x30] sm:$0xf] %v1217
        %1282 = vst [vmem:[%s288 + $0x34] sm:$0xf] %v1218
        %1283 = vst [vmem:[%s288 + $0x38] sm:$0xf] %v1219
        %1284 = vst [vmem:[%s288 + $0x3c] sm:$0xf] %v1220
        %1285 = vst [vmem:[%s288 + $0x40] sm:$0xf] %v1221
        %1286 = vst [vmem:[%s288 + $0x44] sm:$0xf] %v1222
        %1287 = vst [vmem:[%s288 + $0x48] sm:$0xf] %v1223
        %1288 = vst [vmem:[%s288 + $0x4c] sm:$0xf] %v1224
        %1289 = vst [vmem:[%s288 + $0x50] sm:$0xf] %v1225
        %1290 = vst [vmem:[%s288 + $0x54] sm:$0xf] %v1226
        %1291 = vst [vmem:[%s288 + $0x58] sm:$0xf] %v1227
        %1292 = vst [vmem:[%s288 + $0x5c] sm:$0xf] %v1228
        %1293 = vst [vmem:[%s288 + $0x60] sm:$0xf] %v1229
        %1294 = vst [vmem:[%s288 + $0x64] sm:$0xf] %v1230
        %1295 = vst [vmem:[%s288 + $0x68] sm:$0xf] %v1231
        %1296 = vst [vmem:[%s288 + $0x6c] sm:$0xf] %v1232
        %1297 = vst [vmem:[%s288 + $0x70] sm:$0xf] %v1233
        %1298 = vst [vmem:[%s288 + $0x74] sm:$0xf] %v1234
        %1299 = vst [vmem:[%s288 + $0x78] sm:$0xf] %v1235
        %1300 = vst [vmem:[%s288 + $0x7c] sm:$0xf] %v1236
      $region40: #{_lambda_.7} parent=31 // pred_fallthru
        _
      %s1301 = smul.u32 32, %s21
      %p1302 = scmp.lt.s32.totalorder %s20, 1
      %s1303 = scalar_select %p1302, %s20, 1
      %p1304 = scmp.lt.s32.totalorder %s1301, 159
      %s1305 = scalar_select %p1304, %s1301, 159
      %p1306 = scmp.lt.s32.totalorder %s22, 0
      %s1307 = scalar_select %p1306, %s22, 0
      %s1308 = sadd.s32 %s1307, %s1305
      %s1309 = smul.addr %s1303, 160
      %s1310 = sadd.s32 %s1308, %s1309
      %s1311 = smul.addr %s1310, 4
      %s1312 = scalar_lea.vmem %s3, %s1311
      // Predicated region
      $region41: #{_lambda_.7} parent=31 // pred_check
        %p1313 = pneg %p146
      $region42: #{_lambda_.7} parent=31 // pred_check_branch
        %1315 = sbr.rel (%p1313) target = $region44
      $region43: #{_lambda_.7} parent=31 // pred_region
        %s1316 = smul.u32 32, %s21
      $region44: #{_lambda_.7} parent=31 // pred_fallthru
        _
    $region32: #{_lambda_.7} parent=5 // pred_fallthru
      _
    %p1317 = scmp.le.s32.totalorder 2, %s9
    // Predicated region
    $region45: #{_lambda_.7} parent=5 // pred_check
      %p1318 = pneg %p1317
    $region46: #{_lambda_.7} parent=5 // pred_check_branch
      %1320 = sbr.rel (%p1318) target = $region48
    $region47: #{_lambda_.7} parent=5 // pred_region
      %s1321 = ssub.s32 %s9, 2
      // Predicated region
      $region49: #{_lambda_.7} parent=47 // pred_check
        %p1322 = pneg %p152
      $region50: #{_lambda_.7} parent=47 // pred_check_branch
        %1324 = sbr.rel (%p1322) target = $region52
      $region51: #{_lambda_.7} parent=47 // pred_region
        %s1325 = smul.u32 32, %s25
        %p1326 = scmp.lt.s32.totalorder %s24, 1
        %s1327 = scalar_select %p1326, %s24, 1
        %p1328 = scmp.lt.s32.totalorder %s1325, 159
        %s1329 = scalar_select %p1328, %s1325, 159
        %p1330 = scmp.lt.s32.totalorder %s26, 0
        %s1331 = scalar_select %p1330, %s26, 0
        %s1332 = sadd.s32 %s1331, %s1329
        %s1333 = smul.addr %s1327, 160
        %s1334 = sadd.s32 %s1332, %s1333
        %s1335 = smul.addr %s1334, 4
        %s1336 = scalar_lea.vmem %s3, %s1335
      $region52: #{_lambda_.7} parent=47 // pred_fallthru
        _
    $region48: #{_lambda_.7} parent=5 // pred_fallthru
      _
  $region6: #{_lambda_.7} parent=0 // loop_footer
    %s13 = sadd.s32 1, %s9
  $region7: #{_lambda_.7} parent=0 // loop_footer_branch
    %8 = sbr.rel target = $region3
  $region8: #{_lambda_.7} parent=0 // loop_exit
    _

// kernel: _lambda_.9
$region0: #{_lambda_.9}
  #allocation0 [shape = 'u32[]', space=smem, size = 0x4, offset = 0x4, fixed_abs, tag = 'smem constant byte address 0x4 - core index']
  #allocation1 [shape = 'u32[144,128]{1,0:T(1,128)}', space=vmem, size = 0x12000, scoped, tag = 'internal scratch']
  %s0 = inlined_call_operand.vmem [shape: bf16[2,256,128], index: 0, kind: input, shape index: {}]
  %s1 = inlined_call_operand.vmem [shape: f32[2,1,128], index: 1, kind: input, shape index: {}]
  %s2 = inlined_call_operand.vmem [shape: f32[2,1,128], index: 2, kind: input, shape index: {}]
  %s3 = inlined_call_operand.vmem [shape: bf16[2,256,128], index: 3, kind: output, shape index: {}]
  %s4 = sld [smem:[#allocation0]]
  $region45: #{_lambda_.9} parent=0
    _
  %s6 = ssub.s32 1, %s4
  %s7 = scalar_select 0, %s6, %s4
  loop: start=0, step=1, limit=4
  $region2: #{_lambda_.9} parent=0 // loop_pre_header
    _
  $region3: #{_lambda_.9} parent=0 // loop_header
    %s9 = sphi 0, %s13
    %p10 = scmp.ge.s32.totalorder %s9, 4
    %s16 = sphi 0, %s35
    %s17 = sphi 0, %s31
    %s18 = sphi 0, %s27
    %s19 = sphi 0, %s16
    %s20 = sphi 0, %s17
    %s21 = sphi 0, %s18
    %s22 = sphi 0, %s19
    %s23 = sphi 0, %s20
    %s24 = sphi 0, %s21
    %s42 = sphi 0, %s44
    %s45 = sphi 0, %s42
    %s46 = sphi 0, %s45
    %s62 = sphi 0, %s46
    %s70 = sphi 0, %s72
    %s73 = sphi 0, %s70
    %s74 = sphi 0, %s73
    %s90 = sphi 0, %s74
    %s98 = sphi 0, %s100
    %s101 = sphi 0, %s98
    %s102 = sphi 0, %s101
    %s118 = sphi 0, %s102
    %s128 = sphi 0, %s130
    %s131 = sphi 0, %s128
    %s132 = sphi 0, %s131
    %s148 = sphi 0, %s132
  $region4: #{_lambda_.9} parent=0 // loop_header_branch
    %12 = sbr.rel (%p10) target = $region8
  $region5: #{_lambda_.9} parent=0 // loop_body
    %s14 = ssub.s32 %s9, 1
    %s15 = ssub.s32 %s9, 2
    %s25 = sadd.s32 1, %s18
    %p26 = scmp.ge.s32.totalorder %s25, 1
    %s27 = scalar_select %p26, 0, %s25
    %s28 = sadd.s32 1, %s17
    %s29 = scalar_select %p26, %s28, %s17
    %p30 = scmp.ge.s32.totalorder %s29, 1
    %s31 = scalar_select %p30, 0, %s29
    %s32 = sadd.s32 1, %s16
    %s33 = scalar_select %p30, %s32, %s16
    %p34 = scmp.ge.s32.totalorder %s33, 2
    %s35 = scalar_select %p34, 0, %s33
    %s36 = ssub.s32 %s16, %s35
    %s37 = ssub.s32 %s17, %s31
    %s38 = sor.u32 %s36, %s37
    %s39 = ssub.s32 %s18, %s27
    %s40 = sor.u32 %s38, %s39
    %p41 = scmp.eq.s32.totalorder %s40, 0
    %s43 = sadd.s32 %s42, 1
    %s44 = scalar_select %p41, %s42, %s43
    %p47 = pneg %p41
    %p48 = scmp.eq.s32.totalorder %s9, 1
    %p49 = por %p47, %p48
    %p50 = scmp.ne.s32.totalorder %s42, %s45
    %p51 = scmp.eq.s32.totalorder %s9, 0
    %p52 = por %p50, %p51
    %p53 = scmp.ne.s32.totalorder %s42, %s45
    %p54 = scmp.eq.s32.totalorder %s14, 1
    %p55 = por %p53, %p54
    %p56 = scmp.ne.s32.totalorder %s45, %s46
    %p57 = scmp.eq.s32.totalorder %s14, 0
    %p58 = por %p56, %p57
    %p59 = scmp.ne.s32.totalorder %s45, %s46
    %p60 = scmp.eq.s32.totalorder %s15, 1
    %p61 = por %p59, %p60
    %p63 = scmp.ne.s32.totalorder %s46, %s62
    %p64 = scmp.eq.s32.totalorder %s15, 0
    %p65 = por %p63, %p64
    %s66 = ssub.s32 %s16, %s35
    %s67 = ssub.s32 %s18, %s27
    %s68 = sor.u32 %s66, %s67
    %p69 = scmp.eq.s32.totalorder %s68, 0
    %s71 = sadd.s32 %s70, 1
    %s72 = scalar_select %p69, %s70, %s71
    %p75 = pneg %p69
    %p76 = scmp.eq.s32.totalorder %s9, 1
    %p77 = por %p75, %p76
    %p78 = scmp.ne.s32.totalorder %s70, %s73
    %p79 = scmp.eq.s32.totalorder %s9, 0
    %p80 = por %p78, %p79
    %p81 = scmp.ne.s32.totalorder %s70, %s73
    %p82 = scmp.eq.s32.totalorder %s14, 1
    %p83 = por %p81, %p82
    %p84 = scmp.ne.s32.totalorder %s73, %s74
    %p85 = scmp.eq.s32.totalorder %s14, 0
    %p86 = por %p84, %p85
    %p87 = scmp.ne.s32.totalorder %s73, %s74
    %p88 = scmp.eq.s32.totalorder %s15, 1
    %p89 = por %p87, %p88
    %p91 = scmp.ne.s32.totalorder %s74, %s90
    %p92 = scmp.eq.s32.totalorder %s15, 0
    %p93 = por %p91, %p92
    %s94 = ssub.s32 %s16, %s35
    %s95 = ssub.s32 %s18, %s27
    %s96 = sor.u32 %s94, %s95
    %p97 = scmp.eq.s32.totalorder %s96, 0
    %s99 = sadd.s32 %s98, 1
    %s100 = scalar_select %p97, %s98, %s99
    %p103 = pneg %p97
    %p104 = scmp.eq.s32.totalorder %s9, 1
    %p105 = por %p103, %p104
    %p106 = scmp.ne.s32.totalorder %s98, %s101
    %p107 = scmp.eq.s32.totalorder %s9, 0
    %p108 = por %p106, %p107
    %p109 = scmp.ne.s32.totalorder %s98, %s101
    %p110 = scmp.eq.s32.totalorder %s14, 1
    %p111 = por %p109, %p110
    %p112 = scmp.ne.s32.totalorder %s101, %s102
    %p113 = scmp.eq.s32.totalorder %s14, 0
    %p114 = por %p112, %p113
    %p115 = scmp.ne.s32.totalorder %s101, %s102
    %p116 = scmp.eq.s32.totalorder %s15, 1
    %p117 = por %p115, %p116
    %p119 = scmp.ne.s32.totalorder %s102, %s118
    %p120 = scmp.eq.s32.totalorder %s15, 0
    %p121 = por %p119, %p120
    %s122 = ssub.s32 %s16, %s35
    %s123 = ssub.s32 %s17, %s31
    %s124 = sor.u32 %s122, %s123
    %s125 = ssub.s32 %s18, %s27
    %s126 = sor.u32 %s124, %s125
    %p127 = scmp.eq.s32.totalorder %s126, 0
    %s129 = sadd.s32 %s128, 1
    %s130 = scalar_select %p127, %s128, %s129
    %p133 = pneg %p127
    %p134 = scmp.eq.s32.totalorder %s9, 1
    %p135 = por %p133, %p134
    %p136 = scmp.ne.s32.totalorder %s128, %s131
    %p137 = scmp.eq.s32.totalorder %s9, 0
    %p138 = por %p136, %p137
    %p139 = scmp.ne.s32.totalorder %s128, %s131
    %p140 = scmp.eq.s32.totalorder %s14, 1
    %p141 = por %p139, %p140
    %p142 = scmp.ne.s32.totalorder %s131, %s132
    %p143 = scmp.eq.s32.totalorder %s14, 0
    %p144 = por %p142, %p143
    %p145 = scmp.ne.s32.totalorder %s131, %s132
    %p146 = scmp.eq.s32.totalorder %s15, 1
    %p147 = por %p145, %p146
    %p149 = scmp.ne.s32.totalorder %s132, %s148
    %p150 = scmp.eq.s32.totalorder %s15, 0
    %p151 = por %p149, %p150
    %p152 = scmp.le.s32.totalorder 1, %s9
    %p153 = scmp.lt.s32.totalorder %s9, 3
    %p154 = pnand %p152, %p153
    %p155 = pneg %p154
    // Predicated region
    $region9: #{_lambda_.9} parent=5 // pred_check
      _
    $region10: #{_lambda_.9} parent=5 // pred_check_branch
      %157 = sbr.rel (%p154) target = $region12
    $region11: #{_lambda_.9} parent=5 // pred_region
      %s158 = ssub.s32 %s9, 1
    $region12: #{_lambda_.9} parent=5 // pred_fallthru
      _
    %p159 = scmp.lt.s32.totalorder %s9, 2
    // Predicated region
    $region13: #{_lambda_.9} parent=5 // pred_check
      %p160 = pneg %p159
    $region14: #{_lambda_.9} parent=5 // pred_check_branch
      %162 = sbr.rel (%p160) target = $region16
    $region15: #{_lambda_.9} parent=5 // pred_region
      // Predicated region
      $region17: #{_lambda_.9} parent=15 // pred_check
        %p163 = pneg %p52
      $region18: #{_lambda_.9} parent=15 // pred_check_branch
        %165 = sbr.rel (%p163) target = $region20
      $region19: #{_lambda_.9} parent=15 // pred_region
        %s166 = smul.u32 32, %s17
        %p167 = scmp.lt.s32.totalorder %s16, 1
        %s168 = scalar_select %p167, %s16, 1
        %p169 = scmp.lt.s32.totalorder %s166, 31
        %s170 = scalar_select %p169, %s166, 31
        %p171 = scmp.lt.s32.totalorder %s18, 0
        %s172 = scalar_select %p171, %s18, 0
        %s173 = sadd.s32 %s172, %s170
        %s174 = smul.addr %s168, 32
        %s175 = sadd.s32 %s173, %s174
        %s176 = smul.addr %s175, 4
        %s177 = scalar_lea.vmem %s0, %s176
        %s178 = smul.u32 32, %s17
      $region20: #{_lambda_.9} parent=15 // pred_fallthru
        _
      // Predicated region
      $region21: #{_lambda_.9} parent=15 // pred_check
        %p179 = pneg %p80
      $region22: #{_lambda_.9} parent=15 // pred_check_branch
        %181 = sbr.rel (%p179) target = $region24
      $region23: #{_lambda_.9} parent=15 // pred_region
        %p182 = scmp.lt.s32.totalorder %s16, 1
        %s183 = scalar_select %p182, %s16, 1
        %p184 = scmp.lt.s32.totalorder %s18, 0
        %s185 = scalar_select %p184, %s18, 0
        %s186 = sadd.s32 %s185, %s183
        %s187 = scalar_lea.vmem %s1, %s186
      $region24: #{_lambda_.9} parent=15 // pred_fallthru
        _
      // Predicated region
      $region25: #{_lambda_.9} parent=15 // pred_check
        %p188 = pneg %p108
      $region26: #{_lambda_.9} parent=15 // pred_check_branch
        %190 = sbr.rel (%p188) target = $region28
      $region27: #{_lambda_.9} parent=15 // pred_region
        %p191 = scmp.lt.s32.totalorder %s16, 1
        %s192 = scalar_select %p191, %s16, 1
        %p193 = scmp.lt.s32.totalorder %s18, 0
        %s194 = scalar_select %p193, %s18, 0
        %s195 = sadd.s32 %s194, %s192
        %s196 = scalar_lea.vmem %s2, %s195
      $region28: #{_lambda_.9} parent=15 // pred_fallthru
        _
    $region16: #{_lambda_.9} parent=5 // pred_fallthru
      _
    %p197 = scmp.le.s32.totalorder 1, %s9
    %p198 = scmp.lt.s32.totalorder %s9, 3
    %p199 = pnand %p197, %p198
    %p200 = pneg %p199
    // Predicated region
    $region29: #{_lambda_.9} parent=5 // pred_check
      _
    $region30: #{_lambda_.9} parent=5 // pred_check_branch
      %202 = sbr.rel (%p199) target = $region32
    $region31: #{_lambda_.9} parent=5 // pred_region
      %s203 = ssub.s32 %s9, 1
      %s204 = smul.u32 32, %s20
      %p205 = scmp.lt.s32.totalorder %s19, 1
      %s206 = scalar_select %p205, %s19, 1
      %p207 = scmp.lt.s32.totalorder %s204, 31
      %s208 = scalar_select %p207, %s204, 31
      %p209 = scmp.lt.s32.totalorder %s21, 0
      %s210 = scalar_select %p209, %s21, 0
      %s211 = sadd.s32 %s210, %s208
      %s212 = smul.addr %s206, 32
      %s213 = sadd.s32 %s211, %s212
      %s214 = smul.addr %s213, 4
      %s215 = scalar_lea.vmem %s0, %s214
      %p216 = pneg %p58
      %p217 = pneg %p55
      %p218 = scmp.lt.s32.totalorder %s19, 1
      %s219 = scalar_select %p218, %s19, 1
      %p220 = scmp.lt.s32.totalorder %s21, 0
      %s221 = scalar_select %p220, %s21, 0
      %s222 = sadd.s32 %s221, %s219
      %s223 = scalar_lea.vmem %s1, %s222
      %p224 = pneg %p86
      %p225 = pneg %p83
      %p226 = scmp.lt.s32.totalorder %s19, 1
      %s227 = scalar_select %p226, %s19, 1
      %p228 = scmp.lt.s32.totalorder %s21, 0
      %s229 = scalar_select %p228, %s21, 0
      %s230 = sadd.s32 %s229, %s227
      %s231 = scalar_lea.vmem %s2, %s230
      %p232 = pneg %p114
      %p233 = pneg %p111
      %p234 = pneg %p144
      %p235 = pneg %p141
      %s236 = smul.u32 32, %s20
      %p237 = scmp.lt.s32.totalorder %s19, 1
      %s238 = scalar_select %p237, %s19, 1
      %p239 = scmp.lt.s32.totalorder %s236, 31
      %s240 = scalar_select %p239, %s236, 31
      %p241 = scmp.lt.s32.totalorder %s21, 0
      %s242 = scalar_select %p241, %s21, 0
      %s243 = sadd.s32 %s242, %s240
      %s244 = smul.addr %s238, 32
      %s245 = sadd.s32 %s243, %s244
      %s246 = smul.addr %s245, 4
      %s247 = scalar_lea.vmem %s3, %s246
      %s248 = smul.u32 32, %s20
      %p249 = scmp.lt.s32.totalorder %s19, 1
      %s250 = scalar_select %p249, %s19, 1
      %p251 = scmp.lt.s32.totalorder %s248, 31
      %s252 = scalar_select %p251, %s248, 31
      %p253 = scmp.lt.s32.totalorder %s21, 0
      %s254 = scalar_select %p253, %s21, 0
      %s255 = sadd.s32 %s254, %s252
      %s256 = smul.addr %s250, 32
      %s257 = sadd.s32 %s255, %s256
      %s258 = smul.addr %s257, 4
      %s259 = scalar_lea.vmem %s0, %s258
      %s260 = smul.u32 32, %s20
      %p261 = scmp.lt.s32.totalorder %s19, 1
      %s262 = scalar_select %p261, %s19, 1
      %p263 = scmp.lt.s32.totalorder %s21, 0
      %s264 = scalar_select %p263, %s21, 0
      %s265 = sadd.s32 %s264, %s262
      %s266 = scalar_lea.vmem %s1, %s265
      %p267 = scmp.lt.s32.totalorder %s19, 1
      %s268 = scalar_select %p267, %s19, 1
      %p269 = scmp.lt.s32.totalorder %s21, 0
      %s270 = scalar_select %p269, %s21, 0
      %s271 = sadd.s32 %s270, %s268
      %s272 = scalar_lea.vmem %s2, %s271
      %s273 = smul.u32 32, %s20
      %p274 = scmp.lt.s32.totalorder %s19, 1
      %s275 = scalar_select %p274, %s19, 1
      %p276 = scmp.lt.s32.totalorder %s273, 31
      %s277 = scalar_select %p276, %s273, 31
      %p278 = scmp.lt.s32.totalorder %s21, 0
      %s279 = scalar_select %p278, %s21, 0
      %s280 = sadd.s32 %s279, %s277
      %s281 = smul.addr %s275, 32
      %s282 = sadd.s32 %s280, %s281
      %s283 = smul.addr %s282, 4
      %s284 = scalar_lea.vmem %s3, %s283
      %s285 = smul.u32 32, %s20
      %v286 = vld [vmem:[%s259] sm:$0xf]
      %v287 = vld [vmem:[%s259 + $0x4] sm:$0xf]
      %v288 = vld [vmem:[%s259 + $0x8] sm:$0xf]
      %v289 = vld [vmem:[%s259 + $0xc] sm:$0xf]
      %v290 = vld [vmem:[%s259 + $0x10] sm:$0xf]
      %v291 = vld [vmem:[%s259 + $0x14] sm:$0xf]
      %v292 = vld [vmem:[%s259 + $0x18] sm:$0xf]
      %v293 = vld [vmem:[%s259 + $0x1c] sm:$0xf]
      %v294 = vld [vmem:[%s259 + $0x20] sm:$0xf]
      %v295 = vld [vmem:[%s259 + $0x24] sm:$0xf]
      %v296 = vld [vmem:[%s259 + $0x28] sm:$0xf]
      %v297 = vld [vmem:[%s259 + $0x2c] sm:$0xf]
      %v298 = vld [vmem:[%s259 + $0x30] sm:$0xf]
      %v299 = vld [vmem:[%s259 + $0x34] sm:$0xf]
      %v300 = vld [vmem:[%s259 + $0x38] sm:$0xf]
      %v301 = vld [vmem:[%s259 + $0x3c] sm:$0xf]
      %v302 = vld [vmem:[%s259 + $0x40] sm:$0xf]
      %v303 = vld [vmem:[%s259 + $0x44] sm:$0xf]
      %v304 = vld [vmem:[%s259 + $0x48] sm:$0xf]
      %v305 = vld [vmem:[%s259 + $0x4c] sm:$0xf]
      %v306 = vld [vmem:[%s259 + $0x50] sm:$0xf]
      %v307 = vld [vmem:[%s259 + $0x54] sm:$0xf]
      %v308 = vld [vmem:[%s259 + $0x58] sm:$0xf]
      %v309 = vld [vmem:[%s259 + $0x5c] sm:$0xf]
      %v310 = vld [vmem:[%s259 + $0x60] sm:$0xf]
      %v311 = vld [vmem:[%s259 + $0x64] sm:$0xf]
      %v312 = vld [vmem:[%s259 + $0x68] sm:$0xf]
      %v313 = vld [vmem:[%s259 + $0x6c] sm:$0xf]
      %v314 = vld [vmem:[%s259 + $0x70] sm:$0xf]
      %v315 = vld [vmem:[%s259 + $0x74] sm:$0xf]
      %v316 = vld [vmem:[%s259 + $0x78] sm:$0xf]
      %v317 = vld [vmem:[%s259 + $0x7c] sm:$0xf]
      %v318 = vunpack.c.l.bf16 %v286
      %v319 = vunpack.c.l.bf16 %v287
      %v320 = vunpack.c.l.bf16 %v288
      %v321 = vunpack.c.l.bf16 %v289
      %v322 = vunpack.c.l.bf16 %v290
      %v323 = vunpack.c.l.bf16 %v291
      %v324 = vunpack.c.l.bf16 %v292
      %v325 = vunpack.c.l.bf16 %v293
      %v326 = vunpack.c.l.bf16 %v294
      %v327 = vunpack.c.l.bf16 %v295
      %v328 = vunpack.c.l.bf16 %v296
      %v329 = vunpack.c.l.bf16 %v297
      %v330 = vunpack.c.l.bf16 %v298
      %v331 = vunpack.c.l.bf16 %v299
      %v332 = vunpack.c.l.bf16 %v300
      %v333 = vunpack.c.l.bf16 %v301
      %v334 = vunpack.c.l.bf16 %v302
      %v335 = vunpack.c.l.bf16 %v303
      %v336 = vunpack.c.l.bf16 %v304
      %v337 = vunpack.c.l.bf16 %v305
      %v338 = vunpack.c.l.bf16 %v306
      %v339 = vunpack.c.l.bf16 %v307
      %v340 = vunpack.c.l.bf16 %v308
      %v341 = vunpack.c.l.bf16 %v309
      %v342 = vunpack.c.l.bf16 %v310
      %v343 = vunpack.c.l.bf16 %v311
      %v344 = vunpack.c.l.bf16 %v312
      %v345 = vunpack.c.l.bf16 %v313
      %v346 = vunpack.c.l.bf16 %v314
      %v347 = vunpack.c.l.bf16 %v315
      %v348 = vunpack.c.l.bf16 %v316
      %v349 = vunpack.c.l.bf16 %v317
      %v350 = vld [vmem:[%s266] sm:$0x1]
      %v352 = vlaneseq
      %v353 = vshrl.u32 %v352, 7
      %v354 = vsub.s32 0, %v353
      %v355 = vrot.slane %v350, %v354
      %v357 = vmul.f32 %v318, %v355
      %v358 = vmul.f32 %v319, %v355
      %v359 = vmul.f32 %v320, %v355
      %v360 = vmul.f32 %v321, %v355
      %v361 = vmul.f32 %v322, %v355
      %v362 = vmul.f32 %v323, %v355
      %v363 = vmul.f32 %v324, %v355
      %v364 = vmul.f32 %v325, %v355
      %v365 = vmul.f32 %v326, %v355
      %v366 = vmul.f32 %v327, %v355
      %v367 = vmul.f32 %v328, %v355
      %v368 = vmul.f32 %v329, %v355
      %v369 = vmul.f32 %v330, %v355
      %v370 = vmul.f32 %v331, %v355
      %v371 = vmul.f32 %v332, %v355
      %v372 = vmul.f32 %v333, %v355
      %v373 = vmul.f32 %v334, %v355
      %v374 = vmul.f32 %v335, %v355
      %v375 = vmul.f32 %v336, %v355
      %v376 = vmul.f32 %v337, %v355
      %v377 = vmul.f32 %v338, %v355
      %v378 = vmul.f32 %v339, %v355
      %v379 = vmul.f32 %v340, %v355
      %v380 = vmul.f32 %v341, %v355
      %v381 = vmul.f32 %v342, %v355
      %v382 = vmul.f32 %v343, %v355
      %v383 = vmul.f32 %v344, %v355
      %v384 = vmul.f32 %v345, %v355
      %v385 = vmul.f32 %v346, %v355
      %v386 = vmul.f32 %v347, %v355
      %v387 = vmul.f32 %v348, %v355
      %v388 = vmul.f32 %v349, %v355
      %v389 = vld [vmem:[%s272] sm:$0x1]
      %v391 = vlaneseq
      %v392 = vshrl.u32 %v391, 7
      %v393 = vsub.s32 0, %v392
      %v394 = vrot.slane %v389, %v393
      %v396 = vadd.f32 %v357, %v394
      %v397 = vadd.f32 %v358, %v394
      %v398 = vadd.f32 %v359, %v394
      %v399 = vadd.f32 %v360, %v394
      %v400 = vadd.f32 %v361, %v394
      %v401 = vadd.f32 %v362, %v394
      %v402 = vadd.f32 %v363, %v394
      %v403 = vadd.f32 %v364, %v394
      %v404 = vadd.f32 %v365, %v394
      %v405 = vadd.f32 %v366, %v394
      %v406 = vadd.f32 %v367, %v394
      %v407 = vadd.f32 %v368, %v394
      %v408 = vadd.f32 %v369, %v394
      %v409 = vadd.f32 %v370, %v394
      %v410 = vadd.f32 %v371, %v394
      %v411 = vadd.f32 %v372, %v394
      %v412 = vadd.f32 %v373, %v394
      %v413 = vadd.f32 %v374, %v394
      %v414 = vadd.f32 %v375, %v394
      %v415 = vadd.f32 %v376, %v394
      %v416 = vadd.f32 %v377, %v394
      %v417 = vadd.f32 %v378, %v394
      %v418 = vadd.f32 %v379, %v394
      %v419 = vadd.f32 %v380, %v394
      %v420 = vadd.f32 %v381, %v394
      %v421 = vadd.f32 %v382, %v394
      %v422 = vadd.f32 %v383, %v394
      %v423 = vadd.f32 %v384, %v394
      %v424 = vadd.f32 %v385, %v394
      %v425 = vadd.f32 %v386, %v394
      %v426 = vadd.f32 %v387, %v394
      %v427 = vadd.f32 %v388, %v394
      %vm428 = vcmp.ge.f32.partialorder %v396, 0.0
      %vm429 = vcmp.ge.f32.partialorder %v397, 0.0
      %vm430 = vcmp.ge.f32.partialorder %v398, 0.0
      %vm431 = vcmp.ge.f32.partialorder %v399, 0.0
      %vm432 = vcmp.ge.f32.partialorder %v400, 0.0
      %vm433 = vcmp.ge.f32.partialorder %v401, 0.0
      %vm434 = vcmp.ge.f32.partialorder %v402, 0.0
      %vm435 = vcmp.ge.f32.partialorder %v403, 0.0
      %vm436 = vcmp.ge.f32.partialorder %v404, 0.0
      %vm437 = vcmp.ge.f32.partialorder %v405, 0.0
      %vm438 = vcmp.ge.f32.partialorder %v406, 0.0
      %vm439 = vcmp.ge.f32.partialorder %v407, 0.0
      %vm440 = vcmp.ge.f32.partialorder %v408, 0.0
      %vm441 = vcmp.ge.f32.partialorder %v409, 0.0
      %vm442 = vcmp.ge.f32.partialorder %v410, 0.0
      %vm443 = vcmp.ge.f32.partialorder %v411, 0.0
      %vm444 = vcmp.ge.f32.partialorder %v412, 0.0
      %vm445 = vcmp.ge.f32.partialorder %v413, 0.0
      %vm446 = vcmp.ge.f32.partialorder %v414, 0.0
      %vm447 = vcmp.ge.f32.partialorder %v415, 0.0
      %vm448 = vcmp.ge.f32.partialorder %v416, 0.0
      %vm449 = vcmp.ge.f32.partialorder %v417, 0.0
      %vm450 = vcmp.ge.f32.partialorder %v418, 0.0
      %vm451 = vcmp.ge.f32.partialorder %v419, 0.0
      %vm452 = vcmp.ge.f32.partialorder %v420, 0.0
      %vm453 = vcmp.ge.f32.partialorder %v421, 0.0
      %vm454 = vcmp.ge.f32.partialorder %v422, 0.0
      %vm455 = vcmp.ge.f32.partialorder %v423, 0.0
      %vm456 = vcmp.ge.f32.partialorder %v424, 0.0
      %vm457 = vcmp.ge.f32.partialorder %v425, 0.0
      %vm458 = vcmp.ge.f32.partialorder %v426, 0.0
      %vm459 = vcmp.ge.f32.partialorder %v427, 0.0
      %v460 = vmul.f32 %v396, 0.2
      %v461 = vmul.f32 %v397, 0.2
      %v462 = vmul.f32 %v398, 0.2
      %v463 = vmul.f32 %v399, 0.2
      %v464 = vmul.f32 %v400, 0.2
      %v465 = vmul.f32 %v401, 0.2
      %v466 = vmul.f32 %v402, 0.2
      %v467 = vmul.f32 %v403, 0.2
      %v468 = vmul.f32 %v404, 0.2
      %v469 = vmul.f32 %v405, 0.2
      %v470 = vmul.f32 %v406, 0.2
      %v471 = vmul.f32 %v407, 0.2
      %v472 = vmul.f32 %v408, 0.2
      %v473 = vmul.f32 %v409, 0.2
      %v474 = vmul.f32 %v410, 0.2
      %v475 = vmul.f32 %v411, 0.2
      %v476 = vmul.f32 %v412, 0.2
      %v477 = vmul.f32 %v413, 0.2
      %v478 = vmul.f32 %v414, 0.2
      %v479 = vmul.f32 %v415, 0.2
      %v480 = vmul.f32 %v416, 0.2
      %v481 = vmul.f32 %v417, 0.2
      %v482 = vmul.f32 %v418, 0.2
      %v483 = vmul.f32 %v419, 0.2
      %v484 = vmul.f32 %v420, 0.2
      %v485 = vmul.f32 %v421, 0.2
      %v486 = vmul.f32 %v422, 0.2
      %v487 = vmul.f32 %v423, 0.2
      %v488 = vmul.f32 %v424, 0.2
      %v489 = vmul.f32 %v425, 0.2
      %v490 = vmul.f32 %v426, 0.2
      %v491 = vmul.f32 %v427, 0.2
      %v492 = vsel %vm428, %v396, %v460
      %v493 = vsel %vm429, %v397, %v461
      %v494 = vsel %vm430, %v398, %v462
      %v495 = vsel %vm431, %v399, %v463
      %v496 = vsel %vm432, %v400, %v464
      %v497 = vsel %vm433, %v401, %v465
      %v498 = vsel %vm434, %v402, %v466
      %v499 = vsel %vm435, %v403, %v467
      %v500 = vsel %vm436, %v404, %v468
      %v501 = vsel %vm437, %v405, %v469
      %v502 = vsel %vm438, %v406, %v470
      %v503 = vsel %vm439, %v407, %v471
      %v504 = vsel %vm440, %v408, %v472
      %v505 = vsel %vm441, %v409, %v473
      %v506 = vsel %vm442, %v410, %v474
      %v507 = vsel %vm443, %v411, %v475
      %v508 = vsel %vm444, %v412, %v476
      %v509 = vsel %vm445, %v413, %v477
      %v510 = vsel %vm446, %v414, %v478
      %v511 = vsel %vm447, %v415, %v479
      %v512 = vsel %vm448, %v416, %v480
      %v513 = vsel %vm449, %v417, %v481
      %v514 = vsel %vm450, %v418, %v482
      %v515 = vsel %vm451, %v419, %v483
      %v516 = vsel %vm452, %v420, %v484
      %v517 = vsel %vm453, %v421, %v485
      %v518 = vsel %vm454, %v422, %v486
      %v519 = vsel %vm455, %v423, %v487
      %v520 = vsel %vm456, %v424, %v488
      %v521 = vsel %vm457, %v425, %v489
      %v522 = vsel %vm458, %v426, %v490
      %v523 = vsel %vm459, %v427, %v491
      %v524 = vpack.c.bf16 %v493, %v492
      %v525 = vpack.c.bf16 %v495, %v494
      %v526 = vpack.c.bf16 %v497, %v496
      %v527 = vpack.c.bf16 %v499, %v498
      %v528 = vpack.c.bf16 %v501, %v500
      %v529 = vpack.c.bf16 %v503, %v502
      %v530 = vpack.c.bf16 %v505, %v504
      %v531 = vpack.c.bf16 %v507, %v506
      %v532 = vpack.c.bf16 %v509, %v508
      %v533 = vpack.c.bf16 %v511, %v510
      %v534 = vpack.c.bf16 %v513, %v512
      %v535 = vpack.c.bf16 %v515, %v514
      %v536 = vpack.c.bf16 %v517, %v516
      %v537 = vpack.c.bf16 %v519, %v518
      %v538 = vpack.c.bf16 %v521, %v520
      %v539 = vpack.c.bf16 %v523, %v522
      %v556 = vunpack.c.l.b16 %v524
      %v557 = vunpack.c.h.b16 %v524
      %v558 = vunpack.c.l.b16 %v525
      %v559 = vunpack.c.h.b16 %v525
      %v560 = vunpack.c.l.b16 %v526
      %v561 = vunpack.c.h.b16 %v526
      %v562 = vunpack.c.l.b16 %v527
      %v563 = vunpack.c.h.b16 %v527
      %v564 = vunpack.c.l.b16 %v528
      %v565 = vunpack.c.h.b16 %v528
      %v566 = vunpack.c.l.b16 %v529
      %v567 = vunpack.c.h.b16 %v529
      %v568 = vunpack.c.l.b16 %v530
      %v569 = vunpack.c.h.b16 %v530
      %v570 = vunpack.c.l.b16 %v531
      %v571 = vunpack.c.h.b16 %v531
      %v572 = vunpack.c.l.b16 %v532
      %v573 = vunpack.c.h.b16 %v532
      %v574 = vunpack.c.l.b16 %v533
      %v575 = vunpack.c.h.b16 %v533
      %v576 = vunpack.c.l.b16 %v534
      %v577 = vunpack.c.h.b16 %v534
      %v578 = vunpack.c.l.b16 %v535
      %v579 = vunpack.c.h.b16 %v535
      %v580 = vunpack.c.l.b16 %v536
      %v581 = vunpack.c.h.b16 %v536
      %v582 = vunpack.c.l.b16 %v537
      %v583 = vunpack.c.h.b16 %v537
      %v584 = vunpack.c.l.b16 %v538
      %v585 = vunpack.c.h.b16 %v538
      %v586 = vunpack.c.l.b16 %v539
      %v587 = vunpack.c.h.b16 %v539
      %v588 = vpack.c.b16 %v556, %v556
      %v589 = vpack.c.b16 %v557, %v557
      %v590 = vpack.c.b16 %v558, %v558
      %v591 = vpack.c.b16 %v559, %v559
      %v592 = vpack.c.b16 %v560, %v560
      %v593 = vpack.c.b16 %v561, %v561
      %v594 = vpack.c.b16 %v562, %v562
      %v595 = vpack.c.b16 %v563, %v563
      %v596 = vpack.c.b16 %v564, %v564
      %v597 = vpack.c.b16 %v565, %v565
      %v598 = vpack.c.b16 %v566, %v566
      %v599 = vpack.c.b16 %v567, %v567
      %v600 = vpack.c.b16 %v568, %v568
      %v601 = vpack.c.b16 %v569, %v569
      %v602 = vpack.c.b16 %v570, %v570
      %v603 = vpack.c.b16 %v571, %v571
      %v604 = vpack.c.b16 %v572, %v572
      %v605 = vpack.c.b16 %v573, %v573
      %v606 = vpack.c.b16 %v574, %v574
      %v607 = vpack.c.b16 %v575, %v575
      %v608 = vpack.c.b16 %v576, %v576
      %v609 = vpack.c.b16 %v577, %v577
      %v610 = vpack.c.b16 %v578, %v578
      %v611 = vpack.c.b16 %v579, %v579
      %v612 = vpack.c.b16 %v580, %v580
      %v613 = vpack.c.b16 %v581, %v581
      %v614 = vpack.c.b16 %v582, %v582
      %v615 = vpack.c.b16 %v583, %v583
      %v616 = vpack.c.b16 %v584, %v584
      %v617 = vpack.c.b16 %v585, %v585
      %v618 = vpack.c.b16 %v586, %v586
      %v619 = vpack.c.b16 %v587, %v587
      %652 = vst [vmem:[%s284] sm:$0xf] %v588
      %653 = vst [vmem:[%s284 + $0x4] sm:$0xf] %v589
      %654 = vst [vmem:[%s284 + $0x8] sm:$0xf] %v590
      %655 = vst [vmem:[%s284 + $0xc] sm:$0xf] %v591
      %656 = vst [vmem:[%s284 + $0x10] sm:$0xf] %v592
      %657 = vst [vmem:[%s284 + $0x14] sm:$0xf] %v593
      %658 = vst [vmem:[%s284 + $0x18] sm:$0xf] %v594
      %659 = vst [vmem:[%s284 + $0x1c] sm:$0xf] %v595
      %660 = vst [vmem:[%s284 + $0x20] sm:$0xf] %v596
      %661 = vst [vmem:[%s284 + $0x24] sm:$0xf] %v597
      %662 = vst [vmem:[%s284 + $0x28] sm:$0xf] %v598
      %663 = vst [vmem:[%s284 + $0x2c] sm:$0xf] %v599
      %664 = vst [vmem:[%s284 + $0x30] sm:$0xf] %v600
      %665 = vst [vmem:[%s284 + $0x34] sm:$0xf] %v601
      %666 = vst [vmem:[%s284 + $0x38] sm:$0xf] %v602
      %667 = vst [vmem:[%s284 + $0x3c] sm:$0xf] %v603
      %668 = vst [vmem:[%s284 + $0x40] sm:$0xf] %v604
      %669 = vst [vmem:[%s284 + $0x44] sm:$0xf] %v605
      %670 = vst [vmem:[%s284 + $0x48] sm:$0xf] %v606
      %671 = vst [vmem:[%s284 + $0x4c] sm:$0xf] %v607
      %672 = vst [vmem:[%s284 + $0x50] sm:$0xf] %v608
      %673 = vst [vmem:[%s284 + $0x54] sm:$0xf] %v609
      %674 = vst [vmem:[%s284 + $0x58] sm:$0xf] %v610
      %675 = vst [vmem:[%s284 + $0x5c] sm:$0xf] %v611
      %676 = vst [vmem:[%s284 + $0x60] sm:$0xf] %v612
      %677 = vst [vmem:[%s284 + $0x64] sm:$0xf] %v613
      %678 = vst [vmem:[%s284 + $0x68] sm:$0xf] %v614
      %679 = vst [vmem:[%s284 + $0x6c] sm:$0xf] %v615
      %680 = vst [vmem:[%s284 + $0x70] sm:$0xf] %v616
      %681 = vst [vmem:[%s284 + $0x74] sm:$0xf] %v617
      %682 = vst [vmem:[%s284 + $0x78] sm:$0xf] %v618
      %683 = vst [vmem:[%s284 + $0x7c] sm:$0xf] %v619
      %s684 = smul.u32 32, %s20
      %p685 = scmp.lt.s32.totalorder %s19, 1
      %s686 = scalar_select %p685, %s19, 1
      %p687 = scmp.lt.s32.totalorder %s684, 31
      %s688 = scalar_select %p687, %s684, 31
      %p689 = scmp.lt.s32.totalorder %s21, 0
      %s690 = scalar_select %p689, %s21, 0
      %s691 = sadd.s32 %s690, %s688
      %s692 = smul.addr %s686, 32
      %s693 = sadd.s32 %s691, %s692
      %s694 = smul.addr %s693, 4
      %s695 = scalar_lea.vmem %s3, %s694
      // Predicated region
      $region33: #{_lambda_.9} parent=31 // pred_check
        %p696 = pneg %p141
      $region34: #{_lambda_.9} parent=31 // pred_check_branch
        %698 = sbr.rel (%p696) target = $region36
      $region35: #{_lambda_.9} parent=31 // pred_region
        %s699 = smul.u32 32, %s20
      $region36: #{_lambda_.9} parent=31 // pred_fallthru
        _
    $region32: #{_lambda_.9} parent=5 // pred_fallthru
      _
    %p700 = scmp.le.s32.totalorder 2, %s9
    // Predicated region
    $region37: #{_lambda_.9} parent=5 // pred_check
      %p701 = pneg %p700
    $region38: #{_lambda_.9} parent=5 // pred_check_branch
      %703 = sbr.rel (%p701) target = $region40
    $region39: #{_lambda_.9} parent=5 // pred_region
      %s704 = ssub.s32 %s9, 2
      // Predicated region
      $region41: #{_lambda_.9} parent=39 // pred_check
        %p705 = pneg %p147
      $region42: #{_lambda_.9} parent=39 // pred_check_branch
        %707 = sbr.rel (%p705) target = $region44
      $region43: #{_lambda_.9} parent=39 // pred_region
        %s708 = smul.u32 32, %s23
        %p709 = scmp.lt.s32.totalorder %s22, 1
        %s710 = scalar_select %p709, %s22, 1
        %p711 = scmp.lt.s32.totalorder %s708, 31
        %s712 = scalar_select %p711, %s708, 31
        %p713 = scmp.lt.s32.totalorder %s24, 0
        %s714 = scalar_select %p713, %s24, 0
        %s715 = sadd.s32 %s714, %s712
        %s716 = smul.addr %s710, 32
        %s717 = sadd.s32 %s715, %s716
        %s718 = smul.addr %s717, 4
        %s719 = scalar_lea.vmem %s3, %s718
      $region44: #{_lambda_.9} parent=39 // pred_fallthru
        _
    $region40: #{_lambda_.9} parent=5 // pred_fallthru
      _
  $region6: #{_lambda_.9} parent=0 // loop_footer
    %s13 = sadd.s32 1, %s9
  $region7: #{_lambda_.9} parent=0 // loop_footer_branch
    %8 = sbr.rel target = $region3
  $region8: #{_lambda_.9} parent=0 // loop_exit
    _

// kernel: _lambda_.8
$region0: #{_lambda_.8}
  #allocation0 [shape = 'u32[]', space=smem, size = 0x4, offset = 0x4, fixed_abs, tag = 'smem constant byte address 0x4 - core index']
  #allocation1 [shape = 'u32[144,128]{1,0:T(1,128)}', space=vmem, size = 0x12000, scoped, tag = 'internal scratch']
  #allocation2 [shape = 'f32[256,128]{1,0:T(8,128)}', space=vmem, size = 0x20000, scoped, tag = 'scratch operand']
  %s0 = inlined_call_operand.vmem [shape: bf16[2,256,256], index: 0, kind: input, shape index: {}]
  %s1 = inlined_call_operand.vmem [shape: bf16[256,128], index: 1, kind: input, shape index: {}]
  %s2 = inlined_call_operand.vmem [shape: f32[1,128], index: 2, kind: input, shape index: {}]
  %s3 = inlined_call_operand.vmem [shape: bf16[2,256,128], index: 3, kind: output, shape index: {0}]
  %s4 = inlined_call_operand.vmem [shape: f32[2,1,1,128], index: 4, kind: output, shape index: {1}]
  %s5 = inlined_call_operand.vmem [shape: f32[2,1,1,128], index: 5, kind: output, shape index: {2}]
  %6 = xla_tuple %s3, %s4, %s5
  %s7 = sld [smem:[#allocation0]]
  $region69: #{_lambda_.8} parent=0
    _
  %s9 = ssub.s32 1, %s7
  %s10 = scalar_select 0, %s9, %s7
  loop: start=0, step=1, limit=4
  $region2: #{_lambda_.8} parent=0 // loop_pre_header
    _
  $region3: #{_lambda_.8} parent=0 // loop_header
    %s12 = sphi 0, %s16
    %p13 = scmp.ge.s32.totalorder %s12, 4
    %s19 = sphi 0, %s45
    %s20 = sphi 0, %s41
    %s21 = sphi 0, %s37
    %s22 = sphi 0, %s33
    %s23 = sphi 0, %s19
    %s24 = sphi 0, %s20
    %s25 = sphi 0, %s21
    %s26 = sphi 0, %s22
    %s27 = sphi 0, %s23
    %s28 = sphi 0, %s24
    %s29 = sphi 0, %s25
    %s30 = sphi 0, %s26
    %s52 = sphi 0, %s54
    %s55 = sphi 0, %s52
    %s56 = sphi 0, %s55
    %s72 = sphi 0, %s56
    %s80 = sphi 0, %s82
    %s83 = sphi 0, %s80
    %s84 = sphi 0, %s83
    %s100 = sphi 0, %s84
    %s106 = sphi 0, %s108
    %s109 = sphi 0, %s106
    %s110 = sphi 0, %s109
    %s126 = sphi 0, %s110
    %s136 = sphi 0, %s138
    %s139 = sphi 0, %s136
    %s140 = sphi 0, %s139
    %s156 = sphi 0, %s140
    %s166 = sphi 0, %s168
    %s169 = sphi 0, %s166
    %s170 = sphi 0, %s169
    %s186 = sphi 0, %s170
    %s196 = sphi 0, %s198
    %s199 = sphi 0, %s196
    %s200 = sphi 0, %s199
    %s216 = sphi 0, %s200
  $region4: #{_lambda_.8} parent=0 // loop_header_branch
    %15 = sbr.rel (%p13) target = $region8
  $region5: #{_lambda_.8} parent=0 // loop_body
    %s17 = ssub.s32 %s12, 1
    %s18 = ssub.s32 %s12, 2
    %s31 = sadd.s32 1, %s22
    %p32 = scmp.ge.s32.totalorder %s31, 1
    %s33 = scalar_select %p32, 0, %s31
    %s34 = sadd.s32 1, %s21
    %s35 = scalar_select %p32, %s34, %s21
    %p36 = scmp.ge.s32.totalorder %s35, 1
    %s37 = scalar_select %p36, 0, %s35
    %s38 = sadd.s32 1, %s20
    %s39 = scalar_select %p36, %s38, %s20
    %p40 = scmp.ge.s32.totalorder %s39, 1
    %s41 = scalar_select %p40, 0, %s39
    %s42 = sadd.s32 1, %s19
    %s43 = scalar_select %p40, %s42, %s19
    %p44 = scmp.ge.s32.totalorder %s43, 2
    %s45 = scalar_select %p44, 0, %s43
    %s46 = ssub.s32 %s19, %s45
    %s47 = ssub.s32 %s20, %s41
    %s48 = sor.u32 %s46, %s47
    %s49 = ssub.s32 %s22, %s33
    %s50 = sor.u32 %s48, %s49
    %p51 = scmp.eq.s32.totalorder %s50, 0
    %s53 = sadd.s32 %s52, 1
    %s54 = scalar_select %p51, %s52, %s53
    %p57 = pneg %p51
    %p58 = scmp.eq.s32.totalorder %s12, 1
    %p59 = por %p57, %p58
    %p60 = scmp.ne.s32.totalorder %s52, %s55
    %p61 = scmp.eq.s32.totalorder %s12, 0
    %p62 = por %p60, %p61
    %p63 = scmp.ne.s32.totalorder %s52, %s55
    %p64 = scmp.eq.s32.totalorder %s17, 1
    %p65 = por %p63, %p64
    %p66 = scmp.ne.s32.totalorder %s55, %s56
    %p67 = scmp.eq.s32.totalorder %s17, 0
    %p68 = por %p66, %p67
    %p69 = scmp.ne.s32.totalorder %s55, %s56
    %p70 = scmp.eq.s32.totalorder %s18, 1
    %p71 = por %p69, %p70
    %p73 = scmp.ne.s32.totalorder %s56, %s72
    %p74 = scmp.eq.s32.totalorder %s18, 0
    %p75 = por %p73, %p74
    %s76 = ssub.s32 %s22, %s33
    %s77 = ssub.s32 %s21, %s37
    %s78 = sor.u32 %s76, %s77
    %p79 = scmp.eq.s32.totalorder %s78, 0
    %s81 = sadd.s32 %s80, 1
    %s82 = scalar_select %p79, %s80, %s81
    %p85 = pneg %p79
    %p86 = scmp.eq.s32.totalorder %s12, 1
    %p87 = por %p85, %p86
    %p88 = scmp.ne.s32.totalorder %s80, %s83
    %p89 = scmp.eq.s32.totalorder %s12, 0
    %p90 = por %p88, %p89
    %p91 = scmp.ne.s32.totalorder %s80, %s83
    %p92 = scmp.eq.s32.totalorder %s17, 1
    %p93 = por %p91, %p92
    %p94 = scmp.ne.s32.totalorder %s83, %s84
    %p95 = scmp.eq.s32.totalorder %s17, 0
    %p96 = por %p94, %p95
    %p97 = scmp.ne.s32.totalorder %s83, %s84
    %p98 = scmp.eq.s32.totalorder %s18, 1
    %p99 = por %p97, %p98
    %p101 = scmp.ne.s32.totalorder %s84, %s100
    %p102 = scmp.eq.s32.totalorder %s18, 0
    %p103 = por %p101, %p102
    %s104 = ssub.s32 %s21, %s37
    %p105 = scmp.eq.s32.totalorder %s104, 0
    %s107 = sadd.s32 %s106, 1
    %s108 = scalar_select %p105, %s106, %s107
    %p111 = pneg %p105
    %p112 = scmp.eq.s32.totalorder %s12, 1
    %p113 = por %p111, %p112
    %p114 = scmp.ne.s32.totalorder %s106, %s109
    %p115 = scmp.eq.s32.totalorder %s12, 0
    %p116 = por %p114, %p115
    %p117 = scmp.ne.s32.totalorder %s106, %s109
    %p118 = scmp.eq.s32.totalorder %s17, 1
    %p119 = por %p117, %p118
    %p120 = scmp.ne.s32.totalorder %s109, %s110
    %p121 = scmp.eq.s32.totalorder %s17, 0
    %p122 = por %p120, %p121
    %p123 = scmp.ne.s32.totalorder %s109, %s110
    %p124 = scmp.eq.s32.totalorder %s18, 1
    %p125 = por %p123, %p124
    %p127 = scmp.ne.s32.totalorder %s110, %s126
    %p128 = scmp.eq.s32.totalorder %s18, 0
    %p129 = por %p127, %p128
    %s130 = ssub.s32 %s19, %s45
    %s131 = ssub.s32 %s20, %s41
    %s132 = sor.u32 %s130, %s131
    %s133 = ssub.s32 %s21, %s37
    %s134 = sor.u32 %s132, %s133
    %p135 = scmp.eq.s32.totalorder %s134, 0
    %s137 = sadd.s32 %s136, 1
    %s138 = scalar_select %p135, %s136, %s137
    %p141 = pneg %p135
    %p142 = scmp.eq.s32.totalorder %s12, 1
    %p143 = por %p141, %p142
    %p144 = scmp.ne.s32.totalorder %s136, %s139
    %p145 = scmp.eq.s32.totalorder %s12, 0
    %p146 = por %p144, %p145
    %p147 = scmp.ne.s32.totalorder %s136, %s139
    %p148 = scmp.eq.s32.totalorder %s17, 1
    %p149 = por %p147, %p148
    %p150 = scmp.ne.s32.totalorder %s139, %s140
    %p151 = scmp.eq.s32.totalorder %s17, 0
    %p152 = por %p150, %p151
    %p153 = scmp.ne.s32.totalorder %s139, %s140
    %p154 = scmp.eq.s32.totalorder %s18, 1
    %p155 = por %p153, %p154
    %p157 = scmp.ne.s32.totalorder %s140, %s156
    %p158 = scmp.eq.s32.totalorder %s18, 0
    %p159 = por %p157, %p158
    %s160 = ssub.s32 %s19, %s45
    %s161 = ssub.s32 %s20, %s41
    %s162 = sor.u32 %s160, %s161
    %s163 = ssub.s32 %s21, %s37
    %s164 = sor.u32 %s162, %s163
    %p165 = scmp.eq.s32.totalorder %s164, 0
    %s167 = sadd.s32 %s166, 1
    %s168 = scalar_select %p165, %s166, %s167
    %p171 = pneg %p165
    %p172 = scmp.eq.s32.totalorder %s12, 1
    %p173 = por %p171, %p172
    %p174 = scmp.ne.s32.totalorder %s166, %s169
    %p175 = scmp.eq.s32.totalorder %s12, 0
    %p176 = por %p174, %p175
    %p177 = scmp.ne.s32.totalorder %s166, %s169
    %p178 = scmp.eq.s32.totalorder %s17, 1
    %p179 = por %p177, %p178
    %p180 = scmp.ne.s32.totalorder %s169, %s170
    %p181 = scmp.eq.s32.totalorder %s17, 0
    %p182 = por %p180, %p181
    %p183 = scmp.ne.s32.totalorder %s169, %s170
    %p184 = scmp.eq.s32.totalorder %s18, 1
    %p185 = por %p183, %p184
    %p187 = scmp.ne.s32.totalorder %s170, %s186
    %p188 = scmp.eq.s32.totalorder %s18, 0
    %p189 = por %p187, %p188
    %s190 = ssub.s32 %s19, %s45
    %s191 = ssub.s32 %s20, %s41
    %s192 = sor.u32 %s190, %s191
    %s193 = ssub.s32 %s21, %s37
    %s194 = sor.u32 %s192, %s193
    %p195 = scmp.eq.s32.totalorder %s194, 0
    %s197 = sadd.s32 %s196, 1
    %s198 = scalar_select %p195, %s196, %s197
    %p201 = pneg %p195
    %p202 = scmp.eq.s32.totalorder %s12, 1
    %p203 = por %p201, %p202
    %p204 = scmp.ne.s32.totalorder %s196, %s199
    %p205 = scmp.eq.s32.totalorder %s12, 0
    %p206 = por %p204, %p205
    %p207 = scmp.ne.s32.totalorder %s196, %s199
    %p208 = scmp.eq.s32.totalorder %s17, 1
    %p209 = por %p207, %p208
    %p210 = scmp.ne.s32.totalorder %s199, %s200
    %p211 = scmp.eq.s32.totalorder %s17, 0
    %p212 = por %p210, %p211
    %p213 = scmp.ne.s32.totalorder %s199, %s200
    %p214 = scmp.eq.s32.totalorder %s18, 1
    %p215 = por %p213, %p214
    %p217 = scmp.ne.s32.totalorder %s200, %s216
    %p218 = scmp.eq.s32.totalorder %s18, 0
    %p219 = por %p217, %p218
    %p220 = scmp.le.s32.totalorder 1, %s12
    %p221 = scmp.lt.s32.totalorder %s12, 3
    %p222 = pnand %p220, %p221
    %p223 = pneg %p222
    // Predicated region
    $region9: #{_lambda_.8} parent=5 // pred_check
      _
    $region10: #{_lambda_.8} parent=5 // pred_check_branch
      %225 = sbr.rel (%p222) target = $region12
    $region11: #{_lambda_.8} parent=5 // pred_region
      %s226 = ssub.s32 %s12, 1
      // Predicated region
      $region13: #{_lambda_.8} parent=11 // pred_check
        %p227 = pneg %p96
      $region14: #{_lambda_.8} parent=11 // pred_check_branch
        %229 = sbr.rel (%p227) target = $region16
      $region15: #{_lambda_.8} parent=11 // pred_region
        %s230 = smul.u32 32, %s26
        %p231 = scmp.lt.s32.totalorder %s230, 31
        %s232 = scalar_select %p231, %s230, 31
        %p233 = scmp.lt.s32.totalorder %s25, 0
        %s234 = scalar_select %p233, %s25, 0
        %s235 = sadd.s32 %s234, %s232
        %s236 = smul.addr %s235, 4
        %s237 = scalar_lea.vmem %s1, %s236
        %s238 = smul.u32 32, %s26
      $region16: #{_lambda_.8} parent=11 // pred_fallthru
        _
      // Predicated region
      $region17: #{_lambda_.8} parent=11 // pred_check
        %p239 = pneg %p122
      $region18: #{_lambda_.8} parent=11 // pred_check_branch
        %241 = sbr.rel (%p239) target = $region20
      $region19: #{_lambda_.8} parent=11 // pred_region
        %p242 = scmp.lt.s32.totalorder %s25, 0
        %s243 = scalar_select %p242, %s25, 0
        %s244 = scalar_lea.vmem %s2, %s243
      $region20: #{_lambda_.8} parent=11 // pred_fallthru
        _
    $region12: #{_lambda_.8} parent=5 // pred_fallthru
      _
    %p245 = scmp.lt.s32.totalorder %s12, 2
    // Predicated region
    $region21: #{_lambda_.8} parent=5 // pred_check
      %p246 = pneg %p245
    $region22: #{_lambda_.8} parent=5 // pred_check_branch
      %248 = sbr.rel (%p246) target = $region24
    $region23: #{_lambda_.8} parent=5 // pred_region
      // Predicated region
      $region25: #{_lambda_.8} parent=23 // pred_check
        %p249 = pneg %p62
      $region26: #{_lambda_.8} parent=23 // pred_check_branch
        %251 = sbr.rel (%p249) target = $region28
      $region27: #{_lambda_.8} parent=23 // pred_region
        %s252 = smul.u32 32, %s20
        %s253 = smul.u32 2, %s22
        %p254 = scmp.lt.s32.totalorder %s19, 1
        %s255 = scalar_select %p254, %s19, 1
        %p256 = scmp.lt.s32.totalorder %s252, 31
        %s257 = scalar_select %p256, %s252, 31
        %p258 = scmp.lt.s32.totalorder %s253, 1
        %s259 = scalar_select %p258, %s253, 1
        %s260 = smul.addr %s257, 2
        %s261 = sadd.s32 %s259, %s260
        %s262 = smul.addr %s255, 64
        %s263 = sadd.s32 %s261, %s262
        %s264 = smul.addr %s263, 4
        %s265 = scalar_lea.vmem %s0, %s264
        %s266 = smul.u32 32, %s20
        %s267 = smul.u32 2, %s22
      $region28: #{_lambda_.8} parent=23 // pred_fallthru
        _
    $region24: #{_lambda_.8} parent=5 // pred_fallthru
      _
    %p268 = scmp.le.s32.totalorder 1, %s12
    %p269 = scmp.lt.s32.totalorder %s12, 3
    %p270 = pnand %p268, %p269
    %p271 = pneg %p270
    // Predicated region
    $region29: #{_lambda_.8} parent=5 // pred_check
      _
    $region30: #{_lambda_.8} parent=5 // pred_check_branch
      %273 = sbr.rel (%p270) target = $region32
    $region31: #{_lambda_.8} parent=5 // pred_region
      %s274 = ssub.s32 %s12, 1
      %s275 = smul.u32 32, %s24
      %s276 = smul.u32 2, %s26
      %p277 = scmp.lt.s32.totalorder %s23, 1
      %s278 = scalar_select %p277, %s23, 1
      %p279 = scmp.lt.s32.totalorder %s275, 31
      %s280 = scalar_select %p279, %s275, 31
      %p281 = scmp.lt.s32.totalorder %s276, 1
      %s282 = scalar_select %p281, %s276, 1
      %s283 = smul.addr %s280, 2
      %s284 = sadd.s32 %s282, %s283
      %s285 = smul.addr %s278, 64
      %s286 = sadd.s32 %s284, %s285
      %s287 = smul.addr %s286, 4
      %s288 = scalar_lea.vmem %s0, %s287
      %p289 = pneg %p68
      %p290 = pneg %p65
      %s291 = smul.u32 32, %s26
      %p292 = scmp.lt.s32.totalorder %s291, 31
      %s293 = scalar_select %p292, %s291, 31
      %p294 = scmp.lt.s32.totalorder %s25, 0
      %s295 = scalar_select %p294, %s25, 0
      %s296 = sadd.s32 %s295, %s293
      %s297 = smul.addr %s296, 4
      %s298 = scalar_lea.vmem %s1, %s297
      %p299 = pneg %p96
      %p300 = pneg %p93
      %p301 = scmp.lt.s32.totalorder %s25, 0
      %s302 = scalar_select %p301, %s25, 0
      %s303 = scalar_lea.vmem %s2, %s302
      %p304 = pneg %p122
      %p305 = pneg %p119
      %p306 = pneg %p152
      %p307 = pneg %p149
      %s308 = smul.u32 32, %s24
      %p309 = scmp.lt.s32.totalorder %s23, 1
      %s310 = scalar_select %p309, %s23, 1
      %p311 = scmp.lt.s32.totalorder %s308, 31
      %s312 = scalar_select %p311, %s308, 31
      %p313 = scmp.lt.s32.totalorder %s25, 0
      %s314 = scalar_select %p313, %s25, 0
      %s315 = sadd.s32 %s314, %s312
      %s316 = smul.addr %s310, 32
      %s317 = sadd.s32 %s315, %s316
      %s318 = smul.addr %s317, 4
      %s319 = scalar_lea.vmem %s3, %s318
      %p320 = pneg %p182
      %p321 = pneg %p179
      %p322 = scmp.lt.s32.totalorder %s23, 1
      %s323 = scalar_select %p322, %s23, 1
      %p324 = scmp.lt.s32.totalorder %s24, 0
      %s325 = scalar_select %p324, %s24, 0
      %p326 = scmp.lt.s32.totalorder %s25, 0
      %s327 = scalar_select %p326, %s25, 0
      %s328 = sadd.s32 %s327, %s325
      %s329 = sadd.s32 %s328, %s323
      %s330 = scalar_lea.vmem %s4, %s329
      %p331 = pneg %p212
      %p332 = pneg %p209
      %p333 = scmp.lt.s32.totalorder %s23, 1
      %s334 = scalar_select %p333, %s23, 1
      %p335 = scmp.lt.s32.totalorder %s24, 0
      %s336 = scalar_select %p335, %s24, 0
      %p337 = scmp.lt.s32.totalorder %s25, 0
      %s338 = scalar_select %p337, %s25, 0
      %s339 = sadd.s32 %s338, %s336
      %s340 = sadd.s32 %s339, %s334
      %s341 = scalar_lea.vmem %s5, %s340
      %s342 = smul.u32 32, %s24
      %s343 = smul.u32 2, %s26
      %p344 = scmp.lt.s32.totalorder %s23, 1
      %s345 = scalar_select %p344, %s23, 1
      %p346 = scmp.lt.s32.totalorder %s342, 31
      %s347 = scalar_select %p346, %s342, 31
      %p348 = scmp.lt.s32.totalorder %s343, 1
      %s349 = scalar_select %p348, %s343, 1
      %s350 = smul.addr %s347, 2
      %s351 = sadd.s32 %s349, %s350
      %s352 = smul.addr %s345, 64
      %s353 = sadd.s32 %s351, %s352
      %s354 = smul.addr %s353, 4
      %s355 = scalar_lea.vmem %s0, %s354
      %s356 = smul.u32 32, %s24
      %s357 = smul.u32 2, %s26
      %s358 = smul.u32 32, %s26
      %p359 = scmp.lt.s32.totalorder %s358, 31
      %s360 = scalar_select %p359, %s358, 31
      %p361 = scmp.lt.s32.totalorder %s25, 0
      %s362 = scalar_select %p361, %s25, 0
      %s363 = sadd.s32 %s362, %s360
      %s364 = smul.addr %s363, 4
      %s365 = scalar_lea.vmem %s1, %s364
      %s366 = smul.u32 32, %s26
      %p367 = scmp.lt.s32.totalorder %s25, 0
      %s368 = scalar_select %p367, %s25, 0
      %s369 = scalar_lea.vmem %s2, %s368
      %s370 = smul.u32 32, %s24
      %p371 = scmp.lt.s32.totalorder %s23, 1
      %s372 = scalar_select %p371, %s23, 1
      %p373 = scmp.lt.s32.totalorder %s370, 31
      %s374 = scalar_select %p373, %s370, 31
      %p375 = scmp.lt.s32.totalorder %s25, 0
      %s376 = scalar_select %p375, %s25, 0
      %s377 = sadd.s32 %s376, %s374
      %s378 = smul.addr %s372, 32
      %s379 = sadd.s32 %s377, %s378
      %s380 = smul.addr %s379, 4
      %s381 = scalar_lea.vmem %s3, %s380
      %s382 = smul.u32 32, %s24
      %p383 = scmp.lt.s32.totalorder %s23, 1
      %s384 = scalar_select %p383, %s23, 1
      %p385 = scmp.lt.s32.totalorder %s24, 0
      %s386 = scalar_select %p385, %s24, 0
      %p387 = scmp.lt.s32.totalorder %s25, 0
      %s388 = scalar_select %p387, %s25, 0
      %s389 = sadd.s32 %s388, %s386
      %s390 = sadd.s32 %s389, %s384
      %s391 = scalar_lea.vmem %s4, %s390
      %p392 = scmp.lt.s32.totalorder %s23, 1
      %s393 = scalar_select %p392, %s23, 1
      %p394 = scmp.lt.s32.totalorder %s24, 0
      %s395 = scalar_select %p394, %s24, 0
      %p396 = scmp.lt.s32.totalorder %s25, 0
      %s397 = scalar_select %p396, %s25, 0
      %s398 = sadd.s32 %s397, %s395
      %s399 = sadd.s32 %s398, %s393
      %s400 = scalar_lea.vmem %s5, %s399
      %p402 = scmp.eq.s32.totalorder %s26, 0
      // Predicated region
      $region33: #{_lambda_.8} parent=31 // pred_check
        %p403 = pneg %p402
      $region34: #{_lambda_.8} parent=31 // pred_check_branch
        %405 = sbr.rel (%p403) target = $region36
      $region35: #{_lambda_.8} parent=31 // pred_region
        %406 = vst [vmem:[#allocation2] sm:$0xff] 0.0
        %407 = vst [vmem:[#allocation2 + $0x8] sm:$0xff] 0.0
        %408 = vst [vmem:[#allocation2 + $0x10] sm:$0xff] 0.0
        %409 = vst [vmem:[#allocation2 + $0x18] sm:$0xff] 0.0
        %410 = vst [vmem:[#allocation2 + $0x20] sm:$0xff] 0.0
        %411 = vst [vmem:[#allocation2 + $0x28] sm:$0xff] 0.0
        %412 = vst [vmem:[#allocation2 + $0x30] sm:$0xff] 0.0
        %413 = vst [vmem:[#allocation2 + $0x38] sm:$0xff] 0.0
        %414 = vst [vmem:[#allocation2 + $0x40] sm:$0xff] 0.0
        %415 = vst [vmem:[#allocation2 + $0x48] sm:$0xff] 0.0
        %416 = vst [vmem:[#allocation2 + $0x50] sm:$0xff] 0.0
        %417 = vst [vmem:[#allocation2 + $0x58] sm:$0xff] 0.0
        %418 = vst [vmem:[#allocation2 + $0x60] sm:$0xff] 0.0
        %419 = vst [vmem:[#allocation2 + $0x68] sm:$0xff] 0.0
        %420 = vst [vmem:[#allocation2 + $0x70] sm:$0xff] 0.0
        %421 = vst [vmem:[#allocation2 + $0x78] sm:$0xff] 0.0
        %422 = vst [vmem:[#allocation2 + $0x80] sm:$0xff] 0.0
        %423 = vst [vmem:[#allocation2 + $0x88] sm:$0xff] 0.0
        %424 = vst [vmem:[#allocation2 + $0x90] sm:$0xff] 0.0
        %425 = vst [vmem:[#allocation2 + $0x98] sm:$0xff] 0.0
        %426 = vst [vmem:[#allocation2 + $0xa0] sm:$0xff] 0.0
        %427 = vst [vmem:[#allocation2 + $0xa8] sm:$0xff] 0.0
        %428 = vst [vmem:[#allocation2 + $0xb0] sm:$0xff] 0.0
        %429 = vst [vmem:[#allocation2 + $0xb8] sm:$0xff] 0.0
        %430 = vst [vmem:[#allocation2 + $0xc0] sm:$0xff] 0.0
        %431 = vst [vmem:[#allocation2 + $0xc8] sm:$0xff] 0.0
        %432 = vst [vmem:[#allocation2 + $0xd0] sm:$0xff] 0.0
        %433 = vst [vmem:[#allocation2 + $0xd8] sm:$0xff] 0.0
        %434 = vst [vmem:[#allocation2 + $0xe0] sm:$0xff] 0.0
        %435 = vst [vmem:[#allocation2 + $0xe8] sm:$0xff] 0.0
        %436 = vst [vmem:[#allocation2 + $0xf0] sm:$0xff] 0.0
        %437 = vst [vmem:[#allocation2 + $0xf8] sm:$0xff] 0.0
      $region36: #{_lambda_.8} parent=31 // pred_fallthru
        _
      %v438 = vld [vmem:[#allocation2] sm:$0xff]
      %v439 = vld [vmem:[#allocation2 + $0x8] sm:$0xff]
      %v440 = vld [vmem:[#allocation2 + $0x10] sm:$0xff]
      %v441 = vld [vmem:[#allocation2 + $0x18] sm:$0xff]
      %v442 = vld [vmem:[#allocation2 + $0x20] sm:$0xff]
      %v443 = vld [vmem:[#allocation2 + $0x28] sm:$0xff]
      %v444 = vld [vmem:[#allocation2 + $0x30] sm:$0xff]
      %v445 = vld [vmem:[#allocation2 + $0x38] sm:$0xff]
      %v446 = vld [vmem:[#allocation2 + $0x40] sm:$0xff]
      %v447 = vld [vmem:[#allocation2 + $0x48] sm:$0xff]
      %v448 = vld [vmem:[#allocation2 + $0x50] sm:$0xff]
      %v449 = vld [vmem:[#allocation2 + $0x58] sm:$0xff]
      %v450 = vld [vmem:[#allocation2 + $0x60] sm:$0xff]
      %v451 = vld [vmem:[#allocation2 + $0x68] sm:$0xff]
      %v452 = vld [vmem:[#allocation2 + $0x70] sm:$0xff]
      %v453 = vld [vmem:[#allocation2 + $0x78] sm:$0xff]
      %v454 = vld [vmem:[#allocation2 + $0x80] sm:$0xff]
      %v455 = vld [vmem:[#allocation2 + $0x88] sm:$0xff]
      %v456 = vld [vmem:[#allocation2 + $0x90] sm:$0xff]
      %v457 = vld [vmem:[#allocation2 + $0x98] sm:$0xff]
      %v458 = vld [vmem:[#allocation2 + $0xa0] sm:$0xff]
      %v459 = vld [vmem:[#allocation2 + $0xa8] sm:$0xff]
      %v460 = vld [vmem:[#allocation2 + $0xb0] sm:$0xff]
      %v461 = vld [vmem:[#allocation2 + $0xb8] sm:$0xff]
      %v462 = vld [vmem:[#allocation2 + $0xc0] sm:$0xff]
      %v463 = vld [vmem:[#allocation2 + $0xc8] sm:$0xff]
      %v464 = vld [vmem:[#allocation2 + $0xd0] sm:$0xff]
      %v465 = vld [vmem:[#allocation2 + $0xd8] sm:$0xff]
      %v466 = vld [vmem:[#allocation2 + $0xe0] sm:$0xff]
      %v467 = vld [vmem:[#allocation2 + $0xe8] sm:$0xff]
      %v468 = vld [vmem:[#allocation2 + $0xf0] sm:$0xff]
      %v469 = vld [vmem:[#allocation2 + $0xf8] sm:$0xff]
      %v470 = vld [vmem:[%s355] sm:$0xff]
      %v471 = vld [vmem:[%s355 + $0x8] sm:$0xff]
      %v472 = vld [vmem:[%s355 + $0x10] sm:$0xff]
      %v473 = vld [vmem:[%s355 + $0x18] sm:$0xff]
      %v474 = vld [vmem:[%s355 + $0x20] sm:$0xff]
      %v475 = vld [vmem:[%s355 + $0x28] sm:$0xff]
      %v476 = vld [vmem:[%s355 + $0x30] sm:$0xff]
      %v477 = vld [vmem:[%s355 + $0x38] sm:$0xff]
      %v478 = vld [vmem:[%s355 + $0x40] sm:$0xff]
      %v479 = vld [vmem:[%s355 + $0x48] sm:$0xff]
      %v480 = vld [vmem:[%s355 + $0x50] sm:$0xff]
      %v481 = vld [vmem:[%s355 + $0x58] sm:$0xff]
      %v482 = vld [vmem:[%s355 + $0x60] sm:$0xff]
      %v483 = vld [vmem:[%s355 + $0x68] sm:$0xff]
      %v484 = vld [vmem:[%s355 + $0x70] sm:$0xff]
      %v485 = vld [vmem:[%s355 + $0x78] sm:$0xff]
      %v486 = vld [vmem:[%s355 + $0x80] sm:$0xff]
      %v487 = vld [vmem:[%s355 + $0x88] sm:$0xff]
      %v488 = vld [vmem:[%s355 + $0x90] sm:$0xff]
      %v489 = vld [vmem:[%s355 + $0x98] sm:$0xff]
      %v490 = vld [vmem:[%s355 + $0xa0] sm:$0xff]
      %v491 = vld [vmem:[%s355 + $0xa8] sm:$0xff]
      %v492 = vld [vmem:[%s355 + $0xb0] sm:$0xff]
      %v493 = vld [vmem:[%s355 + $0xb8] sm:$0xff]
      %v494 = vld [vmem:[%s355 + $0xc0] sm:$0xff]
      %v495 = vld [vmem:[%s355 + $0xc8] sm:$0xff]
      %v496 = vld [vmem:[%s355 + $0xd0] sm:$0xff]
      %v497 = vld [vmem:[%s355 + $0xd8] sm:$0xff]
      %v498 = vld [vmem:[%s355 + $0xe0] sm:$0xff]
      %v499 = vld [vmem:[%s355 + $0xe8] sm:$0xff]
      %v500 = vld [vmem:[%s355 + $0xf0] sm:$0xff]
      %v501 = vld [vmem:[%s355 + $0xf8] sm:$0xff]
      %v502 = vld [vmem:[%s365] sm:$0xf]
      %v503 = vld [vmem:[%s365 + $0x4] sm:$0xf]
      %v504 = vld [vmem:[%s365 + $0x8] sm:$0xf]
      %v505 = vld [vmem:[%s365 + $0xc] sm:$0xf]
      %v506 = vld [vmem:[%s365 + $0x10] sm:$0xf]
      %v507 = vld [vmem:[%s365 + $0x14] sm:$0xf]
      %v508 = vld [vmem:[%s365 + $0x18] sm:$0xf]
      %v509 = vld [vmem:[%s365 + $0x1c] sm:$0xf]
      %v510 = vld [vmem:[%s365 + $0x20] sm:$0xf]
      %v511 = vld [vmem:[%s365 + $0x24] sm:$0xf]
      %v512 = vld [vmem:[%s365 + $0x28] sm:$0xf]
      %v513 = vld [vmem:[%s365 + $0x2c] sm:$0xf]
      %v514 = vld [vmem:[%s365 + $0x30] sm:$0xf]
      %v515 = vld [vmem:[%s365 + $0x34] sm:$0xf]
      %v516 = vld [vmem:[%s365 + $0x38] sm:$0xf]
      %v517 = vld [vmem:[%s365 + $0x3c] sm:$0xf]
      %v518 = vld [vmem:[%s365 + $0x40] sm:$0xf]
      %v519 = vld [vmem:[%s365 + $0x44] sm:$0xf]
      %v520 = vld [vmem:[%s365 + $0x48] sm:$0xf]
      %v521 = vld [vmem:[%s365 + $0x4c] sm:$0xf]
      %v522 = vld [vmem:[%s365 + $0x50] sm:$0xf]
      %v523 = vld [vmem:[%s365 + $0x54] sm:$0xf]
      %v524 = vld [vmem:[%s365 + $0x58] sm:$0xf]
      %v525 = vld [vmem:[%s365 + $0x5c] sm:$0xf]
      %v526 = vld [vmem:[%s365 + $0x60] sm:$0xf]
      %v527 = vld [vmem:[%s365 + $0x64] sm:$0xf]
      %v528 = vld [vmem:[%s365 + $0x68] sm:$0xf]
      %v529 = vld [vmem:[%s365 + $0x6c] sm:$0xf]
      %v530 = vld [vmem:[%s365 + $0x70] sm:$0xf]
      %v531 = vld [vmem:[%s365 + $0x74] sm:$0xf]
      %v532 = vld [vmem:[%s365 + $0x78] sm:$0xf]
      %v533 = vld [vmem:[%s365 + $0x7c] sm:$0xf]
      %v566 = vunpack.c.l.b16 %v470
      %v567 = vunpack.c.h.b16 %v470
      %v568 = vunpack.c.l.b16 %v471
      %v569 = vunpack.c.h.b16 %v471
      %v570 = vunpack.c.l.b16 %v472
      %v571 = vunpack.c.h.b16 %v472
      %v572 = vunpack.c.l.b16 %v473
      %v573 = vunpack.c.h.b16 %v473
      %v574 = vunpack.c.l.b16 %v474
      %v575 = vunpack.c.h.b16 %v474
      %v576 = vunpack.c.l.b16 %v475
      %v577 = vunpack.c.h.b16 %v475
      %v578 = vunpack.c.l.b16 %v476
      %v579 = vunpack.c.h.b16 %v476
      %v580 = vunpack.c.l.b16 %v477
      %v581 = vunpack.c.h.b16 %v477
      %v582 = vunpack.c.l.b16 %v478
      %v583 = vunpack.c.h.b16 %v478
      %v584 = vunpack.c.l.b16 %v479
      %v585 = vunpack.c.h.b16 %v479
      %v586 = vunpack.c.l.b16 %v480
      %v587 = vunpack.c.h.b16 %v480
      %v588 = vunpack.c.l.b16 %v481
      %v589 = vunpack.c.h.b16 %v481
      %v590 = vunpack.c.l.b16 %v482
      %v591 = vunpack.c.h.b16 %v482
      %v592 = vunpack.c.l.b16 %v483
      %v593 = vunpack.c.h.b16 %v483
      %v594 = vunpack.c.l.b16 %v484
      %v595 = vunpack.c.h.b16 %v484
      %v596 = vunpack.c.l.b16 %v485
      %v597 = vunpack.c.h.b16 %v485
      %v598 = vunpack.c.l.b16 %v486
      %v599 = vunpack.c.h.b16 %v486
      %v600 = vunpack.c.l.b16 %v487
      %v601 = vunpack.c.h.b16 %v487
      %v602 = vunpack.c.l.b16 %v488
      %v603 = vunpack.c.h.b16 %v488
      %v604 = vunpack.c.l.b16 %v489
      %v605 = vunpack.c.h.b16 %v489
      %v606 = vunpack.c.l.b16 %v490
      %v607 = vunpack.c.h.b16 %v490
      %v608 = vunpack.c.l.b16 %v491
      %v609 = vunpack.c.h.b16 %v491
      %v610 = vunpack.c.l.b16 %v492
      %v611 = vunpack.c.h.b16 %v492
      %v612 = vunpack.c.l.b16 %v493
      %v613 = vunpack.c.h.b16 %v493
      %v614 = vunpack.c.l.b16 %v494
      %v615 = vunpack.c.h.b16 %v494
      %v616 = vunpack.c.l.b16 %v495
      %v617 = vunpack.c.h.b16 %v495
      %v618 = vunpack.c.l.b16 %v496
      %v619 = vunpack.c.h.b16 %v496
      %v620 = vunpack.c.l.b16 %v497
      %v621 = vunpack.c.h.b16 %v497
      %v622 = vunpack.c.l.b16 %v498
      %v623 = vunpack.c.h.b16 %v498
      %v624 = vunpack.c.l.b16 %v499
      %v625 = vunpack.c.h.b16 %v499
      %v626 = vunpack.c.l.b16 %v500
      %v627 = vunpack.c.h.b16 %v500
      %v628 = vunpack.c.l.b16 %v501
      %v629 = vunpack.c.h.b16 %v501
      %v630 = vpack.c.b16 %v568, %v566
      %v631 = vpack.c.b16 %v569, %v567
      %v632 = vpack.c.b16 %v572, %v570
      %v633 = vpack.c.b16 %v573, %v571
      %v634 = vpack.c.b16 %v576, %v574
      %v635 = vpack.c.b16 %v577, %v575
      %v636 = vpack.c.b16 %v580, %v578
      %v637 = vpack.c.b16 %v581, %v579
      %v638 = vpack.c.b16 %v584, %v582
      %v639 = vpack.c.b16 %v585, %v583
      %v640 = vpack.c.b16 %v588, %v586
      %v641 = vpack.c.b16 %v589, %v587
      %v642 = vpack.c.b16 %v592, %v590
      %v643 = vpack.c.b16 %v593, %v591
      %v644 = vpack.c.b16 %v596, %v594
      %v645 = vpack.c.b16 %v597, %v595
      %v646 = vpack.c.b16 %v600, %v598
      %v647 = vpack.c.b16 %v601, %v599
      %v648 = vpack.c.b16 %v604, %v602
      %v649 = vpack.c.b16 %v605, %v603
      %v650 = vpack.c.b16 %v608, %v606
      %v651 = vpack.c.b16 %v609, %v607
      %v652 = vpack.c.b16 %v612, %v610
      %v653 = vpack.c.b16 %v613, %v611
      %v654 = vpack.c.b16 %v616, %v614
      %v655 = vpack.c.b16 %v617, %v615
      %v656 = vpack.c.b16 %v620, %v618
      %v657 = vpack.c.b16 %v621, %v619
      %v658 = vpack.c.b16 %v624, %v622
      %v659 = vpack.c.b16 %v625, %v623
      %v660 = vpack.c.b16 %v628, %v626
      %v661 = vpack.c.b16 %v629, %v627
      %v726 = vunpack.c.l.b16 %v502
      %v727 = vunpack.c.l.b16 %v503
      %v728 = vunpack.c.l.b16 %v504
      %v729 = vunpack.c.l.b16 %v505
      %v730 = vunpack.c.l.b16 %v506
      %v731 = vunpack.c.l.b16 %v507
      %v732 = vunpack.c.l.b16 %v508
      %v733 = vunpack.c.l.b16 %v509
      %v734 = vunpack.c.l.b16 %v510
      %v735 = vunpack.c.l.b16 %v511
      %v736 = vunpack.c.l.b16 %v512
      %v737 = vunpack.c.l.b16 %v513
      %v738 = vunpack.c.l.b16 %v514
      %v739 = vunpack.c.l.b16 %v515
      %v740 = vunpack.c.l.b16 %v516
      %v741 = vunpack.c.l.b16 %v517
      %v742 = vunpack.c.l.b16 %v518
      %v743 = vunpack.c.l.b16 %v519
      %v744 = vunpack.c.l.b16 %v520
      %v745 = vunpack.c.l.b16 %v521
      %v746 = vunpack.c.l.b16 %v522
      %v747 = vunpack.c.l.b16 %v523
      %v748 = vunpack.c.l.b16 %v524
      %v749 = vunpack.c.l.b16 %v525
      %v750 = vunpack.c.l.b16 %v526
      %v751 = vunpack.c.l.b16 %v527
      %v752 = vunpack.c.l.b16 %v528
      %v753 = vunpack.c.l.b16 %v529
      %v754 = vunpack.c.l.b16 %v530
      %v755 = vunpack.c.l.b16 %v531
      %v756 = vunpack.c.l.b16 %v532
      %v757 = vunpack.c.l.b16 %v533
      %v758 = vpack.c.b16 %v727, %v726
      %v759 = vpack.c.b16 %v729, %v728
      %v760 = vpack.c.b16 %v731, %v730
      %v761 = vpack.c.b16 %v733, %v732
      %v762 = vpack.c.b16 %v735, %v734
      %v763 = vpack.c.b16 %v737, %v736
      %v764 = vpack.c.b16 %v739, %v738
      %v765 = vpack.c.b16 %v741, %v740
      %v766 = vpack.c.b16 %v743, %v742
      %v767 = vpack.c.b16 %v745, %v744
      %v768 = vpack.c.b16 %v747, %v746
      %v769 = vpack.c.b16 %v749, %v748
      %v770 = vpack.c.b16 %v751, %v750
      %v771 = vpack.c.b16 %v753, %v752
      %v772 = vpack.c.b16 %v755, %v754
      %v773 = vpack.c.b16 %v757, %v756
      %790 = vmatprep.subr.bf16.mxu0 0
      %791 = vmatpush1.bf16.msra.mxu0 %v765
      %792 = vmatprep.subr.bf16.mxu0 0
      %793 = vmatpush1.bf16.msra.mxu0 %v764
      %794 = vmatprep.subr.bf16.mxu0 0
      %795 = vmatpush1.bf16.msra.mxu0 %v763
      %796 = vmatprep.subr.bf16.mxu0 0
      %797 = vmatpush1.bf16.msra.mxu0 %v762
      %798 = vmatprep.subr.bf16.mxu0 0
      %799 = vmatpush1.bf16.msra.mxu0 %v761
      %800 = vmatprep.subr.bf16.mxu0 0
      %801 = vmatpush1.bf16.msra.mxu0 %v760
      %802 = vmatprep.subr.bf16.mxu0 0
      %803 = vmatpush1.bf16.msra.mxu0 %v759
      %804 = vmatprep.subr.bf16.mxu0 0
      %805 = vmatpush1.bf16.msra.mxu0 %v758
      %806 = vmatprep.subr.bf16.mxu0 0
      %807 = vmatpush2.bf16.msra.mxu0 %v773
      %808 = vmatprep.subr.bf16.mxu0 0
      %809 = vmatpush2.bf16.msra.mxu0 %v772
      %810 = vmatprep.subr.bf16.mxu0 0
      %811 = vmatpush2.bf16.msra.mxu0 %v771
      %812 = vmatprep.subr.bf16.mxu0 0
      %813 = vmatpush2.bf16.msra.mxu0 %v770
      %814 = vmatprep.subr.bf16.mxu0 0
      %815 = vmatpush2.bf16.msra.mxu0 %v769
      %816 = vmatprep.subr.bf16.mxu0 0
      %817 = vmatpush2.bf16.msra.mxu0 %v768
      %818 = vmatprep.subr.bf16.mxu0 0
      %819 = vmatpush2.bf16.msra.mxu0 %v767
      %820 = vmatprep.subr.bf16.mxu0 0
      %821 = vmatpush2.bf16.msra.mxu0 %v766
      %822 = vmatprep.mubr.bf16.mxu0 %v631
      %823 = vmatmul.mubr.bf16.gmra.mxu0 %v630
      %v824 = vpop.f32.mrf.mxu0
      %v825 = vadd.f32 0.0, %v824
      %v826 = vpop.f32.mrf.mxu0
      %v827 = vpop.f32.mrf.mxu0
      %v828 = vadd.f32 0.0, %v827
      %v829 = vpop.f32.mrf.mxu0
      %830 = vmatprep.mubr.bf16.mxu0 %v633
      %831 = vmatmul.mubr.bf16.gmra.mxu0 %v632
      %v832 = vpop.f32.mrf.mxu0
      %v833 = vadd.f32 0.0, %v832
      %v834 = vpop.f32.mrf.mxu0
      %v835 = vpop.f32.mrf.mxu0
      %v836 = vadd.f32 0.0, %v835
      %v837 = vpop.f32.mrf.mxu0
      %838 = vmatprep.mubr.bf16.mxu0 %v635
      %839 = vmatmul.mubr.bf16.gmra.mxu0 %v634
      %v840 = vpop.f32.mrf.mxu0
      %v841 = vadd.f32 0.0, %v840
      %v842 = vpop.f32.mrf.mxu0
      %v843 = vpop.f32.mrf.mxu0
      %v844 = vadd.f32 0.0, %v843
      %v845 = vpop.f32.mrf.mxu0
      %846 = vmatprep.mubr.bf16.mxu0 %v637
      %847 = vmatmul.mubr.bf16.gmra.mxu0 %v636
      %v848 = vpop.f32.mrf.mxu0
      %v849 = vadd.f32 0.0, %v848
      %v850 = vpop.f32.mrf.mxu0
      %v851 = vpop.f32.mrf.mxu0
      %v852 = vadd.f32 0.0, %v851
      %v853 = vpop.f32.mrf.mxu0
      %854 = vmatprep.mubr.bf16.mxu0 %v639
      %855 = vmatmul.mubr.bf16.gmra.mxu0 %v638
      %v856 = vpop.f32.mrf.mxu0
      %v857 = vadd.f32 0.0, %v856
      %v858 = vpop.f32.mrf.mxu0
      %v859 = vpop.f32.mrf.mxu0
      %v860 = vadd.f32 0.0, %v859
      %v861 = vpop.f32.mrf.mxu0
      %862 = vmatprep.mubr.bf16.mxu0 %v641
      %863 = vmatmul.mubr.bf16.gmra.mxu0 %v640
      %v864 = vpop.f32.mrf.mxu0
      %v865 = vadd.f32 0.0, %v864
      %v866 = vpop.f32.mrf.mxu0
      %v867 = vpop.f32.mrf.mxu0
      %v868 = vadd.f32 0.0, %v867
      %v869 = vpop.f32.mrf.mxu0
      %870 = vmatprep.mubr.bf16.mxu0 %v643
      %871 = vmatmul.mubr.bf16.gmra.mxu0 %v642
      %v872 = vpop.f32.mrf.mxu0
      %v873 = vadd.f32 0.0, %v872
      %v874 = vpop.f32.mrf.mxu0
      %v875 = vpop.f32.mrf.mxu0
      %v876 = vadd.f32 0.0, %v875
      %v877 = vpop.f32.mrf.mxu0
      %878 = vmatprep.mubr.bf16.mxu0 %v645
      %879 = vmatmul.mubr.bf16.gmra.mxu0 %v644
      %v880 = vpop.f32.mrf.mxu0
      %v881 = vadd.f32 0.0, %v880
      %v882 = vpop.f32.mrf.mxu0
      %v883 = vpop.f32.mrf.mxu0
      %v884 = vadd.f32 0.0, %v883
      %v885 = vpop.f32.mrf.mxu0
      %886 = vmatprep.mubr.bf16.mxu0 %v647
      %887 = vmatmul.mubr.bf16.gmra.mxu0 %v646
      %v888 = vpop.f32.mrf.mxu0
      %v889 = vadd.f32 0.0, %v888
      %v890 = vpop.f32.mrf.mxu0
      %v891 = vpop.f32.mrf.mxu0
      %v892 = vadd.f32 0.0, %v891
      %v893 = vpop.f32.mrf.mxu0
      %894 = vmatprep.mubr.bf16.mxu0 %v649
      %895 = vmatmul.mubr.bf16.gmra.mxu0 %v648
      %v896 = vpop.f32.mrf.mxu0
      %v897 = vadd.f32 0.0, %v896
      %v898 = vpop.f32.mrf.mxu0
      %v899 = vpop.f32.mrf.mxu0
      %v900 = vadd.f32 0.0, %v899
      %v901 = vpop.f32.mrf.mxu0
      %902 = vmatprep.mubr.bf16.mxu0 %v651
      %903 = vmatmul.mubr.bf16.gmra.mxu0 %v650
      %v904 = vpop.f32.mrf.mxu0
      %v905 = vadd.f32 0.0, %v904
      %v906 = vpop.f32.mrf.mxu0
      %v907 = vpop.f32.mrf.mxu0
      %v908 = vadd.f32 0.0, %v907
      %v909 = vpop.f32.mrf.mxu0
      %910 = vmatprep.mubr.bf16.mxu0 %v653
      %911 = vmatmul.mubr.bf16.gmra.mxu0 %v652
      %v912 = vpop.f32.mrf.mxu0
      %v913 = vadd.f32 0.0, %v912
      %v914 = vpop.f32.mrf.mxu0
      %v915 = vpop.f32.mrf.mxu0
      %v916 = vadd.f32 0.0, %v915
      %v917 = vpop.f32.mrf.mxu0
      %918 = vmatprep.mubr.bf16.mxu0 %v655
      %919 = vmatmul.mubr.bf16.gmra.mxu0 %v654
      %v920 = vpop.f32.mrf.mxu0
      %v921 = vadd.f32 0.0, %v920
      %v922 = vpop.f32.mrf.mxu0
      %v923 = vpop.f32.mrf.mxu0
      %v924 = vadd.f32 0.0, %v923
      %v925 = vpop.f32.mrf.mxu0
      %926 = vmatprep.mubr.bf16.mxu0 %v657
      %927 = vmatmul.mubr.bf16.gmra.mxu0 %v656
      %v928 = vpop.f32.mrf.mxu0
      %v929 = vadd.f32 0.0, %v928
      %v930 = vpop.f32.mrf.mxu0
      %v931 = vpop.f32.mrf.mxu0
      %v932 = vadd.f32 0.0, %v931
      %v933 = vpop.f32.mrf.mxu0
      %934 = vmatprep.mubr.bf16.mxu0 %v659
      %935 = vmatmul.mubr.bf16.gmra.mxu0 %v658
      %v936 = vpop.f32.mrf.mxu0
      %v937 = vadd.f32 0.0, %v936
      %v938 = vpop.f32.mrf.mxu0
      %v939 = vpop.f32.mrf.mxu0
      %v940 = vadd.f32 0.0, %v939
      %v941 = vpop.f32.mrf.mxu0
      %942 = vmatprep.mubr.bf16.mxu0 %v661
      %943 = vmatmul.mubr.bf16.gmra.mxu0 %v660
      %v944 = vpop.f32.mrf.mxu0
      %v945 = vadd.f32 0.0, %v944
      %v946 = vpop.f32.mrf.mxu0
      %v947 = vpop.f32.mrf.mxu0
      %v948 = vadd.f32 0.0, %v947
      %v949 = vpop.f32.mrf.mxu0
      %950 = vdwg.mxu0
      %v951 = vadd.f32 %v438, %v825
      %v952 = vadd.f32 %v439, %v828
      %v953 = vadd.f32 %v440, %v833
      %v954 = vadd.f32 %v441, %v836
      %v955 = vadd.f32 %v442, %v841
      %v956 = vadd.f32 %v443, %v844
      %v957 = vadd.f32 %v444, %v849
      %v958 = vadd.f32 %v445, %v852
      %v959 = vadd.f32 %v446, %v857
      %v960 = vadd.f32 %v447, %v860
      %v961 = vadd.f32 %v448, %v865
      %v962 = vadd.f32 %v449, %v868
      %v963 = vadd.f32 %v450, %v873
      %v964 = vadd.f32 %v451, %v876
      %v965 = vadd.f32 %v452, %v881
      %v966 = vadd.f32 %v453, %v884
      %v967 = vadd.f32 %v454, %v889
      %v968 = vadd.f32 %v455, %v892
      %v969 = vadd.f32 %v456, %v897
      %v970 = vadd.f32 %v457, %v900
      %v971 = vadd.f32 %v458, %v905
      %v972 = vadd.f32 %v459, %v908
      %v973 = vadd.f32 %v460, %v913
      %v974 = vadd.f32 %v461, %v916
      %v975 = vadd.f32 %v462, %v921
      %v976 = vadd.f32 %v463, %v924
      %v977 = vadd.f32 %v464, %v929
      %v978 = vadd.f32 %v465, %v932
      %v979 = vadd.f32 %v466, %v937
      %v980 = vadd.f32 %v467, %v940
      %v981 = vadd.f32 %v468, %v945
      %v982 = vadd.f32 %v469, %v948
      %983 = vst [vmem:[#allocation2] sm:$0xff] %v951
      %984 = vst [vmem:[#allocation2 + $0x8] sm:$0xff] %v952
      %985 = vst [vmem:[#allocation2 + $0x10] sm:$0xff] %v953
      %986 = vst [vmem:[#allocation2 + $0x18] sm:$0xff] %v954
      %987 = vst [vmem:[#allocation2 + $0x20] sm:$0xff] %v955
      %988 = vst [vmem:[#allocation2 + $0x28] sm:$0xff] %v956
      %989 = vst [vmem:[#allocation2 + $0x30] sm:$0xff] %v957
      %990 = vst [vmem:[#allocation2 + $0x38] sm:$0xff] %v958
      %991 = vst [vmem:[#allocation2 + $0x40] sm:$0xff] %v959
      %992 = vst [vmem:[#allocation2 + $0x48] sm:$0xff] %v960
      %993 = vst [vmem:[#allocation2 + $0x50] sm:$0xff] %v961
      %994 = vst [vmem:[#allocation2 + $0x58] sm:$0xff] %v962
      %995 = vst [vmem:[#allocation2 + $0x60] sm:$0xff] %v963
      %996 = vst [vmem:[#allocation2 + $0x68] sm:$0xff] %v964
      %997 = vst [vmem:[#allocation2 + $0x70] sm:$0xff] %v965
      %998 = vst [vmem:[#allocation2 + $0x78] sm:$0xff] %v966
      %999 = vst [vmem:[#allocation2 + $0x80] sm:$0xff] %v967
      %1000 = vst [vmem:[#allocation2 + $0x88] sm:$0xff] %v968
      %1001 = vst [vmem:[#allocation2 + $0x90] sm:$0xff] %v969
      %1002 = vst [vmem:[#allocation2 + $0x98] sm:$0xff] %v970
      %1003 = vst [vmem:[#allocation2 + $0xa0] sm:$0xff] %v971
      %1004 = vst [vmem:[#allocation2 + $0xa8] sm:$0xff] %v972
      %1005 = vst [vmem:[#allocation2 + $0xb0] sm:$0xff] %v973
      %1006 = vst [vmem:[#allocation2 + $0xb8] sm:$0xff] %v974
      %1007 = vst [vmem:[#allocation2 + $0xc0] sm:$0xff] %v975
      %1008 = vst [vmem:[#allocation2 + $0xc8] sm:$0xff] %v976
      %1009 = vst [vmem:[#allocation2 + $0xd0] sm:$0xff] %v977
      %1010 = vst [vmem:[#allocation2 + $0xd8] sm:$0xff] %v978
      %1011 = vst [vmem:[#allocation2 + $0xe0] sm:$0xff] %v979
      %1012 = vst [vmem:[#allocation2 + $0xe8] sm:$0xff] %v980
      %1013 = vst [vmem:[#allocation2 + $0xf0] sm:$0xff] %v981
      %1014 = vst [vmem:[#allocation2 + $0xf8] sm:$0xff] %v982
      // Predicated region
      $region37: #{_lambda_.8} parent=31 // pred_check
        %p1015 = pneg %p402
      $region38: #{_lambda_.8} parent=31 // pred_check_branch
        %1017 = sbr.rel (%p1015) target = $region40
      $region39: #{_lambda_.8} parent=31 // pred_region
        %v1018 = vld [vmem:[#allocation2] sm:$0xff]
        %v1019 = vld [vmem:[#allocation2 + $0x8] sm:$0xff]
        %v1020 = vld [vmem:[#allocation2 + $0x10] sm:$0xff]
        %v1021 = vld [vmem:[#allocation2 + $0x18] sm:$0xff]
        %v1022 = vld [vmem:[#allocation2 + $0x20] sm:$0xff]
        %v1023 = vld [vmem:[#allocation2 + $0x28] sm:$0xff]
        %v1024 = vld [vmem:[#allocation2 + $0x30] sm:$0xff]
        %v1025 = vld [vmem:[#allocation2 + $0x38] sm:$0xff]
        %v1026 = vld [vmem:[#allocation2 + $0x40] sm:$0xff]
        %v1027 = vld [vmem:[#allocation2 + $0x48] sm:$0xff]
        %v1028 = vld [vmem:[#allocation2 + $0x50] sm:$0xff]
        %v1029 = vld [vmem:[#allocation2 + $0x58] sm:$0xff]
        %v1030 = vld [vmem:[#allocation2 + $0x60] sm:$0xff]
        %v1031 = vld [vmem:[#allocation2 + $0x68] sm:$0xff]
        %v1032 = vld [vmem:[#allocation2 + $0x70] sm:$0xff]
        %v1033 = vld [vmem:[#allocation2 + $0x78] sm:$0xff]
        %v1034 = vld [vmem:[#allocation2 + $0x80] sm:$0xff]
        %v1035 = vld [vmem:[#allocation2 + $0x88] sm:$0xff]
        %v1036 = vld [vmem:[#allocation2 + $0x90] sm:$0xff]
        %v1037 = vld [vmem:[#allocation2 + $0x98] sm:$0xff]
        %v1038 = vld [vmem:[#allocation2 + $0xa0] sm:$0xff]
        %v1039 = vld [vmem:[#allocation2 + $0xa8] sm:$0xff]
        %v1040 = vld [vmem:[#allocation2 + $0xb0] sm:$0xff]
        %v1041 = vld [vmem:[#allocation2 + $0xb8] sm:$0xff]
        %v1042 = vld [vmem:[#allocation2 + $0xc0] sm:$0xff]
        %v1043 = vld [vmem:[#allocation2 + $0xc8] sm:$0xff]
        %v1044 = vld [vmem:[#allocation2 + $0xd0] sm:$0xff]
        %v1045 = vld [vmem:[#allocation2 + $0xd8] sm:$0xff]
        %v1046 = vld [vmem:[#allocation2 + $0xe0] sm:$0xff]
        %v1047 = vld [vmem:[#allocation2 + $0xe8] sm:$0xff]
        %v1048 = vld [vmem:[#allocation2 + $0xf0] sm:$0xff]
        %v1049 = vld [vmem:[#allocation2 + $0xf8] sm:$0xff]
        %v1050 = vld [vmem:[%s369] sm:$0x1]
        %v1052 = vlaneseq
        %v1053 = vshrl.u32 %v1052, 7
        %v1054 = vsub.s32 0, %v1053
        %v1055 = vrot.slane %v1050, %v1054
        %v1057 = vadd.f32 %v1018, %v1055
        %v1058 = vadd.f32 %v1019, %v1055
        %v1059 = vadd.f32 %v1020, %v1055
        %v1060 = vadd.f32 %v1021, %v1055
        %v1061 = vadd.f32 %v1022, %v1055
        %v1062 = vadd.f32 %v1023, %v1055
        %v1063 = vadd.f32 %v1024, %v1055
        %v1064 = vadd.f32 %v1025, %v1055
        %v1065 = vadd.f32 %v1026, %v1055
        %v1066 = vadd.f32 %v1027, %v1055
        %v1067 = vadd.f32 %v1028, %v1055
        %v1068 = vadd.f32 %v1029, %v1055
        %v1069 = vadd.f32 %v1030, %v1055
        %v1070 = vadd.f32 %v1031, %v1055
        %v1071 = vadd.f32 %v1032, %v1055
        %v1072 = vadd.f32 %v1033, %v1055
        %v1073 = vadd.f32 %v1034, %v1055
        %v1074 = vadd.f32 %v1035, %v1055
        %v1075 = vadd.f32 %v1036, %v1055
        %v1076 = vadd.f32 %v1037, %v1055
        %v1077 = vadd.f32 %v1038, %v1055
        %v1078 = vadd.f32 %v1039, %v1055
        %v1079 = vadd.f32 %v1040, %v1055
        %v1080 = vadd.f32 %v1041, %v1055
        %v1081 = vadd.f32 %v1042, %v1055
        %v1082 = vadd.f32 %v1043, %v1055
        %v1083 = vadd.f32 %v1044, %v1055
        %v1084 = vadd.f32 %v1045, %v1055
        %v1085 = vadd.f32 %v1046, %v1055
        %v1086 = vadd.f32 %v1047, %v1055
        %v1087 = vadd.f32 %v1048, %v1055
        %v1088 = vadd.f32 %v1049, %v1055
        %v1089 = vadd.f32 %v1057, %v1058
        %v1090 = vadd.f32 %v1089, %v1059
        %v1091 = vadd.f32 %v1090, %v1060
        %v1092 = vadd.f32 %v1091, %v1061
        %v1093 = vadd.f32 %v1092, %v1062
        %v1094 = vadd.f32 %v1093, %v1063
        %v1095 = vadd.f32 %v1094, %v1064
        %v1096 = vadd.f32 %v1095, %v1065
        %v1097 = vadd.f32 %v1096, %v1066
        %v1098 = vadd.f32 %v1097, %v1067
        %v1099 = vadd.f32 %v1098, %v1068
        %v1100 = vadd.f32 %v1099, %v1069
        %v1101 = vadd.f32 %v1100, %v1070
        %v1102 = vadd.f32 %v1101, %v1071
        %v1103 = vadd.f32 %v1102, %v1072
        %v1104 = vadd.f32 %v1103, %v1073
        %v1105 = vadd.f32 %v1104, %v1074
        %v1106 = vadd.f32 %v1105, %v1075
        %v1107 = vadd.f32 %v1106, %v1076
        %v1108 = vadd.f32 %v1107, %v1077
        %v1109 = vadd.f32 %v1108, %v1078
        %v1110 = vadd.f32 %v1109, %v1079
        %v1111 = vadd.f32 %v1110, %v1080
        %v1112 = vadd.f32 %v1111, %v1081
        %v1113 = vadd.f32 %v1112, %v1082
        %v1114 = vadd.f32 %v1113, %v1083
        %v1115 = vadd.f32 %v1114, %v1084
        %v1116 = vadd.f32 %v1115, %v1085
        %v1117 = vadd.f32 %v1116, %v1086
        %v1118 = vadd.f32 %v1117, %v1087
        %v1119 = vadd.f32 %v1118, %v1088
        %v1120 = vrot.slane %v1119, 4
        %v1121 = vadd.f32 %v1119, %v1120
        %v1122 = vrot.slane %v1121, 2
        %v1123 = vadd.f32 %v1121, %v1122
        %v1124 = vrot.slane %v1123, 1
        %v1125 = vadd.f32 %v1123, %v1124
        %1126 = vst [vmem:[%s391] sm:$0x1] %v1125
        %v1127 = vmul.f32 %v1057, %v1057
        %v1128 = vmul.f32 %v1058, %v1058
        %v1129 = vmul.f32 %v1059, %v1059
        %v1130 = vmul.f32 %v1060, %v1060
        %v1131 = vmul.f32 %v1061, %v1061
        %v1132 = vmul.f32 %v1062, %v1062
        %v1133 = vmul.f32 %v1063, %v1063
        %v1134 = vmul.f32 %v1064, %v1064
        %v1135 = vmul.f32 %v1065, %v1065
        %v1136 = vmul.f32 %v1066, %v1066
        %v1137 = vmul.f32 %v1067, %v1067
        %v1138 = vmul.f32 %v1068, %v1068
        %v1139 = vmul.f32 %v1069, %v1069
        %v1140 = vmul.f32 %v1070, %v1070
        %v1141 = vmul.f32 %v1071, %v1071
        %v1142 = vmul.f32 %v1072, %v1072
        %v1143 = vmul.f32 %v1073, %v1073
        %v1144 = vmul.f32 %v1074, %v1074
        %v1145 = vmul.f32 %v1075, %v1075
        %v1146 = vmul.f32 %v1076, %v1076
        %v1147 = vmul.f32 %v1077, %v1077
        %v1148 = vmul.f32 %v1078, %v1078
        %v1149 = vmul.f32 %v1079, %v1079
        %v1150 = vmul.f32 %v1080, %v1080
        %v1151 = vmul.f32 %v1081, %v1081
        %v1152 = vmul.f32 %v1082, %v1082
        %v1153 = vmul.f32 %v1083, %v1083
        %v1154 = vmul.f32 %v1084, %v1084
        %v1155 = vmul.f32 %v1085, %v1085
        %v1156 = vmul.f32 %v1086, %v1086
        %v1157 = vmul.f32 %v1087, %v1087
        %v1158 = vmul.f32 %v1088, %v1088
        %v1159 = vadd.f32 %v1127, %v1128
        %v1160 = vadd.f32 %v1159, %v1129
        %v1161 = vadd.f32 %v1160, %v1130
        %v1162 = vadd.f32 %v1161, %v1131
        %v1163 = vadd.f32 %v1162, %v1132
        %v1164 = vadd.f32 %v1163, %v1133
        %v1165 = vadd.f32 %v1164, %v1134
        %v1166 = vadd.f32 %v1165, %v1135
        %v1167 = vadd.f32 %v1166, %v1136
        %v1168 = vadd.f32 %v1167, %v1137
        %v1169 = vadd.f32 %v1168, %v1138
        %v1170 = vadd.f32 %v1169, %v1139
        %v1171 = vadd.f32 %v1170, %v1140
        %v1172 = vadd.f32 %v1171, %v1141
        %v1173 = vadd.f32 %v1172, %v1142
        %v1174 = vadd.f32 %v1173, %v1143
        %v1175 = vadd.f32 %v1174, %v1144
        %v1176 = vadd.f32 %v1175, %v1145
        %v1177 = vadd.f32 %v1176, %v1146
        %v1178 = vadd.f32 %v1177, %v1147
        %v1179 = vadd.f32 %v1178, %v1148
        %v1180 = vadd.f32 %v1179, %v1149
        %v1181 = vadd.f32 %v1180, %v1150
        %v1182 = vadd.f32 %v1181, %v1151
        %v1183 = vadd.f32 %v1182, %v1152
        %v1184 = vadd.f32 %v1183, %v1153
        %v1185 = vadd.f32 %v1184, %v1154
        %v1186 = vadd.f32 %v1185, %v1155
        %v1187 = vadd.f32 %v1186, %v1156
        %v1188 = vadd.f32 %v1187, %v1157
        %v1189 = vadd.f32 %v1188, %v1158
        %v1190 = vrot.slane %v1189, 4
        %v1191 = vadd.f32 %v1189, %v1190
        %v1192 = vrot.slane %v1191, 2
        %v1193 = vadd.f32 %v1191, %v1192
        %v1194 = vrot.slane %v1193, 1
        %v1195 = vadd.f32 %v1193, %v1194
        %1196 = vst [vmem:[%s400] sm:$0x1] %v1195
        %v1197 = vpack.c.bf16 %v1058, %v1057
        %v1198 = vpack.c.bf16 %v1060, %v1059
        %v1199 = vpack.c.bf16 %v1062, %v1061
        %v1200 = vpack.c.bf16 %v1064, %v1063
        %v1201 = vpack.c.bf16 %v1066, %v1065
        %v1202 = vpack.c.bf16 %v1068, %v1067
        %v1203 = vpack.c.bf16 %v1070, %v1069
        %v1204 = vpack.c.bf16 %v1072, %v1071
        %v1205 = vpack.c.bf16 %v1074, %v1073
        %v1206 = vpack.c.bf16 %v1076, %v1075
        %v1207 = vpack.c.bf16 %v1078, %v1077
        %v1208 = vpack.c.bf16 %v1080, %v1079
        %v1209 = vpack.c.bf16 %v1082, %v1081
        %v1210 = vpack.c.bf16 %v1084, %v1083
        %v1211 = vpack.c.bf16 %v1086, %v1085
        %v1212 = vpack.c.bf16 %v1088, %v1087
        %v1229 = vunpack.c.l.b16 %v1197
        %v1230 = vunpack.c.h.b16 %v1197
        %v1231 = vunpack.c.l.b16 %v1198
        %v1232 = vunpack.c.h.b16 %v1198
        %v1233 = vunpack.c.l.b16 %v1199
        %v1234 = vunpack.c.h.b16 %v1199
        %v1235 = vunpack.c.l.b16 %v1200
        %v1236 = vunpack.c.h.b16 %v1200
        %v1237 = vunpack.c.l.b16 %v1201
        %v1238 = vunpack.c.h.b16 %v1201
        %v1239 = vunpack.c.l.b16 %v1202
        %v1240 = vunpack.c.h.b16 %v1202
        %v1241 = vunpack.c.l.b16 %v1203
        %v1242 = vunpack.c.h.b16 %v1203
        %v1243 = vunpack.c.l.b16 %v1204
        %v1244 = vunpack.c.h.b16 %v1204
        %v1245 = vunpack.c.l.b16 %v1205
        %v1246 = vunpack.c.h.b16 %v1205
        %v1247 = vunpack.c.l.b16 %v1206
        %v1248 = vunpack.c.h.b16 %v1206
        %v1249 = vunpack.c.l.b16 %v1207
        %v1250 = vunpack.c.h.b16 %v1207
        %v1251 = vunpack.c.l.b16 %v1208
        %v1252 = vunpack.c.h.b16 %v1208
        %v1253 = vunpack.c.l.b16 %v1209
        %v1254 = vunpack.c.h.b16 %v1209
        %v1255 = vunpack.c.l.b16 %v1210
        %v1256 = vunpack.c.h.b16 %v1210
        %v1257 = vunpack.c.l.b16 %v1211
        %v1258 = vunpack.c.h.b16 %v1211
        %v1259 = vunpack.c.l.b16 %v1212
        %v1260 = vunpack.c.h.b16 %v1212
        %v1261 = vpack.c.b16 %v1229, %v1229
        %v1262 = vpack.c.b16 %v1230, %v1230
        %v1263 = vpack.c.b16 %v1231, %v1231
        %v1264 = vpack.c.b16 %v1232, %v1232
        %v1265 = vpack.c.b16 %v1233, %v1233
        %v1266 = vpack.c.b16 %v1234, %v1234
        %v1267 = vpack.c.b16 %v1235, %v1235
        %v1268 = vpack.c.b16 %v1236, %v1236
        %v1269 = vpack.c.b16 %v1237, %v1237
        %v1270 = vpack.c.b16 %v1238, %v1238
        %v1271 = vpack.c.b16 %v1239, %v1239
        %v1272 = vpack.c.b16 %v1240, %v1240
        %v1273 = vpack.c.b16 %v1241, %v1241
        %v1274 = vpack.c.b16 %v1242, %v1242
        %v1275 = vpack.c.b16 %v1243, %v1243
        %v1276 = vpack.c.b16 %v1244, %v1244
        %v1277 = vpack.c.b16 %v1245, %v1245
        %v1278 = vpack.c.b16 %v1246, %v1246
        %v1279 = vpack.c.b16 %v1247, %v1247
        %v1280 = vpack.c.b16 %v1248, %v1248
        %v1281 = vpack.c.b16 %v1249, %v1249
        %v1282 = vpack.c.b16 %v1250, %v1250
        %v1283 = vpack.c.b16 %v1251, %v1251
        %v1284 = vpack.c.b16 %v1252, %v1252
        %v1285 = vpack.c.b16 %v1253, %v1253
        %v1286 = vpack.c.b16 %v1254, %v1254
        %v1287 = vpack.c.b16 %v1255, %v1255
        %v1288 = vpack.c.b16 %v1256, %v1256
        %v1289 = vpack.c.b16 %v1257, %v1257
        %v1290 = vpack.c.b16 %v1258, %v1258
        %v1291 = vpack.c.b16 %v1259, %v1259
        %v1292 = vpack.c.b16 %v1260, %v1260
        %1325 = vst [vmem:[%s381] sm:$0xf] %v1261
        %1326 = vst [vmem:[%s381 + $0x4] sm:$0xf] %v1262
        %1327 = vst [vmem:[%s381 + $0x8] sm:$0xf] %v1263
        %1328 = vst [vmem:[%s381 + $0xc] sm:$0xf] %v1264
        %1329 = vst [vmem:[%s381 + $0x10] sm:$0xf] %v1265
        %1330 = vst [vmem:[%s381 + $0x14] sm:$0xf] %v1266
        %1331 = vst [vmem:[%s381 + $0x18] sm:$0xf] %v1267
        %1332 = vst [vmem:[%s381 + $0x1c] sm:$0xf] %v1268
        %1333 = vst [vmem:[%s381 + $0x20] sm:$0xf] %v1269
        %1334 = vst [vmem:[%s381 + $0x24] sm:$0xf] %v1270
        %1335 = vst [vmem:[%s381 + $0x28] sm:$0xf] %v1271
        %1336 = vst [vmem:[%s381 + $0x2c] sm:$0xf] %v1272
        %1337 = vst [vmem:[%s381 + $0x30] sm:$0xf] %v1273
        %1338 = vst [vmem:[%s381 + $0x34] sm:$0xf] %v1274
        %1339 = vst [vmem:[%s381 + $0x38] sm:$0xf] %v1275
        %1340 = vst [vmem:[%s381 + $0x3c] sm:$0xf] %v1276
        %1341 = vst [vmem:[%s381 + $0x40] sm:$0xf] %v1277
        %1342 = vst [vmem:[%s381 + $0x44] sm:$0xf] %v1278
        %1343 = vst [vmem:[%s381 + $0x48] sm:$0xf] %v1279
        %1344 = vst [vmem:[%s381 + $0x4c] sm:$0xf] %v1280
        %1345 = vst [vmem:[%s381 + $0x50] sm:$0xf] %v1281
        %1346 = vst [vmem:[%s381 + $0x54] sm:$0xf] %v1282
        %1347 = vst [vmem:[%s381 + $0x58] sm:$0xf] %v1283
        %1348 = vst [vmem:[%s381 + $0x5c] sm:$0xf] %v1284
        %1349 = vst [vmem:[%s381 + $0x60] sm:$0xf] %v1285
        %1350 = vst [vmem:[%s381 + $0x64] sm:$0xf] %v1286
        %1351 = vst [vmem:[%s381 + $0x68] sm:$0xf] %v1287
        %1352 = vst [vmem:[%s381 + $0x6c] sm:$0xf] %v1288
        %1353 = vst [vmem:[%s381 + $0x70] sm:$0xf] %v1289
        %1354 = vst [vmem:[%s381 + $0x74] sm:$0xf] %v1290
        %1355 = vst [vmem:[%s381 + $0x78] sm:$0xf] %v1291
        %1356 = vst [vmem:[%s381 + $0x7c] sm:$0xf] %v1292
      $region40: #{_lambda_.8} parent=31 // pred_fallthru
        _
      %s1357 = smul.u32 32, %s24
      %p1358 = scmp.lt.s32.totalorder %s23, 1
      %s1359 = scalar_select %p1358, %s23, 1
      %p1360 = scmp.lt.s32.totalorder %s1357, 31
      %s1361 = scalar_select %p1360, %s1357, 31
      %p1362 = scmp.lt.s32.totalorder %s25, 0
      %s1363 = scalar_select %p1362, %s25, 0
      %s1364 = sadd.s32 %s1363, %s1361
      %s1365 = smul.addr %s1359, 32
      %s1366 = sadd.s32 %s1364, %s1365
      %s1367 = smul.addr %s1366, 4
      %s1368 = scalar_lea.vmem %s3, %s1367
      %p1369 = scmp.lt.s32.totalorder %s23, 1
      %s1370 = scalar_select %p1369, %s23, 1
      %p1371 = scmp.lt.s32.totalorder %s24, 0
      %s1372 = scalar_select %p1371, %s24, 0
      %p1373 = scmp.lt.s32.totalorder %s25, 0
      %s1374 = scalar_select %p1373, %s25, 0
      %s1375 = sadd.s32 %s1374, %s1372
      %s1376 = sadd.s32 %s1375, %s1370
      %s1377 = scalar_lea.vmem %s4, %s1376
      %p1378 = scmp.lt.s32.totalorder %s23, 1
      %s1379 = scalar_select %p1378, %s23, 1
      %p1380 = scmp.lt.s32.totalorder %s24, 0
      %s1381 = scalar_select %p1380, %s24, 0
      %p1382 = scmp.lt.s32.totalorder %s25, 0
      %s1383 = scalar_select %p1382, %s25, 0
      %s1384 = sadd.s32 %s1383, %s1381
      %s1385 = sadd.s32 %s1384, %s1379
      %s1386 = scalar_lea.vmem %s5, %s1385
      // Predicated region
      $region41: #{_lambda_.8} parent=31 // pred_check
        %p1387 = pneg %p149
      $region42: #{_lambda_.8} parent=31 // pred_check_branch
        %1389 = sbr.rel (%p1387) target = $region44
      $region43: #{_lambda_.8} parent=31 // pred_region
        %s1390 = smul.u32 32, %s24
      $region44: #{_lambda_.8} parent=31 // pred_fallthru
        _
      // Predicated region
      $region45: #{_lambda_.8} parent=31 // pred_check
        %p1391 = pneg %p179
      $region46: #{_lambda_.8} parent=31 // pred_check_branch
        %1393 = sbr.rel (%p1391) target = $region48
      $region47: #{_lambda_.8} parent=31 // pred_region
        _
      $region48: #{_lambda_.8} parent=31 // pred_fallthru
        _
      // Predicated region
      $region49: #{_lambda_.8} parent=31 // pred_check
        %p1394 = pneg %p209
      $region50: #{_lambda_.8} parent=31 // pred_check_branch
        %1396 = sbr.rel (%p1394) target = $region52
      $region51: #{_lambda_.8} parent=31 // pred_region
        _
      $region52: #{_lambda_.8} parent=31 // pred_fallthru
        _
    $region32: #{_lambda_.8} parent=5 // pred_fallthru
      _
    %p1397 = scmp.le.s32.totalorder 2, %s12
    // Predicated region
    $region53: #{_lambda_.8} parent=5 // pred_check
      %p1398 = pneg %p1397
    $region54: #{_lambda_.8} parent=5 // pred_check_branch
      %1400 = sbr.rel (%p1398) target = $region56
    $region55: #{_lambda_.8} parent=5 // pred_region
      %s1401 = ssub.s32 %s12, 2
      // Predicated region
      $region57: #{_lambda_.8} parent=55 // pred_check
        %p1402 = pneg %p155
      $region58: #{_lambda_.8} parent=55 // pred_check_branch
        %1404 = sbr.rel (%p1402) target = $region60
      $region59: #{_lambda_.8} parent=55 // pred_region
        %s1405 = smul.u32 32, %s28
        %p1406 = scmp.lt.s32.totalorder %s27, 1
        %s1407 = scalar_select %p1406, %s27, 1
        %p1408 = scmp.lt.s32.totalorder %s1405, 31
        %s1409 = scalar_select %p1408, %s1405, 31
        %p1410 = scmp.lt.s32.totalorder %s29, 0
        %s1411 = scalar_select %p1410, %s29, 0
        %s1412 = sadd.s32 %s1411, %s1409
        %s1413 = smul.addr %s1407, 32
        %s1414 = sadd.s32 %s1412, %s1413
        %s1415 = smul.addr %s1414, 4
        %s1416 = scalar_lea.vmem %s3, %s1415
      $region60: #{_lambda_.8} parent=55 // pred_fallthru
        _
      // Predicated region
      $region61: #{_lambda_.8} parent=55 // pred_check
        %p1417 = pneg %p185
      $region62: #{_lambda_.8} parent=55 // pred_check_branch
        %1419 = sbr.rel (%p1417) target = $region64
      $region63: #{_lambda_.8} parent=55 // pred_region
        %p1420 = scmp.lt.s32.totalorder %s27, 1
        %s1421 = scalar_select %p1420, %s27, 1
        %p1422 = scmp.lt.s32.totalorder %s28, 0
        %s1423 = scalar_select %p1422, %s28, 0
        %p1424 = scmp.lt.s32.totalorder %s29, 0
        %s1425 = scalar_select %p1424, %s29, 0
        %s1426 = sadd.s32 %s1425, %s1423
        %s1427 = sadd.s32 %s1426, %s1421
        %s1428 = scalar_lea.vmem %s4, %s1427
      $region64: #{_lambda_.8} parent=55 // pred_fallthru
        _
      // Predicated region
      $region65: #{_lambda_.8} parent=55 // pred_check
        %p1429 = pneg %p215
      $region66: #{_lambda_.8} parent=55 // pred_check_branch
        %1431 = sbr.rel (%p1429) target = $region68
      $region67: #{_lambda_.8} parent=55 // pred_region
        %p1432 = scmp.lt.s32.totalorder %s27, 1
        %s1433 = scalar_select %p1432, %s27, 1
        %p1434 = scmp.lt.s32.totalorder %s28, 0
        %s1435 = scalar_select %p1434, %s28, 0
        %p1436 = scmp.lt.s32.totalorder %s29, 0
        %s1437 = scalar_select %p1436, %s29, 0
        %s1438 = sadd.s32 %s1437, %s1435
        %s1439 = sadd.s32 %s1438, %s1433
        %s1440 = scalar_lea.vmem %s5, %s1439
      $region68: #{_lambda_.8} parent=55 // pred_fallthru
        _
    $region56: #{_lambda_.8} parent=5 // pred_fallthru
      _
  $region6: #{_lambda_.8} parent=0 // loop_footer
    %s16 = sadd.s32 1, %s12
  $region7: #{_lambda_.8} parent=0 // loop_footer_branch
    %11 = sbr.rel target = $region3
  $region8: #{_lambda_.8} parent=0 // loop_exit
    _

// kernel: _lambda_.11
$region0: #{_lambda_.11}
  #allocation0 [shape = 'u32[]', space=smem, size = 0x4, offset = 0x4, fixed_abs, tag = 'smem constant byte address 0x4 - core index']
  #allocation1 [shape = 'u32[144,128]{1,0:T(1,128)}', space=vmem, size = 0x12000, scoped, tag = 'internal scratch']
  %s0 = inlined_call_operand.vmem [shape: bf16[2,64,128], index: 0, kind: input, shape index: {}]
  %s1 = inlined_call_operand.vmem [shape: f32[2,1,128], index: 1, kind: input, shape index: {}]
  %s2 = inlined_call_operand.vmem [shape: f32[2,1,128], index: 2, kind: input, shape index: {}]
  %s3 = inlined_call_operand.vmem [shape: bf16[2,64,128], index: 3, kind: output, shape index: {}]
  %s4 = sld [smem:[#allocation0]]
  $region45: #{_lambda_.11} parent=0
    _
  %s6 = ssub.s32 1, %s4
  %s7 = scalar_select 0, %s6, %s4
  loop: start=0, step=1, limit=4
  $region2: #{_lambda_.11} parent=0 // loop_pre_header
    _
  $region3: #{_lambda_.11} parent=0 // loop_header
    %s9 = sphi 0, %s13
    %p10 = scmp.ge.s32.totalorder %s9, 4
    %s16 = sphi 0, %s35
    %s17 = sphi 0, %s31
    %s18 = sphi 0, %s27
    %s19 = sphi 0, %s16
    %s20 = sphi 0, %s17
    %s21 = sphi 0, %s18
    %s22 = sphi 0, %s19
    %s23 = sphi 0, %s20
    %s24 = sphi 0, %s21
    %s42 = sphi 0, %s44
    %s45 = sphi 0, %s42
    %s46 = sphi 0, %s45
    %s62 = sphi 0, %s46
    %s70 = sphi 0, %s72
    %s73 = sphi 0, %s70
    %s74 = sphi 0, %s73
    %s90 = sphi 0, %s74
    %s98 = sphi 0, %s100
    %s101 = sphi 0, %s98
    %s102 = sphi 0, %s101
    %s118 = sphi 0, %s102
    %s128 = sphi 0, %s130
    %s131 = sphi 0, %s128
    %s132 = sphi 0, %s131
    %s148 = sphi 0, %s132
  $region4: #{_lambda_.11} parent=0 // loop_header_branch
    %12 = sbr.rel (%p10) target = $region8
  $region5: #{_lambda_.11} parent=0 // loop_body
    %s14 = ssub.s32 %s9, 1
    %s15 = ssub.s32 %s9, 2
    %s25 = sadd.s32 1, %s18
    %p26 = scmp.ge.s32.totalorder %s25, 1
    %s27 = scalar_select %p26, 0, %s25
    %s28 = sadd.s32 1, %s17
    %s29 = scalar_select %p26, %s28, %s17
    %p30 = scmp.ge.s32.totalorder %s29, 1
    %s31 = scalar_select %p30, 0, %s29
    %s32 = sadd.s32 1, %s16
    %s33 = scalar_select %p30, %s32, %s16
    %p34 = scmp.ge.s32.totalorder %s33, 2
    %s35 = scalar_select %p34, 0, %s33
    %s36 = ssub.s32 %s16, %s35
    %s37 = ssub.s32 %s17, %s31
    %s38 = sor.u32 %s36, %s37
    %s39 = ssub.s32 %s18, %s27
    %s40 = sor.u32 %s38, %s39
    %p41 = scmp.eq.s32.totalorder %s40, 0
    %s43 = sadd.s32 %s42, 1
    %s44 = scalar_select %p41, %s42, %s43
    %p47 = pneg %p41
    %p48 = scmp.eq.s32.totalorder %s9, 1
    %p49 = por %p47, %p48
    %p50 = scmp.ne.s32.totalorder %s42, %s45
    %p51 = scmp.eq.s32.totalorder %s9, 0
    %p52 = por %p50, %p51
    %p53 = scmp.ne.s32.totalorder %s42, %s45
    %p54 = scmp.eq.s32.totalorder %s14, 1
    %p55 = por %p53, %p54
    %p56 = scmp.ne.s32.totalorder %s45, %s46
    %p57 = scmp.eq.s32.totalorder %s14, 0
    %p58 = por %p56, %p57
    %p59 = scmp.ne.s32.totalorder %s45, %s46
    %p60 = scmp.eq.s32.totalorder %s15, 1
    %p61 = por %p59, %p60
    %p63 = scmp.ne.s32.totalorder %s46, %s62
    %p64 = scmp.eq.s32.totalorder %s15, 0
    %p65 = por %p63, %p64
    %s66 = ssub.s32 %s16, %s35
    %s67 = ssub.s32 %s18, %s27
    %s68 = sor.u32 %s66, %s67
    %p69 = scmp.eq.s32.totalorder %s68, 0
    %s71 = sadd.s32 %s70, 1
    %s72 = scalar_select %p69, %s70, %s71
    %p75 = pneg %p69
    %p76 = scmp.eq.s32.totalorder %s9, 1
    %p77 = por %p75, %p76
    %p78 = scmp.ne.s32.totalorder %s70, %s73
    %p79 = scmp.eq.s32.totalorder %s9, 0
    %p80 = por %p78, %p79
    %p81 = scmp.ne.s32.totalorder %s70, %s73
    %p82 = scmp.eq.s32.totalorder %s14, 1
    %p83 = por %p81, %p82
    %p84 = scmp.ne.s32.totalorder %s73, %s74
    %p85 = scmp.eq.s32.totalorder %s14, 0
    %p86 = por %p84, %p85
    %p87 = scmp.ne.s32.totalorder %s73, %s74
    %p88 = scmp.eq.s32.totalorder %s15, 1
    %p89 = por %p87, %p88
    %p91 = scmp.ne.s32.totalorder %s74, %s90
    %p92 = scmp.eq.s32.totalorder %s15, 0
    %p93 = por %p91, %p92
    %s94 = ssub.s32 %s16, %s35
    %s95 = ssub.s32 %s18, %s27
    %s96 = sor.u32 %s94, %s95
    %p97 = scmp.eq.s32.totalorder %s96, 0
    %s99 = sadd.s32 %s98, 1
    %s100 = scalar_select %p97, %s98, %s99
    %p103 = pneg %p97
    %p104 = scmp.eq.s32.totalorder %s9, 1
    %p105 = por %p103, %p104
    %p106 = scmp.ne.s32.totalorder %s98, %s101
    %p107 = scmp.eq.s32.totalorder %s9, 0
    %p108 = por %p106, %p107
    %p109 = scmp.ne.s32.totalorder %s98, %s101
    %p110 = scmp.eq.s32.totalorder %s14, 1
    %p111 = por %p109, %p110
    %p112 = scmp.ne.s32.totalorder %s101, %s102
    %p113 = scmp.eq.s32.totalorder %s14, 0
    %p114 = por %p112, %p113
    %p115 = scmp.ne.s32.totalorder %s101, %s102
    %p116 = scmp.eq.s32.totalorder %s15, 1
    %p117 = por %p115, %p116
    %p119 = scmp.ne.s32.totalorder %s102, %s118
    %p120 = scmp.eq.s32.totalorder %s15, 0
    %p121 = por %p119, %p120
    %s122 = ssub.s32 %s16, %s35
    %s123 = ssub.s32 %s17, %s31
    %s124 = sor.u32 %s122, %s123
    %s125 = ssub.s32 %s18, %s27
    %s126 = sor.u32 %s124, %s125
    %p127 = scmp.eq.s32.totalorder %s126, 0
    %s129 = sadd.s32 %s128, 1
    %s130 = scalar_select %p127, %s128, %s129
    %p133 = pneg %p127
    %p134 = scmp.eq.s32.totalorder %s9, 1
    %p135 = por %p133, %p134
    %p136 = scmp.ne.s32.totalorder %s128, %s131
    %p137 = scmp.eq.s32.totalorder %s9, 0
    %p138 = por %p136, %p137
    %p139 = scmp.ne.s32.totalorder %s128, %s131
    %p140 = scmp.eq.s32.totalorder %s14, 1
    %p141 = por %p139, %p140
    %p142 = scmp.ne.s32.totalorder %s131, %s132
    %p143 = scmp.eq.s32.totalorder %s14, 0
    %p144 = por %p142, %p143
    %p145 = scmp.ne.s32.totalorder %s131, %s132
    %p146 = scmp.eq.s32.totalorder %s15, 1
    %p147 = por %p145, %p146
    %p149 = scmp.ne.s32.totalorder %s132, %s148
    %p150 = scmp.eq.s32.totalorder %s15, 0
    %p151 = por %p149, %p150
    %p152 = scmp.le.s32.totalorder 1, %s9
    %p153 = scmp.lt.s32.totalorder %s9, 3
    %p154 = pnand %p152, %p153
    %p155 = pneg %p154
    // Predicated region
    $region9: #{_lambda_.11} parent=5 // pred_check
      _
    $region10: #{_lambda_.11} parent=5 // pred_check_branch
      %157 = sbr.rel (%p154) target = $region12
    $region11: #{_lambda_.11} parent=5 // pred_region
      %s158 = ssub.s32 %s9, 1
    $region12: #{_lambda_.11} parent=5 // pred_fallthru
      _
    %p159 = scmp.lt.s32.totalorder %s9, 2
    // Predicated region
    $region13: #{_lambda_.11} parent=5 // pred_check
      %p160 = pneg %p159
    $region14: #{_lambda_.11} parent=5 // pred_check_branch
      %162 = sbr.rel (%p160) target = $region16
    $region15: #{_lambda_.11} parent=5 // pred_region
      // Predicated region
      $region17: #{_lambda_.11} parent=15 // pred_check
        %p163 = pneg %p52
      $region18: #{_lambda_.11} parent=15 // pred_check_branch
        %165 = sbr.rel (%p163) target = $region20
      $region19: #{_lambda_.11} parent=15 // pred_region
        %s166 = smul.u32 8, %s17
        %p167 = scmp.lt.s32.totalorder %s16, 1
        %s168 = scalar_select %p167, %s16, 1
        %p169 = scmp.lt.s32.totalorder %s166, 7
        %s170 = scalar_select %p169, %s166, 7
        %p171 = scmp.lt.s32.totalorder %s18, 0
        %s172 = scalar_select %p171, %s18, 0
        %s173 = sadd.s32 %s172, %s170
        %s174 = smul.addr %s168, 8
        %s175 = sadd.s32 %s173, %s174
        %s176 = smul.addr %s175, 4
        %s177 = scalar_lea.vmem %s0, %s176
        %s178 = smul.u32 8, %s17
      $region20: #{_lambda_.11} parent=15 // pred_fallthru
        _
      // Predicated region
      $region21: #{_lambda_.11} parent=15 // pred_check
        %p179 = pneg %p80
      $region22: #{_lambda_.11} parent=15 // pred_check_branch
        %181 = sbr.rel (%p179) target = $region24
      $region23: #{_lambda_.11} parent=15 // pred_region
        %p182 = scmp.lt.s32.totalorder %s16, 1
        %s183 = scalar_select %p182, %s16, 1
        %p184 = scmp.lt.s32.totalorder %s18, 0
        %s185 = scalar_select %p184, %s18, 0
        %s186 = sadd.s32 %s185, %s183
        %s187 = scalar_lea.vmem %s1, %s186
      $region24: #{_lambda_.11} parent=15 // pred_fallthru
        _
      // Predicated region
      $region25: #{_lambda_.11} parent=15 // pred_check
        %p188 = pneg %p108
      $region26: #{_lambda_.11} parent=15 // pred_check_branch
        %190 = sbr.rel (%p188) target = $region28
      $region27: #{_lambda_.11} parent=15 // pred_region
        %p191 = scmp.lt.s32.totalorder %s16, 1
        %s192 = scalar_select %p191, %s16, 1
        %p193 = scmp.lt.s32.totalorder %s18, 0
        %s194 = scalar_select %p193, %s18, 0
        %s195 = sadd.s32 %s194, %s192
        %s196 = scalar_lea.vmem %s2, %s195
      $region28: #{_lambda_.11} parent=15 // pred_fallthru
        _
    $region16: #{_lambda_.11} parent=5 // pred_fallthru
      _
    %p197 = scmp.le.s32.totalorder 1, %s9
    %p198 = scmp.lt.s32.totalorder %s9, 3
    %p199 = pnand %p197, %p198
    %p200 = pneg %p199
    // Predicated region
    $region29: #{_lambda_.11} parent=5 // pred_check
      _
    $region30: #{_lambda_.11} parent=5 // pred_check_branch
      %202 = sbr.rel (%p199) target = $region32
    $region31: #{_lambda_.11} parent=5 // pred_region
      %s203 = ssub.s32 %s9, 1
      %s204 = smul.u32 8, %s20
      %p205 = scmp.lt.s32.totalorder %s19, 1
      %s206 = scalar_select %p205, %s19, 1
      %p207 = scmp.lt.s32.totalorder %s204, 7
      %s208 = scalar_select %p207, %s204, 7
      %p209 = scmp.lt.s32.totalorder %s21, 0
      %s210 = scalar_select %p209, %s21, 0
      %s211 = sadd.s32 %s210, %s208
      %s212 = smul.addr %s206, 8
      %s213 = sadd.s32 %s211, %s212
      %s214 = smul.addr %s213, 4
      %s215 = scalar_lea.vmem %s0, %s214
      %p216 = pneg %p58
      %p217 = pneg %p55
      %p218 = scmp.lt.s32.totalorder %s19, 1
      %s219 = scalar_select %p218, %s19, 1
      %p220 = scmp.lt.s32.totalorder %s21, 0
      %s221 = scalar_select %p220, %s21, 0
      %s222 = sadd.s32 %s221, %s219
      %s223 = scalar_lea.vmem %s1, %s222
      %p224 = pneg %p86
      %p225 = pneg %p83
      %p226 = scmp.lt.s32.totalorder %s19, 1
      %s227 = scalar_select %p226, %s19, 1
      %p228 = scmp.lt.s32.totalorder %s21, 0
      %s229 = scalar_select %p228, %s21, 0
      %s230 = sadd.s32 %s229, %s227
      %s231 = scalar_lea.vmem %s2, %s230
      %p232 = pneg %p114
      %p233 = pneg %p111
      %p234 = pneg %p144
      %p235 = pneg %p141
      %s236 = smul.u32 8, %s20
      %p237 = scmp.lt.s32.totalorder %s19, 1
      %s238 = scalar_select %p237, %s19, 1
      %p239 = scmp.lt.s32.totalorder %s236, 7
      %s240 = scalar_select %p239, %s236, 7
      %p241 = scmp.lt.s32.totalorder %s21, 0
      %s242 = scalar_select %p241, %s21, 0
      %s243 = sadd.s32 %s242, %s240
      %s244 = smul.addr %s238, 8
      %s245 = sadd.s32 %s243, %s244
      %s246 = smul.addr %s245, 4
      %s247 = scalar_lea.vmem %s3, %s246
      %s248 = smul.u32 8, %s20
      %p249 = scmp.lt.s32.totalorder %s19, 1
      %s250 = scalar_select %p249, %s19, 1
      %p251 = scmp.lt.s32.totalorder %s248, 7
      %s252 = scalar_select %p251, %s248, 7
      %p253 = scmp.lt.s32.totalorder %s21, 0
      %s254 = scalar_select %p253, %s21, 0
      %s255 = sadd.s32 %s254, %s252
      %s256 = smul.addr %s250, 8
      %s257 = sadd.s32 %s255, %s256
      %s258 = smul.addr %s257, 4
      %s259 = scalar_lea.vmem %s0, %s258
      %s260 = smul.u32 8, %s20
      %p261 = scmp.lt.s32.totalorder %s19, 1
      %s262 = scalar_select %p261, %s19, 1
      %p263 = scmp.lt.s32.totalorder %s21, 0
      %s264 = scalar_select %p263, %s21, 0
      %s265 = sadd.s32 %s264, %s262
      %s266 = scalar_lea.vmem %s1, %s265
      %p267 = scmp.lt.s32.totalorder %s19, 1
      %s268 = scalar_select %p267, %s19, 1
      %p269 = scmp.lt.s32.totalorder %s21, 0
      %s270 = scalar_select %p269, %s21, 0
      %s271 = sadd.s32 %s270, %s268
      %s272 = scalar_lea.vmem %s2, %s271
      %s273 = smul.u32 8, %s20
      %p274 = scmp.lt.s32.totalorder %s19, 1
      %s275 = scalar_select %p274, %s19, 1
      %p276 = scmp.lt.s32.totalorder %s273, 7
      %s277 = scalar_select %p276, %s273, 7
      %p278 = scmp.lt.s32.totalorder %s21, 0
      %s279 = scalar_select %p278, %s21, 0
      %s280 = sadd.s32 %s279, %s277
      %s281 = smul.addr %s275, 8
      %s282 = sadd.s32 %s280, %s281
      %s283 = smul.addr %s282, 4
      %s284 = scalar_lea.vmem %s3, %s283
      %s285 = smul.u32 8, %s20
      %v286 = vld [vmem:[%s259] sm:$0xf]
      %v287 = vld [vmem:[%s259 + $0x4] sm:$0xf]
      %v288 = vld [vmem:[%s259 + $0x8] sm:$0xf]
      %v289 = vld [vmem:[%s259 + $0xc] sm:$0xf]
      %v290 = vld [vmem:[%s259 + $0x10] sm:$0xf]
      %v291 = vld [vmem:[%s259 + $0x14] sm:$0xf]
      %v292 = vld [vmem:[%s259 + $0x18] sm:$0xf]
      %v293 = vld [vmem:[%s259 + $0x1c] sm:$0xf]
      %v294 = vunpack.c.l.bf16 %v286
      %v295 = vunpack.c.l.bf16 %v287
      %v296 = vunpack.c.l.bf16 %v288
      %v297 = vunpack.c.l.bf16 %v289
      %v298 = vunpack.c.l.bf16 %v290
      %v299 = vunpack.c.l.bf16 %v291
      %v300 = vunpack.c.l.bf16 %v292
      %v301 = vunpack.c.l.bf16 %v293
      %v302 = vld [vmem:[%s266] sm:$0x1]
      %v304 = vlaneseq
      %v305 = vshrl.u32 %v304, 7
      %v306 = vsub.s32 0, %v305
      %v307 = vrot.slane %v302, %v306
      %v309 = vmul.f32 %v294, %v307
      %v310 = vmul.f32 %v295, %v307
      %v311 = vmul.f32 %v296, %v307
      %v312 = vmul.f32 %v297, %v307
      %v313 = vmul.f32 %v298, %v307
      %v314 = vmul.f32 %v299, %v307
      %v315 = vmul.f32 %v300, %v307
      %v316 = vmul.f32 %v301, %v307
      %v317 = vld [vmem:[%s272] sm:$0x1]
      %v319 = vlaneseq
      %v320 = vshrl.u32 %v319, 7
      %v321 = vsub.s32 0, %v320
      %v322 = vrot.slane %v317, %v321
      %v324 = vadd.f32 %v309, %v322
      %v325 = vadd.f32 %v310, %v322
      %v326 = vadd.f32 %v311, %v322
      %v327 = vadd.f32 %v312, %v322
      %v328 = vadd.f32 %v313, %v322
      %v329 = vadd.f32 %v314, %v322
      %v330 = vadd.f32 %v315, %v322
      %v331 = vadd.f32 %v316, %v322
      %vm332 = vcmp.ge.f32.partialorder %v324, 0.0
      %vm333 = vcmp.ge.f32.partialorder %v325, 0.0
      %vm334 = vcmp.ge.f32.partialorder %v326, 0.0
      %vm335 = vcmp.ge.f32.partialorder %v327, 0.0
      %vm336 = vcmp.ge.f32.partialorder %v328, 0.0
      %vm337 = vcmp.ge.f32.partialorder %v329, 0.0
      %vm338 = vcmp.ge.f32.partialorder %v330, 0.0
      %vm339 = vcmp.ge.f32.partialorder %v331, 0.0
      %v340 = vmul.f32 %v324, 0.2
      %v341 = vmul.f32 %v325, 0.2
      %v342 = vmul.f32 %v326, 0.2
      %v343 = vmul.f32 %v327, 0.2
      %v344 = vmul.f32 %v328, 0.2
      %v345 = vmul.f32 %v329, 0.2
      %v346 = vmul.f32 %v330, 0.2
      %v347 = vmul.f32 %v331, 0.2
      %v348 = vsel %vm332, %v324, %v340
      %v349 = vsel %vm333, %v325, %v341
      %v350 = vsel %vm334, %v326, %v342
      %v351 = vsel %vm335, %v327, %v343
      %v352 = vsel %vm336, %v328, %v344
      %v353 = vsel %vm337, %v329, %v345
      %v354 = vsel %vm338, %v330, %v346
      %v355 = vsel %vm339, %v331, %v347
      %v356 = vpack.c.bf16 %v349, %v348
      %v357 = vpack.c.bf16 %v351, %v350
      %v358 = vpack.c.bf16 %v353, %v352
      %v359 = vpack.c.bf16 %v355, %v354
      %v364 = vunpack.c.l.b16 %v356
      %v365 = vunpack.c.h.b16 %v356
      %v366 = vunpack.c.l.b16 %v357
      %v367 = vunpack.c.h.b16 %v357
      %v368 = vunpack.c.l.b16 %v358
      %v369 = vunpack.c.h.b16 %v358
      %v370 = vunpack.c.l.b16 %v359
      %v371 = vunpack.c.h.b16 %v359
      %v372 = vpack.c.b16 %v364, %v364
      %v373 = vpack.c.b16 %v365, %v365
      %v374 = vpack.c.b16 %v366, %v366
      %v375 = vpack.c.b16 %v367, %v367
      %v376 = vpack.c.b16 %v368, %v368
      %v377 = vpack.c.b16 %v369, %v369
      %v378 = vpack.c.b16 %v370, %v370
      %v379 = vpack.c.b16 %v371, %v371
      %388 = vst [vmem:[%s284] sm:$0xf] %v372
      %389 = vst [vmem:[%s284 + $0x4] sm:$0xf] %v373
      %390 = vst [vmem:[%s284 + $0x8] sm:$0xf] %v374
      %391 = vst [vmem:[%s284 + $0xc] sm:$0xf] %v375
      %392 = vst [vmem:[%s284 + $0x10] sm:$0xf] %v376
      %393 = vst [vmem:[%s284 + $0x14] sm:$0xf] %v377
      %394 = vst [vmem:[%s284 + $0x18] sm:$0xf] %v378
      %395 = vst [vmem:[%s284 + $0x1c] sm:$0xf] %v379
      %s396 = smul.u32 8, %s20
      %p397 = scmp.lt.s32.totalorder %s19, 1
      %s398 = scalar_select %p397, %s19, 1
      %p399 = scmp.lt.s32.totalorder %s396, 7
      %s400 = scalar_select %p399, %s396, 7
      %p401 = scmp.lt.s32.totalorder %s21, 0
      %s402 = scalar_select %p401, %s21, 0
      %s403 = sadd.s32 %s402, %s400
      %s404 = smul.addr %s398, 8
      %s405 = sadd.s32 %s403, %s404
      %s406 = smul.addr %s405, 4
      %s407 = scalar_lea.vmem %s3, %s406
      // Predicated region
      $region33: #{_lambda_.11} parent=31 // pred_check
        %p408 = pneg %p141
      $region34: #{_lambda_.11} parent=31 // pred_check_branch
        %410 = sbr.rel (%p408) target = $region36
      $region35: #{_lambda_.11} parent=31 // pred_region
        %s411 = smul.u32 8, %s20
      $region36: #{_lambda_.11} parent=31 // pred_fallthru
        _
    $region32: #{_lambda_.11} parent=5 // pred_fallthru
      _
    %p412 = scmp.le.s32.totalorder 2, %s9
    // Predicated region
    $region37: #{_lambda_.11} parent=5 // pred_check
      %p413 = pneg %p412
    $region38: #{_lambda_.11} parent=5 // pred_check_branch
      %415 = sbr.rel (%p413) target = $region40
    $region39: #{_lambda_.11} parent=5 // pred_region
      %s416 = ssub.s32 %s9, 2
      // Predicated region
      $region41: #{_lambda_.11} parent=39 // pred_check
        %p417 = pneg %p147
      $region42: #{_lambda_.11} parent=39 // pred_check_branch
        %419 = sbr.rel (%p417) target = $region44
      $region43: #{_lambda_.11} parent=39 // pred_region
        %s420 = smul.u32 8, %s23
        %p421 = scmp.lt.s32.totalorder %s22, 1
        %s422 = scalar_select %p421, %s22, 1
        %p423 = scmp.lt.s32.totalorder %s420, 7
        %s424 = scalar_select %p423, %s420, 7
        %p425 = scmp.lt.s32.totalorder %s24, 0
        %s426 = scalar_select %p425, %s24, 0
        %s427 = sadd.s32 %s426, %s424
        %s428 = smul.addr %s422, 8
        %s429 = sadd.s32 %s427, %s428
        %s430 = smul.addr %s429, 4
        %s431 = scalar_lea.vmem %s3, %s430
      $region44: #{_lambda_.11} parent=39 // pred_fallthru
        _
    $region40: #{_lambda_.11} parent=5 // pred_fallthru
      _
  $region6: #{_lambda_.11} parent=0 // loop_footer
    %s13 = sadd.s32 1, %s9
  $region7: #{_lambda_.11} parent=0 // loop_footer_branch
    %8 = sbr.rel target = $region3
  $region8: #{_lambda_.11} parent=0 // loop_exit
    _

// kernel: _lambda_.10
$region0: #{_lambda_.10}
  #allocation0 [shape = 'u32[]', space=smem, size = 0x4, offset = 0x4, fixed_abs, tag = 'smem constant byte address 0x4 - core index']
  #allocation1 [shape = 'u32[144,128]{1,0:T(1,128)}', space=vmem, size = 0x12000, scoped, tag = 'internal scratch']
  #allocation2 [shape = 'f32[64,128]{1,0:T(8,128)}', space=vmem, size = 0x8000, scoped, tag = 'scratch operand']
  %s0 = inlined_call_operand.vmem [shape: bf16[2,64,512], index: 0, kind: input, shape index: {}]
  %s1 = inlined_call_operand.vmem [shape: bf16[512,128], index: 1, kind: input, shape index: {}]
  %s2 = inlined_call_operand.vmem [shape: f32[1,128], index: 2, kind: input, shape index: {}]
  %s3 = inlined_call_operand.vmem [shape: bf16[2,64,128], index: 3, kind: output, shape index: {0}]
  %s4 = inlined_call_operand.vmem [shape: f32[2,1,1,128], index: 4, kind: output, shape index: {1}]
  %s5 = inlined_call_operand.vmem [shape: f32[2,1,1,128], index: 5, kind: output, shape index: {2}]
  %6 = xla_tuple %s3, %s4, %s5
  %s7 = sld [smem:[#allocation0]]
  $region69: #{_lambda_.10} parent=0
    _
  %s9 = ssub.s32 1, %s7
  %s10 = scalar_select 0, %s9, %s7
  loop: start=0, step=1, limit=4
  $region2: #{_lambda_.10} parent=0 // loop_pre_header
    _
  $region3: #{_lambda_.10} parent=0 // loop_header
    %s12 = sphi 0, %s16
    %p13 = scmp.ge.s32.totalorder %s12, 4
    %s19 = sphi 0, %s45
    %s20 = sphi 0, %s41
    %s21 = sphi 0, %s37
    %s22 = sphi 0, %s33
    %s23 = sphi 0, %s19
    %s24 = sphi 0, %s20
    %s25 = sphi 0, %s21
    %s26 = sphi 0, %s22
    %s27 = sphi 0, %s23
    %s28 = sphi 0, %s24
    %s29 = sphi 0, %s25
    %s30 = sphi 0, %s26
    %s52 = sphi 0, %s54
    %s55 = sphi 0, %s52
    %s56 = sphi 0, %s55
    %s72 = sphi 0, %s56
    %s80 = sphi 0, %s82
    %s83 = sphi 0, %s80
    %s84 = sphi 0, %s83
    %s100 = sphi 0, %s84
    %s106 = sphi 0, %s108
    %s109 = sphi 0, %s106
    %s110 = sphi 0, %s109
    %s126 = sphi 0, %s110
    %s136 = sphi 0, %s138
    %s139 = sphi 0, %s136
    %s140 = sphi 0, %s139
    %s156 = sphi 0, %s140
    %s166 = sphi 0, %s168
    %s169 = sphi 0, %s166
    %s170 = sphi 0, %s169
    %s186 = sphi 0, %s170
    %s196 = sphi 0, %s198
    %s199 = sphi 0, %s196
    %s200 = sphi 0, %s199
    %s216 = sphi 0, %s200
  $region4: #{_lambda_.10} parent=0 // loop_header_branch
    %15 = sbr.rel (%p13) target = $region8
  $region5: #{_lambda_.10} parent=0 // loop_body
    %s17 = ssub.s32 %s12, 1
    %s18 = ssub.s32 %s12, 2
    %s31 = sadd.s32 1, %s22
    %p32 = scmp.ge.s32.totalorder %s31, 1
    %s33 = scalar_select %p32, 0, %s31
    %s34 = sadd.s32 1, %s21
    %s35 = scalar_select %p32, %s34, %s21
    %p36 = scmp.ge.s32.totalorder %s35, 1
    %s37 = scalar_select %p36, 0, %s35
    %s38 = sadd.s32 1, %s20
    %s39 = scalar_select %p36, %s38, %s20
    %p40 = scmp.ge.s32.totalorder %s39, 1
    %s41 = scalar_select %p40, 0, %s39
    %s42 = sadd.s32 1, %s19
    %s43 = scalar_select %p40, %s42, %s19
    %p44 = scmp.ge.s32.totalorder %s43, 2
    %s45 = scalar_select %p44, 0, %s43
    %s46 = ssub.s32 %s19, %s45
    %s47 = ssub.s32 %s20, %s41
    %s48 = sor.u32 %s46, %s47
    %s49 = ssub.s32 %s22, %s33
    %s50 = sor.u32 %s48, %s49
    %p51 = scmp.eq.s32.totalorder %s50, 0
    %s53 = sadd.s32 %s52, 1
    %s54 = scalar_select %p51, %s52, %s53
    %p57 = pneg %p51
    %p58 = scmp.eq.s32.totalorder %s12, 1
    %p59 = por %p57, %p58
    %p60 = scmp.ne.s32.totalorder %s52, %s55
    %p61 = scmp.eq.s32.totalorder %s12, 0
    %p62 = por %p60, %p61
    %p63 = scmp.ne.s32.totalorder %s52, %s55
    %p64 = scmp.eq.s32.totalorder %s17, 1
    %p65 = por %p63, %p64
    %p66 = scmp.ne.s32.totalorder %s55, %s56
    %p67 = scmp.eq.s32.totalorder %s17, 0
    %p68 = por %p66, %p67
    %p69 = scmp.ne.s32.totalorder %s55, %s56
    %p70 = scmp.eq.s32.totalorder %s18, 1
    %p71 = por %p69, %p70
    %p73 = scmp.ne.s32.totalorder %s56, %s72
    %p74 = scmp.eq.s32.totalorder %s18, 0
    %p75 = por %p73, %p74
    %s76 = ssub.s32 %s22, %s33
    %s77 = ssub.s32 %s21, %s37
    %s78 = sor.u32 %s76, %s77
    %p79 = scmp.eq.s32.totalorder %s78, 0
    %s81 = sadd.s32 %s80, 1
    %s82 = scalar_select %p79, %s80, %s81
    %p85 = pneg %p79
    %p86 = scmp.eq.s32.totalorder %s12, 1
    %p87 = por %p85, %p86
    %p88 = scmp.ne.s32.totalorder %s80, %s83
    %p89 = scmp.eq.s32.totalorder %s12, 0
    %p90 = por %p88, %p89
    %p91 = scmp.ne.s32.totalorder %s80, %s83
    %p92 = scmp.eq.s32.totalorder %s17, 1
    %p93 = por %p91, %p92
    %p94 = scmp.ne.s32.totalorder %s83, %s84
    %p95 = scmp.eq.s32.totalorder %s17, 0
    %p96 = por %p94, %p95
    %p97 = scmp.ne.s32.totalorder %s83, %s84
    %p98 = scmp.eq.s32.totalorder %s18, 1
    %p99 = por %p97, %p98
    %p101 = scmp.ne.s32.totalorder %s84, %s100
    %p102 = scmp.eq.s32.totalorder %s18, 0
    %p103 = por %p101, %p102
    %s104 = ssub.s32 %s21, %s37
    %p105 = scmp.eq.s32.totalorder %s104, 0
    %s107 = sadd.s32 %s106, 1
    %s108 = scalar_select %p105, %s106, %s107
    %p111 = pneg %p105
    %p112 = scmp.eq.s32.totalorder %s12, 1
    %p113 = por %p111, %p112
    %p114 = scmp.ne.s32.totalorder %s106, %s109
    %p115 = scmp.eq.s32.totalorder %s12, 0
    %p116 = por %p114, %p115
    %p117 = scmp.ne.s32.totalorder %s106, %s109
    %p118 = scmp.eq.s32.totalorder %s17, 1
    %p119 = por %p117, %p118
    %p120 = scmp.ne.s32.totalorder %s109, %s110
    %p121 = scmp.eq.s32.totalorder %s17, 0
    %p122 = por %p120, %p121
    %p123 = scmp.ne.s32.totalorder %s109, %s110
    %p124 = scmp.eq.s32.totalorder %s18, 1
    %p125 = por %p123, %p124
    %p127 = scmp.ne.s32.totalorder %s110, %s126
    %p128 = scmp.eq.s32.totalorder %s18, 0
    %p129 = por %p127, %p128
    %s130 = ssub.s32 %s19, %s45
    %s131 = ssub.s32 %s20, %s41
    %s132 = sor.u32 %s130, %s131
    %s133 = ssub.s32 %s21, %s37
    %s134 = sor.u32 %s132, %s133
    %p135 = scmp.eq.s32.totalorder %s134, 0
    %s137 = sadd.s32 %s136, 1
    %s138 = scalar_select %p135, %s136, %s137
    %p141 = pneg %p135
    %p142 = scmp.eq.s32.totalorder %s12, 1
    %p143 = por %p141, %p142
    %p144 = scmp.ne.s32.totalorder %s136, %s139
    %p145 = scmp.eq.s32.totalorder %s12, 0
    %p146 = por %p144, %p145
    %p147 = scmp.ne.s32.totalorder %s136, %s139
    %p148 = scmp.eq.s32.totalorder %s17, 1
    %p149 = por %p147, %p148
    %p150 = scmp.ne.s32.totalorder %s139, %s140
    %p151 = scmp.eq.s32.totalorder %s17, 0
    %p152 = por %p150, %p151
    %p153 = scmp.ne.s32.totalorder %s139, %s140
    %p154 = scmp.eq.s32.totalorder %s18, 1
    %p155 = por %p153, %p154
    %p157 = scmp.ne.s32.totalorder %s140, %s156
    %p158 = scmp.eq.s32.totalorder %s18, 0
    %p159 = por %p157, %p158
    %s160 = ssub.s32 %s19, %s45
    %s161 = ssub.s32 %s20, %s41
    %s162 = sor.u32 %s160, %s161
    %s163 = ssub.s32 %s21, %s37
    %s164 = sor.u32 %s162, %s163
    %p165 = scmp.eq.s32.totalorder %s164, 0
    %s167 = sadd.s32 %s166, 1
    %s168 = scalar_select %p165, %s166, %s167
    %p171 = pneg %p165
    %p172 = scmp.eq.s32.totalorder %s12, 1
    %p173 = por %p171, %p172
    %p174 = scmp.ne.s32.totalorder %s166, %s169
    %p175 = scmp.eq.s32.totalorder %s12, 0
    %p176 = por %p174, %p175
    %p177 = scmp.ne.s32.totalorder %s166, %s169
    %p178 = scmp.eq.s32.totalorder %s17, 1
    %p179 = por %p177, %p178
    %p180 = scmp.ne.s32.totalorder %s169, %s170
    %p181 = scmp.eq.s32.totalorder %s17, 0
    %p182 = por %p180, %p181
    %p183 = scmp.ne.s32.totalorder %s169, %s170
    %p184 = scmp.eq.s32.totalorder %s18, 1
    %p185 = por %p183, %p184
    %p187 = scmp.ne.s32.totalorder %s170, %s186
    %p188 = scmp.eq.s32.totalorder %s18, 0
    %p189 = por %p187, %p188
    %s190 = ssub.s32 %s19, %s45
    %s191 = ssub.s32 %s20, %s41
    %s192 = sor.u32 %s190, %s191
    %s193 = ssub.s32 %s21, %s37
    %s194 = sor.u32 %s192, %s193
    %p195 = scmp.eq.s32.totalorder %s194, 0
    %s197 = sadd.s32 %s196, 1
    %s198 = scalar_select %p195, %s196, %s197
    %p201 = pneg %p195
    %p202 = scmp.eq.s32.totalorder %s12, 1
    %p203 = por %p201, %p202
    %p204 = scmp.ne.s32.totalorder %s196, %s199
    %p205 = scmp.eq.s32.totalorder %s12, 0
    %p206 = por %p204, %p205
    %p207 = scmp.ne.s32.totalorder %s196, %s199
    %p208 = scmp.eq.s32.totalorder %s17, 1
    %p209 = por %p207, %p208
    %p210 = scmp.ne.s32.totalorder %s199, %s200
    %p211 = scmp.eq.s32.totalorder %s17, 0
    %p212 = por %p210, %p211
    %p213 = scmp.ne.s32.totalorder %s199, %s200
    %p214 = scmp.eq.s32.totalorder %s18, 1
    %p215 = por %p213, %p214
    %p217 = scmp.ne.s32.totalorder %s200, %s216
    %p218 = scmp.eq.s32.totalorder %s18, 0
    %p219 = por %p217, %p218
    %p220 = scmp.le.s32.totalorder 1, %s12
    %p221 = scmp.lt.s32.totalorder %s12, 3
    %p222 = pnand %p220, %p221
    %p223 = pneg %p222
    // Predicated region
    $region9: #{_lambda_.10} parent=5 // pred_check
      _
    $region10: #{_lambda_.10} parent=5 // pred_check_branch
      %225 = sbr.rel (%p222) target = $region12
    $region11: #{_lambda_.10} parent=5 // pred_region
      %s226 = ssub.s32 %s12, 1
      // Predicated region
      $region13: #{_lambda_.10} parent=11 // pred_check
        %p227 = pneg %p96
      $region14: #{_lambda_.10} parent=11 // pred_check_branch
        %229 = sbr.rel (%p227) target = $region16
      $region15: #{_lambda_.10} parent=11 // pred_region
        %s230 = smul.u32 64, %s26
        %p231 = scmp.lt.s32.totalorder %s230, 63
        %s232 = scalar_select %p231, %s230, 63
        %p233 = scmp.lt.s32.totalorder %s25, 0
        %s234 = scalar_select %p233, %s25, 0
        %s235 = sadd.s32 %s234, %s232
        %s236 = smul.addr %s235, 4
        %s237 = scalar_lea.vmem %s1, %s236
        %s238 = smul.u32 64, %s26
      $region16: #{_lambda_.10} parent=11 // pred_fallthru
        _
      // Predicated region
      $region17: #{_lambda_.10} parent=11 // pred_check
        %p239 = pneg %p122
      $region18: #{_lambda_.10} parent=11 // pred_check_branch
        %241 = sbr.rel (%p239) target = $region20
      $region19: #{_lambda_.10} parent=11 // pred_region
        %p242 = scmp.lt.s32.totalorder %s25, 0
        %s243 = scalar_select %p242, %s25, 0
        %s244 = scalar_lea.vmem %s2, %s243
      $region20: #{_lambda_.10} parent=11 // pred_fallthru
        _
    $region12: #{_lambda_.10} parent=5 // pred_fallthru
      _
    %p245 = scmp.lt.s32.totalorder %s12, 2
    // Predicated region
    $region21: #{_lambda_.10} parent=5 // pred_check
      %p246 = pneg %p245
    $region22: #{_lambda_.10} parent=5 // pred_check_branch
      %248 = sbr.rel (%p246) target = $region24
    $region23: #{_lambda_.10} parent=5 // pred_region
      // Predicated region
      $region25: #{_lambda_.10} parent=23 // pred_check
        %p249 = pneg %p62
      $region26: #{_lambda_.10} parent=23 // pred_check_branch
        %251 = sbr.rel (%p249) target = $region28
      $region27: #{_lambda_.10} parent=23 // pred_region
        %s252 = smul.u32 8, %s20
        %s253 = smul.u32 4, %s22
        %p254 = scmp.lt.s32.totalorder %s19, 1
        %s255 = scalar_select %p254, %s19, 1
        %p256 = scmp.lt.s32.totalorder %s252, 7
        %s257 = scalar_select %p256, %s252, 7
        %p258 = scmp.lt.s32.totalorder %s253, 3
        %s259 = scalar_select %p258, %s253, 3
        %s260 = smul.addr %s257, 4
        %s261 = sadd.s32 %s259, %s260
        %s262 = smul.addr %s255, 32
        %s263 = sadd.s32 %s261, %s262
        %s264 = smul.addr %s263, 4
        %s265 = scalar_lea.vmem %s0, %s264
        %s266 = smul.u32 8, %s20
        %s267 = smul.u32 4, %s22
      $region28: #{_lambda_.10} parent=23 // pred_fallthru
        _
    $region24: #{_lambda_.10} parent=5 // pred_fallthru
      _
    %p268 = scmp.le.s32.totalorder 1, %s12
    %p269 = scmp.lt.s32.totalorder %s12, 3
    %p270 = pnand %p268, %p269
    %p271 = pneg %p270
    // Predicated region
    $region29: #{_lambda_.10} parent=5 // pred_check
      _
    $region30: #{_lambda_.10} parent=5 // pred_check_branch
      %273 = sbr.rel (%p270) target = $region32
    $region31: #{_lambda_.10} parent=5 // pred_region
      %s274 = ssub.s32 %s12, 1
      %s275 = smul.u32 8, %s24
      %s276 = smul.u32 4, %s26
      %p277 = scmp.lt.s32.totalorder %s23, 1
      %s278 = scalar_select %p277, %s23, 1
      %p279 = scmp.lt.s32.totalorder %s275, 7
      %s280 = scalar_select %p279, %s275, 7
      %p281 = scmp.lt.s32.totalorder %s276, 3
      %s282 = scalar_select %p281, %s276, 3
      %s283 = smul.addr %s280, 4
      %s284 = sadd.s32 %s282, %s283
      %s285 = smul.addr %s278, 32
      %s286 = sadd.s32 %s284, %s285
      %s287 = smul.addr %s286, 4
      %s288 = scalar_lea.vmem %s0, %s287
      %p289 = pneg %p68
      %p290 = pneg %p65
      %s291 = smul.u32 64, %s26
      %p292 = scmp.lt.s32.totalorder %s291, 63
      %s293 = scalar_select %p292, %s291, 63
      %p294 = scmp.lt.s32.totalorder %s25, 0
      %s295 = scalar_select %p294, %s25, 0
      %s296 = sadd.s32 %s295, %s293
      %s297 = smul.addr %s296, 4
      %s298 = scalar_lea.vmem %s1, %s297
      %p299 = pneg %p96
      %p300 = pneg %p93
      %p301 = scmp.lt.s32.totalorder %s25, 0
      %s302 = scalar_select %p301, %s25, 0
      %s303 = scalar_lea.vmem %s2, %s302
      %p304 = pneg %p122
      %p305 = pneg %p119
      %p306 = pneg %p152
      %p307 = pneg %p149
      %s308 = smul.u32 8, %s24
      %p309 = scmp.lt.s32.totalorder %s23, 1
      %s310 = scalar_select %p309, %s23, 1
      %p311 = scmp.lt.s32.totalorder %s308, 7
      %s312 = scalar_select %p311, %s308, 7
      %p313 = scmp.lt.s32.totalorder %s25, 0
      %s314 = scalar_select %p313, %s25, 0
      %s315 = sadd.s32 %s314, %s312
      %s316 = smul.addr %s310, 8
      %s317 = sadd.s32 %s315, %s316
      %s318 = smul.addr %s317, 4
      %s319 = scalar_lea.vmem %s3, %s318
      %p320 = pneg %p182
      %p321 = pneg %p179
      %p322 = scmp.lt.s32.totalorder %s23, 1
      %s323 = scalar_select %p322, %s23, 1
      %p324 = scmp.lt.s32.totalorder %s24, 0
      %s325 = scalar_select %p324, %s24, 0
      %p326 = scmp.lt.s32.totalorder %s25, 0
      %s327 = scalar_select %p326, %s25, 0
      %s328 = sadd.s32 %s327, %s325
      %s329 = sadd.s32 %s328, %s323
      %s330 = scalar_lea.vmem %s4, %s329
      %p331 = pneg %p212
      %p332 = pneg %p209
      %p333 = scmp.lt.s32.totalorder %s23, 1
      %s334 = scalar_select %p333, %s23, 1
      %p335 = scmp.lt.s32.totalorder %s24, 0
      %s336 = scalar_select %p335, %s24, 0
      %p337 = scmp.lt.s32.totalorder %s25, 0
      %s338 = scalar_select %p337, %s25, 0
      %s339 = sadd.s32 %s338, %s336
      %s340 = sadd.s32 %s339, %s334
      %s341 = scalar_lea.vmem %s5, %s340
      %s342 = smul.u32 8, %s24
      %s343 = smul.u32 4, %s26
      %p344 = scmp.lt.s32.totalorder %s23, 1
      %s345 = scalar_select %p344, %s23, 1
      %p346 = scmp.lt.s32.totalorder %s342, 7
      %s347 = scalar_select %p346, %s342, 7
      %p348 = scmp.lt.s32.totalorder %s343, 3
      %s349 = scalar_select %p348, %s343, 3
      %s350 = smul.addr %s347, 4
      %s351 = sadd.s32 %s349, %s350
      %s352 = smul.addr %s345, 32
      %s353 = sadd.s32 %s351, %s352
      %s354 = smul.addr %s353, 4
      %s355 = scalar_lea.vmem %s0, %s354
      %s356 = smul.u32 8, %s24
      %s357 = smul.u32 4, %s26
      %s358 = smul.u32 64, %s26
      %p359 = scmp.lt.s32.totalorder %s358, 63
      %s360 = scalar_select %p359, %s358, 63
      %p361 = scmp.lt.s32.totalorder %s25, 0
      %s362 = scalar_select %p361, %s25, 0
      %s363 = sadd.s32 %s362, %s360
      %s364 = smul.addr %s363, 4
      %s365 = scalar_lea.vmem %s1, %s364
      %s366 = smul.u32 64, %s26
      %p367 = scmp.lt.s32.totalorder %s25, 0
      %s368 = scalar_select %p367, %s25, 0
      %s369 = scalar_lea.vmem %s2, %s368
      %s370 = smul.u32 8, %s24
      %p371 = scmp.lt.s32.totalorder %s23, 1
      %s372 = scalar_select %p371, %s23, 1
      %p373 = scmp.lt.s32.totalorder %s370, 7
      %s374 = scalar_select %p373, %s370, 7
      %p375 = scmp.lt.s32.totalorder %s25, 0
      %s376 = scalar_select %p375, %s25, 0
      %s377 = sadd.s32 %s376, %s374
      %s378 = smul.addr %s372, 8
      %s379 = sadd.s32 %s377, %s378
      %s380 = smul.addr %s379, 4
      %s381 = scalar_lea.vmem %s3, %s380
      %s382 = smul.u32 8, %s24
      %p383 = scmp.lt.s32.totalorder %s23, 1
      %s384 = scalar_select %p383, %s23, 1
      %p385 = scmp.lt.s32.totalorder %s24, 0
      %s386 = scalar_select %p385, %s24, 0
      %p387 = scmp.lt.s32.totalorder %s25, 0
      %s388 = scalar_select %p387, %s25, 0
      %s389 = sadd.s32 %s388, %s386
      %s390 = sadd.s32 %s389, %s384
      %s391 = scalar_lea.vmem %s4, %s390
      %p392 = scmp.lt.s32.totalorder %s23, 1
      %s393 = scalar_select %p392, %s23, 1
      %p394 = scmp.lt.s32.totalorder %s24, 0
      %s395 = scalar_select %p394, %s24, 0
      %p396 = scmp.lt.s32.totalorder %s25, 0
      %s397 = scalar_select %p396, %s25, 0
      %s398 = sadd.s32 %s397, %s395
      %s399 = sadd.s32 %s398, %s393
      %s400 = scalar_lea.vmem %s5, %s399
      %s402 = smul.u32 %s24, 64
      %v403 = vlaneseq
      %v404 = vshrl.u32 %v403, 7
      %v405 = vadd.s32 %v404, 8
      %v406 = vadd.s32 %v404, 16
      %v407 = vadd.s32 %v404, 24
      %v408 = vadd.s32 %v404, 32
      %v409 = vadd.s32 %v404, 40
      %v410 = vadd.s32 %v404, 48
      %v411 = vadd.s32 %v404, 56
      %v412 = vstv %s402
      %v413 = vadd.s32 %v412, %v404
      %v414 = vadd.s32 %v412, %v405
      %v415 = vadd.s32 %v412, %v406
      %v416 = vadd.s32 %v412, %v407
      %v417 = vadd.s32 %v412, %v408
      %v418 = vadd.s32 %v412, %v409
      %v419 = vadd.s32 %v412, %v410
      %v420 = vadd.s32 %v412, %v411
      %p421 = scmp.eq.s32.totalorder %s26, 0
      // Predicated region
      $region33: #{_lambda_.10} parent=31 // pred_check
        %p422 = pneg %p421
      $region34: #{_lambda_.10} parent=31 // pred_check_branch
        %424 = sbr.rel (%p422) target = $region36
      $region35: #{_lambda_.10} parent=31 // pred_region
        %425 = vst [vmem:[#allocation2] sm:$0xff] 0.0
        %426 = vst [vmem:[#allocation2 + $0x8] sm:$0xff] 0.0
        %427 = vst [vmem:[#allocation2 + $0x10] sm:$0xff] 0.0
        %428 = vst [vmem:[#allocation2 + $0x18] sm:$0xff] 0.0
        %429 = vst [vmem:[#allocation2 + $0x20] sm:$0xff] 0.0
        %430 = vst [vmem:[#allocation2 + $0x28] sm:$0xff] 0.0
        %431 = vst [vmem:[#allocation2 + $0x30] sm:$0xff] 0.0
        %432 = vst [vmem:[#allocation2 + $0x38] sm:$0xff] 0.0
      $region36: #{_lambda_.10} parent=31 // pred_fallthru
        _
      %v433 = vld [vmem:[#allocation2] sm:$0xff]
      %v434 = vld [vmem:[#allocation2 + $0x8] sm:$0xff]
      %v435 = vld [vmem:[#allocation2 + $0x10] sm:$0xff]
      %v436 = vld [vmem:[#allocation2 + $0x18] sm:$0xff]
      %v437 = vld [vmem:[#allocation2 + $0x20] sm:$0xff]
      %v438 = vld [vmem:[#allocation2 + $0x28] sm:$0xff]
      %v439 = vld [vmem:[#allocation2 + $0x30] sm:$0xff]
      %v440 = vld [vmem:[#allocation2 + $0x38] sm:$0xff]
      %v441 = vld [vmem:[%s355] sm:$0xff]
      %v442 = vld [vmem:[%s355 + $0x8] sm:$0xff]
      %v443 = vld [vmem:[%s355 + $0x10] sm:$0xff]
      %v444 = vld [vmem:[%s355 + $0x18] sm:$0xff]
      %v445 = vld [vmem:[%s355 + $0x20] sm:$0xff]
      %v446 = vld [vmem:[%s355 + $0x28] sm:$0xff]
      %v447 = vld [vmem:[%s355 + $0x30] sm:$0xff]
      %v448 = vld [vmem:[%s355 + $0x38] sm:$0xff]
      %v449 = vld [vmem:[%s355 + $0x40] sm:$0xff]
      %v450 = vld [vmem:[%s355 + $0x48] sm:$0xff]
      %v451 = vld [vmem:[%s355 + $0x50] sm:$0xff]
      %v452 = vld [vmem:[%s355 + $0x58] sm:$0xff]
      %v453 = vld [vmem:[%s355 + $0x60] sm:$0xff]
      %v454 = vld [vmem:[%s355 + $0x68] sm:$0xff]
      %v455 = vld [vmem:[%s355 + $0x70] sm:$0xff]
      %v456 = vld [vmem:[%s355 + $0x78] sm:$0xff]
      %v457 = vld [vmem:[%s365] sm:$0xf]
      %v458 = vld [vmem:[%s365 + $0x4] sm:$0xf]
      %v459 = vld [vmem:[%s365 + $0x8] sm:$0xf]
      %v460 = vld [vmem:[%s365 + $0xc] sm:$0xf]
      %v461 = vld [vmem:[%s365 + $0x10] sm:$0xf]
      %v462 = vld [vmem:[%s365 + $0x14] sm:$0xf]
      %v463 = vld [vmem:[%s365 + $0x18] sm:$0xf]
      %v464 = vld [vmem:[%s365 + $0x1c] sm:$0xf]
      %v465 = vld [vmem:[%s365 + $0x20] sm:$0xf]
      %v466 = vld [vmem:[%s365 + $0x24] sm:$0xf]
      %v467 = vld [vmem:[%s365 + $0x28] sm:$0xf]
      %v468 = vld [vmem:[%s365 + $0x2c] sm:$0xf]
      %v469 = vld [vmem:[%s365 + $0x30] sm:$0xf]
      %v470 = vld [vmem:[%s365 + $0x34] sm:$0xf]
      %v471 = vld [vmem:[%s365 + $0x38] sm:$0xf]
      %v472 = vld [vmem:[%s365 + $0x3c] sm:$0xf]
      %v473 = vld [vmem:[%s365 + $0x40] sm:$0xf]
      %v474 = vld [vmem:[%s365 + $0x44] sm:$0xf]
      %v475 = vld [vmem:[%s365 + $0x48] sm:$0xf]
      %v476 = vld [vmem:[%s365 + $0x4c] sm:$0xf]
      %v477 = vld [vmem:[%s365 + $0x50] sm:$0xf]
      %v478 = vld [vmem:[%s365 + $0x54] sm:$0xf]
      %v479 = vld [vmem:[%s365 + $0x58] sm:$0xf]
      %v480 = vld [vmem:[%s365 + $0x5c] sm:$0xf]
      %v481 = vld [vmem:[%s365 + $0x60] sm:$0xf]
      %v482 = vld [vmem:[%s365 + $0x64] sm:$0xf]
      %v483 = vld [vmem:[%s365 + $0x68] sm:$0xf]
      %v484 = vld [vmem:[%s365 + $0x6c] sm:$0xf]
      %v485 = vld [vmem:[%s365 + $0x70] sm:$0xf]
      %v486 = vld [vmem:[%s365 + $0x74] sm:$0xf]
      %v487 = vld [vmem:[%s365 + $0x78] sm:$0xf]
      %v488 = vld [vmem:[%s365 + $0x7c] sm:$0xf]
      %v489 = vld [vmem:[%s365 + $0x80] sm:$0xf]
      %v490 = vld [vmem:[%s365 + $0x84] sm:$0xf]
      %v491 = vld [vmem:[%s365 + $0x88] sm:$0xf]
      %v492 = vld [vmem:[%s365 + $0x8c] sm:$0xf]
      %v493 = vld [vmem:[%s365 + $0x90] sm:$0xf]
      %v494 = vld [vmem:[%s365 + $0x94] sm:$0xf]
      %v495 = vld [vmem:[%s365 + $0x98] sm:$0xf]
      %v496 = vld [vmem:[%s365 + $0x9c] sm:$0xf]
      %v497 = vld [vmem:[%s365 + $0xa0] sm:$0xf]
      %v498 = vld [vmem:[%s365 + $0xa4] sm:$0xf]
      %v499 = vld [vmem:[%s365 + $0xa8] sm:$0xf]
      %v500 = vld [vmem:[%s365 + $0xac] sm:$0xf]
      %v501 = vld [vmem:[%s365 + $0xb0] sm:$0xf]
      %v502 = vld [vmem:[%s365 + $0xb4] sm:$0xf]
      %v503 = vld [vmem:[%s365 + $0xb8] sm:$0xf]
      %v504 = vld [vmem:[%s365 + $0xbc] sm:$0xf]
      %v505 = vld [vmem:[%s365 + $0xc0] sm:$0xf]
      %v506 = vld [vmem:[%s365 + $0xc4] sm:$0xf]
      %v507 = vld [vmem:[%s365 + $0xc8] sm:$0xf]
      %v508 = vld [vmem:[%s365 + $0xcc] sm:$0xf]
      %v509 = vld [vmem:[%s365 + $0xd0] sm:$0xf]
      %v510 = vld [vmem:[%s365 + $0xd4] sm:$0xf]
      %v511 = vld [vmem:[%s365 + $0xd8] sm:$0xf]
      %v512 = vld [vmem:[%s365 + $0xdc] sm:$0xf]
      %v513 = vld [vmem:[%s365 + $0xe0] sm:$0xf]
      %v514 = vld [vmem:[%s365 + $0xe4] sm:$0xf]
      %v515 = vld [vmem:[%s365 + $0xe8] sm:$0xf]
      %v516 = vld [vmem:[%s365 + $0xec] sm:$0xf]
      %v517 = vld [vmem:[%s365 + $0xf0] sm:$0xf]
      %v518 = vld [vmem:[%s365 + $0xf4] sm:$0xf]
      %v519 = vld [vmem:[%s365 + $0xf8] sm:$0xf]
      %v520 = vld [vmem:[%s365 + $0xfc] sm:$0xf]
      %v537 = vunpack.c.l.b16 %v441
      %v538 = vunpack.c.h.b16 %v441
      %v539 = vunpack.c.l.b16 %v442
      %v540 = vunpack.c.h.b16 %v442
      %v541 = vunpack.c.l.b16 %v443
      %v542 = vunpack.c.h.b16 %v443
      %v543 = vunpack.c.l.b16 %v444
      %v544 = vunpack.c.h.b16 %v444
      %v545 = vunpack.c.l.b16 %v445
      %v546 = vunpack.c.h.b16 %v445
      %v547 = vunpack.c.l.b16 %v446
      %v548 = vunpack.c.h.b16 %v446
      %v549 = vunpack.c.l.b16 %v447
      %v550 = vunpack.c.h.b16 %v447
      %v551 = vunpack.c.l.b16 %v448
      %v552 = vunpack.c.h.b16 %v448
      %v553 = vunpack.c.l.b16 %v449
      %v554 = vunpack.c.h.b16 %v449
      %v555 = vunpack.c.l.b16 %v450
      %v556 = vunpack.c.h.b16 %v450
      %v557 = vunpack.c.l.b16 %v451
      %v558 = vunpack.c.h.b16 %v451
      %v559 = vunpack.c.l.b16 %v452
      %v560 = vunpack.c.h.b16 %v452
      %v561 = vunpack.c.l.b16 %v453
      %v562 = vunpack.c.h.b16 %v453
      %v563 = vunpack.c.l.b16 %v454
      %v564 = vunpack.c.h.b16 %v454
      %v565 = vunpack.c.l.b16 %v455
      %v566 = vunpack.c.h.b16 %v455
      %v567 = vunpack.c.l.b16 %v456
      %v568 = vunpack.c.h.b16 %v456
      %v569 = vpack.c.b16 %v541, %v537
      %v570 = vpack.c.b16 %v542, %v538
      %v571 = vpack.c.b16 %v543, %v539
      %v572 = vpack.c.b16 %v544, %v540
      %v573 = vpack.c.b16 %v549, %v545
      %v574 = vpack.c.b16 %v550, %v546
      %v575 = vpack.c.b16 %v551, %v547
      %v576 = vpack.c.b16 %v552, %v548
      %v577 = vpack.c.b16 %v557, %v553
      %v578 = vpack.c.b16 %v558, %v554
      %v579 = vpack.c.b16 %v559, %v555
      %v580 = vpack.c.b16 %v560, %v556
      %v581 = vpack.c.b16 %v565, %v561
      %v582 = vpack.c.b16 %v566, %v562
      %v583 = vpack.c.b16 %v567, %v563
      %v584 = vpack.c.b16 %v568, %v564
      %v665 = vunpack.c.l.b16 %v457
      %v666 = vunpack.c.l.b16 %v458
      %v667 = vunpack.c.l.b16 %v459
      %v668 = vunpack.c.l.b16 %v460
      %v669 = vunpack.c.l.b16 %v461
      %v670 = vunpack.c.l.b16 %v462
      %v671 = vunpack.c.l.b16 %v463
      %v672 = vunpack.c.l.b16 %v464
      %v673 = vunpack.c.l.b16 %v465
      %v674 = vunpack.c.l.b16 %v466
      %v675 = vunpack.c.l.b16 %v467
      %v676 = vunpack.c.l.b16 %v468
      %v677 = vunpack.c.l.b16 %v469
      %v678 = vunpack.c.l.b16 %v470
      %v679 = vunpack.c.l.b16 %v471
      %v680 = vunpack.c.l.b16 %v472
      %v681 = vunpack.c.l.b16 %v473
      %v682 = vunpack.c.l.b16 %v474
      %v683 = vunpack.c.l.b16 %v475
      %v684 = vunpack.c.l.b16 %v476
      %v685 = vunpack.c.l.b16 %v477
      %v686 = vunpack.c.l.b16 %v478
      %v687 = vunpack.c.l.b16 %v479
      %v688 = vunpack.c.l.b16 %v480
      %v689 = vunpack.c.l.b16 %v481
      %v690 = vunpack.c.l.b16 %v482
      %v691 = vunpack.c.l.b16 %v483
      %v692 = vunpack.c.l.b16 %v484
      %v693 = vunpack.c.l.b16 %v485
      %v694 = vunpack.c.l.b16 %v486
      %v695 = vunpack.c.l.b16 %v487
      %v696 = vunpack.c.l.b16 %v488
      %v697 = vunpack.c.l.b16 %v489
      %v698 = vunpack.c.l.b16 %v490
      %v699 = vunpack.c.l.b16 %v491
      %v700 = vunpack.c.l.b16 %v492
      %v701 = vunpack.c.l.b16 %v493
      %v702 = vunpack.c.l.b16 %v494
      %v703 = vunpack.c.l.b16 %v495
      %v704 = vunpack.c.l.b16 %v496
      %v705 = vunpack.c.l.b16 %v497
      %v706 = vunpack.c.l.b16 %v498
      %v707 = vunpack.c.l.b16 %v499
      %v708 = vunpack.c.l.b16 %v500
      %v709 = vunpack.c.l.b16 %v501
      %v710 = vunpack.c.l.b16 %v502
      %v711 = vunpack.c.l.b16 %v503
      %v712 = vunpack.c.l.b16 %v504
      %v713 = vunpack.c.l.b16 %v505
      %v714 = vunpack.c.l.b16 %v506
      %v715 = vunpack.c.l.b16 %v507
      %v716 = vunpack.c.l.b16 %v508
      %v717 = vunpack.c.l.b16 %v509
      %v718 = vunpack.c.l.b16 %v510
      %v719 = vunpack.c.l.b16 %v511
      %v720 = vunpack.c.l.b16 %v512
      %v721 = vunpack.c.l.b16 %v513
      %v722 = vunpack.c.l.b16 %v514
      %v723 = vunpack.c.l.b16 %v515
      %v724 = vunpack.c.l.b16 %v516
      %v725 = vunpack.c.l.b16 %v517
      %v726 = vunpack.c.l.b16 %v518
      %v727 = vunpack.c.l.b16 %v519
      %v728 = vunpack.c.l.b16 %v520
      %v729 = vpack.c.b16 %v666, %v665
      %v730 = vpack.c.b16 %v668, %v667
      %v731 = vpack.c.b16 %v670, %v669
      %v732 = vpack.c.b16 %v672, %v671
      %v733 = vpack.c.b16 %v674, %v673
      %v734 = vpack.c.b16 %v676, %v675
      %v735 = vpack.c.b16 %v678, %v677
      %v736 = vpack.c.b16 %v680, %v679
      %v737 = vpack.c.b16 %v682, %v681
      %v738 = vpack.c.b16 %v684, %v683
      %v739 = vpack.c.b16 %v686, %v685
      %v740 = vpack.c.b16 %v688, %v687
      %v741 = vpack.c.b16 %v690, %v689
      %v742 = vpack.c.b16 %v692, %v691
      %v743 = vpack.c.b16 %v694, %v693
      %v744 = vpack.c.b16 %v696, %v695
      %v745 = vpack.c.b16 %v698, %v697
      %v746 = vpack.c.b16 %v700, %v699
      %v747 = vpack.c.b16 %v702, %v701
      %v748 = vpack.c.b16 %v704, %v703
      %v749 = vpack.c.b16 %v706, %v705
      %v750 = vpack.c.b16 %v708, %v707
      %v751 = vpack.c.b16 %v710, %v709
      %v752 = vpack.c.b16 %v712, %v711
      %v753 = vpack.c.b16 %v714, %v713
      %v754 = vpack.c.b16 %v716, %v715
      %v755 = vpack.c.b16 %v718, %v717
      %v756 = vpack.c.b16 %v720, %v719
      %v757 = vpack.c.b16 %v722, %v721
      %v758 = vpack.c.b16 %v724, %v723
      %v759 = vpack.c.b16 %v726, %v725
      %v760 = vpack.c.b16 %v728, %v727
      %793 = vmatprep.subr.bf16.mxu0 0
      %794 = vmatpush1.bf16.msra.mxu0 %v736
      %795 = vmatprep.subr.bf16.mxu0 0
      %796 = vmatpush1.bf16.msra.mxu0 %v735
      %797 = vmatprep.subr.bf16.mxu0 0
      %798 = vmatpush1.bf16.msra.mxu0 %v734
      %799 = vmatprep.subr.bf16.mxu0 0
      %800 = vmatpush1.bf16.msra.mxu0 %v733
      %801 = vmatprep.subr.bf16.mxu0 0
      %802 = vmatpush1.bf16.msra.mxu0 %v732
      %803 = vmatprep.subr.bf16.mxu0 0
      %804 = vmatpush1.bf16.msra.mxu0 %v731
      %805 = vmatprep.subr.bf16.mxu0 0
      %806 = vmatpush1.bf16.msra.mxu0 %v730
      %807 = vmatprep.subr.bf16.mxu0 0
      %808 = vmatpush1.bf16.msra.mxu0 %v729
      %809 = vmatprep.subr.bf16.mxu0 0
      %810 = vmatpush2.bf16.msra.mxu0 %v744
      %811 = vmatprep.subr.bf16.mxu0 0
      %812 = vmatpush2.bf16.msra.mxu0 %v743
      %813 = vmatprep.subr.bf16.mxu0 0
      %814 = vmatpush2.bf16.msra.mxu0 %v742
      %815 = vmatprep.subr.bf16.mxu0 0
      %816 = vmatpush2.bf16.msra.mxu0 %v741
      %817 = vmatprep.subr.bf16.mxu0 0
      %818 = vmatpush2.bf16.msra.mxu0 %v740
      %819 = vmatprep.subr.bf16.mxu0 0
      %820 = vmatpush2.bf16.msra.mxu0 %v739
      %821 = vmatprep.subr.bf16.mxu0 0
      %822 = vmatpush2.bf16.msra.mxu0 %v738
      %823 = vmatprep.subr.bf16.mxu0 0
      %824 = vmatpush2.bf16.msra.mxu0 %v737
      %825 = vmatprep.mubr.bf16.mxu0 %v570
      %826 = vmatmul.mubr.bf16.gmra.mxu0 %v569
      %v827 = vpop.f32.mrf.mxu0
      %v828 = vadd.f32 0.0, %v827
      %v829 = vpop.f32.mrf.mxu0
      %v830 = vpop.f32.mrf.mxu0
      %v831 = vadd.f32 0.0, %v830
      %v832 = vpop.f32.mrf.mxu0
      %833 = vmatprep.mubr.bf16.mxu0 %v574
      %834 = vmatmul.mubr.bf16.gmra.mxu0 %v573
      %v835 = vpop.f32.mrf.mxu0
      %v836 = vadd.f32 0.0, %v835
      %v837 = vpop.f32.mrf.mxu0
      %v838 = vpop.f32.mrf.mxu0
      %v839 = vadd.f32 0.0, %v838
      %v840 = vpop.f32.mrf.mxu0
      %841 = vmatprep.mubr.bf16.mxu0 %v578
      %842 = vmatmul.mubr.bf16.gmra.mxu0 %v577
      %v843 = vpop.f32.mrf.mxu0
      %v844 = vadd.f32 0.0, %v843
      %v845 = vpop.f32.mrf.mxu0
      %v846 = vpop.f32.mrf.mxu0
      %v847 = vadd.f32 0.0, %v846
      %v848 = vpop.f32.mrf.mxu0
      %849 = vmatprep.mubr.bf16.mxu0 %v582
      %850 = vmatmul.mubr.bf16.gmra.mxu0 %v581
      %v851 = vpop.f32.mrf.mxu0
      %v852 = vadd.f32 0.0, %v851
      %v853 = vpop.f32.mrf.mxu0
      %v854 = vpop.f32.mrf.mxu0
      %v855 = vadd.f32 0.0, %v854
      %v856 = vpop.f32.mrf.mxu0
      %857 = vdwg.mxu0
      %858 = vmatprep.subr.bf16.mxu0 0
      %859 = vmatpush1.bf16.msra.mxu0 %v752
      %860 = vmatprep.subr.bf16.mxu0 0
      %861 = vmatpush1.bf16.msra.mxu0 %v751
      %862 = vmatprep.subr.bf16.mxu0 0
      %863 = vmatpush1.bf16.msra.mxu0 %v750
      %864 = vmatprep.subr.bf16.mxu0 0
      %865 = vmatpush1.bf16.msra.mxu0 %v749
      %866 = vmatprep.subr.bf16.mxu0 0
      %867 = vmatpush1.bf16.msra.mxu0 %v748
      %868 = vmatprep.subr.bf16.mxu0 0
      %869 = vmatpush1.bf16.msra.mxu0 %v747
      %870 = vmatprep.subr.bf16.mxu0 0
      %871 = vmatpush1.bf16.msra.mxu0 %v746
      %872 = vmatprep.subr.bf16.mxu0 0
      %873 = vmatpush1.bf16.msra.mxu0 %v745
      %874 = vmatprep.subr.bf16.mxu0 0
      %875 = vmatpush2.bf16.msra.mxu0 %v760
      %876 = vmatprep.subr.bf16.mxu0 0
      %877 = vmatpush2.bf16.msra.mxu0 %v759
      %878 = vmatprep.subr.bf16.mxu0 0
      %879 = vmatpush2.bf16.msra.mxu0 %v758
      %880 = vmatprep.subr.bf16.mxu0 0
      %881 = vmatpush2.bf16.msra.mxu0 %v757
      %882 = vmatprep.subr.bf16.mxu0 0
      %883 = vmatpush2.bf16.msra.mxu0 %v756
      %884 = vmatprep.subr.bf16.mxu0 0
      %885 = vmatpush2.bf16.msra.mxu0 %v755
      %886 = vmatprep.subr.bf16.mxu0 0
      %887 = vmatpush2.bf16.msra.mxu0 %v754
      %888 = vmatprep.subr.bf16.mxu0 0
      %889 = vmatpush2.bf16.msra.mxu0 %v753
      %890 = vmatprep.mubr.bf16.mxu0 %v572
      %891 = vmatmul.mubr.bf16.gmra.mxu0 %v571
      %v892 = vpop.f32.mrf.mxu0
      %v893 = vadd.f32 %v828, %v892
      %v894 = vpop.f32.mrf.mxu0
      %v895 = vpop.f32.mrf.mxu0
      %v896 = vadd.f32 %v831, %v895
      %v897 = vpop.f32.mrf.mxu0
      %898 = vmatprep.mubr.bf16.mxu0 %v576
      %899 = vmatmul.mubr.bf16.gmra.mxu0 %v575
      %v900 = vpop.f32.mrf.mxu0
      %v901 = vadd.f32 %v836, %v900
      %v902 = vpop.f32.mrf.mxu0
      %v903 = vpop.f32.mrf.mxu0
      %v904 = vadd.f32 %v839, %v903
      %v905 = vpop.f32.mrf.mxu0
      %906 = vmatprep.mubr.bf16.mxu0 %v580
      %907 = vmatmul.mubr.bf16.gmra.mxu0 %v579
      %v908 = vpop.f32.mrf.mxu0
      %v909 = vadd.f32 %v844, %v908
      %v910 = vpop.f32.mrf.mxu0
      %v911 = vpop.f32.mrf.mxu0
      %v912 = vadd.f32 %v847, %v911
      %v913 = vpop.f32.mrf.mxu0
      %914 = vmatprep.mubr.bf16.mxu0 %v584
      %915 = vmatmul.mubr.bf16.gmra.mxu0 %v583
      %v916 = vpop.f32.mrf.mxu0
      %v917 = vadd.f32 %v852, %v916
      %v918 = vpop.f32.mrf.mxu0
      %v919 = vpop.f32.mrf.mxu0
      %v920 = vadd.f32 %v855, %v919
      %v921 = vpop.f32.mrf.mxu0
      %922 = vdwg.mxu0
      %v923 = vadd.f32 %v433, %v893
      %v924 = vadd.f32 %v434, %v896
      %v925 = vadd.f32 %v435, %v901
      %v926 = vadd.f32 %v436, %v904
      %v927 = vadd.f32 %v437, %v909
      %v928 = vadd.f32 %v438, %v912
      %v929 = vadd.f32 %v439, %v917
      %v930 = vadd.f32 %v440, %v920
      %931 = vst [vmem:[#allocation2] sm:$0xff] %v923
      %932 = vst [vmem:[#allocation2 + $0x8] sm:$0xff] %v924
      %933 = vst [vmem:[#allocation2 + $0x10] sm:$0xff] %v925
      %934 = vst [vmem:[#allocation2 + $0x18] sm:$0xff] %v926
      %935 = vst [vmem:[#allocation2 + $0x20] sm:$0xff] %v927
      %936 = vst [vmem:[#allocation2 + $0x28] sm:$0xff] %v928
      %937 = vst [vmem:[#allocation2 + $0x30] sm:$0xff] %v929
      %938 = vst [vmem:[#allocation2 + $0x38] sm:$0xff] %v930
      // Predicated region
      $region37: #{_lambda_.10} parent=31 // pred_check
        %p939 = pneg %p421
      $region38: #{_lambda_.10} parent=31 // pred_check_branch
        %941 = sbr.rel (%p939) target = $region40
      $region39: #{_lambda_.10} parent=31 // pred_region
        %v942 = vld [vmem:[#allocation2] sm:$0xff]
        %v943 = vld [vmem:[#allocation2 + $0x8] sm:$0xff]
        %v944 = vld [vmem:[#allocation2 + $0x10] sm:$0xff]
        %v945 = vld [vmem:[#allocation2 + $0x18] sm:$0xff]
        %v946 = vld [vmem:[#allocation2 + $0x20] sm:$0xff]
        %v947 = vld [vmem:[#allocation2 + $0x28] sm:$0xff]
        %v948 = vld [vmem:[#allocation2 + $0x30] sm:$0xff]
        %v949 = vld [vmem:[#allocation2 + $0x38] sm:$0xff]
        %v950 = vld [vmem:[%s369] sm:$0x1]
        %v952 = vlaneseq
        %v953 = vshrl.u32 %v952, 7
        %v954 = vsub.s32 0, %v953
        %v955 = vrot.slane %v950, %v954
        %v957 = vadd.f32 %v942, %v955
        %v958 = vadd.f32 %v943, %v955
        %v959 = vadd.f32 %v944, %v955
        %v960 = vadd.f32 %v945, %v955
        %v961 = vadd.f32 %v946, %v955
        %v962 = vadd.f32 %v947, %v955
        %v963 = vadd.f32 %v948, %v955
        %v964 = vadd.f32 %v949, %v955
        %vm965 = vcmp.lt.s32.totalorder %v413, 49
        %vm966 = vcmp.lt.s32.totalorder %v414, 49
        %vm967 = vcmp.lt.s32.totalorder %v415, 49
        %vm968 = vcmp.lt.s32.totalorder %v416, 49
        %vm969 = vcmp.lt.s32.totalorder %v417, 49
        %vm970 = vcmp.lt.s32.totalorder %v418, 49
        %vm971 = vcmp.lt.s32.totalorder %v419, 49
        %vm972 = vcmp.lt.s32.totalorder %v420, 49
        %v973 = vsel %vm965, 1, 0
        %v974 = vsel %vm966, 1, 0
        %v975 = vsel %vm967, 1, 0
        %v976 = vsel %vm968, 1, 0
        %v977 = vsel %vm969, 1, 0
        %v978 = vsel %vm970, 1, 0
        %v979 = vsel %vm971, 1, 0
        %v980 = vsel %vm972, 1, 0
        %vm981 = vcmp.eq.s32.totalorder %v973, 1
        %vm982 = vcmp.eq.s32.totalorder %v974, 1
        %vm983 = vcmp.eq.s32.totalorder %v975, 1
        %vm984 = vcmp.eq.s32.totalorder %v976, 1
        %vm985 = vcmp.eq.s32.totalorder %v977, 1
        %vm986 = vcmp.eq.s32.totalorder %v978, 1
        %vm987 = vcmp.eq.s32.totalorder %v979, 1
        %vm988 = vcmp.eq.s32.totalorder %v980, 1
        %v989 = vsel %vm981, %v957, 0.0
        %v990 = vsel %vm982, %v958, 0.0
        %v991 = vsel %vm983, %v959, 0.0
        %v992 = vsel %vm984, %v960, 0.0
        %v993 = vsel %vm985, %v961, 0.0
        %v994 = vsel %vm986, %v962, 0.0
        %v995 = vsel %vm987, %v963, 0.0
        %v996 = vsel %vm988, %v964, 0.0
        %v997 = vadd.f32 %v989, %v990
        %v998 = vadd.f32 %v997, %v991
        %v999 = vadd.f32 %v998, %v992
        %v1000 = vadd.f32 %v999, %v993
        %v1001 = vadd.f32 %v1000, %v994
        %v1002 = vadd.f32 %v1001, %v995
        %v1003 = vadd.f32 %v1002, %v996
        %v1004 = vrot.slane %v1003, 4
        %v1005 = vadd.f32 %v1003, %v1004
        %v1006 = vrot.slane %v1005, 2
        %v1007 = vadd.f32 %v1005, %v1006
        %v1008 = vrot.slane %v1007, 1
        %v1009 = vadd.f32 %v1007, %v1008
        %1010 = vst [vmem:[%s391] sm:$0x1] %v1009
        %v1011 = vmul.f32 %v989, %v989
        %v1012 = vmul.f32 %v990, %v990
        %v1013 = vmul.f32 %v991, %v991
        %v1014 = vmul.f32 %v992, %v992
        %v1015 = vmul.f32 %v993, %v993
        %v1016 = vmul.f32 %v994, %v994
        %v1017 = vmul.f32 %v995, %v995
        %v1018 = vmul.f32 %v996, %v996
        %v1019 = vadd.f32 %v1011, %v1012
        %v1020 = vadd.f32 %v1019, %v1013
        %v1021 = vadd.f32 %v1020, %v1014
        %v1022 = vadd.f32 %v1021, %v1015
        %v1023 = vadd.f32 %v1022, %v1016
        %v1024 = vadd.f32 %v1023, %v1017
        %v1025 = vadd.f32 %v1024, %v1018
        %v1026 = vrot.slane %v1025, 4
        %v1027 = vadd.f32 %v1025, %v1026
        %v1028 = vrot.slane %v1027, 2
        %v1029 = vadd.f32 %v1027, %v1028
        %v1030 = vrot.slane %v1029, 1
        %v1031 = vadd.f32 %v1029, %v1030
        %1032 = vst [vmem:[%s400] sm:$0x1] %v1031
        %v1033 = vpack.c.bf16 %v990, %v989
        %v1034 = vpack.c.bf16 %v992, %v991
        %v1035 = vpack.c.bf16 %v994, %v993
        %v1036 = vpack.c.bf16 %v996, %v995
        %v1041 = vunpack.c.l.b16 %v1033
        %v1042 = vunpack.c.h.b16 %v1033
        %v1043 = vunpack.c.l.b16 %v1034
        %v1044 = vunpack.c.h.b16 %v1034
        %v1045 = vunpack.c.l.b16 %v1035
        %v1046 = vunpack.c.h.b16 %v1035
        %v1047 = vunpack.c.l.b16 %v1036
        %v1048 = vunpack.c.h.b16 %v1036
        %v1049 = vpack.c.b16 %v1041, %v1041
        %v1050 = vpack.c.b16 %v1042, %v1042
        %v1051 = vpack.c.b16 %v1043, %v1043
        %v1052 = vpack.c.b16 %v1044, %v1044
        %v1053 = vpack.c.b16 %v1045, %v1045
        %v1054 = vpack.c.b16 %v1046, %v1046
        %v1055 = vpack.c.b16 %v1047, %v1047
        %v1056 = vpack.c.b16 %v1048, %v1048
        %1065 = vst [vmem:[%s381] sm:$0xf] %v1049
        %1066 = vst [vmem:[%s381 + $0x4] sm:$0xf] %v1050
        %1067 = vst [vmem:[%s381 + $0x8] sm:$0xf] %v1051
        %1068 = vst [vmem:[%s381 + $0xc] sm:$0xf] %v1052
        %1069 = vst [vmem:[%s381 + $0x10] sm:$0xf] %v1053
        %1070 = vst [vmem:[%s381 + $0x14] sm:$0xf] %v1054
        %1071 = vst [vmem:[%s381 + $0x18] sm:$0xf] %v1055
        %1072 = vst [vmem:[%s381 + $0x1c] sm:$0xf] %v1056
      $region40: #{_lambda_.10} parent=31 // pred_fallthru
        _
      %s1073 = smul.u32 8, %s24
      %p1074 = scmp.lt.s32.totalorder %s23, 1
      %s1075 = scalar_select %p1074, %s23, 1
      %p1076 = scmp.lt.s32.totalorder %s1073, 7
      %s1077 = scalar_select %p1076, %s1073, 7
      %p1078 = scmp.lt.s32.totalorder %s25, 0
      %s1079 = scalar_select %p1078, %s25, 0
      %s1080 = sadd.s32 %s1079, %s1077
      %s1081 = smul.addr %s1075, 8
      %s1082 = sadd.s32 %s1080, %s1081
      %s1083 = smul.addr %s1082, 4
      %s1084 = scalar_lea.vmem %s3, %s1083
      %p1085 = scmp.lt.s32.totalorder %s23, 1
      %s1086 = scalar_select %p1085, %s23, 1
      %p1087 = scmp.lt.s32.totalorder %s24, 0
      %s1088 = scalar_select %p1087, %s24, 0
      %p1089 = scmp.lt.s32.totalorder %s25, 0
      %s1090 = scalar_select %p1089, %s25, 0
      %s1091 = sadd.s32 %s1090, %s1088
      %s1092 = sadd.s32 %s1091, %s1086
      %s1093 = scalar_lea.vmem %s4, %s1092
      %p1094 = scmp.lt.s32.totalorder %s23, 1
      %s1095 = scalar_select %p1094, %s23, 1
      %p1096 = scmp.lt.s32.totalorder %s24, 0
      %s1097 = scalar_select %p1096, %s24, 0
      %p1098 = scmp.lt.s32.totalorder %s25, 0
      %s1099 = scalar_select %p1098, %s25, 0
      %s1100 = sadd.s32 %s1099, %s1097
      %s1101 = sadd.s32 %s1100, %s1095
      %s1102 = scalar_lea.vmem %s5, %s1101
      // Predicated region
      $region41: #{_lambda_.10} parent=31 // pred_check
        %p1103 = pneg %p149
      $region42: #{_lambda_.10} parent=31 // pred_check_branch
        %1105 = sbr.rel (%p1103) target = $region44
      $region43: #{_lambda_.10} parent=31 // pred_region
        %s1106 = smul.u32 8, %s24
      $region44: #{_lambda_.10} parent=31 // pred_fallthru
        _
      // Predicated region
      $region45: #{_lambda_.10} parent=31 // pred_check
        %p1107 = pneg %p179
      $region46: #{_lambda_.10} parent=31 // pred_check_branch
        %1109 = sbr.rel (%p1107) target = $region48
      $region47: #{_lambda_.10} parent=31 // pred_region
        _
      $region48: #{_lambda_.10} parent=31 // pred_fallthru
        _
      // Predicated region
      $region49: #{_lambda_.10} parent=31 // pred_check
        %p1110 = pneg %p209
      $region50: #{_lambda_.10} parent=31 // pred_check_branch
        %1112 = sbr.rel (%p1110) target = $region52
      $region51: #{_lambda_.10} parent=31 // pred_region
        _
      $region52: #{_lambda_.10} parent=31 // pred_fallthru
        _
    $region32: #{_lambda_.10} parent=5 // pred_fallthru
      _
    %p1113 = scmp.le.s32.totalorder 2, %s12
    // Predicated region
    $region53: #{_lambda_.10} parent=5 // pred_check
      %p1114 = pneg %p1113
    $region54: #{_lambda_.10} parent=5 // pred_check_branch
      %1116 = sbr.rel (%p1114) target = $region56
    $region55: #{_lambda_.10} parent=5 // pred_region
      %s1117 = ssub.s32 %s12, 2
      // Predicated region
      $region57: #{_lambda_.10} parent=55 // pred_check
        %p1118 = pneg %p155
      $region58: #{_lambda_.10} parent=55 // pred_check_branch
        %1120 = sbr.rel (%p1118) target = $region60
      $region59: #{_lambda_.10} parent=55 // pred_region
        %s1121 = smul.u32 8, %s28
        %p1122 = scmp.lt.s32.totalorder %s27, 1
        %s1123 = scalar_select %p1122, %s27, 1
        %p1124 = scmp.lt.s32.totalorder %s1121, 7
        %s1125 = scalar_select %p1124, %s1121, 7
        %p1126 = scmp.lt.s32.totalorder %s29, 0
        %s1127 = scalar_select %p1126, %s29, 0
        %s1128 = sadd.s32 %s1127, %s1125
        %s1129 = smul.addr %s1123, 8
        %s1130 = sadd.s32 %s1128, %s1129
        %s1131 = smul.addr %s1130, 4
        %s1132 = scalar_lea.vmem %s3, %s1131
      $region60: #{_lambda_.10} parent=55 // pred_fallthru
        _
      // Predicated region
      $region61: #{_lambda_.10} parent=55 // pred_check
        %p1133 = pneg %p185
      $region62: #{_lambda_.10} parent=55 // pred_check_branch
        %1135 = sbr.rel (%p1133) target = $region64
      $region63: #{_lambda_.10} parent=55 // pred_region
        %p1136 = scmp.lt.s32.totalorder %s27, 1
        %s1137 = scalar_select %p1136, %s27, 1
        %p1138 = scmp.lt.s32.totalorder %s28, 0
        %s1139 = scalar_select %p1138, %s28, 0
        %p1140 = scmp.lt.s32.totalorder %s29, 0
        %s1141 = scalar_select %p1140, %s29, 0
        %s1142 = sadd.s32 %s1141, %s1139
        %s1143 = sadd.s32 %s1142, %s1137
        %s1144 = scalar_lea.vmem %s4, %s1143
      $region64: #{_lambda_.10} parent=55 // pred_fallthru
        _
      // Predicated region
      $region65: #{_lambda_.10} parent=55 // pred_check
        %p1145 = pneg %p215
      $region66: #{_lambda_.10} parent=55 // pred_check_branch
        %1147 = sbr.rel (%p1145) target = $region68
      $region67: #{_lambda_.10} parent=55 // pred_region
        %p1148 = scmp.lt.s32.totalorder %s27, 1
        %s1149 = scalar_select %p1148, %s27, 1
        %p1150 = scmp.lt.s32.totalorder %s28, 0
        %s1151 = scalar_select %p1150, %s28, 0
        %p1152 = scmp.lt.s32.totalorder %s29, 0
        %s1153 = scalar_select %p1152, %s29, 0
        %s1154 = sadd.s32 %s1153, %s1151
        %s1155 = sadd.s32 %s1154, %s1149
        %s1156 = scalar_lea.vmem %s5, %s1155
      $region68: #{_lambda_.10} parent=55 // pred_fallthru
        _
    $region56: #{_lambda_.10} parent=5 // pred_fallthru
      _
  $region6: #{_lambda_.10} parent=0 // loop_footer
    %s16 = sadd.s32 1, %s12
  $region7: #{_lambda_.10} parent=0 // loop_footer_branch
    %11 = sbr.rel target = $region3
  $region8: #{_lambda_.10} parent=0 // loop_exit
    _

// kernel: mul.143
$region0: #{mul.143}
  #allocation0 [shape = 's32[1]{0}', space=sflag, size = 0x4, scoped, tag = 'scoped memory for mul.143']
  %s0 = inlined_call_operand.vmem [shape: f32[2,1,128], index: 0, kind: input, shape index: {}]
  %s1 = inlined_call_operand.vmem [shape: f32[2,1,128], index: 1, kind: input, shape index: {}]
  %s2 = inlined_call_operand.vmem [shape: f32[2,1,128], index: 2, kind: output, shape index: {}]
  %v3 = vld [vmem:[%s0] sm:$0x1]
  %v4 = vld [vmem:[%s1] sm:$0x1]
  %5 = xla_tuple %v3, %v4
  %6 = xla_tuple %5
  %v7 = vmul.f32 %v3, %v4
  %8 = xla_tuple %v7
  %9 = vst [vmem:[%s2] sm:$0x1] %v7
  %s10 = scalar_lea.vmem %s0, 1
  %v11 = vld [vmem:[%s10] sm:$0x1]
  %s12 = scalar_lea.vmem %s1, 1
  %v13 = vld [vmem:[%s12] sm:$0x1]
  %14 = xla_tuple %v11, %v13
  %15 = xla_tuple %14
  %v16 = vmul.f32 %v11, %v13
  %17 = xla_tuple %v16
  %s18 = scalar_lea.vmem %s2, 1
  %19 = vst [vmem:[%s18] sm:$0x1] %v16

// kernel: _lambda_.13
$region0: #{_lambda_.13}
  #allocation0 [shape = 'u32[]', space=smem, size = 0x4, offset = 0x4, fixed_abs, tag = 'smem constant byte address 0x4 - core index']
  #allocation1 [shape = 'u32[144,128]{1,0:T(1,128)}', space=vmem, size = 0x12000, scoped, tag = 'internal scratch']
  %s0 = inlined_call_operand.vmem [shape: bf16[2,16,128], index: 0, kind: input, shape index: {}]
  %s1 = inlined_call_operand.vmem [shape: f32[2,1,128], index: 1, kind: input, shape index: {}]
  %s2 = inlined_call_operand.vmem [shape: f32[2,1,128], index: 2, kind: input, shape index: {}]
  %s3 = inlined_call_operand.vmem [shape: bf16[2,16,128], index: 3, kind: output, shape index: {}]
  %s4 = sld [smem:[#allocation0]]
  $region45: #{_lambda_.13} parent=0
    _
  %s6 = ssub.s32 1, %s4
  %s7 = scalar_select 0, %s6, %s4
  loop: start=0, step=1, limit=4
  $region2: #{_lambda_.13} parent=0 // loop_pre_header
    _
  $region3: #{_lambda_.13} parent=0 // loop_header
    %s9 = sphi 0, %s13
    %p10 = scmp.ge.s32.totalorder %s9, 4
    %s16 = sphi 0, %s35
    %s17 = sphi 0, %s31
    %s18 = sphi 0, %s27
    %s19 = sphi 0, %s16
    %s20 = sphi 0, %s17
    %s21 = sphi 0, %s18
    %s22 = sphi 0, %s19
    %s23 = sphi 0, %s20
    %s24 = sphi 0, %s21
    %s42 = sphi 0, %s44
    %s45 = sphi 0, %s42
    %s46 = sphi 0, %s45
    %s62 = sphi 0, %s46
    %s70 = sphi 0, %s72
    %s73 = sphi 0, %s70
    %s74 = sphi 0, %s73
    %s90 = sphi 0, %s74
    %s98 = sphi 0, %s100
    %s101 = sphi 0, %s98
    %s102 = sphi 0, %s101
    %s118 = sphi 0, %s102
    %s128 = sphi 0, %s130
    %s131 = sphi 0, %s128
    %s132 = sphi 0, %s131
    %s148 = sphi 0, %s132
  $region4: #{_lambda_.13} parent=0 // loop_header_branch
    %12 = sbr.rel (%p10) target = $region8
  $region5: #{_lambda_.13} parent=0 // loop_body
    %s14 = ssub.s32 %s9, 1
    %s15 = ssub.s32 %s9, 2
    %s25 = sadd.s32 1, %s18
    %p26 = scmp.ge.s32.totalorder %s25, 1
    %s27 = scalar_select %p26, 0, %s25
    %s28 = sadd.s32 1, %s17
    %s29 = scalar_select %p26, %s28, %s17
    %p30 = scmp.ge.s32.totalorder %s29, 1
    %s31 = scalar_select %p30, 0, %s29
    %s32 = sadd.s32 1, %s16
    %s33 = scalar_select %p30, %s32, %s16
    %p34 = scmp.ge.s32.totalorder %s33, 2
    %s35 = scalar_select %p34, 0, %s33
    %s36 = ssub.s32 %s16, %s35
    %s37 = ssub.s32 %s17, %s31
    %s38 = sor.u32 %s36, %s37
    %s39 = ssub.s32 %s18, %s27
    %s40 = sor.u32 %s38, %s39
    %p41 = scmp.eq.s32.totalorder %s40, 0
    %s43 = sadd.s32 %s42, 1
    %s44 = scalar_select %p41, %s42, %s43
    %p47 = pneg %p41
    %p48 = scmp.eq.s32.totalorder %s9, 1
    %p49 = por %p47, %p48
    %p50 = scmp.ne.s32.totalorder %s42, %s45
    %p51 = scmp.eq.s32.totalorder %s9, 0
    %p52 = por %p50, %p51
    %p53 = scmp.ne.s32.totalorder %s42, %s45
    %p54 = scmp.eq.s32.totalorder %s14, 1
    %p55 = por %p53, %p54
    %p56 = scmp.ne.s32.totalorder %s45, %s46
    %p57 = scmp.eq.s32.totalorder %s14, 0
    %p58 = por %p56, %p57
    %p59 = scmp.ne.s32.totalorder %s45, %s46
    %p60 = scmp.eq.s32.totalorder %s15, 1
    %p61 = por %p59, %p60
    %p63 = scmp.ne.s32.totalorder %s46, %s62
    %p64 = scmp.eq.s32.totalorder %s15, 0
    %p65 = por %p63, %p64
    %s66 = ssub.s32 %s16, %s35
    %s67 = ssub.s32 %s18, %s27
    %s68 = sor.u32 %s66, %s67
    %p69 = scmp.eq.s32.totalorder %s68, 0
    %s71 = sadd.s32 %s70, 1
    %s72 = scalar_select %p69, %s70, %s71
    %p75 = pneg %p69
    %p76 = scmp.eq.s32.totalorder %s9, 1
    %p77 = por %p75, %p76
    %p78 = scmp.ne.s32.totalorder %s70, %s73
    %p79 = scmp.eq.s32.totalorder %s9, 0
    %p80 = por %p78, %p79
    %p81 = scmp.ne.s32.totalorder %s70, %s73
    %p82 = scmp.eq.s32.totalorder %s14, 1
    %p83 = por %p81, %p82
    %p84 = scmp.ne.s32.totalorder %s73, %s74
    %p85 = scmp.eq.s32.totalorder %s14, 0
    %p86 = por %p84, %p85
    %p87 = scmp.ne.s32.totalorder %s73, %s74
    %p88 = scmp.eq.s32.totalorder %s15, 1
    %p89 = por %p87, %p88
    %p91 = scmp.ne.s32.totalorder %s74, %s90
    %p92 = scmp.eq.s32.totalorder %s15, 0
    %p93 = por %p91, %p92
    %s94 = ssub.s32 %s16, %s35
    %s95 = ssub.s32 %s18, %s27
    %s96 = sor.u32 %s94, %s95
    %p97 = scmp.eq.s32.totalorder %s96, 0
    %s99 = sadd.s32 %s98, 1
    %s100 = scalar_select %p97, %s98, %s99
    %p103 = pneg %p97
    %p104 = scmp.eq.s32.totalorder %s9, 1
    %p105 = por %p103, %p104
    %p106 = scmp.ne.s32.totalorder %s98, %s101
    %p107 = scmp.eq.s32.totalorder %s9, 0
    %p108 = por %p106, %p107
    %p109 = scmp.ne.s32.totalorder %s98, %s101
    %p110 = scmp.eq.s32.totalorder %s14, 1
    %p111 = por %p109, %p110
    %p112 = scmp.ne.s32.totalorder %s101, %s102
    %p113 = scmp.eq.s32.totalorder %s14, 0
    %p114 = por %p112, %p113
    %p115 = scmp.ne.s32.totalorder %s101, %s102
    %p116 = scmp.eq.s32.totalorder %s15, 1
    %p117 = por %p115, %p116
    %p119 = scmp.ne.s32.totalorder %s102, %s118
    %p120 = scmp.eq.s32.totalorder %s15, 0
    %p121 = por %p119, %p120
    %s122 = ssub.s32 %s16, %s35
    %s123 = ssub.s32 %s17, %s31
    %s124 = sor.u32 %s122, %s123
    %s125 = ssub.s32 %s18, %s27
    %s126 = sor.u32 %s124, %s125
    %p127 = scmp.eq.s32.totalorder %s126, 0
    %s129 = sadd.s32 %s128, 1
    %s130 = scalar_select %p127, %s128, %s129
    %p133 = pneg %p127
    %p134 = scmp.eq.s32.totalorder %s9, 1
    %p135 = por %p133, %p134
    %p136 = scmp.ne.s32.totalorder %s128, %s131
    %p137 = scmp.eq.s32.totalorder %s9, 0
    %p138 = por %p136, %p137
    %p139 = scmp.ne.s32.totalorder %s128, %s131
    %p140 = scmp.eq.s32.totalorder %s14, 1
    %p141 = por %p139, %p140
    %p142 = scmp.ne.s32.totalorder %s131, %s132
    %p143 = scmp.eq.s32.totalorder %s14, 0
    %p144 = por %p142, %p143
    %p145 = scmp.ne.s32.totalorder %s131, %s132
    %p146 = scmp.eq.s32.totalorder %s15, 1
    %p147 = por %p145, %p146
    %p149 = scmp.ne.s32.totalorder %s132, %s148
    %p150 = scmp.eq.s32.totalorder %s15, 0
    %p151 = por %p149, %p150
    %p152 = scmp.le.s32.totalorder 1, %s9
    %p153 = scmp.lt.s32.totalorder %s9, 3
    %p154 = pnand %p152, %p153
    %p155 = pneg %p154
    // Predicated region
    $region9: #{_lambda_.13} parent=5 // pred_check
      _
    $region10: #{_lambda_.13} parent=5 // pred_check_branch
      %157 = sbr.rel (%p154) target = $region12
    $region11: #{_lambda_.13} parent=5 // pred_region
      %s158 = ssub.s32 %s9, 1
    $region12: #{_lambda_.13} parent=5 // pred_fallthru
      _
    %p159 = scmp.lt.s32.totalorder %s9, 2
    // Predicated region
    $region13: #{_lambda_.13} parent=5 // pred_check
      %p160 = pneg %p159
    $region14: #{_lambda_.13} parent=5 // pred_check_branch
      %162 = sbr.rel (%p160) target = $region16
    $region15: #{_lambda_.13} parent=5 // pred_region
      // Predicated region
      $region17: #{_lambda_.13} parent=15 // pred_check
        %p163 = pneg %p52
      $region18: #{_lambda_.13} parent=15 // pred_check_branch
        %165 = sbr.rel (%p163) target = $region20
      $region19: #{_lambda_.13} parent=15 // pred_region
        %s166 = smul.u32 2, %s17
        %p167 = scmp.lt.s32.totalorder %s16, 1
        %s168 = scalar_select %p167, %s16, 1
        %p169 = scmp.lt.s32.totalorder %s166, 1
        %s170 = scalar_select %p169, %s166, 1
        %p171 = scmp.lt.s32.totalorder %s18, 0
        %s172 = scalar_select %p171, %s18, 0
        %s173 = sadd.s32 %s172, %s170
        %s174 = smul.addr %s168, 2
        %s175 = sadd.s32 %s173, %s174
        %s176 = smul.addr %s175, 4
        %s177 = scalar_lea.vmem %s0, %s176
        %s178 = smul.u32 2, %s17
      $region20: #{_lambda_.13} parent=15 // pred_fallthru
        _
      // Predicated region
      $region21: #{_lambda_.13} parent=15 // pred_check
        %p179 = pneg %p80
      $region22: #{_lambda_.13} parent=15 // pred_check_branch
        %181 = sbr.rel (%p179) target = $region24
      $region23: #{_lambda_.13} parent=15 // pred_region
        %p182 = scmp.lt.s32.totalorder %s16, 1
        %s183 = scalar_select %p182, %s16, 1
        %p184 = scmp.lt.s32.totalorder %s18, 0
        %s185 = scalar_select %p184, %s18, 0
        %s186 = sadd.s32 %s185, %s183
        %s187 = scalar_lea.vmem %s1, %s186
      $region24: #{_lambda_.13} parent=15 // pred_fallthru
        _
      // Predicated region
      $region25: #{_lambda_.13} parent=15 // pred_check
        %p188 = pneg %p108
      $region26: #{_lambda_.13} parent=15 // pred_check_branch
        %190 = sbr.rel (%p188) target = $region28
      $region27: #{_lambda_.13} parent=15 // pred_region
        %p191 = scmp.lt.s32.totalorder %s16, 1
        %s192 = scalar_select %p191, %s16, 1
        %p193 = scmp.lt.s32.totalorder %s18, 0
        %s194 = scalar_select %p193, %s18, 0
        %s195 = sadd.s32 %s194, %s192
        %s196 = scalar_lea.vmem %s2, %s195
      $region28: #{_lambda_.13} parent=15 // pred_fallthru
        _
    $region16: #{_lambda_.13} parent=5 // pred_fallthru
      _
    %p197 = scmp.le.s32.totalorder 1, %s9
    %p198 = scmp.lt.s32.totalorder %s9, 3
    %p199 = pnand %p197, %p198
    %p200 = pneg %p199
    // Predicated region
    $region29: #{_lambda_.13} parent=5 // pred_check
      _
    $region30: #{_lambda_.13} parent=5 // pred_check_branch
      %202 = sbr.rel (%p199) target = $region32
    $region31: #{_lambda_.13} parent=5 // pred_region
      %s203 = ssub.s32 %s9, 1
      %s204 = smul.u32 2, %s20
      %p205 = scmp.lt.s32.totalorder %s19, 1
      %s206 = scalar_select %p205, %s19, 1
      %p207 = scmp.lt.s32.totalorder %s204, 1
      %s208 = scalar_select %p207, %s204, 1
      %p209 = scmp.lt.s32.totalorder %s21, 0
      %s210 = scalar_select %p209, %s21, 0
      %s211 = sadd.s32 %s210, %s208
      %s212 = smul.addr %s206, 2
      %s213 = sadd.s32 %s211, %s212
      %s214 = smul.addr %s213, 4
      %s215 = scalar_lea.vmem %s0, %s214
      %p216 = pneg %p58
      %p217 = pneg %p55
      %p218 = scmp.lt.s32.totalorder %s19, 1
      %s219 = scalar_select %p218, %s19, 1
      %p220 = scmp.lt.s32.totalorder %s21, 0
      %s221 = scalar_select %p220, %s21, 0
      %s222 = sadd.s32 %s221, %s219
      %s223 = scalar_lea.vmem %s1, %s222
      %p224 = pneg %p86
      %p225 = pneg %p83
      %p226 = scmp.lt.s32.totalorder %s19, 1
      %s227 = scalar_select %p226, %s19, 1
      %p228 = scmp.lt.s32.totalorder %s21, 0
      %s229 = scalar_select %p228, %s21, 0
      %s230 = sadd.s32 %s229, %s227
      %s231 = scalar_lea.vmem %s2, %s230
      %p232 = pneg %p114
      %p233 = pneg %p111
      %p234 = pneg %p144
      %p235 = pneg %p141
      %s236 = smul.u32 2, %s20
      %p237 = scmp.lt.s32.totalorder %s19, 1
      %s238 = scalar_select %p237, %s19, 1
      %p239 = scmp.lt.s32.totalorder %s236, 1
      %s240 = scalar_select %p239, %s236, 1
      %p241 = scmp.lt.s32.totalorder %s21, 0
      %s242 = scalar_select %p241, %s21, 0
      %s243 = sadd.s32 %s242, %s240
      %s244 = smul.addr %s238, 2
      %s245 = sadd.s32 %s243, %s244
      %s246 = smul.addr %s245, 4
      %s247 = scalar_lea.vmem %s3, %s246
      %s248 = smul.u32 2, %s20
      %p249 = scmp.lt.s32.totalorder %s19, 1
      %s250 = scalar_select %p249, %s19, 1
      %p251 = scmp.lt.s32.totalorder %s248, 1
      %s252 = scalar_select %p251, %s248, 1
      %p253 = scmp.lt.s32.totalorder %s21, 0
      %s254 = scalar_select %p253, %s21, 0
      %s255 = sadd.s32 %s254, %s252
      %s256 = smul.addr %s250, 2
      %s257 = sadd.s32 %s255, %s256
      %s258 = smul.addr %s257, 4
      %s259 = scalar_lea.vmem %s0, %s258
      %s260 = smul.u32 2, %s20
      %p261 = scmp.lt.s32.totalorder %s19, 1
      %s262 = scalar_select %p261, %s19, 1
      %p263 = scmp.lt.s32.totalorder %s21, 0
      %s264 = scalar_select %p263, %s21, 0
      %s265 = sadd.s32 %s264, %s262
      %s266 = scalar_lea.vmem %s1, %s265
      %p267 = scmp.lt.s32.totalorder %s19, 1
      %s268 = scalar_select %p267, %s19, 1
      %p269 = scmp.lt.s32.totalorder %s21, 0
      %s270 = scalar_select %p269, %s21, 0
      %s271 = sadd.s32 %s270, %s268
      %s272 = scalar_lea.vmem %s2, %s271
      %s273 = smul.u32 2, %s20
      %p274 = scmp.lt.s32.totalorder %s19, 1
      %s275 = scalar_select %p274, %s19, 1
      %p276 = scmp.lt.s32.totalorder %s273, 1
      %s277 = scalar_select %p276, %s273, 1
      %p278 = scmp.lt.s32.totalorder %s21, 0
      %s279 = scalar_select %p278, %s21, 0
      %s280 = sadd.s32 %s279, %s277
      %s281 = smul.addr %s275, 2
      %s282 = sadd.s32 %s280, %s281
      %s283 = smul.addr %s282, 4
      %s284 = scalar_lea.vmem %s3, %s283
      %s285 = smul.u32 2, %s20
      %v286 = vld [vmem:[%s259] sm:$0xf]
      %v287 = vld [vmem:[%s259 + $0x4] sm:$0xf]
      %v288 = vunpack.c.l.bf16 %v286
      %v289 = vunpack.c.l.bf16 %v287
      %v290 = vld [vmem:[%s266] sm:$0x1]
      %v292 = vlaneseq
      %v293 = vshrl.u32 %v292, 7
      %v294 = vsub.s32 0, %v293
      %v295 = vrot.slane %v290, %v294
      %v297 = vmul.f32 %v288, %v295
      %v298 = vmul.f32 %v289, %v295
      %v299 = vld [vmem:[%s272] sm:$0x1]
      %v301 = vlaneseq
      %v302 = vshrl.u32 %v301, 7
      %v303 = vsub.s32 0, %v302
      %v304 = vrot.slane %v299, %v303
      %v306 = vadd.f32 %v297, %v304
      %v307 = vadd.f32 %v298, %v304
      %vm308 = vcmp.ge.f32.partialorder %v306, 0.0
      %vm309 = vcmp.ge.f32.partialorder %v307, 0.0
      %v310 = vmul.f32 %v306, 0.2
      %v311 = vmul.f32 %v307, 0.2
      %v312 = vsel %vm308, %v306, %v310
      %v313 = vsel %vm309, %v307, %v311
      %v314 = vpack.c.bf16 %v313, %v312
      %v316 = vunpack.c.l.b16 %v314
      %v317 = vunpack.c.h.b16 %v314
      %v318 = vpack.c.b16 %v316, %v316
      %v319 = vpack.c.b16 %v317, %v317
      %322 = vst [vmem:[%s284] sm:$0xf] %v318
      %323 = vst [vmem:[%s284 + $0x4] sm:$0xf] %v319
      %s324 = smul.u32 2, %s20
      %p325 = scmp.lt.s32.totalorder %s19, 1
      %s326 = scalar_select %p325, %s19, 1
      %p327 = scmp.lt.s32.totalorder %s324, 1
      %s328 = scalar_select %p327, %s324, 1
      %p329 = scmp.lt.s32.totalorder %s21, 0
      %s330 = scalar_select %p329, %s21, 0
      %s331 = sadd.s32 %s330, %s328
      %s332 = smul.addr %s326, 2
      %s333 = sadd.s32 %s331, %s332
      %s334 = smul.addr %s333, 4
      %s335 = scalar_lea.vmem %s3, %s334
      // Predicated region
      $region33: #{_lambda_.13} parent=31 // pred_check
        %p336 = pneg %p141
      $region34: #{_lambda_.13} parent=31 // pred_check_branch
        %338 = sbr.rel (%p336) target = $region36
      $region35: #{_lambda_.13} parent=31 // pred_region
        %s339 = smul.u32 2, %s20
      $region36: #{_lambda_.13} parent=31 // pred_fallthru
        _
    $region32: #{_lambda_.13} parent=5 // pred_fallthru
      _
    %p340 = scmp.le.s32.totalorder 2, %s9
    // Predicated region
    $region37: #{_lambda_.13} parent=5 // pred_check
      %p341 = pneg %p340
    $region38: #{_lambda_.13} parent=5 // pred_check_branch
      %343 = sbr.rel (%p341) target = $region40
    $region39: #{_lambda_.13} parent=5 // pred_region
      %s344 = ssub.s32 %s9, 2
      // Predicated region
      $region41: #{_lambda_.13} parent=39 // pred_check
        %p345 = pneg %p147
      $region42: #{_lambda_.13} parent=39 // pred_check_branch
        %347 = sbr.rel (%p345) target = $region44
      $region43: #{_lambda_.13} parent=39 // pred_region
        %s348 = smul.u32 2, %s23
        %p349 = scmp.lt.s32.totalorder %s22, 1
        %s350 = scalar_select %p349, %s22, 1
        %p351 = scmp.lt.s32.totalorder %s348, 1
        %s352 = scalar_select %p351, %s348, 1
        %p353 = scmp.lt.s32.totalorder %s24, 0
        %s354 = scalar_select %p353, %s24, 0
        %s355 = sadd.s32 %s354, %s352
        %s356 = smul.addr %s350, 2
        %s357 = sadd.s32 %s355, %s356
        %s358 = smul.addr %s357, 4
        %s359 = scalar_lea.vmem %s3, %s358
      $region44: #{_lambda_.13} parent=39 // pred_fallthru
        _
    $region40: #{_lambda_.13} parent=5 // pred_fallthru
      _
  $region6: #{_lambda_.13} parent=0 // loop_footer
    %s13 = sadd.s32 1, %s9
  $region7: #{_lambda_.13} parent=0 // loop_footer_branch
    %8 = sbr.rel target = $region3
  $region8: #{_lambda_.13} parent=0 // loop_exit
    _

// kernel: _lambda_.12
$region0: #{_lambda_.12}
  #allocation0 [shape = 'u32[]', space=smem, size = 0x4, offset = 0x4, fixed_abs, tag = 'smem constant byte address 0x4 - core index']
  #allocation1 [shape = 'u32[144,128]{1,0:T(1,128)}', space=vmem, size = 0x12000, scoped, tag = 'internal scratch']
  #allocation2 [shape = 'f32[16,128]{1,0:T(8,128)}', space=vmem, size = 0x2000, scoped, tag = 'scratch operand']
  %s0 = inlined_call_operand.vmem [shape: bf16[2,16,1024], index: 0, kind: input, shape index: {}]
  %s1 = inlined_call_operand.vmem [shape: bf16[1024,128], index: 1, kind: input, shape index: {}]
  %s2 = inlined_call_operand.vmem [shape: f32[1,128], index: 2, kind: input, shape index: {}]
  %s3 = inlined_call_operand.vmem [shape: bf16[2,16,128], index: 3, kind: output, shape index: {0}]
  %s4 = inlined_call_operand.vmem [shape: f32[2,1,1,128], index: 4, kind: output, shape index: {1}]
  %s5 = inlined_call_operand.vmem [shape: f32[2,1,1,128], index: 5, kind: output, shape index: {2}]
  %6 = xla_tuple %s3, %s4, %s5
  %s7 = sld [smem:[#allocation0]]
  $region69: #{_lambda_.12} parent=0
    _
  %s9 = ssub.s32 1, %s7
  %s10 = scalar_select 0, %s9, %s7
  loop: start=0, step=1, limit=4
  $region2: #{_lambda_.12} parent=0 // loop_pre_header
    _
  $region3: #{_lambda_.12} parent=0 // loop_header
    %s12 = sphi 0, %s16
    %p13 = scmp.ge.s32.totalorder %s12, 4
    %s19 = sphi 0, %s45
    %s20 = sphi 0, %s41
    %s21 = sphi 0, %s37
    %s22 = sphi 0, %s33
    %s23 = sphi 0, %s19
    %s24 = sphi 0, %s20
    %s25 = sphi 0, %s21
    %s26 = sphi 0, %s22
    %s27 = sphi 0, %s23
    %s28 = sphi 0, %s24
    %s29 = sphi 0, %s25
    %s30 = sphi 0, %s26
    %s52 = sphi 0, %s54
    %s55 = sphi 0, %s52
    %s56 = sphi 0, %s55
    %s72 = sphi 0, %s56
    %s80 = sphi 0, %s82
    %s83 = sphi 0, %s80
    %s84 = sphi 0, %s83
    %s100 = sphi 0, %s84
    %s106 = sphi 0, %s108
    %s109 = sphi 0, %s106
    %s110 = sphi 0, %s109
    %s126 = sphi 0, %s110
    %s136 = sphi 0, %s138
    %s139 = sphi 0, %s136
    %s140 = sphi 0, %s139
    %s156 = sphi 0, %s140
    %s166 = sphi 0, %s168
    %s169 = sphi 0, %s166
    %s170 = sphi 0, %s169
    %s186 = sphi 0, %s170
    %s196 = sphi 0, %s198
    %s199 = sphi 0, %s196
    %s200 = sphi 0, %s199
    %s216 = sphi 0, %s200
  $region4: #{_lambda_.12} parent=0 // loop_header_branch
    %15 = sbr.rel (%p13) target = $region8
  $region5: #{_lambda_.12} parent=0 // loop_body
    %s17 = ssub.s32 %s12, 1
    %s18 = ssub.s32 %s12, 2
    %s31 = sadd.s32 1, %s22
    %p32 = scmp.ge.s32.totalorder %s31, 1
    %s33 = scalar_select %p32, 0, %s31
    %s34 = sadd.s32 1, %s21
    %s35 = scalar_select %p32, %s34, %s21
    %p36 = scmp.ge.s32.totalorder %s35, 1
    %s37 = scalar_select %p36, 0, %s35
    %s38 = sadd.s32 1, %s20
    %s39 = scalar_select %p36, %s38, %s20
    %p40 = scmp.ge.s32.totalorder %s39, 1
    %s41 = scalar_select %p40, 0, %s39
    %s42 = sadd.s32 1, %s19
    %s43 = scalar_select %p40, %s42, %s19
    %p44 = scmp.ge.s32.totalorder %s43, 2
    %s45 = scalar_select %p44, 0, %s43
    %s46 = ssub.s32 %s19, %s45
    %s47 = ssub.s32 %s20, %s41
    %s48 = sor.u32 %s46, %s47
    %s49 = ssub.s32 %s22, %s33
    %s50 = sor.u32 %s48, %s49
    %p51 = scmp.eq.s32.totalorder %s50, 0
    %s53 = sadd.s32 %s52, 1
    %s54 = scalar_select %p51, %s52, %s53
    %p57 = pneg %p51
    %p58 = scmp.eq.s32.totalorder %s12, 1
    %p59 = por %p57, %p58
    %p60 = scmp.ne.s32.totalorder %s52, %s55
    %p61 = scmp.eq.s32.totalorder %s12, 0
    %p62 = por %p60, %p61
    %p63 = scmp.ne.s32.totalorder %s52, %s55
    %p64 = scmp.eq.s32.totalorder %s17, 1
    %p65 = por %p63, %p64
    %p66 = scmp.ne.s32.totalorder %s55, %s56
    %p67 = scmp.eq.s32.totalorder %s17, 0
    %p68 = por %p66, %p67
    %p69 = scmp.ne.s32.totalorder %s55, %s56
    %p70 = scmp.eq.s32.totalorder %s18, 1
    %p71 = por %p69, %p70
    %p73 = scmp.ne.s32.totalorder %s56, %s72
    %p74 = scmp.eq.s32.totalorder %s18, 0
    %p75 = por %p73, %p74
    %s76 = ssub.s32 %s22, %s33
    %s77 = ssub.s32 %s21, %s37
    %s78 = sor.u32 %s76, %s77
    %p79 = scmp.eq.s32.totalorder %s78, 0
    %s81 = sadd.s32 %s80, 1
    %s82 = scalar_select %p79, %s80, %s81
    %p85 = pneg %p79
    %p86 = scmp.eq.s32.totalorder %s12, 1
    %p87 = por %p85, %p86
    %p88 = scmp.ne.s32.totalorder %s80, %s83
    %p89 = scmp.eq.s32.totalorder %s12, 0
    %p90 = por %p88, %p89
    %p91 = scmp.ne.s32.totalorder %s80, %s83
    %p92 = scmp.eq.s32.totalorder %s17, 1
    %p93 = por %p91, %p92
    %p94 = scmp.ne.s32.totalorder %s83, %s84
    %p95 = scmp.eq.s32.totalorder %s17, 0
    %p96 = por %p94, %p95
    %p97 = scmp.ne.s32.totalorder %s83, %s84
    %p98 = scmp.eq.s32.totalorder %s18, 1
    %p99 = por %p97, %p98
    %p101 = scmp.ne.s32.totalorder %s84, %s100
    %p102 = scmp.eq.s32.totalorder %s18, 0
    %p103 = por %p101, %p102
    %s104 = ssub.s32 %s21, %s37
    %p105 = scmp.eq.s32.totalorder %s104, 0
    %s107 = sadd.s32 %s106, 1
    %s108 = scalar_select %p105, %s106, %s107
    %p111 = pneg %p105
    %p112 = scmp.eq.s32.totalorder %s12, 1
    %p113 = por %p111, %p112
    %p114 = scmp.ne.s32.totalorder %s106, %s109
    %p115 = scmp.eq.s32.totalorder %s12, 0
    %p116 = por %p114, %p115
    %p117 = scmp.ne.s32.totalorder %s106, %s109
    %p118 = scmp.eq.s32.totalorder %s17, 1
    %p119 = por %p117, %p118
    %p120 = scmp.ne.s32.totalorder %s109, %s110
    %p121 = scmp.eq.s32.totalorder %s17, 0
    %p122 = por %p120, %p121
    %p123 = scmp.ne.s32.totalorder %s109, %s110
    %p124 = scmp.eq.s32.totalorder %s18, 1
    %p125 = por %p123, %p124
    %p127 = scmp.ne.s32.totalorder %s110, %s126
    %p128 = scmp.eq.s32.totalorder %s18, 0
    %p129 = por %p127, %p128
    %s130 = ssub.s32 %s19, %s45
    %s131 = ssub.s32 %s20, %s41
    %s132 = sor.u32 %s130, %s131
    %s133 = ssub.s32 %s21, %s37
    %s134 = sor.u32 %s132, %s133
    %p135 = scmp.eq.s32.totalorder %s134, 0
    %s137 = sadd.s32 %s136, 1
    %s138 = scalar_select %p135, %s136, %s137
    %p141 = pneg %p135
    %p142 = scmp.eq.s32.totalorder %s12, 1
    %p143 = por %p141, %p142
    %p144 = scmp.ne.s32.totalorder %s136, %s139
    %p145 = scmp.eq.s32.totalorder %s12, 0
    %p146 = por %p144, %p145
    %p147 = scmp.ne.s32.totalorder %s136, %s139
    %p148 = scmp.eq.s32.totalorder %s17, 1
    %p149 = por %p147, %p148
    %p150 = scmp.ne.s32.totalorder %s139, %s140
    %p151 = scmp.eq.s32.totalorder %s17, 0
    %p152 = por %p150, %p151
    %p153 = scmp.ne.s32.totalorder %s139, %s140
    %p154 = scmp.eq.s32.totalorder %s18, 1
    %p155 = por %p153, %p154
    %p157 = scmp.ne.s32.totalorder %s140, %s156
    %p158 = scmp.eq.s32.totalorder %s18, 0
    %p159 = por %p157, %p158
    %s160 = ssub.s32 %s19, %s45
    %s161 = ssub.s32 %s20, %s41
    %s162 = sor.u32 %s160, %s161
    %s163 = ssub.s32 %s21, %s37
    %s164 = sor.u32 %s162, %s163
    %p165 = scmp.eq.s32.totalorder %s164, 0
    %s167 = sadd.s32 %s166, 1
    %s168 = scalar_select %p165, %s166, %s167
    %p171 = pneg %p165
    %p172 = scmp.eq.s32.totalorder %s12, 1
    %p173 = por %p171, %p172
    %p174 = scmp.ne.s32.totalorder %s166, %s169
    %p175 = scmp.eq.s32.totalorder %s12, 0
    %p176 = por %p174, %p175
    %p177 = scmp.ne.s32.totalorder %s166, %s169
    %p178 = scmp.eq.s32.totalorder %s17, 1
    %p179 = por %p177, %p178
    %p180 = scmp.ne.s32.totalorder %s169, %s170
    %p181 = scmp.eq.s32.totalorder %s17, 0
    %p182 = por %p180, %p181
    %p183 = scmp.ne.s32.totalorder %s169, %s170
    %p184 = scmp.eq.s32.totalorder %s18, 1
    %p185 = por %p183, %p184
    %p187 = scmp.ne.s32.totalorder %s170, %s186
    %p188 = scmp.eq.s32.totalorder %s18, 0
    %p189 = por %p187, %p188
    %s190 = ssub.s32 %s19, %s45
    %s191 = ssub.s32 %s20, %s41
    %s192 = sor.u32 %s190, %s191
    %s193 = ssub.s32 %s21, %s37
    %s194 = sor.u32 %s192, %s193
    %p195 = scmp.eq.s32.totalorder %s194, 0
    %s197 = sadd.s32 %s196, 1
    %s198 = scalar_select %p195, %s196, %s197
    %p201 = pneg %p195
    %p202 = scmp.eq.s32.totalorder %s12, 1
    %p203 = por %p201, %p202
    %p204 = scmp.ne.s32.totalorder %s196, %s199
    %p205 = scmp.eq.s32.totalorder %s12, 0
    %p206 = por %p204, %p205
    %p207 = scmp.ne.s32.totalorder %s196, %s199
    %p208 = scmp.eq.s32.totalorder %s17, 1
    %p209 = por %p207, %p208
    %p210 = scmp.ne.s32.totalorder %s199, %s200
    %p211 = scmp.eq.s32.totalorder %s17, 0
    %p212 = por %p210, %p211
    %p213 = scmp.ne.s32.totalorder %s199, %s200
    %p214 = scmp.eq.s32.totalorder %s18, 1
    %p215 = por %p213, %p214
    %p217 = scmp.ne.s32.totalorder %s200, %s216
    %p218 = scmp.eq.s32.totalorder %s18, 0
    %p219 = por %p217, %p218
    %p220 = scmp.le.s32.totalorder 1, %s12
    %p221 = scmp.lt.s32.totalorder %s12, 3
    %p222 = pnand %p220, %p221
    %p223 = pneg %p222
    // Predicated region
    $region9: #{_lambda_.12} parent=5 // pred_check
      _
    $region10: #{_lambda_.12} parent=5 // pred_check_branch
      %225 = sbr.rel (%p222) target = $region12
    $region11: #{_lambda_.12} parent=5 // pred_region
      %s226 = ssub.s32 %s12, 1
      // Predicated region
      $region13: #{_lambda_.12} parent=11 // pred_check
        %p227 = pneg %p96
      $region14: #{_lambda_.12} parent=11 // pred_check_branch
        %229 = sbr.rel (%p227) target = $region16
      $region15: #{_lambda_.12} parent=11 // pred_region
        %s230 = smul.u32 128, %s26
        %p231 = scmp.lt.s32.totalorder %s230, 127
        %s232 = scalar_select %p231, %s230, 127
        %p233 = scmp.lt.s32.totalorder %s25, 0
        %s234 = scalar_select %p233, %s25, 0
        %s235 = sadd.s32 %s234, %s232
        %s236 = smul.addr %s235, 4
        %s237 = scalar_lea.vmem %s1, %s236
        %s238 = smul.u32 128, %s26
      $region16: #{_lambda_.12} parent=11 // pred_fallthru
        _
      // Predicated region
      $region17: #{_lambda_.12} parent=11 // pred_check
        %p239 = pneg %p122
      $region18: #{_lambda_.12} parent=11 // pred_check_branch
        %241 = sbr.rel (%p239) target = $region20
      $region19: #{_lambda_.12} parent=11 // pred_region
        %p242 = scmp.lt.s32.totalorder %s25, 0
        %s243 = scalar_select %p242, %s25, 0
        %s244 = scalar_lea.vmem %s2, %s243
      $region20: #{_lambda_.12} parent=11 // pred_fallthru
        _
    $region12: #{_lambda_.12} parent=5 // pred_fallthru
      _
    %p245 = scmp.lt.s32.totalorder %s12, 2
    // Predicated region
    $region21: #{_lambda_.12} parent=5 // pred_check
      %p246 = pneg %p245
    $region22: #{_lambda_.12} parent=5 // pred_check_branch
      %248 = sbr.rel (%p246) target = $region24
    $region23: #{_lambda_.12} parent=5 // pred_region
      // Predicated region
      $region25: #{_lambda_.12} parent=23 // pred_check
        %p249 = pneg %p62
      $region26: #{_lambda_.12} parent=23 // pred_check_branch
        %251 = sbr.rel (%p249) target = $region28
      $region27: #{_lambda_.12} parent=23 // pred_region
        %s252 = smul.u32 2, %s20
        %s253 = smul.u32 8, %s22
        %p254 = scmp.lt.s32.totalorder %s19, 1
        %s255 = scalar_select %p254, %s19, 1
        %p256 = scmp.lt.s32.totalorder %s252, 1
        %s257 = scalar_select %p256, %s252, 1
        %p258 = scmp.lt.s32.totalorder %s253, 7
        %s259 = scalar_select %p258, %s253, 7
        %s260 = smul.addr %s257, 8
        %s261 = sadd.s32 %s259, %s260
        %s262 = smul.addr %s255, 16
        %s263 = sadd.s32 %s261, %s262
        %s264 = smul.addr %s263, 4
        %s265 = scalar_lea.vmem %s0, %s264
        %s266 = smul.u32 2, %s20
        %s267 = smul.u32 8, %s22
      $region28: #{_lambda_.12} parent=23 // pred_fallthru
        _
    $region24: #{_lambda_.12} parent=5 // pred_fallthru
      _
    %p268 = scmp.le.s32.totalorder 1, %s12
    %p269 = scmp.lt.s32.totalorder %s12, 3
    %p270 = pnand %p268, %p269
    %p271 = pneg %p270
    // Predicated region
    $region29: #{_lambda_.12} parent=5 // pred_check
      _
    $region30: #{_lambda_.12} parent=5 // pred_check_branch
      %273 = sbr.rel (%p270) target = $region32
    $region31: #{_lambda_.12} parent=5 // pred_region
      %s274 = ssub.s32 %s12, 1
      %s275 = smul.u32 2, %s24
      %s276 = smul.u32 8, %s26
      %p277 = scmp.lt.s32.totalorder %s23, 1
      %s278 = scalar_select %p277, %s23, 1
      %p279 = scmp.lt.s32.totalorder %s275, 1
      %s280 = scalar_select %p279, %s275, 1
      %p281 = scmp.lt.s32.totalorder %s276, 7
      %s282 = scalar_select %p281, %s276, 7
      %s283 = smul.addr %s280, 8
      %s284 = sadd.s32 %s282, %s283
      %s285 = smul.addr %s278, 16
      %s286 = sadd.s32 %s284, %s285
      %s287 = smul.addr %s286, 4
      %s288 = scalar_lea.vmem %s0, %s287
      %p289 = pneg %p68
      %p290 = pneg %p65
      %s291 = smul.u32 128, %s26
      %p292 = scmp.lt.s32.totalorder %s291, 127
      %s293 = scalar_select %p292, %s291, 127
      %p294 = scmp.lt.s32.totalorder %s25, 0
      %s295 = scalar_select %p294, %s25, 0
      %s296 = sadd.s32 %s295, %s293
      %s297 = smul.addr %s296, 4
      %s298 = scalar_lea.vmem %s1, %s297
      %p299 = pneg %p96
      %p300 = pneg %p93
      %p301 = scmp.lt.s32.totalorder %s25, 0
      %s302 = scalar_select %p301, %s25, 0
      %s303 = scalar_lea.vmem %s2, %s302
      %p304 = pneg %p122
      %p305 = pneg %p119
      %p306 = pneg %p152
      %p307 = pneg %p149
      %s308 = smul.u32 2, %s24
      %p309 = scmp.lt.s32.totalorder %s23, 1
      %s310 = scalar_select %p309, %s23, 1
      %p311 = scmp.lt.s32.totalorder %s308, 1
      %s312 = scalar_select %p311, %s308, 1
      %p313 = scmp.lt.s32.totalorder %s25, 0
      %s314 = scalar_select %p313, %s25, 0
      %s315 = sadd.s32 %s314, %s312
      %s316 = smul.addr %s310, 2
      %s317 = sadd.s32 %s315, %s316
      %s318 = smul.addr %s317, 4
      %s319 = scalar_lea.vmem %s3, %s318
      %p320 = pneg %p182
      %p321 = pneg %p179
      %p322 = scmp.lt.s32.totalorder %s23, 1
      %s323 = scalar_select %p322, %s23, 1
      %p324 = scmp.lt.s32.totalorder %s24, 0
      %s325 = scalar_select %p324, %s24, 0
      %p326 = scmp.lt.s32.totalorder %s25, 0
      %s327 = scalar_select %p326, %s25, 0
      %s328 = sadd.s32 %s327, %s325
      %s329 = sadd.s32 %s328, %s323
      %s330 = scalar_lea.vmem %s4, %s329
      %p331 = pneg %p212
      %p332 = pneg %p209
      %p333 = scmp.lt.s32.totalorder %s23, 1
      %s334 = scalar_select %p333, %s23, 1
      %p335 = scmp.lt.s32.totalorder %s24, 0
      %s336 = scalar_select %p335, %s24, 0
      %p337 = scmp.lt.s32.totalorder %s25, 0
      %s338 = scalar_select %p337, %s25, 0
      %s339 = sadd.s32 %s338, %s336
      %s340 = sadd.s32 %s339, %s334
      %s341 = scalar_lea.vmem %s5, %s340
      %s342 = smul.u32 2, %s24
      %s343 = smul.u32 8, %s26
      %p344 = scmp.lt.s32.totalorder %s23, 1
      %s345 = scalar_select %p344, %s23, 1
      %p346 = scmp.lt.s32.totalorder %s342, 1
      %s347 = scalar_select %p346, %s342, 1
      %p348 = scmp.lt.s32.totalorder %s343, 7
      %s349 = scalar_select %p348, %s343, 7
      %s350 = smul.addr %s347, 8
      %s351 = sadd.s32 %s349, %s350
      %s352 = smul.addr %s345, 16
      %s353 = sadd.s32 %s351, %s352
      %s354 = smul.addr %s353, 4
      %s355 = scalar_lea.vmem %s0, %s354
      %s356 = smul.u32 2, %s24
      %s357 = smul.u32 8, %s26
      %s358 = smul.u32 128, %s26
      %p359 = scmp.lt.s32.totalorder %s358, 127
      %s360 = scalar_select %p359, %s358, 127
      %p361 = scmp.lt.s32.totalorder %s25, 0
      %s362 = scalar_select %p361, %s25, 0
      %s363 = sadd.s32 %s362, %s360
      %s364 = smul.addr %s363, 4
      %s365 = scalar_lea.vmem %s1, %s364
      %s366 = smul.u32 128, %s26
      %p367 = scmp.lt.s32.totalorder %s25, 0
      %s368 = scalar_select %p367, %s25, 0
      %s369 = scalar_lea.vmem %s2, %s368
      %s370 = smul.u32 2, %s24
      %p371 = scmp.lt.s32.totalorder %s23, 1
      %s372 = scalar_select %p371, %s23, 1
      %p373 = scmp.lt.s32.totalorder %s370, 1
      %s374 = scalar_select %p373, %s370, 1
      %p375 = scmp.lt.s32.totalorder %s25, 0
      %s376 = scalar_select %p375, %s25, 0
      %s377 = sadd.s32 %s376, %s374
      %s378 = smul.addr %s372, 2
      %s379 = sadd.s32 %s377, %s378
      %s380 = smul.addr %s379, 4
      %s381 = scalar_lea.vmem %s3, %s380
      %s382 = smul.u32 2, %s24
      %p383 = scmp.lt.s32.totalorder %s23, 1
      %s384 = scalar_select %p383, %s23, 1
      %p385 = scmp.lt.s32.totalorder %s24, 0
      %s386 = scalar_select %p385, %s24, 0
      %p387 = scmp.lt.s32.totalorder %s25, 0
      %s388 = scalar_select %p387, %s25, 0
      %s389 = sadd.s32 %s388, %s386
      %s390 = sadd.s32 %s389, %s384
      %s391 = scalar_lea.vmem %s4, %s390
      %p392 = scmp.lt.s32.totalorder %s23, 1
      %s393 = scalar_select %p392, %s23, 1
      %p394 = scmp.lt.s32.totalorder %s24, 0
      %s395 = scalar_select %p394, %s24, 0
      %p396 = scmp.lt.s32.totalorder %s25, 0
      %s397 = scalar_select %p396, %s25, 0
      %s398 = sadd.s32 %s397, %s395
      %s399 = sadd.s32 %s398, %s393
      %s400 = scalar_lea.vmem %s5, %s399
      %p402 = scmp.eq.s32.totalorder %s26, 0
      // Predicated region
      $region33: #{_lambda_.12} parent=31 // pred_check
        %p403 = pneg %p402
      $region34: #{_lambda_.12} parent=31 // pred_check_branch
        %405 = sbr.rel (%p403) target = $region36
      $region35: #{_lambda_.12} parent=31 // pred_region
        %406 = vst [vmem:[#allocation2] sm:$0xff] 0.0
        %407 = vst [vmem:[#allocation2 + $0x8] sm:$0xff] 0.0
      $region36: #{_lambda_.12} parent=31 // pred_fallthru
        _
      %v408 = vld [vmem:[#allocation2] sm:$0xff]
      %v409 = vld [vmem:[#allocation2 + $0x8] sm:$0xff]
      %v410 = vld [vmem:[%s355] sm:$0xff]
      %v411 = vld [vmem:[%s355 + $0x8] sm:$0xff]
      %v412 = vld [vmem:[%s355 + $0x10] sm:$0xff]
      %v413 = vld [vmem:[%s355 + $0x18] sm:$0xff]
      %v414 = vld [vmem:[%s355 + $0x20] sm:$0xff]
      %v415 = vld [vmem:[%s355 + $0x28] sm:$0xff]
      %v416 = vld [vmem:[%s355 + $0x30] sm:$0xff]
      %v417 = vld [vmem:[%s355 + $0x38] sm:$0xff]
      %v418 = vld [vmem:[%s365] sm:$0xf]
      %v419 = vld [vmem:[%s365 + $0x4] sm:$0xf]
      %v420 = vld [vmem:[%s365 + $0x8] sm:$0xf]
      %v421 = vld [vmem:[%s365 + $0xc] sm:$0xf]
      %v422 = vld [vmem:[%s365 + $0x10] sm:$0xf]
      %v423 = vld [vmem:[%s365 + $0x14] sm:$0xf]
      %v424 = vld [vmem:[%s365 + $0x18] sm:$0xf]
      %v425 = vld [vmem:[%s365 + $0x1c] sm:$0xf]
      %v426 = vld [vmem:[%s365 + $0x20] sm:$0xf]
      %v427 = vld [vmem:[%s365 + $0x24] sm:$0xf]
      %v428 = vld [vmem:[%s365 + $0x28] sm:$0xf]
      %v429 = vld [vmem:[%s365 + $0x2c] sm:$0xf]
      %v430 = vld [vmem:[%s365 + $0x30] sm:$0xf]
      %v431 = vld [vmem:[%s365 + $0x34] sm:$0xf]
      %v432 = vld [vmem:[%s365 + $0x38] sm:$0xf]
      %v433 = vld [vmem:[%s365 + $0x3c] sm:$0xf]
      %v434 = vld [vmem:[%s365 + $0x40] sm:$0xf]
      %v435 = vld [vmem:[%s365 + $0x44] sm:$0xf]
      %v436 = vld [vmem:[%s365 + $0x48] sm:$0xf]
      %v437 = vld [vmem:[%s365 + $0x4c] sm:$0xf]
      %v438 = vld [vmem:[%s365 + $0x50] sm:$0xf]
      %v439 = vld [vmem:[%s365 + $0x54] sm:$0xf]
      %v440 = vld [vmem:[%s365 + $0x58] sm:$0xf]
      %v441 = vld [vmem:[%s365 + $0x5c] sm:$0xf]
      %v442 = vld [vmem:[%s365 + $0x60] sm:$0xf]
      %v443 = vld [vmem:[%s365 + $0x64] sm:$0xf]
      %v444 = vld [vmem:[%s365 + $0x68] sm:$0xf]
      %v445 = vld [vmem:[%s365 + $0x6c] sm:$0xf]
      %v446 = vld [vmem:[%s365 + $0x70] sm:$0xf]
      %v447 = vld [vmem:[%s365 + $0x74] sm:$0xf]
      %v448 = vld [vmem:[%s365 + $0x78] sm:$0xf]
      %v449 = vld [vmem:[%s365 + $0x7c] sm:$0xf]
      %v450 = vld [vmem:[%s365 + $0x80] sm:$0xf]
      %v451 = vld [vmem:[%s365 + $0x84] sm:$0xf]
      %v452 = vld [vmem:[%s365 + $0x88] sm:$0xf]
      %v453 = vld [vmem:[%s365 + $0x8c] sm:$0xf]
      %v454 = vld [vmem:[%s365 + $0x90] sm:$0xf]
      %v455 = vld [vmem:[%s365 + $0x94] sm:$0xf]
      %v456 = vld [vmem:[%s365 + $0x98] sm:$0xf]
      %v457 = vld [vmem:[%s365 + $0x9c] sm:$0xf]
      %v458 = vld [vmem:[%s365 + $0xa0] sm:$0xf]
      %v459 = vld [vmem:[%s365 + $0xa4] sm:$0xf]
      %v460 = vld [vmem:[%s365 + $0xa8] sm:$0xf]
      %v461 = vld [vmem:[%s365 + $0xac] sm:$0xf]
      %v462 = vld [vmem:[%s365 + $0xb0] sm:$0xf]
      %v463 = vld [vmem:[%s365 + $0xb4] sm:$0xf]
      %v464 = vld [vmem:[%s365 + $0xb8] sm:$0xf]
      %v465 = vld [vmem:[%s365 + $0xbc] sm:$0xf]
      %v466 = vld [vmem:[%s365 + $0xc0] sm:$0xf]
      %v467 = vld [vmem:[%s365 + $0xc4] sm:$0xf]
      %v468 = vld [vmem:[%s365 + $0xc8] sm:$0xf]
      %v469 = vld [vmem:[%s365 + $0xcc] sm:$0xf]
      %v470 = vld [vmem:[%s365 + $0xd0] sm:$0xf]
      %v471 = vld [vmem:[%s365 + $0xd4] sm:$0xf]
      %v472 = vld [vmem:[%s365 + $0xd8] sm:$0xf]
      %v473 = vld [vmem:[%s365 + $0xdc] sm:$0xf]
      %v474 = vld [vmem:[%s365 + $0xe0] sm:$0xf]
      %v475 = vld [vmem:[%s365 + $0xe4] sm:$0xf]
      %v476 = vld [vmem:[%s365 + $0xe8] sm:$0xf]
      %v477 = vld [vmem:[%s365 + $0xec] sm:$0xf]
      %v478 = vld [vmem:[%s365 + $0xf0] sm:$0xf]
      %v479 = vld [vmem:[%s365 + $0xf4] sm:$0xf]
      %v480 = vld [vmem:[%s365 + $0xf8] sm:$0xf]
      %v481 = vld [vmem:[%s365 + $0xfc] sm:$0xf]
      %v482 = vld [vmem:[%s365 + $0x100] sm:$0xf]
      %v483 = vld [vmem:[%s365 + $0x104] sm:$0xf]
      %v484 = vld [vmem:[%s365 + $0x108] sm:$0xf]
      %v485 = vld [vmem:[%s365 + $0x10c] sm:$0xf]
      %v486 = vld [vmem:[%s365 + $0x110] sm:$0xf]
      %v487 = vld [vmem:[%s365 + $0x114] sm:$0xf]
      %v488 = vld [vmem:[%s365 + $0x118] sm:$0xf]
      %v489 = vld [vmem:[%s365 + $0x11c] sm:$0xf]
      %v490 = vld [vmem:[%s365 + $0x120] sm:$0xf]
      %v491 = vld [vmem:[%s365 + $0x124] sm:$0xf]
      %v492 = vld [vmem:[%s365 + $0x128] sm:$0xf]
      %v493 = vld [vmem:[%s365 + $0x12c] sm:$0xf]
      %v494 = vld [vmem:[%s365 + $0x130] sm:$0xf]
      %v495 = vld [vmem:[%s365 + $0x134] sm:$0xf]
      %v496 = vld [vmem:[%s365 + $0x138] sm:$0xf]
      %v497 = vld [vmem:[%s365 + $0x13c] sm:$0xf]
      %v498 = vld [vmem:[%s365 + $0x140] sm:$0xf]
      %v499 = vld [vmem:[%s365 + $0x144] sm:$0xf]
      %v500 = vld [vmem:[%s365 + $0x148] sm:$0xf]
      %v501 = vld [vmem:[%s365 + $0x14c] sm:$0xf]
      %v502 = vld [vmem:[%s365 + $0x150] sm:$0xf]
      %v503 = vld [vmem:[%s365 + $0x154] sm:$0xf]
      %v504 = vld [vmem:[%s365 + $0x158] sm:$0xf]
      %v505 = vld [vmem:[%s365 + $0x15c] sm:$0xf]
      %v506 = vld [vmem:[%s365 + $0x160] sm:$0xf]
      %v507 = vld [vmem:[%s365 + $0x164] sm:$0xf]
      %v508 = vld [vmem:[%s365 + $0x168] sm:$0xf]
      %v509 = vld [vmem:[%s365 + $0x16c] sm:$0xf]
      %v510 = vld [vmem:[%s365 + $0x170] sm:$0xf]
      %v511 = vld [vmem:[%s365 + $0x174] sm:$0xf]
      %v512 = vld [vmem:[%s365 + $0x178] sm:$0xf]
      %v513 = vld [vmem:[%s365 + $0x17c] sm:$0xf]
      %v514 = vld [vmem:[%s365 + $0x180] sm:$0xf]
      %v515 = vld [vmem:[%s365 + $0x184] sm:$0xf]
      %v516 = vld [vmem:[%s365 + $0x188] sm:$0xf]
      %v517 = vld [vmem:[%s365 + $0x18c] sm:$0xf]
      %v518 = vld [vmem:[%s365 + $0x190] sm:$0xf]
      %v519 = vld [vmem:[%s365 + $0x194] sm:$0xf]
      %v520 = vld [vmem:[%s365 + $0x198] sm:$0xf]
      %v521 = vld [vmem:[%s365 + $0x19c] sm:$0xf]
      %v522 = vld [vmem:[%s365 + $0x1a0] sm:$0xf]
      %v523 = vld [vmem:[%s365 + $0x1a4] sm:$0xf]
      %v524 = vld [vmem:[%s365 + $0x1a8] sm:$0xf]
      %v525 = vld [vmem:[%s365 + $0x1ac] sm:$0xf]
      %v526 = vld [vmem:[%s365 + $0x1b0] sm:$0xf]
      %v527 = vld [vmem:[%s365 + $0x1b4] sm:$0xf]
      %v528 = vld [vmem:[%s365 + $0x1b8] sm:$0xf]
      %v529 = vld [vmem:[%s365 + $0x1bc] sm:$0xf]
      %v530 = vld [vmem:[%s365 + $0x1c0] sm:$0xf]
      %v531 = vld [vmem:[%s365 + $0x1c4] sm:$0xf]
      %v532 = vld [vmem:[%s365 + $0x1c8] sm:$0xf]
      %v533 = vld [vmem:[%s365 + $0x1cc] sm:$0xf]
      %v534 = vld [vmem:[%s365 + $0x1d0] sm:$0xf]
      %v535 = vld [vmem:[%s365 + $0x1d4] sm:$0xf]
      %v536 = vld [vmem:[%s365 + $0x1d8] sm:$0xf]
      %v537 = vld [vmem:[%s365 + $0x1dc] sm:$0xf]
      %v538 = vld [vmem:[%s365 + $0x1e0] sm:$0xf]
      %v539 = vld [vmem:[%s365 + $0x1e4] sm:$0xf]
      %v540 = vld [vmem:[%s365 + $0x1e8] sm:$0xf]
      %v541 = vld [vmem:[%s365 + $0x1ec] sm:$0xf]
      %v542 = vld [vmem:[%s365 + $0x1f0] sm:$0xf]
      %v543 = vld [vmem:[%s365 + $0x1f4] sm:$0xf]
      %v544 = vld [vmem:[%s365 + $0x1f8] sm:$0xf]
      %v545 = vld [vmem:[%s365 + $0x1fc] sm:$0xf]
      %v554 = vunpack.c.l.b16 %v410
      %v555 = vunpack.c.h.b16 %v410
      %v556 = vunpack.c.l.b16 %v411
      %v557 = vunpack.c.h.b16 %v411
      %v558 = vunpack.c.l.b16 %v412
      %v559 = vunpack.c.h.b16 %v412
      %v560 = vunpack.c.l.b16 %v413
      %v561 = vunpack.c.h.b16 %v413
      %v562 = vunpack.c.l.b16 %v414
      %v563 = vunpack.c.h.b16 %v414
      %v564 = vunpack.c.l.b16 %v415
      %v565 = vunpack.c.h.b16 %v415
      %v566 = vunpack.c.l.b16 %v416
      %v567 = vunpack.c.h.b16 %v416
      %v568 = vunpack.c.l.b16 %v417
      %v569 = vunpack.c.h.b16 %v417
      %v570 = vpack.c.b16 %v562, %v554
      %v571 = vpack.c.b16 %v563, %v555
      %v572 = vpack.c.b16 %v564, %v556
      %v573 = vpack.c.b16 %v565, %v557
      %v574 = vpack.c.b16 %v566, %v558
      %v575 = vpack.c.b16 %v567, %v559
      %v576 = vpack.c.b16 %v568, %v560
      %v577 = vpack.c.b16 %v569, %v561
      %v714 = vunpack.c.l.b16 %v418
      %v715 = vunpack.c.l.b16 %v419
      %v716 = vunpack.c.l.b16 %v420
      %v717 = vunpack.c.l.b16 %v421
      %v718 = vunpack.c.l.b16 %v422
      %v719 = vunpack.c.l.b16 %v423
      %v720 = vunpack.c.l.b16 %v424
      %v721 = vunpack.c.l.b16 %v425
      %v722 = vunpack.c.l.b16 %v426
      %v723 = vunpack.c.l.b16 %v427
      %v724 = vunpack.c.l.b16 %v428
      %v725 = vunpack.c.l.b16 %v429
      %v726 = vunpack.c.l.b16 %v430
      %v727 = vunpack.c.l.b16 %v431
      %v728 = vunpack.c.l.b16 %v432
      %v729 = vunpack.c.l.b16 %v433
      %v730 = vunpack.c.l.b16 %v434
      %v731 = vunpack.c.l.b16 %v435
      %v732 = vunpack.c.l.b16 %v436
      %v733 = vunpack.c.l.b16 %v437
      %v734 = vunpack.c.l.b16 %v438
      %v735 = vunpack.c.l.b16 %v439
      %v736 = vunpack.c.l.b16 %v440
      %v737 = vunpack.c.l.b16 %v441
      %v738 = vunpack.c.l.b16 %v442
      %v739 = vunpack.c.l.b16 %v443
      %v740 = vunpack.c.l.b16 %v444
      %v741 = vunpack.c.l.b16 %v445
      %v742 = vunpack.c.l.b16 %v446
      %v743 = vunpack.c.l.b16 %v447
      %v744 = vunpack.c.l.b16 %v448
      %v745 = vunpack.c.l.b16 %v449
      %v746 = vunpack.c.l.b16 %v450
      %v747 = vunpack.c.l.b16 %v451
      %v748 = vunpack.c.l.b16 %v452
      %v749 = vunpack.c.l.b16 %v453
      %v750 = vunpack.c.l.b16 %v454
      %v751 = vunpack.c.l.b16 %v455
      %v752 = vunpack.c.l.b16 %v456
      %v753 = vunpack.c.l.b16 %v457
      %v754 = vunpack.c.l.b16 %v458
      %v755 = vunpack.c.l.b16 %v459
      %v756 = vunpack.c.l.b16 %v460
      %v757 = vunpack.c.l.b16 %v461
      %v758 = vunpack.c.l.b16 %v462
      %v759 = vunpack.c.l.b16 %v463
      %v760 = vunpack.c.l.b16 %v464
      %v761 = vunpack.c.l.b16 %v465
      %v762 = vunpack.c.l.b16 %v466
      %v763 = vunpack.c.l.b16 %v467
      %v764 = vunpack.c.l.b16 %v468
      %v765 = vunpack.c.l.b16 %v469
      %v766 = vunpack.c.l.b16 %v470
      %v767 = vunpack.c.l.b16 %v471
      %v768 = vunpack.c.l.b16 %v472
      %v769 = vunpack.c.l.b16 %v473
      %v770 = vunpack.c.l.b16 %v474
      %v771 = vunpack.c.l.b16 %v475
      %v772 = vunpack.c.l.b16 %v476
      %v773 = vunpack.c.l.b16 %v477
      %v774 = vunpack.c.l.b16 %v478
      %v775 = vunpack.c.l.b16 %v479
      %v776 = vunpack.c.l.b16 %v480
      %v777 = vunpack.c.l.b16 %v481
      %v778 = vunpack.c.l.b16 %v482
      %v779 = vunpack.c.l.b16 %v483
      %v780 = vunpack.c.l.b16 %v484
      %v781 = vunpack.c.l.b16 %v485
      %v782 = vunpack.c.l.b16 %v486
      %v783 = vunpack.c.l.b16 %v487
      %v784 = vunpack.c.l.b16 %v488
      %v785 = vunpack.c.l.b16 %v489
      %v786 = vunpack.c.l.b16 %v490
      %v787 = vunpack.c.l.b16 %v491
      %v788 = vunpack.c.l.b16 %v492
      %v789 = vunpack.c.l.b16 %v493
      %v790 = vunpack.c.l.b16 %v494
      %v791 = vunpack.c.l.b16 %v495
      %v792 = vunpack.c.l.b16 %v496
      %v793 = vunpack.c.l.b16 %v497
      %v794 = vunpack.c.l.b16 %v498
      %v795 = vunpack.c.l.b16 %v499
      %v796 = vunpack.c.l.b16 %v500
      %v797 = vunpack.c.l.b16 %v501
      %v798 = vunpack.c.l.b16 %v502
      %v799 = vunpack.c.l.b16 %v503
      %v800 = vunpack.c.l.b16 %v504
      %v801 = vunpack.c.l.b16 %v505
      %v802 = vunpack.c.l.b16 %v506
      %v803 = vunpack.c.l.b16 %v507
      %v804 = vunpack.c.l.b16 %v508
      %v805 = vunpack.c.l.b16 %v509
      %v806 = vunpack.c.l.b16 %v510
      %v807 = vunpack.c.l.b16 %v511
      %v808 = vunpack.c.l.b16 %v512
      %v809 = vunpack.c.l.b16 %v513
      %v810 = vunpack.c.l.b16 %v514
      %v811 = vunpack.c.l.b16 %v515
      %v812 = vunpack.c.l.b16 %v516
      %v813 = vunpack.c.l.b16 %v517
      %v814 = vunpack.c.l.b16 %v518
      %v815 = vunpack.c.l.b16 %v519
      %v816 = vunpack.c.l.b16 %v520
      %v817 = vunpack.c.l.b16 %v521
      %v818 = vunpack.c.l.b16 %v522
      %v819 = vunpack.c.l.b16 %v523
      %v820 = vunpack.c.l.b16 %v524
      %v821 = vunpack.c.l.b16 %v525
      %v822 = vunpack.c.l.b16 %v526
      %v823 = vunpack.c.l.b16 %v527
      %v824 = vunpack.c.l.b16 %v528
      %v825 = vunpack.c.l.b16 %v529
      %v826 = vunpack.c.l.b16 %v530
      %v827 = vunpack.c.l.b16 %v531
      %v828 = vunpack.c.l.b16 %v532
      %v829 = vunpack.c.l.b16 %v533
      %v830 = vunpack.c.l.b16 %v534
      %v831 = vunpack.c.l.b16 %v535
      %v832 = vunpack.c.l.b16 %v536
      %v833 = vunpack.c.l.b16 %v537
      %v834 = vunpack.c.l.b16 %v538
      %v835 = vunpack.c.l.b16 %v539
      %v836 = vunpack.c.l.b16 %v540
      %v837 = vunpack.c.l.b16 %v541
      %v838 = vunpack.c.l.b16 %v542
      %v839 = vunpack.c.l.b16 %v543
      %v840 = vunpack.c.l.b16 %v544
      %v841 = vunpack.c.l.b16 %v545
      %v842 = vpack.c.b16 %v715, %v714
      %v843 = vpack.c.b16 %v717, %v716
      %v844 = vpack.c.b16 %v719, %v718
      %v845 = vpack.c.b16 %v721, %v720
      %v846 = vpack.c.b16 %v723, %v722
      %v847 = vpack.c.b16 %v725, %v724
      %v848 = vpack.c.b16 %v727, %v726
      %v849 = vpack.c.b16 %v729, %v728
      %v850 = vpack.c.b16 %v731, %v730
      %v851 = vpack.c.b16 %v733, %v732
      %v852 = vpack.c.b16 %v735, %v734
      %v853 = vpack.c.b16 %v737, %v736
      %v854 = vpack.c.b16 %v739, %v738
      %v855 = vpack.c.b16 %v741, %v740
      %v856 = vpack.c.b16 %v743, %v742
      %v857 = vpack.c.b16 %v745, %v744
      %v858 = vpack.c.b16 %v747, %v746
      %v859 = vpack.c.b16 %v749, %v748
      %v860 = vpack.c.b16 %v751, %v750
      %v861 = vpack.c.b16 %v753, %v752
      %v862 = vpack.c.b16 %v755, %v754
      %v863 = vpack.c.b16 %v757, %v756
      %v864 = vpack.c.b16 %v759, %v758
      %v865 = vpack.c.b16 %v761, %v760
      %v866 = vpack.c.b16 %v763, %v762
      %v867 = vpack.c.b16 %v765, %v764
      %v868 = vpack.c.b16 %v767, %v766
      %v869 = vpack.c.b16 %v769, %v768
      %v870 = vpack.c.b16 %v771, %v770
      %v871 = vpack.c.b16 %v773, %v772
      %v872 = vpack.c.b16 %v775, %v774
      %v873 = vpack.c.b16 %v777, %v776
      %v874 = vpack.c.b16 %v779, %v778
      %v875 = vpack.c.b16 %v781, %v780
      %v876 = vpack.c.b16 %v783, %v782
      %v877 = vpack.c.b16 %v785, %v784
      %v878 = vpack.c.b16 %v787, %v786
      %v879 = vpack.c.b16 %v789, %v788
      %v880 = vpack.c.b16 %v791, %v790
      %v881 = vpack.c.b16 %v793, %v792
      %v882 = vpack.c.b16 %v795, %v794
      %v883 = vpack.c.b16 %v797, %v796
      %v884 = vpack.c.b16 %v799, %v798
      %v885 = vpack.c.b16 %v801, %v800
      %v886 = vpack.c.b16 %v803, %v802
      %v887 = vpack.c.b16 %v805, %v804
      %v888 = vpack.c.b16 %v807, %v806
      %v889 = vpack.c.b16 %v809, %v808
      %v890 = vpack.c.b16 %v811, %v810
      %v891 = vpack.c.b16 %v813, %v812
      %v892 = vpack.c.b16 %v815, %v814
      %v893 = vpack.c.b16 %v817, %v816
      %v894 = vpack.c.b16 %v819, %v818
      %v895 = vpack.c.b16 %v821, %v820
      %v896 = vpack.c.b16 %v823, %v822
      %v897 = vpack.c.b16 %v825, %v824
      %v898 = vpack.c.b16 %v827, %v826
      %v899 = vpack.c.b16 %v829, %v828
      %v900 = vpack.c.b16 %v831, %v830
      %v901 = vpack.c.b16 %v833, %v832
      %v902 = vpack.c.b16 %v835, %v834
      %v903 = vpack.c.b16 %v837, %v836
      %v904 = vpack.c.b16 %v839, %v838
      %v905 = vpack.c.b16 %v841, %v840
      %970 = vmatprep.subr.bf16.mxu0 0
      %971 = vmatpush1.bf16.msra.mxu0 %v849
      %972 = vmatprep.subr.bf16.mxu0 0
      %973 = vmatpush1.bf16.msra.mxu0 %v848
      %974 = vmatprep.subr.bf16.mxu0 0
      %975 = vmatpush1.bf16.msra.mxu0 %v847
      %976 = vmatprep.subr.bf16.mxu0 0
      %977 = vmatpush1.bf16.msra.mxu0 %v846
      %978 = vmatprep.subr.bf16.mxu0 0
      %979 = vmatpush1.bf16.msra.mxu0 %v845
      %980 = vmatprep.subr.bf16.mxu0 0
      %981 = vmatpush1.bf16.msra.mxu0 %v844
      %982 = vmatprep.subr.bf16.mxu0 0
      %983 = vmatpush1.bf16.msra.mxu0 %v843
      %984 = vmatprep.subr.bf16.mxu0 0
      %985 = vmatpush1.bf16.msra.mxu0 %v842
      %986 = vmatprep.subr.bf16.mxu0 0
      %987 = vmatpush2.bf16.msra.mxu0 %v857
      %988 = vmatprep.subr.bf16.mxu0 0
      %989 = vmatpush2.bf16.msra.mxu0 %v856
      %990 = vmatprep.subr.bf16.mxu0 0
      %991 = vmatpush2.bf16.msra.mxu0 %v855
      %992 = vmatprep.subr.bf16.mxu0 0
      %993 = vmatpush2.bf16.msra.mxu0 %v854
      %994 = vmatprep.subr.bf16.mxu0 0
      %995 = vmatpush2.bf16.msra.mxu0 %v853
      %996 = vmatprep.subr.bf16.mxu0 0
      %997 = vmatpush2.bf16.msra.mxu0 %v852
      %998 = vmatprep.subr.bf16.mxu0 0
      %999 = vmatpush2.bf16.msra.mxu0 %v851
      %1000 = vmatprep.subr.bf16.mxu0 0
      %1001 = vmatpush2.bf16.msra.mxu0 %v850
      %1002 = vmatprep.mubr.bf16.mxu0 %v571
      %1003 = vmatmul.mubr.bf16.gmra.mxu0 %v570
      %v1004 = vpop.f32.mrf.mxu0
      %v1005 = vadd.f32 0.0, %v1004
      %v1006 = vpop.f32.mrf.mxu0
      %v1007 = vpop.f32.mrf.mxu0
      %v1008 = vadd.f32 0.0, %v1007
      %v1009 = vpop.f32.mrf.mxu0
      %1010 = vdwg.mxu0
      %1011 = vmatprep.subr.bf16.mxu0 0
      %1012 = vmatpush1.bf16.msra.mxu0 %v865
      %1013 = vmatprep.subr.bf16.mxu0 0
      %1014 = vmatpush1.bf16.msra.mxu0 %v864
      %1015 = vmatprep.subr.bf16.mxu0 0
      %1016 = vmatpush1.bf16.msra.mxu0 %v863
      %1017 = vmatprep.subr.bf16.mxu0 0
      %1018 = vmatpush1.bf16.msra.mxu0 %v862
      %1019 = vmatprep.subr.bf16.mxu0 0
      %1020 = vmatpush1.bf16.msra.mxu0 %v861
      %1021 = vmatprep.subr.bf16.mxu0 0
      %1022 = vmatpush1.bf16.msra.mxu0 %v860
      %1023 = vmatprep.subr.bf16.mxu0 0
      %1024 = vmatpush1.bf16.msra.mxu0 %v859
      %1025 = vmatprep.subr.bf16.mxu0 0
      %1026 = vmatpush1.bf16.msra.mxu0 %v858
      %1027 = vmatprep.subr.bf16.mxu0 0
      %1028 = vmatpush2.bf16.msra.mxu0 %v873
      %1029 = vmatprep.subr.bf16.mxu0 0
      %1030 = vmatpush2.bf16.msra.mxu0 %v872
      %1031 = vmatprep.subr.bf16.mxu0 0
      %1032 = vmatpush2.bf16.msra.mxu0 %v871
      %1033 = vmatprep.subr.bf16.mxu0 0
      %1034 = vmatpush2.bf16.msra.mxu0 %v870
      %1035 = vmatprep.subr.bf16.mxu0 0
      %1036 = vmatpush2.bf16.msra.mxu0 %v869
      %1037 = vmatprep.subr.bf16.mxu0 0
      %1038 = vmatpush2.bf16.msra.mxu0 %v868
      %1039 = vmatprep.subr.bf16.mxu0 0
      %1040 = vmatpush2.bf16.msra.mxu0 %v867
      %1041 = vmatprep.subr.bf16.mxu0 0
      %1042 = vmatpush2.bf16.msra.mxu0 %v866
      %1043 = vmatprep.mubr.bf16.mxu0 %v573
      %1044 = vmatmul.mubr.bf16.gmra.mxu0 %v572
      %v1045 = vpop.f32.mrf.mxu0
      %v1046 = vadd.f32 %v1005, %v1045
      %v1047 = vpop.f32.mrf.mxu0
      %v1048 = vpop.f32.mrf.mxu0
      %v1049 = vadd.f32 %v1008, %v1048
      %v1050 = vpop.f32.mrf.mxu0
      %1051 = vdwg.mxu0
      %1052 = vmatprep.subr.bf16.mxu0 0
      %1053 = vmatpush1.bf16.msra.mxu0 %v881
      %1054 = vmatprep.subr.bf16.mxu0 0
      %1055 = vmatpush1.bf16.msra.mxu0 %v880
      %1056 = vmatprep.subr.bf16.mxu0 0
      %1057 = vmatpush1.bf16.msra.mxu0 %v879
      %1058 = vmatprep.subr.bf16.mxu0 0
      %1059 = vmatpush1.bf16.msra.mxu0 %v878
      %1060 = vmatprep.subr.bf16.mxu0 0
      %1061 = vmatpush1.bf16.msra.mxu0 %v877
      %1062 = vmatprep.subr.bf16.mxu0 0
      %1063 = vmatpush1.bf16.msra.mxu0 %v876
      %1064 = vmatprep.subr.bf16.mxu0 0
      %1065 = vmatpush1.bf16.msra.mxu0 %v875
      %1066 = vmatprep.subr.bf16.mxu0 0
      %1067 = vmatpush1.bf16.msra.mxu0 %v874
      %1068 = vmatprep.subr.bf16.mxu0 0
      %1069 = vmatpush2.bf16.msra.mxu0 %v889
      %1070 = vmatprep.subr.bf16.mxu0 0
      %1071 = vmatpush2.bf16.msra.mxu0 %v888
      %1072 = vmatprep.subr.bf16.mxu0 0
      %1073 = vmatpush2.bf16.msra.mxu0 %v887
      %1074 = vmatprep.subr.bf16.mxu0 0
      %1075 = vmatpush2.bf16.msra.mxu0 %v886
      %1076 = vmatprep.subr.bf16.mxu0 0
      %1077 = vmatpush2.bf16.msra.mxu0 %v885
      %1078 = vmatprep.subr.bf16.mxu0 0
      %1079 = vmatpush2.bf16.msra.mxu0 %v884
      %1080 = vmatprep.subr.bf16.mxu0 0
      %1081 = vmatpush2.bf16.msra.mxu0 %v883
      %1082 = vmatprep.subr.bf16.mxu0 0
      %1083 = vmatpush2.bf16.msra.mxu0 %v882
      %1084 = vmatprep.mubr.bf16.mxu0 %v575
      %1085 = vmatmul.mubr.bf16.gmra.mxu0 %v574
      %v1086 = vpop.f32.mrf.mxu0
      %v1087 = vadd.f32 %v1046, %v1086
      %v1088 = vpop.f32.mrf.mxu0
      %v1089 = vpop.f32.mrf.mxu0
      %v1090 = vadd.f32 %v1049, %v1089
      %v1091 = vpop.f32.mrf.mxu0
      %1092 = vdwg.mxu0
      %1093 = vmatprep.subr.bf16.mxu0 0
      %1094 = vmatpush1.bf16.msra.mxu0 %v897
      %1095 = vmatprep.subr.bf16.mxu0 0
      %1096 = vmatpush1.bf16.msra.mxu0 %v896
      %1097 = vmatprep.subr.bf16.mxu0 0
      %1098 = vmatpush1.bf16.msra.mxu0 %v895
      %1099 = vmatprep.subr.bf16.mxu0 0
      %1100 = vmatpush1.bf16.msra.mxu0 %v894
      %1101 = vmatprep.subr.bf16.mxu0 0
      %1102 = vmatpush1.bf16.msra.mxu0 %v893
      %1103 = vmatprep.subr.bf16.mxu0 0
      %1104 = vmatpush1.bf16.msra.mxu0 %v892
      %1105 = vmatprep.subr.bf16.mxu0 0
      %1106 = vmatpush1.bf16.msra.mxu0 %v891
      %1107 = vmatprep.subr.bf16.mxu0 0
      %1108 = vmatpush1.bf16.msra.mxu0 %v890
      %1109 = vmatprep.subr.bf16.mxu0 0
      %1110 = vmatpush2.bf16.msra.mxu0 %v905
      %1111 = vmatprep.subr.bf16.mxu0 0
      %1112 = vmatpush2.bf16.msra.mxu0 %v904
      %1113 = vmatprep.subr.bf16.mxu0 0
      %1114 = vmatpush2.bf16.msra.mxu0 %v903
      %1115 = vmatprep.subr.bf16.mxu0 0
      %1116 = vmatpush2.bf16.msra.mxu0 %v902
      %1117 = vmatprep.subr.bf16.mxu0 0
      %1118 = vmatpush2.bf16.msra.mxu0 %v901
      %1119 = vmatprep.subr.bf16.mxu0 0
      %1120 = vmatpush2.bf16.msra.mxu0 %v900
      %1121 = vmatprep.subr.bf16.mxu0 0
      %1122 = vmatpush2.bf16.msra.mxu0 %v899
      %1123 = vmatprep.subr.bf16.mxu0 0
      %1124 = vmatpush2.bf16.msra.mxu0 %v898
      %1125 = vmatprep.mubr.bf16.mxu0 %v577
      %1126 = vmatmul.mubr.bf16.gmra.mxu0 %v576
      %v1127 = vpop.f32.mrf.mxu0
      %v1128 = vadd.f32 %v1087, %v1127
      %v1129 = vpop.f32.mrf.mxu0
      %v1130 = vpop.f32.mrf.mxu0
      %v1131 = vadd.f32 %v1090, %v1130
      %v1132 = vpop.f32.mrf.mxu0
      %1133 = vdwg.mxu0
      %v1134 = vadd.f32 %v408, %v1128
      %v1135 = vadd.f32 %v409, %v1131
      %1136 = vst [vmem:[#allocation2] sm:$0xff] %v1134
      %1137 = vst [vmem:[#allocation2 + $0x8] sm:$0xff] %v1135
      // Predicated region
      $region37: #{_lambda_.12} parent=31 // pred_check
        %p1138 = pneg %p402
      $region38: #{_lambda_.12} parent=31 // pred_check_branch
        %1140 = sbr.rel (%p1138) target = $region40
      $region39: #{_lambda_.12} parent=31 // pred_region
        %v1141 = vld [vmem:[#allocation2] sm:$0xff]
        %v1142 = vld [vmem:[#allocation2 + $0x8] sm:$0xff]
        %v1143 = vld [vmem:[%s369] sm:$0x1]
        %v1145 = vlaneseq
        %v1146 = vshrl.u32 %v1145, 7
        %v1147 = vsub.s32 0, %v1146
        %v1148 = vrot.slane %v1143, %v1147
        %v1150 = vadd.f32 %v1141, %v1148
        %v1151 = vadd.f32 %v1142, %v1148
        %v1152 = vadd.f32 %v1150, %v1151
        %v1153 = vrot.slane %v1152, 4
        %v1154 = vadd.f32 %v1152, %v1153
        %v1155 = vrot.slane %v1154, 2
        %v1156 = vadd.f32 %v1154, %v1155
        %v1157 = vrot.slane %v1156, 1
        %v1158 = vadd.f32 %v1156, %v1157
        %1159 = vst [vmem:[%s391] sm:$0x1] %v1158
        %v1160 = vmul.f32 %v1150, %v1150
        %v1161 = vmul.f32 %v1151, %v1151
        %v1162 = vadd.f32 %v1160, %v1161
        %v1163 = vrot.slane %v1162, 4
        %v1164 = vadd.f32 %v1162, %v1163
        %v1165 = vrot.slane %v1164, 2
        %v1166 = vadd.f32 %v1164, %v1165
        %v1167 = vrot.slane %v1166, 1
        %v1168 = vadd.f32 %v1166, %v1167
        %1169 = vst [vmem:[%s400] sm:$0x1] %v1168
        %v1170 = vpack.c.bf16 %v1151, %v1150
        %v1172 = vunpack.c.l.b16 %v1170
        %v1173 = vunpack.c.h.b16 %v1170
        %v1174 = vpack.c.b16 %v1172, %v1172
        %v1175 = vpack.c.b16 %v1173, %v1173
        %1178 = vst [vmem:[%s381] sm:$0xf] %v1174
        %1179 = vst [vmem:[%s381 + $0x4] sm:$0xf] %v1175
      $region40: #{_lambda_.12} parent=31 // pred_fallthru
        _
      %s1180 = smul.u32 2, %s24
      %p1181 = scmp.lt.s32.totalorder %s23, 1
      %s1182 = scalar_select %p1181, %s23, 1
      %p1183 = scmp.lt.s32.totalorder %s1180, 1
      %s1184 = scalar_select %p1183, %s1180, 1
      %p1185 = scmp.lt.s32.totalorder %s25, 0
      %s1186 = scalar_select %p1185, %s25, 0
      %s1187 = sadd.s32 %s1186, %s1184
      %s1188 = smul.addr %s1182, 2
      %s1189 = sadd.s32 %s1187, %s1188
      %s1190 = smul.addr %s1189, 4
      %s1191 = scalar_lea.vmem %s3, %s1190
      %p1192 = scmp.lt.s32.totalorder %s23, 1
      %s1193 = scalar_select %p1192, %s23, 1
      %p1194 = scmp.lt.s32.totalorder %s24, 0
      %s1195 = scalar_select %p1194, %s24, 0
      %p1196 = scmp.lt.s32.totalorder %s25, 0
      %s1197 = scalar_select %p1196, %s25, 0
      %s1198 = sadd.s32 %s1197, %s1195
      %s1199 = sadd.s32 %s1198, %s1193
      %s1200 = scalar_lea.vmem %s4, %s1199
      %p1201 = scmp.lt.s32.totalorder %s23, 1
      %s1202 = scalar_select %p1201, %s23, 1
      %p1203 = scmp.lt.s32.totalorder %s24, 0
      %s1204 = scalar_select %p1203, %s24, 0
      %p1205 = scmp.lt.s32.totalorder %s25, 0
      %s1206 = scalar_select %p1205, %s25, 0
      %s1207 = sadd.s32 %s1206, %s1204
      %s1208 = sadd.s32 %s1207, %s1202
      %s1209 = scalar_lea.vmem %s5, %s1208
      // Predicated region
      $region41: #{_lambda_.12} parent=31 // pred_check
        %p1210 = pneg %p149
      $region42: #{_lambda_.12} parent=31 // pred_check_branch
        %1212 = sbr.rel (%p1210) target = $region44
      $region43: #{_lambda_.12} parent=31 // pred_region
        %s1213 = smul.u32 2, %s24
      $region44: #{_lambda_.12} parent=31 // pred_fallthru
        _
      // Predicated region
      $region45: #{_lambda_.12} parent=31 // pred_check
        %p1214 = pneg %p179
      $region46: #{_lambda_.12} parent=31 // pred_check_branch
        %1216 = sbr.rel (%p1214) target = $region48
      $region47: #{_lambda_.12} parent=31 // pred_region
        _
      $region48: #{_lambda_.12} parent=31 // pred_fallthru
        _
      // Predicated region
      $region49: #{_lambda_.12} parent=31 // pred_check
        %p1217 = pneg %p209
      $region50: #{_lambda_.12} parent=31 // pred_check_branch
        %1219 = sbr.rel (%p1217) target = $region52
      $region51: #{_lambda_.12} parent=31 // pred_region
        _
      $region52: #{_lambda_.12} parent=31 // pred_fallthru
        _
    $region32: #{_lambda_.12} parent=5 // pred_fallthru
      _
    %p1220 = scmp.le.s32.totalorder 2, %s12
    // Predicated region
    $region53: #{_lambda_.12} parent=5 // pred_check
      %p1221 = pneg %p1220
    $region54: #{_lambda_.12} parent=5 // pred_check_branch
      %1223 = sbr.rel (%p1221) target = $region56
    $region55: #{_lambda_.12} parent=5 // pred_region
      %s1224 = ssub.s32 %s12, 2
      // Predicated region
      $region57: #{_lambda_.12} parent=55 // pred_check
        %p1225 = pneg %p155
      $region58: #{_lambda_.12} parent=55 // pred_check_branch
        %1227 = sbr.rel (%p1225) target = $region60
      $region59: #{_lambda_.12} parent=55 // pred_region
        %s1228 = smul.u32 2, %s28
        %p1229 = scmp.lt.s32.totalorder %s27, 1
        %s1230 = scalar_select %p1229, %s27, 1
        %p1231 = scmp.lt.s32.totalorder %s1228, 1
        %s1232 = scalar_select %p1231, %s1228, 1
        %p1233 = scmp.lt.s32.totalorder %s29, 0
        %s1234 = scalar_select %p1233, %s29, 0
        %s1235 = sadd.s32 %s1234, %s1232
        %s1236 = smul.addr %s1230, 2
        %s1237 = sadd.s32 %s1235, %s1236
        %s1238 = smul.addr %s1237, 4
        %s1239 = scalar_lea.vmem %s3, %s1238
      $region60: #{_lambda_.12} parent=55 // pred_fallthru
        _
      // Predicated region
      $region61: #{_lambda_.12} parent=55 // pred_check
        %p1240 = pneg %p185
      $region62: #{_lambda_.12} parent=55 // pred_check_branch
        %1242 = sbr.rel (%p1240) target = $region64
      $region63: #{_lambda_.12} parent=55 // pred_region
        %p1243 = scmp.lt.s32.totalorder %s27, 1
        %s1244 = scalar_select %p1243, %s27, 1
        %p1245 = scmp.lt.s32.totalorder %s28, 0
        %s1246 = scalar_select %p1245, %s28, 0
        %p1247 = scmp.lt.s32.totalorder %s29, 0
        %s1248 = scalar_select %p1247, %s29, 0
        %s1249 = sadd.s32 %s1248, %s1246
        %s1250 = sadd.s32 %s1249, %s1244
        %s1251 = scalar_lea.vmem %s4, %s1250
      $region64: #{_lambda_.12} parent=55 // pred_fallthru
        _
      // Predicated region
      $region65: #{_lambda_.12} parent=55 // pred_check
        %p1252 = pneg %p215
      $region66: #{_lambda_.12} parent=55 // pred_check_branch
        %1254 = sbr.rel (%p1252) target = $region68
      $region67: #{_lambda_.12} parent=55 // pred_region
        %p1255 = scmp.lt.s32.totalorder %s27, 1
        %s1256 = scalar_select %p1255, %s27, 1
        %p1257 = scmp.lt.s32.totalorder %s28, 0
        %s1258 = scalar_select %p1257, %s28, 0
        %p1259 = scmp.lt.s32.totalorder %s29, 0
        %s1260 = scalar_select %p1259, %s29, 0
        %s1261 = sadd.s32 %s1260, %s1258
        %s1262 = sadd.s32 %s1261, %s1256
        %s1263 = scalar_lea.vmem %s5, %s1262
      $region68: #{_lambda_.12} parent=55 // pred_fallthru
        _
    $region56: #{_lambda_.12} parent=5 // pred_fallthru
      _
  $region6: #{_lambda_.12} parent=0 // loop_footer
    %s16 = sadd.s32 1, %s12
  $region7: #{_lambda_.12} parent=0 // loop_footer_branch
    %11 = sbr.rel target = $region3
  $region8: #{_lambda_.12} parent=0 // loop_exit
    _

</llo_original>
